<compile_context>
chip_gen: v6e
topology: v6e:2x2x1
jax: 0.10.0
libtpu: 0.0.40
codegen_flags: <defaults>
</compile_context>

<pallas_src>
import functools

import jax
import jax.numpy as jnp
import numpy as np
from jax.experimental import pallas as pl
from jax.experimental.pallas import tpu as pltpu

_LANE = 128


def _ceil_to(x, m):
    return ((x + m - 1) // m) * m


def _fold_bn(gamma, beta, mean, var, eps=1e-5):
    scale = gamma / jnp.sqrt(var + eps)
    bias = beta - mean * scale
    return scale, bias


def _pack_weight(w_hwio, cin_p, cout_p):
    """(K,K,Cin,Cout) -> channel-padded, im2col-packed (K*K*cin_p, cout_p) bf16."""
    k = w_hwio.shape[0]
    cin, cout = w_hwio.shape[2], w_hwio.shape[3]
    wp = jnp.zeros((k, k, cin_p, cout_p), jnp.bfloat16)
    wp = wp.at[:, :, :cin, :cout].set(w_hwio.astype(jnp.bfloat16))
    return wp.reshape(k * k * cin_p, cout_p)


def _pack_bn(bn, cout_p):
    """Fold BN running stats into (2, cout_p) f32: row0 = scale, row1 = bias."""
    scale, bias = _fold_bn(*bn)
    c = scale.shape[0]
    out = jnp.zeros((2, cout_p), jnp.float32)
    out = out.at[0, :c].set(scale.astype(jnp.float32))
    out = out.at[1, :c].set(bias.astype(jnp.float32))
    return out


def _make_block_kernel(K, stride, H, W, H1, W1, Cin, Cip, Cp, has_sc):
    pad = 1  # conv1/conv2 padding=1 (3x3)

    def tap(ref, dy, dx, s, hh, ww):
        # Static-offset window load, optionally strided (downsampling blocks).
        if s == 1:
            return ref[dy:dy + hh, dx:dx + ww, :]
        # TODO(synk): hoist the stride-s subsampling into the DMA / index_map
        # instead of a strided VMEM load.
        return ref[pl.ds(dy, hh, s), pl.ds(dx, ww, s), :]

    def kernel(*refs):
        if has_sc:
            (x_ref, w1_ref, w2_ref, wsc_ref, bn1_ref, bn2_ref, bnsc_ref,
             o_ref, xp_s, col1_s, o1p_s, col2_s) = refs
        else:
            (x_ref, w1_ref, w2_ref, bn1_ref, bn2_ref,
             o_ref, xp_s, col1_s, o1p_s, col2_s) = refs

        # ---- zero-padded (spatial + channel) copy of x, kept in VMEM ----
        xp_s[...] = jnp.zeros_like(xp_s)
        xp_s[pad:pad + H, pad:pad + W, :Cin] = x_ref[0].astype(xp_s.dtype)

        # ---- conv1: im2col -> one (H1*W1, K*K*Cip) x (K*K*Cip, Cp) bf16 matmul
        for dy in range(K):
            for dx in range(K):
                t = dy * K + dx
                p = tap(xp_s, dy, dx, stride, H1, W1)          # (H1, W1, Cip) f32
                col1_s[:, t * Cip:(t + 1) * Cip] = (
                    p.reshape(H1 * W1, Cip).astype(col1_s.dtype))
        acc1 = jnp.dot(col1_s[...], w1_ref[...],
                       preferred_element_type=jnp.float32)      # (H1*W1, Cp) f32
        bn1 = bn1_ref[...]
        y1 = jnp.maximum(acc1 * bn1[0:1, :] + bn1[1:2, :], 0.0)

        # ---- conv1 output stays in VMEM, zero-padded for conv2 ----
        o1p_s[...] = jnp.zeros_like(o1p_s)
        o1p_s[pad:pad + H1, pad:pad + W1, :] = y1.reshape(H1, W1, Cp)

        # ---- conv2: im2col -> one deep matmul ----
        for dy in range(K):
            for dx in range(K):
                t = dy * K + dx
                p = tap(o1p_s, dy, dx, 1, H1, W1)               # (H1, W1, Cp) f32
                col2_s[:, t * Cp:(t + 1) * Cp] = (
                    p.reshape(H1 * W1, Cp).astype(col2_s.dtype))
        acc2 = jnp.dot(col2_s[...], w2_ref[...],
                       preferred_element_type=jnp.float32)
        bn2 = bn2_ref[...]
        y2 = acc2 * bn2[0:1, :] + bn2[1:2, :]

        # ---- shortcut (1x1 conv + bn, or identity) ----
        if has_sc:
            xs = tap(xp_s, pad, pad, stride, H1, W1)            # (H1, W1, Cip) f32
            sc = jnp.dot(xs.reshape(H1 * W1, Cip).astype(jnp.bfloat16),
                         wsc_ref[...], preferred_element_type=jnp.float32)
            bnsc = bnsc_ref[...]
            sc = sc * bnsc[0:1, :] + bnsc[1:2, :]
        else:
            sc = xp_s[pad:pad + H1, pad:pad + W1, :].reshape(H1 * W1, Cp)

        out = jnp.maximum(y2 + sc, 0.0)
        o_ref[0] = out.reshape(H1, W1, Cp).astype(o_ref.dtype)  # lane-dense store

    return kernel


def basic_block_forward(x_nchw, params, *, in_planes, planes, stride=1):
    """NCHW in / NCHW out (PyTorch convention); NHWC + padded lanes inside."""
    N, Cin, H, W = x_nchw.shape
    assert Cin == in_planes
    K = 3
    Cout = planes
    Cip = _ceil_to(Cin, _LANE)         # padded-in-kernel input channels
    Cp = _ceil_to(Cout, _LANE)         # padded output channels (lane-dense)
    H1 = (H + 2 - K) // stride + 1
    W1 = (W + 2 - K) // stride + 1
    has_sc = (stride != 1) or (in_planes != planes)

    # bf16 activations in HBM (halved DMA traffic); MXU is bf16-native.
    x = jnp.transpose(x_nchw, (0, 2, 3, 1)).astype(jnp.bfloat16)   # NHWC

    w1p = _pack_weight(params["w1"], Cip, Cp)     # (K*K*Cip, Cp) bf16
    w2p = _pack_weight(params["w2"], Cp, Cp)      # (K*K*Cp,  Cp) bf16
    bn1p = _pack_bn(params["bn1"], Cp)            # (2, Cp) f32
    bn2p = _pack_bn(params["bn2"], Cp)

    args = [x, w1p, w2p]
    in_specs = [
        pl.BlockSpec((1, H, W, Cin), lambda n: (n, 0, 0, 0)),
        pl.BlockSpec((K * K * Cip, Cp), lambda n: (0, 0)),
        pl.BlockSpec((K * K * Cp, Cp), lambda n: (0, 0)),
    ]
    if has_sc:
        wscp = _pack_weight(params["w_sc"], Cip, Cp)   # (Cip, Cp) bf16
        args.append(wscp)
        in_specs.append(pl.BlockSpec((Cip, Cp), lambda n: (0, 0)))
    args += [bn1p, bn2p]
    in_specs += [pl.BlockSpec((2, Cp), lambda n: (0, 0)),
                 pl.BlockSpec((2, Cp), lambda n: (0, 0))]
    if has_sc:
        bnscp = _pack_bn(params["bn_sc"], Cp)
        args.append(bnscp)
        in_specs.append(pl.BlockSpec((2, Cp), lambda n: (0, 0)))

    kernel = _make_block_kernel(K, stride, H, W, H1, W1, Cin, Cip, Cp, has_sc)

    out = pl.pallas_call(
        kernel,
        out_shape=jax.ShapeDtypeStruct((N, H1, W1, Cp), jnp.bfloat16),
        grid=(N,),
        in_specs=in_specs,
        out_specs=pl.BlockSpec((1, H1, W1, Cp), lambda n: (n, 0, 0, 0)),
        scratch_shapes=[
            pltpu.VMEM((H + 2, W + 2, Cip), jnp.float32),        # zero-padded x
            pltpu.VMEM((H1 * W1, K * K * Cip), jnp.bfloat16),    # im2col (conv1)
            pltpu.VMEM((H1 + 2, W1 + 2, Cp), jnp.float32),       # padded conv1 out
            pltpu.VMEM((H1 * W1, K * K * Cp), jnp.bfloat16),     # im2col (conv2)
        ],
        compiler_params=pltpu.CompilerParams(
            dimension_semantics=("parallel",)),
    )(*args)

    out = out[:, :, :, :Cout]                       # drop padded channels
    return jnp.transpose(out, (0, 3, 1, 2)).astype(jnp.float32)


# ---------------- pure-JAX f32 reference (correctness check only) ----------------
def _conv_ref(x, w, stride, pad):
    return jax.lax.conv_general_dilated(
        x, w, (stride, stride), [(pad, pad), (pad, pad)],
        dimension_numbers=("NHWC", "HWIO", "NHWC"))


def _reference_forward(x_nchw, params, *, in_planes, planes, stride=1):
    x = jnp.transpose(x_nchw, (0, 2, 3, 1)).astype(jnp.float32)
    s1, b1 = _fold_bn(*params["bn1"])
    out = jnp.maximum(_conv_ref(x, params["w1"], stride, 1) * s1 + b1, 0.0)
    s2, b2 = _fold_bn(*params["bn2"])
    out = _conv_ref(out, params["w2"], 1, 1) * s2 + b2
    if stride != 1 or in_planes != planes:
        ssc, bsc = _fold_bn(*params["bn_sc"])
        sc = _conv_ref(x, params["w_sc"], stride, 0) * ssc + bsc
    else:
        sc = x
    out = jnp.maximum(out + sc, 0.0)
    return jnp.transpose(out, (0, 3, 1, 2))


if __name__ == "__main__":
    N, in_planes, planes, H, W = 2, 4, 8, 16, 16
    stride = 1

    key = jax.random.PRNGKey(0)
    keys = jax.random.split(key, 12)

    x = jax.random.normal(keys[0], (N, in_planes, H, W), jnp.float32)

    def bn_params(k, c):
        k1, k2, k3, k4 = jax.random.split(k, 4)
        gamma = jax.random.uniform(k1, (c,), jnp.float32, 0.5, 1.5)
        beta = jax.random.normal(k2, (c,), jnp.float32) * 0.1
        mean = jax.random.normal(k3, (c,), jnp.float32) * 0.1
        var = jax.random.uniform(k4, (c,), jnp.float32, 0.5, 1.5)
        return gamma, beta, mean, var

    params = {
        # conv weights in HWIO (PyTorch OIHW transposed)
        "w1": jax.random.normal(keys[1], (3, 3, in_planes, planes), jnp.float32) * 0.1,
        "w2": jax.random.normal(keys[2], (3, 3, planes, planes), jnp.float32) * 0.1,
        "w_sc": jax.random.normal(keys[3], (1, 1, in_planes, planes), jnp.float32) * 0.1,
        "bn1": bn_params(keys[4], planes),
        "bn2": bn_params(keys[5], planes),
        "bn_sc": bn_params(keys[6], planes),
    }

    fwd = jax.jit(functools.partial(basic_block_forward,
                                    in_planes=in_planes, planes=planes, stride=stride))
    y = fwd(x, params)
    jax.block_until_ready(y)

    y_ref = _reference_forward(x, params, in_planes=in_planes, planes=planes,
                               stride=stride)
    # bf16 activations/weights vs f32 reference -> relaxed tolerance.
    np.testing.assert_allclose(np.asarray(y), np.asarray(y_ref),
                               rtol=5e-2, atol=3e-2)

    print("KERNEL_OK")
</pallas_src>

<mosaic_0001>
module attributes {stable_mosaic.version = 11 : i64} {
  func.func @kernel(%arg0: i32, %arg1: memref<1x16x16x4xbf16, #tpu.memory_space<vmem>>, %arg2: memref<1152x128xbf16, #tpu.memory_space<vmem>>, %arg3: memref<1152x128xbf16, #tpu.memory_space<vmem>>, %arg4: memref<128x128xbf16, #tpu.memory_space<vmem>>, %arg5: memref<2x128xf32, #tpu.memory_space<vmem>>, %arg6: memref<2x128xf32, #tpu.memory_space<vmem>>, %arg7: memref<2x128xf32, #tpu.memory_space<vmem>>, %arg8: memref<1x16x16x128xbf16, #tpu.memory_space<vmem>>, %arg9: memref<18x18x128xf32, #tpu.memory_space<vmem>>, %arg10: memref<256x1152xbf16, #tpu.memory_space<vmem>>, %arg11: memref<18x18x128xf32, #tpu.memory_space<vmem>>, %arg12: memref<256x1152xbf16, #tpu.memory_space<vmem>>) attributes {dimension_semantics = [#tpu.dimension_semantics<parallel>], iteration_bounds = array<i64: 2>, scalar_prefetch = 0 : i64, scratch_operands = 4 : i64, tpu.core_type = #tpu.core_type<tc>, window_params = [{transform_indices = @transform_0, window_bounds = array<i64: 1, 16, 16, 4>}, {pipeline_mode = #tpu.pipeline_mode<synchronous>, transform_indices = @transform_1, window_bounds = array<i64: 1152, 128>}, {pipeline_mode = #tpu.pipeline_mode<synchronous>, transform_indices = @transform_2, window_bounds = array<i64: 1152, 128>}, {pipeline_mode = #tpu.pipeline_mode<synchronous>, transform_indices = @transform_3, window_bounds = array<i64: 128, 128>}, {pipeline_mode = #tpu.pipeline_mode<synchronous>, transform_indices = @transform_4, window_bounds = array<i64: 2, 128>}, {pipeline_mode = #tpu.pipeline_mode<synchronous>, transform_indices = @transform_5, window_bounds = array<i64: 2, 128>}, {pipeline_mode = #tpu.pipeline_mode<synchronous>, transform_indices = @transform_6, window_bounds = array<i64: 2, 128>}, {transform_indices = @transform_7, window_bounds = array<i64: 1, 16, 16, 128>}]} {
    %cst = arith.constant 0.000000e+00 : f32
    %0 = vector.broadcast %cst : f32 to vector<18x18x128xf32>
    %c0 = arith.constant 0 : index
    %c0_0 = arith.constant 0 : index
    %c0_1 = arith.constant 0 : index
    %1 = vector.load %arg9[%c0, %c0_0, %c0_1] : memref<18x18x128xf32, #tpu.memory_space<vmem>>, vector<18x18x128xf32>
    tpu.vector_store %arg9[%c0, %c0_0, %c0_1], %0 {strides = array<i32>} : memref<18x18x128xf32, #tpu.memory_space<vmem>>, vector<18x18x128xf32>,
    %c0_2 = arith.constant 0 : index
    %c0_3 = arith.constant 0 : index
    %c0_4 = arith.constant 0 : index
    %c0_5 = arith.constant 0 : index
    %2 = vector.load %arg1[%c0_2, %c0_3, %c0_4, %c0_5] : memref<1x16x16x4xbf16, #tpu.memory_space<vmem>>, vector<1x16x16x4xbf16>
    %3 = vector.shape_cast %2 : vector<1x16x16x4xbf16> to vector<16x16x4xbf16>
    %4 = arith.extf %3 : vector<16x16x4xbf16> to vector<16x16x4xf32>
    %c1 = arith.constant 1 : index
    %c1_6 = arith.constant 1 : index
    %c0_7 = arith.constant 0 : index
    %5 = vector.load %arg9[%c1, %c1_6, %c0_7] : memref<18x18x128xf32, #tpu.memory_space<vmem>>, vector<16x16x4xf32>
    tpu.vector_store %arg9[%c1, %c1_6, %c0_7], %4 {strides = array<i32>} : memref<18x18x128xf32, #tpu.memory_space<vmem>>, vector<16x16x4xf32>,
    %c0_8 = arith.constant 0 : index
    %c0_9 = arith.constant 0 : index
    %c0_10 = arith.constant 0 : index
    %6 = vector.load %arg9[%c0_8, %c0_9, %c0_10] : memref<18x18x128xf32, #tpu.memory_space<vmem>>, vector<16x16x128xf32>
    %7 = vector.shape_cast %6 : vector<16x16x128xf32> to vector<256x128xf32>
    %8 = arith.truncf %7 : vector<256x128xf32> to vector<256x128xbf16>
    %c0_11 = arith.constant 0 : index
    %c0_12 = arith.constant 0 : index
    %9 = vector.load %arg10[%c0_11, %c0_12] : memref<256x1152xbf16, #tpu.memory_space<vmem>>, vector<256x128xbf16>
    tpu.vector_store %arg10[%c0_11, %c0_12], %8 {strides = array<i32>} : memref<256x1152xbf16, #tpu.memory_space<vmem>>, vector<256x128xbf16>,
    %c0_13 = arith.constant 0 : index
    %c1_14 = arith.constant 1 : index
    %c0_15 = arith.constant 0 : index
    %10 = vector.load %arg9[%c0_13, %c1_14, %c0_15] : memref<18x18x128xf32, #tpu.memory_space<vmem>>, vector<16x16x128xf32>
    %11 = vector.shape_cast %10 : vector<16x16x128xf32> to vector<256x128xf32>
    %12 = arith.truncf %11 : vector<256x128xf32> to vector<256x128xbf16>
    %c0_16 = arith.constant 0 : index
    %c128 = arith.constant 128 : index
    %13 = vector.load %arg10[%c0_16, %c128] : memref<256x1152xbf16, #tpu.memory_space<vmem>>, vector<256x128xbf16>
    tpu.vector_store %arg10[%c0_16, %c128], %12 {strides = array<i32>} : memref<256x1152xbf16, #tpu.memory_space<vmem>>, vector<256x128xbf16>,
    %c0_17 = arith.constant 0 : index
    %c2 = arith.constant 2 : index
    %c0_18 = arith.constant 0 : index
    %14 = vector.load %arg9[%c0_17, %c2, %c0_18] : memref<18x18x128xf32, #tpu.memory_space<vmem>>, vector<16x16x128xf32>
    %15 = vector.shape_cast %14 : vector<16x16x128xf32> to vector<256x128xf32>
    %16 = arith.truncf %15 : vector<256x128xf32> to vector<256x128xbf16>
    %c0_19 = arith.constant 0 : index
    %c256 = arith.constant 256 : index
    %17 = vector.load %arg10[%c0_19, %c256] : memref<256x1152xbf16, #tpu.memory_space<vmem>>, vector<256x128xbf16>
    tpu.vector_store %arg10[%c0_19, %c256], %16 {strides = array<i32>} : memref<256x1152xbf16, #tpu.memory_space<vmem>>, vector<256x128xbf16>,
    %c1_20 = arith.constant 1 : index
    %c0_21 = arith.constant 0 : index
    %c0_22 = arith.constant 0 : index
    %18 = vector.load %arg9[%c1_20, %c0_21, %c0_22] : memref<18x18x128xf32, #tpu.memory_space<vmem>>, vector<16x16x128xf32>
    %19 = vector.shape_cast %18 : vector<16x16x128xf32> to vector<256x128xf32>
    %20 = arith.truncf %19 : vector<256x128xf32> to vector<256x128xbf16>
    %c0_23 = arith.constant 0 : index
    %c384 = arith.constant 384 : index
    %21 = vector.load %arg10[%c0_23, %c384] : memref<256x1152xbf16, #tpu.memory_space<vmem>>, vector<256x128xbf16>
    tpu.vector_store %arg10[%c0_23, %c384], %20 {strides = array<i32>} : memref<256x1152xbf16, #tpu.memory_space<vmem>>, vector<256x128xbf16>,
    %c1_24 = arith.constant 1 : index
    %c1_25 = arith.constant 1 : index
    %c0_26 = arith.constant 0 : index
    %22 = vector.load %arg9[%c1_24, %c1_25, %c0_26] : memref<18x18x128xf32, #tpu.memory_space<vmem>>, vector<16x16x128xf32>
    %23 = vector.shape_cast %22 : vector<16x16x128xf32> to vector<256x128xf32>
    %24 = arith.truncf %23 : vector<256x128xf32> to vector<256x128xbf16>
    %c0_27 = arith.constant 0 : index
    %c512 = arith.constant 512 : index
    %25 = vector.load %arg10[%c0_27, %c512] : memref<256x1152xbf16, #tpu.memory_space<vmem>>, vector<256x128xbf16>
    tpu.vector_store %arg10[%c0_27, %c512], %24 {strides = array<i32>} : memref<256x1152xbf16, #tpu.memory_space<vmem>>, vector<256x128xbf16>,
    %c1_28 = arith.constant 1 : index
    %c2_29 = arith.constant 2 : index
    %c0_30 = arith.constant 0 : index
    %26 = vector.load %arg9[%c1_28, %c2_29, %c0_30] : memref<18x18x128xf32, #tpu.memory_space<vmem>>, vector<16x16x128xf32>
    %27 = vector.shape_cast %26 : vector<16x16x128xf32> to vector<256x128xf32>
    %28 = arith.truncf %27 : vector<256x128xf32> to vector<256x128xbf16>
    %c0_31 = arith.constant 0 : index
    %c640 = arith.constant 640 : index
    %29 = vector.load %arg10[%c0_31, %c640] : memref<256x1152xbf16, #tpu.memory_space<vmem>>, vector<256x128xbf16>
    tpu.vector_store %arg10[%c0_31, %c640], %28 {strides = array<i32>} : memref<256x1152xbf16, #tpu.memory_space<vmem>>, vector<256x128xbf16>,
    %c2_32 = arith.constant 2 : index
    %c0_33 = arith.constant 0 : index
    %c0_34 = arith.constant 0 : index
    %30 = vector.load %arg9[%c2_32, %c0_33, %c0_34] : memref<18x18x128xf32, #tpu.memory_space<vmem>>, vector<16x16x128xf32>
    %31 = vector.shape_cast %30 : vector<16x16x128xf32> to vector<256x128xf32>
    %32 = arith.truncf %31 : vector<256x128xf32> to vector<256x128xbf16>
    %c0_35 = arith.constant 0 : index
    %c768 = arith.constant 768 : index
    %33 = vector.load %arg10[%c0_35, %c768] : memref<256x1152xbf16, #tpu.memory_space<vmem>>, vector<256x128xbf16>
    tpu.vector_store %arg10[%c0_35, %c768], %32 {strides = array<i32>} : memref<256x1152xbf16, #tpu.memory_space<vmem>>, vector<256x128xbf16>,
    %c2_36 = arith.constant 2 : index
    %c1_37 = arith.constant 1 : index
    %c0_38 = arith.constant 0 : index
    %34 = vector.load %arg9[%c2_36, %c1_37, %c0_38] : memref<18x18x128xf32, #tpu.memory_space<vmem>>, vector<16x16x128xf32>
    %35 = vector.shape_cast %34 : vector<16x16x128xf32> to vector<256x128xf32>
    %36 = arith.truncf %35 : vector<256x128xf32> to vector<256x128xbf16>
    %c0_39 = arith.constant 0 : index
    %c896 = arith.constant 896 : index
    %37 = vector.load %arg10[%c0_39, %c896] : memref<256x1152xbf16, #tpu.memory_space<vmem>>, vector<256x128xbf16>
    tpu.vector_store %arg10[%c0_39, %c896], %36 {strides = array<i32>} : memref<256x1152xbf16, #tpu.memory_space<vmem>>, vector<256x128xbf16>,
    %c2_40 = arith.constant 2 : index
    %c2_41 = arith.constant 2 : index
    %c0_42 = arith.constant 0 : index
    %38 = vector.load %arg9[%c2_40, %c2_41, %c0_42] : memref<18x18x128xf32, #tpu.memory_space<vmem>>, vector<16x16x128xf32>
    %39 = vector.shape_cast %38 : vector<16x16x128xf32> to vector<256x128xf32>
    %40 = arith.truncf %39 : vector<256x128xf32> to vector<256x128xbf16>
    %c0_43 = arith.constant 0 : index
    %c1024 = arith.constant 1024 : index
    %41 = vector.load %arg10[%c0_43, %c1024] : memref<256x1152xbf16, #tpu.memory_space<vmem>>, vector<256x128xbf16>
    tpu.vector_store %arg10[%c0_43, %c1024], %40 {strides = array<i32>} : memref<256x1152xbf16, #tpu.memory_space<vmem>>, vector<256x128xbf16>,
    %c0_44 = arith.constant 0 : index
    %c0_45 = arith.constant 0 : index
    %42 = vector.load %arg10[%c0_44, %c0_45] : memref<256x1152xbf16, #tpu.memory_space<vmem>>, vector<256x1152xbf16>
    %c0_46 = arith.constant 0 : index
    %c0_47 = arith.constant 0 : index
    %43 = vector.load %arg2[%c0_46, %c0_47] : memref<1152x128xbf16, #tpu.memory_space<vmem>>, vector<1152x128xbf16>
    %cst_48 = arith.constant dense<0.000000e+00> : vector<256x128xf32>
    %44 = tpu.matmul %42, %43, %cst_48 {dimension_numbers = #tpu.dot_dimension_numbers<[1], [0], [0], [1], [0, 0, 1, 1], [], []>} : vector<256x1152xbf16>, vector<1152x128xbf16>, vector<256x128xf32> -> vector<256x128xf32>
    %c0_49 = arith.constant 0 : index
    %c0_50 = arith.constant 0 : index
    %45 = vector.load %arg5[%c0_49, %c0_50] : memref<2x128xf32, #tpu.memory_space<vmem>>, vector<2x128xf32>
    %46 = vector.extract_strided_slice %45 {offsets = [0, 0], sizes = [1, 128], strides = [1, 1]} : vector<2x128xf32> to vector<1x128xf32>
    %47 = vector.broadcast %46 : vector<1x128xf32> to vector<256x128xf32>
    %48 = arith.mulf %44, %47 : vector<256x128xf32>
    %49 = vector.extract_strided_slice %45 {offsets = [1, 0], sizes = [1, 128], strides = [1, 1]} : vector<2x128xf32> to vector<1x128xf32>
    %50 = vector.broadcast %49 : vector<1x128xf32> to vector<256x128xf32>
    %51 = arith.addf %48, %50 : vector<256x128xf32>
    %cst_51 = arith.constant 0.000000e+00 : f32
    %52 = vector.broadcast %cst_51 : f32 to vector<256x128xf32>
    %53 = arith.maximumf %51, %52 : vector<256x128xf32>
    %cst_52 = arith.constant 0.000000e+00 : f32
    %54 = vector.broadcast %cst_52 : f32 to vector<18x18x128xf32>
    %c0_53 = arith.constant 0 : index
    %c0_54 = arith.constant 0 : index
    %c0_55 = arith.constant 0 : index
    %55 = vector.load %arg11[%c0_53, %c0_54, %c0_55] : memref<18x18x128xf32, #tpu.memory_space<vmem>>, vector<18x18x128xf32>
    tpu.vector_store %arg11[%c0_53, %c0_54, %c0_55], %54 {strides = array<i32>} : memref<18x18x128xf32, #tpu.memory_space<vmem>>, vector<18x18x128xf32>,
    %56 = vector.shape_cast %53 : vector<256x128xf32> to vector<16x16x128xf32>
    %c1_56 = arith.constant 1 : index
    %c1_57 = arith.constant 1 : index
    %c0_58 = arith.constant 0 : index
    %57 = vector.load %arg11[%c1_56, %c1_57, %c0_58] : memref<18x18x128xf32, #tpu.memory_space<vmem>>, vector<16x16x128xf32>
    tpu.vector_store %arg11[%c1_56, %c1_57, %c0_58], %56 {strides = array<i32>} : memref<18x18x128xf32, #tpu.memory_space<vmem>>, vector<16x16x128xf32>,
    %c0_59 = arith.constant 0 : index
    %c0_60 = arith.constant 0 : index
    %c0_61 = arith.constant 0 : index
    %58 = vector.load %arg11[%c0_59, %c0_60, %c0_61] : memref<18x18x128xf32, #tpu.memory_space<vmem>>, vector<16x16x128xf32>
    %59 = vector.shape_cast %58 : vector<16x16x128xf32> to vector<256x128xf32>
    %60 = arith.truncf %59 : vector<256x128xf32> to vector<256x128xbf16>
    %c0_62 = arith.constant 0 : index
    %c0_63 = arith.constant 0 : index
    %61 = vector.load %arg12[%c0_62, %c0_63] : memref<256x1152xbf16, #tpu.memory_space<vmem>>, vector<256x128xbf16>
    tpu.vector_store %arg12[%c0_62, %c0_63], %60 {strides = array<i32>} : memref<256x1152xbf16, #tpu.memory_space<vmem>>, vector<256x128xbf16>,
    %c0_64 = arith.constant 0 : index
    %c1_65 = arith.constant 1 : index
    %c0_66 = arith.constant 0 : index
    %62 = vector.load %arg11[%c0_64, %c1_65, %c0_66] : memref<18x18x128xf32, #tpu.memory_space<vmem>>, vector<16x16x128xf32>
    %63 = vector.shape_cast %62 : vector<16x16x128xf32> to vector<256x128xf32>
    %64 = arith.truncf %63 : vector<256x128xf32> to vector<256x128xbf16>
    %c0_67 = arith.constant 0 : index
    %c128_68 = arith.constant 128 : index
    %65 = vector.load %arg12[%c0_67, %c128_68] : memref<256x1152xbf16, #tpu.memory_space<vmem>>, vector<256x128xbf16>
    tpu.vector_store %arg12[%c0_67, %c128_68], %64 {strides = array<i32>} : memref<256x1152xbf16, #tpu.memory_space<vmem>>, vector<256x128xbf16>,
    %c0_69 = arith.constant 0 : index
    %c2_70 = arith.constant 2 : index
    %c0_71 = arith.constant 0 : index
    %66 = vector.load %arg11[%c0_69, %c2_70, %c0_71] : memref<18x18x128xf32, #tpu.memory_space<vmem>>, vector<16x16x128xf32>
    %67 = vector.shape_cast %66 : vector<16x16x128xf32> to vector<256x128xf32>
    %68 = arith.truncf %67 : vector<256x128xf32> to vector<256x128xbf16>
    %c0_72 = arith.constant 0 : index
    %c256_73 = arith.constant 256 : index
    %69 = vector.load %arg12[%c0_72, %c256_73] : memref<256x1152xbf16, #tpu.memory_space<vmem>>, vector<256x128xbf16>
    tpu.vector_store %arg12[%c0_72, %c256_73], %68 {strides = array<i32>} : memref<256x1152xbf16, #tpu.memory_space<vmem>>, vector<256x128xbf16>,
    %c1_74 = arith.constant 1 : index
    %c0_75 = arith.constant 0 : index
    %c0_76 = arith.constant 0 : index
    %70 = vector.load %arg11[%c1_74, %c0_75, %c0_76] : memref<18x18x128xf32, #tpu.memory_space<vmem>>, vector<16x16x128xf32>
    %71 = vector.shape_cast %70 : vector<16x16x128xf32> to vector<256x128xf32>
    %72 = arith.truncf %71 : vector<256x128xf32> to vector<256x128xbf16>
    %c0_77 = arith.constant 0 : index
    %c384_78 = arith.constant 384 : index
    %73 = vector.load %arg12[%c0_77, %c384_78] : memref<256x1152xbf16, #tpu.memory_space<vmem>>, vector<256x128xbf16>
    tpu.vector_store %arg12[%c0_77, %c384_78], %72 {strides = array<i32>} : memref<256x1152xbf16, #tpu.memory_space<vmem>>, vector<256x128xbf16>,
    %c1_79 = arith.constant 1 : index
    %c1_80 = arith.constant 1 : index
    %c0_81 = arith.constant 0 : index
    %74 = vector.load %arg11[%c1_79, %c1_80, %c0_81] : memref<18x18x128xf32, #tpu.memory_space<vmem>>, vector<16x16x128xf32>
    %75 = vector.shape_cast %74 : vector<16x16x128xf32> to vector<256x128xf32>
    %76 = arith.truncf %75 : vector<256x128xf32> to vector<256x128xbf16>
    %c0_82 = arith.constant 0 : index
    %c512_83 = arith.constant 512 : index
    %77 = vector.load %arg12[%c0_82, %c512_83] : memref<256x1152xbf16, #tpu.memory_space<vmem>>, vector<256x128xbf16>
    tpu.vector_store %arg12[%c0_82, %c512_83], %76 {strides = array<i32>} : memref<256x1152xbf16, #tpu.memory_space<vmem>>, vector<256x128xbf16>,
    %c1_84 = arith.constant 1 : index
    %c2_85 = arith.constant 2 : index
    %c0_86 = arith.constant 0 : index
    %78 = vector.load %arg11[%c1_84, %c2_85, %c0_86] : memref<18x18x128xf32, #tpu.memory_space<vmem>>, vector<16x16x128xf32>
    %79 = vector.shape_cast %78 : vector<16x16x128xf32> to vector<256x128xf32>
    %80 = arith.truncf %79 : vector<256x128xf32> to vector<256x128xbf16>
    %c0_87 = arith.constant 0 : index
    %c640_88 = arith.constant 640 : index
    %81 = vector.load %arg12[%c0_87, %c640_88] : memref<256x1152xbf16, #tpu.memory_space<vmem>>, vector<256x128xbf16>
    tpu.vector_store %arg12[%c0_87, %c640_88], %80 {strides = array<i32>} : memref<256x1152xbf16, #tpu.memory_space<vmem>>, vector<256x128xbf16>,
    %c2_89 = arith.constant 2 : index
    %c0_90 = arith.constant 0 : index
    %c0_91 = arith.constant 0 : index
    %82 = vector.load %arg11[%c2_89, %c0_90, %c0_91] : memref<18x18x128xf32, #tpu.memory_space<vmem>>, vector<16x16x128xf32>
    %83 = vector.shape_cast %82 : vector<16x16x128xf32> to vector<256x128xf32>
    %84 = arith.truncf %83 : vector<256x128xf32> to vector<256x128xbf16>
    %c0_92 = arith.constant 0 : index
    %c768_93 = arith.constant 768 : index
    %85 = vector.load %arg12[%c0_92, %c768_93] : memref<256x1152xbf16, #tpu.memory_space<vmem>>, vector<256x128xbf16>
    tpu.vector_store %arg12[%c0_92, %c768_93], %84 {strides = array<i32>} : memref<256x1152xbf16, #tpu.memory_space<vmem>>, vector<256x128xbf16>,
    %c2_94 = arith.constant 2 : index
    %c1_95 = arith.constant 1 : index
    %c0_96 = arith.constant 0 : index
    %86 = vector.load %arg11[%c2_94, %c1_95, %c0_96] : memref<18x18x128xf32, #tpu.memory_space<vmem>>, vector<16x16x128xf32>
    %87 = vector.shape_cast %86 : vector<16x16x128xf32> to vector<256x128xf32>
    %88 = arith.truncf %87 : vector<256x128xf32> to vector<256x128xbf16>
    %c0_97 = arith.constant 0 : index
    %c896_98 = arith.constant 896 : index
    %89 = vector.load %arg12[%c0_97, %c896_98] : memref<256x1152xbf16, #tpu.memory_space<vmem>>, vector<256x128xbf16>
    tpu.vector_store %arg12[%c0_97, %c896_98], %88 {strides = array<i32>} : memref<256x1152xbf16, #tpu.memory_space<vmem>>, vector<256x128xbf16>,
    %c2_99 = arith.constant 2 : index
    %c2_100 = arith.constant 2 : index
    %c0_101 = arith.constant 0 : index
    %90 = vector.load %arg11[%c2_99, %c2_100, %c0_101] : memref<18x18x128xf32, #tpu.memory_space<vmem>>, vector<16x16x128xf32>
    %91 = vector.shape_cast %90 : vector<16x16x128xf32> to vector<256x128xf32>
    %92 = arith.truncf %91 : vector<256x128xf32> to vector<256x128xbf16>
    %c0_102 = arith.constant 0 : index
    %c1024_103 = arith.constant 1024 : index
    %93 = vector.load %arg12[%c0_102, %c1024_103] : memref<256x1152xbf16, #tpu.memory_space<vmem>>, vector<256x128xbf16>
    tpu.vector_store %arg12[%c0_102, %c1024_103], %92 {strides = array<i32>} : memref<256x1152xbf16, #tpu.memory_space<vmem>>, vector<256x128xbf16>,
    %c0_104 = arith.constant 0 : index
    %c0_105 = arith.constant 0 : index
    %94 = vector.load %arg12[%c0_104, %c0_105] : memref<256x1152xbf16, #tpu.memory_space<vmem>>, vector<256x1152xbf16>
    %c0_106 = arith.constant 0 : index
    %c0_107 = arith.constant 0 : index
    %95 = vector.load %arg3[%c0_106, %c0_107] : memref<1152x128xbf16, #tpu.memory_space<vmem>>, vector<1152x128xbf16>
    %cst_108 = arith.constant dense<0.000000e+00> : vector<256x128xf32>
    %96 = tpu.matmul %94, %95, %cst_108 {dimension_numbers = #tpu.dot_dimension_numbers<[1], [0], [0], [1], [0, 0, 1, 1], [], []>} : vector<256x1152xbf16>, vector<1152x128xbf16>, vector<256x128xf32> -> vector<256x128xf32>
    %c0_109 = arith.constant 0 : index
    %c0_110 = arith.constant 0 : index
    %97 = vector.load %arg6[%c0_109, %c0_110] : memref<2x128xf32, #tpu.memory_space<vmem>>, vector<2x128xf32>
    %98 = vector.extract_strided_slice %97 {offsets = [0, 0], sizes = [1, 128], strides = [1, 1]} : vector<2x128xf32> to vector<1x128xf32>
    %99 = vector.broadcast %98 : vector<1x128xf32> to vector<256x128xf32>
    %100 = arith.mulf %96, %99 : vector<256x128xf32>
    %101 = vector.extract_strided_slice %97 {offsets = [1, 0], sizes = [1, 128], strides = [1, 1]} : vector<2x128xf32> to vector<1x128xf32>
    %102 = vector.broadcast %101 : vector<1x128xf32> to vector<256x128xf32>
    %103 = arith.addf %100, %102 : vector<256x128xf32>
    %c1_111 = arith.constant 1 : index
    %c1_112 = arith.constant 1 : index
    %c0_113 = arith.constant 0 : index
    %104 = vector.load %arg9[%c1_111, %c1_112, %c0_113] : memref<18x18x128xf32, #tpu.memory_space<vmem>>, vector<16x16x128xf32>
    %105 = vector.shape_cast %104 : vector<16x16x128xf32> to vector<256x128xf32>
    %106 = arith.truncf %105 : vector<256x128xf32> to vector<256x128xbf16>
    %c0_114 = arith.constant 0 : index
    %c0_115 = arith.constant 0 : index
    %107 = vector.load %arg4[%c0_114, %c0_115] : memref<128x128xbf16, #tpu.memory_space<vmem>>, vector<128x128xbf16>
    %cst_116 = arith.constant dense<0.000000e+00> : vector<256x128xf32>
    %108 = tpu.matmul %106, %107, %cst_116 {dimension_numbers = #tpu.dot_dimension_numbers<[1], [0], [0], [1], [0, 0, 1, 1], [], []>} : vector<256x128xbf16>, vector<128x128xbf16>, vector<256x128xf32> -> vector<256x128xf32>
    %c0_117 = arith.constant 0 : index
    %c0_118 = arith.constant 0 : index
    %109 = vector.load %arg7[%c0_117, %c0_118] : memref<2x128xf32, #tpu.memory_space<vmem>>, vector<2x128xf32>
    %110 = vector.extract_strided_slice %109 {offsets = [0, 0], sizes = [1, 128], strides = [1, 1]} : vector<2x128xf32> to vector<1x128xf32>
    %111 = vector.broadcast %110 : vector<1x128xf32> to vector<256x128xf32>
    %112 = arith.mulf %108, %111 : vector<256x128xf32>
    %113 = vector.extract_strided_slice %109 {offsets = [1, 0], sizes = [1, 128], strides = [1, 1]} : vector<2x128xf32> to vector<1x128xf32>
    %114 = vector.broadcast %113 : vector<1x128xf32> to vector<256x128xf32>
    %115 = arith.addf %112, %114 : vector<256x128xf32>
    %116 = arith.addf %103, %115 : vector<256x128xf32>
    %cst_119 = arith.constant 0.000000e+00 : f32
    %117 = vector.broadcast %cst_119 : f32 to vector<256x128xf32>
    %118 = arith.maximumf %116, %117 : vector<256x128xf32>
    %119 = vector.shape_cast %118 : vector<256x128xf32> to vector<16x16x128xf32>
    %120 = arith.truncf %119 : vector<16x16x128xf32> to vector<16x16x128xbf16>
    %c0_120 = arith.constant 0 : index
    %c0_121 = arith.constant 0 : index
    %c0_122 = arith.constant 0 : index
    %c0_123 = arith.constant 0 : index
    %121 = vector.load %arg8[%c0_120, %c0_121, %c0_122, %c0_123] : memref<1x16x16x128xbf16, #tpu.memory_space<vmem>>, vector<1x16x16x128xbf16>
    %122 = vector.shape_cast %121 : vector<1x16x16x128xbf16> to vector<16x16x128xbf16>
    %123 = vector.shape_cast %120 : vector<16x16x128xbf16> to vector<1x16x16x128xbf16>
    tpu.vector_store %arg8[%c0_120, %c0_121, %c0_122, %c0_123], %123 {strides = array<i32>} : memref<1x16x16x128xbf16, #tpu.memory_space<vmem>>, vector<1x16x16x128xbf16>,
    return
  }
  func.func @transform_0(%arg0: i32) -> (i32, i32, i32, i32) {
    %c0_i32 = arith.constant 0 : i32
    %c0_i32_0 = arith.constant 0 : i32
    %c0_i32_1 = arith.constant 0 : i32
    %c0_i32_2 = arith.constant 0 : i32
    return %arg0, %c0_i32, %c0_i32_0, %c0_i32_1 : i32, i32, i32, i32
  }
  func.func @transform_1(%arg0: i32) -> (i32, i32) {
    %c0_i32 = arith.constant 0 : i32
    %c0_i32_0 = arith.constant 0 : i32
    %c0_i32_1 = arith.constant 0 : i32
    return %c0_i32, %c0_i32_0 : i32, i32
  }
  func.func @transform_2(%arg0: i32) -> (i32, i32) {
    %c0_i32 = arith.constant 0 : i32
    %c0_i32_0 = arith.constant 0 : i32
    %c0_i32_1 = arith.constant 0 : i32
    return %c0_i32, %c0_i32_0 : i32, i32
  }
  func.func @transform_3(%arg0: i32) -> (i32, i32) {
    %c0_i32 = arith.constant 0 : i32
    %c0_i32_0 = arith.constant 0 : i32
    %c0_i32_1 = arith.constant 0 : i32
    return %c0_i32, %c0_i32_0 : i32, i32
  }
  func.func @transform_4(%arg0: i32) -> (i32, i32) {
    %c0_i32 = arith.constant 0 : i32
    %c0_i32_0 = arith.constant 0 : i32
    %c0_i32_1 = arith.constant 0 : i32
    return %c0_i32, %c0_i32_0 : i32, i32
  }
  func.func @transform_5(%arg0: i32) -> (i32, i32) {
    %c0_i32 = arith.constant 0 : i32
    %c0_i32_0 = arith.constant 0 : i32
    %c0_i32_1 = arith.constant 0 : i32
    return %c0_i32, %c0_i32_0 : i32, i32
  }
  func.func @transform_6(%arg0: i32) -> (i32, i32) {
    %c0_i32 = arith.constant 0 : i32
    %c0_i32_0 = arith.constant 0 : i32
    %c0_i32_1 = arith.constant 0 : i32
    return %c0_i32, %c0_i32_0 : i32, i32
  }
  func.func @transform_7(%arg0: i32) -> (i32, i32, i32, i32) {
    %c0_i32 = arith.constant 0 : i32
    %c0_i32_0 = arith.constant 0 : i32
    %c0_i32_1 = arith.constant 0 : i32
    %c0_i32_2 = arith.constant 0 : i32
    return %arg0, %c0_i32, %c0_i32_0, %c0_i32_1 : i32, i32, i32, i32
  }
}

</mosaic_0001>

<llo_original>
// kernel: basic_block_forward.1
$region0: #{basic_block_forward.1}
  #allocation0 [shape = 'u32[]', space=smem, size = 0x4, offset = 0x4, fixed_abs, tag = 'smem constant byte address 0x4 - core index']
  #allocation1 [shape = 'u32[144,128]{1,0:T(1,128)}', space=vmem, size = 0x12000, scoped, tag = 'internal scratch']
  #allocation2 [shape = 'f32[18,18,128]{2,1,0:T(8,128)}', space=vmem, size = 0x36000, scoped, tag = 'scratch operand']
  #allocation3 [shape = 'bf16[256,1152]{1,0:T(8,128)(2,1)}', space=vmem, size = 0x90000, scoped, tag = 'scratch operand']
  #allocation4 [shape = 'f32[18,18,128]{2,1,0:T(8,128)}', space=vmem, size = 0x36000, scoped, tag = 'scratch operand']
  #allocation5 [shape = 'bf16[256,1152]{1,0:T(8,128)(2,1)}', space=vmem, size = 0x90000, scoped, tag = 'scratch operand']
  %s0 = inlined_call_operand.vmem [shape: bf16[2,16,16,4], index: 0, kind: input, shape index: {}]
  %s1 = inlined_call_operand.vmem [shape: bf16[1152,128], index: 1, kind: input, shape index: {}]
  %s2 = inlined_call_operand.vmem [shape: bf16[1152,128], index: 2, kind: input, shape index: {}]
  %s3 = inlined_call_operand.vmem [shape: bf16[128,128], index: 3, kind: input, shape index: {}]
  %s4 = inlined_call_operand.vmem [shape: f32[2,128], index: 4, kind: input, shape index: {}]
  %s5 = inlined_call_operand.vmem [shape: f32[2,128], index: 5, kind: input, shape index: {}]
  %s6 = inlined_call_operand.vmem [shape: f32[2,128], index: 6, kind: input, shape index: {}]
  %s7 = inlined_call_operand.vmem [shape: bf16[2,16,16,128], index: 7, kind: output, shape index: {}]
  %s8 = sld [smem:[#allocation0]]
  $region61: #{basic_block_forward.1} parent=0
    _
  %s10 = ssub.s32 1, %s8
  %s11 = scalar_select 0, %s10, %s8
  loop: start=0, step=1, limit=4
  $region2: #{basic_block_forward.1} parent=0 // loop_pre_header
    _
  $region3: #{basic_block_forward.1} parent=0 // loop_header
    %s13 = sphi 0, %s17
    %p14 = scmp.ge.s32.totalorder %s13, 4
    %s23 = sphi 0, %s25
    %s26 = sphi 0, %s23
    %s27 = sphi 0, %s26
    %s43 = sphi 0, %s27
    %s47 = sphi 0, %s47
    %s49 = sphi 0, %s47
    %s50 = sphi 0, %s49
    %s64 = sphi 0, %s50
    %s68 = sphi 0, %s68
    %s70 = sphi 0, %s68
    %s71 = sphi 0, %s70
    %s85 = sphi 0, %s71
    %s89 = sphi 0, %s89
    %s91 = sphi 0, %s89
    %s92 = sphi 0, %s91
    %s106 = sphi 0, %s92
    %s110 = sphi 0, %s110
    %s112 = sphi 0, %s110
    %s113 = sphi 0, %s112
    %s127 = sphi 0, %s113
    %s131 = sphi 0, %s131
    %s133 = sphi 0, %s131
    %s134 = sphi 0, %s133
    %s148 = sphi 0, %s134
    %s152 = sphi 0, %s152
    %s154 = sphi 0, %s152
    %s155 = sphi 0, %s154
    %s169 = sphi 0, %s155
    %s175 = sphi 0, %s177
    %s178 = sphi 0, %s175
    %s179 = sphi 0, %s178
    %s195 = sphi 0, %s179
  $region4: #{basic_block_forward.1} parent=0 // loop_header_branch
    %16 = sbr.rel (%p14) target = $region8
  $region5: #{basic_block_forward.1} parent=0 // loop_body
    %s18 = ssub.s32 %s13, 1
    %s19 = ssub.s32 %s13, 2
    %s20 = sadd.s32 %s13, 1
    %s21 = ssub.s32 %s13, %s20
    %p22 = scmp.eq.s32.totalorder %s21, 0
    %s24 = sadd.s32 %s23, 1
    %s25 = scalar_select %p22, %s23, %s24
    %p28 = pneg %p22
    %p29 = scmp.eq.s32.totalorder %s13, 1
    %p30 = por %p28, %p29
    %p31 = scmp.ne.s32.totalorder %s23, %s26
    %p32 = scmp.eq.s32.totalorder %s13, 0
    %p33 = por %p31, %p32
    %p34 = scmp.ne.s32.totalorder %s23, %s26
    %p35 = scmp.eq.s32.totalorder %s18, 1
    %p36 = por %p34, %p35
    %p37 = scmp.ne.s32.totalorder %s26, %s27
    %p38 = scmp.eq.s32.totalorder %s18, 0
    %p39 = por %p37, %p38
    %p40 = scmp.ne.s32.totalorder %s26, %s27
    %p41 = scmp.eq.s32.totalorder %s19, 1
    %p42 = por %p40, %p41
    %p44 = scmp.ne.s32.totalorder %s27, %s43
    %p45 = scmp.eq.s32.totalorder %s19, 0
    %p46 = por %p44, %p45
    %s48 = sadd.s32 %s47, 1
    %p51 = scmp.eq.s32.totalorder %s13, 1
    %p52 = scmp.ne.s32.totalorder %s47, %s49
    %p53 = scmp.eq.s32.totalorder %s13, 0
    %p54 = por %p52, %p53
    %p55 = scmp.ne.s32.totalorder %s47, %s49
    %p56 = scmp.eq.s32.totalorder %s18, 1
    %p57 = por %p55, %p56
    %p58 = scmp.ne.s32.totalorder %s49, %s50
    %p59 = scmp.eq.s32.totalorder %s18, 0
    %p60 = por %p58, %p59
    %p61 = scmp.ne.s32.totalorder %s49, %s50
    %p62 = scmp.eq.s32.totalorder %s19, 1
    %p63 = por %p61, %p62
    %p65 = scmp.ne.s32.totalorder %s50, %s64
    %p66 = scmp.eq.s32.totalorder %s19, 0
    %p67 = por %p65, %p66
    %s69 = sadd.s32 %s68, 1
    %p72 = scmp.eq.s32.totalorder %s13, 1
    %p73 = scmp.ne.s32.totalorder %s68, %s70
    %p74 = scmp.eq.s32.totalorder %s13, 0
    %p75 = por %p73, %p74
    %p76 = scmp.ne.s32.totalorder %s68, %s70
    %p77 = scmp.eq.s32.totalorder %s18, 1
    %p78 = por %p76, %p77
    %p79 = scmp.ne.s32.totalorder %s70, %s71
    %p80 = scmp.eq.s32.totalorder %s18, 0
    %p81 = por %p79, %p80
    %p82 = scmp.ne.s32.totalorder %s70, %s71
    %p83 = scmp.eq.s32.totalorder %s19, 1
    %p84 = por %p82, %p83
    %p86 = scmp.ne.s32.totalorder %s71, %s85
    %p87 = scmp.eq.s32.totalorder %s19, 0
    %p88 = por %p86, %p87
    %s90 = sadd.s32 %s89, 1
    %p93 = scmp.eq.s32.totalorder %s13, 1
    %p94 = scmp.ne.s32.totalorder %s89, %s91
    %p95 = scmp.eq.s32.totalorder %s13, 0
    %p96 = por %p94, %p95
    %p97 = scmp.ne.s32.totalorder %s89, %s91
    %p98 = scmp.eq.s32.totalorder %s18, 1
    %p99 = por %p97, %p98
    %p100 = scmp.ne.s32.totalorder %s91, %s92
    %p101 = scmp.eq.s32.totalorder %s18, 0
    %p102 = por %p100, %p101
    %p103 = scmp.ne.s32.totalorder %s91, %s92
    %p104 = scmp.eq.s32.totalorder %s19, 1
    %p105 = por %p103, %p104
    %p107 = scmp.ne.s32.totalorder %s92, %s106
    %p108 = scmp.eq.s32.totalorder %s19, 0
    %p109 = por %p107, %p108
    %s111 = sadd.s32 %s110, 1
    %p114 = scmp.eq.s32.totalorder %s13, 1
    %p115 = scmp.ne.s32.totalorder %s110, %s112
    %p116 = scmp.eq.s32.totalorder %s13, 0
    %p117 = por %p115, %p116
    %p118 = scmp.ne.s32.totalorder %s110, %s112
    %p119 = scmp.eq.s32.totalorder %s18, 1
    %p120 = por %p118, %p119
    %p121 = scmp.ne.s32.totalorder %s112, %s113
    %p122 = scmp.eq.s32.totalorder %s18, 0
    %p123 = por %p121, %p122
    %p124 = scmp.ne.s32.totalorder %s112, %s113
    %p125 = scmp.eq.s32.totalorder %s19, 1
    %p126 = por %p124, %p125
    %p128 = scmp.ne.s32.totalorder %s113, %s127
    %p129 = scmp.eq.s32.totalorder %s19, 0
    %p130 = por %p128, %p129
    %s132 = sadd.s32 %s131, 1
    %p135 = scmp.eq.s32.totalorder %s13, 1
    %p136 = scmp.ne.s32.totalorder %s131, %s133
    %p137 = scmp.eq.s32.totalorder %s13, 0
    %p138 = por %p136, %p137
    %p139 = scmp.ne.s32.totalorder %s131, %s133
    %p140 = scmp.eq.s32.totalorder %s18, 1
    %p141 = por %p139, %p140
    %p142 = scmp.ne.s32.totalorder %s133, %s134
    %p143 = scmp.eq.s32.totalorder %s18, 0
    %p144 = por %p142, %p143
    %p145 = scmp.ne.s32.totalorder %s133, %s134
    %p146 = scmp.eq.s32.totalorder %s19, 1
    %p147 = por %p145, %p146
    %p149 = scmp.ne.s32.totalorder %s134, %s148
    %p150 = scmp.eq.s32.totalorder %s19, 0
    %p151 = por %p149, %p150
    %s153 = sadd.s32 %s152, 1
    %p156 = scmp.eq.s32.totalorder %s13, 1
    %p157 = scmp.ne.s32.totalorder %s152, %s154
    %p158 = scmp.eq.s32.totalorder %s13, 0
    %p159 = por %p157, %p158
    %p160 = scmp.ne.s32.totalorder %s152, %s154
    %p161 = scmp.eq.s32.totalorder %s18, 1
    %p162 = por %p160, %p161
    %p163 = scmp.ne.s32.totalorder %s154, %s155
    %p164 = scmp.eq.s32.totalorder %s18, 0
    %p165 = por %p163, %p164
    %p166 = scmp.ne.s32.totalorder %s154, %s155
    %p167 = scmp.eq.s32.totalorder %s19, 1
    %p168 = por %p166, %p167
    %p170 = scmp.ne.s32.totalorder %s155, %s169
    %p171 = scmp.eq.s32.totalorder %s19, 0
    %p172 = por %p170, %p171
    %s173 = ssub.s32 %s13, %s20
    %p174 = scmp.eq.s32.totalorder %s173, 0
    %s176 = sadd.s32 %s175, 1
    %s177 = scalar_select %p174, %s175, %s176
    %p180 = pneg %p174
    %p181 = scmp.eq.s32.totalorder %s13, 1
    %p182 = por %p180, %p181
    %p183 = scmp.ne.s32.totalorder %s175, %s178
    %p184 = scmp.eq.s32.totalorder %s13, 0
    %p185 = por %p183, %p184
    %p186 = scmp.ne.s32.totalorder %s175, %s178
    %p187 = scmp.eq.s32.totalorder %s18, 1
    %p188 = por %p186, %p187
    %p189 = scmp.ne.s32.totalorder %s178, %s179
    %p190 = scmp.eq.s32.totalorder %s18, 0
    %p191 = por %p189, %p190
    %p192 = scmp.ne.s32.totalorder %s178, %s179
    %p193 = scmp.eq.s32.totalorder %s19, 1
    %p194 = por %p192, %p193
    %p196 = scmp.ne.s32.totalorder %s179, %s195
    %p197 = scmp.eq.s32.totalorder %s19, 0
    %p198 = por %p196, %p197
    %p199 = scmp.le.s32.totalorder 1, %s13
    %p200 = scmp.lt.s32.totalorder %s13, 3
    %p201 = pnand %p199, %p200
    %p202 = pneg %p201
    // Predicated region
    $region9: #{basic_block_forward.1} parent=5 // pred_check
      _
    $region10: #{basic_block_forward.1} parent=5 // pred_check_branch
      %204 = sbr.rel (%p201) target = $region12
    $region11: #{basic_block_forward.1} parent=5 // pred_region
      %s205 = ssub.s32 %s13, 1
      // Predicated region
      $region13: #{basic_block_forward.1} parent=11 // pred_check
        %p206 = pneg %p60
      $region14: #{basic_block_forward.1} parent=11 // pred_check_branch
        %208 = sbr.rel (%p206) target = $region16
      $region15: #{basic_block_forward.1} parent=11 // pred_region
        _
      $region16: #{basic_block_forward.1} parent=11 // pred_fallthru
        _
      // Predicated region
      $region17: #{basic_block_forward.1} parent=11 // pred_check
        %p209 = pneg %p81
      $region18: #{basic_block_forward.1} parent=11 // pred_check_branch
        %211 = sbr.rel (%p209) target = $region20
      $region19: #{basic_block_forward.1} parent=11 // pred_region
        _
      $region20: #{basic_block_forward.1} parent=11 // pred_fallthru
        _
      // Predicated region
      $region21: #{basic_block_forward.1} parent=11 // pred_check
        %p212 = pneg %p102
      $region22: #{basic_block_forward.1} parent=11 // pred_check_branch
        %214 = sbr.rel (%p212) target = $region24
      $region23: #{basic_block_forward.1} parent=11 // pred_region
        _
      $region24: #{basic_block_forward.1} parent=11 // pred_fallthru
        _
      // Predicated region
      $region25: #{basic_block_forward.1} parent=11 // pred_check
        %p215 = pneg %p123
      $region26: #{basic_block_forward.1} parent=11 // pred_check_branch
        %217 = sbr.rel (%p215) target = $region28
      $region27: #{basic_block_forward.1} parent=11 // pred_region
        _
      $region28: #{basic_block_forward.1} parent=11 // pred_fallthru
        _
      // Predicated region
      $region29: #{basic_block_forward.1} parent=11 // pred_check
        %p218 = pneg %p144
      $region30: #{basic_block_forward.1} parent=11 // pred_check_branch
        %220 = sbr.rel (%p218) target = $region32
      $region31: #{basic_block_forward.1} parent=11 // pred_region
        _
      $region32: #{basic_block_forward.1} parent=11 // pred_fallthru
        _
      // Predicated region
      $region33: #{basic_block_forward.1} parent=11 // pred_check
        %p221 = pneg %p165
      $region34: #{basic_block_forward.1} parent=11 // pred_check_branch
        %223 = sbr.rel (%p221) target = $region36
      $region35: #{basic_block_forward.1} parent=11 // pred_region
        _
      $region36: #{basic_block_forward.1} parent=11 // pred_fallthru
        _
    $region12: #{basic_block_forward.1} parent=5 // pred_fallthru
      _
    %p224 = scmp.lt.s32.totalorder %s13, 2
    // Predicated region
    $region37: #{basic_block_forward.1} parent=5 // pred_check
      %p225 = pneg %p224
    $region38: #{basic_block_forward.1} parent=5 // pred_check_branch
      %227 = sbr.rel (%p225) target = $region40
    $region39: #{basic_block_forward.1} parent=5 // pred_region
      // Predicated region
      $region41: #{basic_block_forward.1} parent=39 // pred_check
        %p228 = pneg %p33
      $region42: #{basic_block_forward.1} parent=39 // pred_check_branch
        %230 = sbr.rel (%p228) target = $region44
      $region43: #{basic_block_forward.1} parent=39 // pred_region
        %p231 = scmp.lt.s32.totalorder %s13, 1
        %s232 = scalar_select %p231, %s13, 1
        %s233 = smul.addr %s232, 32
        %s234 = smul.addr %s233, 4
        %s235 = scalar_lea.vmem %s0, %s234
      $region44: #{basic_block_forward.1} parent=39 // pred_fallthru
        _
    $region40: #{basic_block_forward.1} parent=5 // pred_fallthru
      _
    %p236 = scmp.le.s32.totalorder 1, %s13
    %p237 = scmp.lt.s32.totalorder %s13, 3
    %p238 = pnand %p236, %p237
    %p239 = pneg %p238
    // Predicated region
    $region45: #{basic_block_forward.1} parent=5 // pred_check
      _
    $region46: #{basic_block_forward.1} parent=5 // pred_check_branch
      %241 = sbr.rel (%p238) target = $region48
    $region47: #{basic_block_forward.1} parent=5 // pred_region
      %s242 = ssub.s32 %s13, 1
      %p243 = scmp.lt.s32.totalorder %s18, 1
      %s244 = scalar_select %p243, %s18, 1
      %s245 = smul.addr %s244, 32
      %s246 = smul.addr %s245, 4
      %s247 = scalar_lea.vmem %s0, %s246
      %p248 = pneg %p39
      %p249 = pneg %p36
      %p250 = pneg %p60
      %p251 = pneg %p57
      %p252 = pneg %p81
      %p253 = pneg %p78
      %p254 = pneg %p102
      %p255 = pneg %p99
      %p256 = pneg %p123
      %p257 = pneg %p120
      %p258 = pneg %p144
      %p259 = pneg %p141
      %p260 = pneg %p165
      %p261 = pneg %p162
      %p262 = pneg %p191
      %p263 = pneg %p188
      %p264 = scmp.lt.s32.totalorder %s18, 1
      %s265 = scalar_select %p264, %s18, 1
      %s266 = smul.addr %s265, 32
      %s267 = smul.addr %s266, 4
      %s268 = scalar_lea.vmem %s7, %s267
      %p269 = scmp.lt.s32.totalorder %s18, 1
      %s270 = scalar_select %p269, %s18, 1
      %s271 = smul.addr %s270, 32
      %s272 = smul.addr %s271, 4
      %s273 = scalar_lea.vmem %s0, %s272
      %p274 = scmp.lt.s32.totalorder %s18, 1
      %s275 = scalar_select %p274, %s18, 1
      %s276 = smul.addr %s275, 32
      %s277 = smul.addr %s276, 4
      %s278 = scalar_lea.vmem %s7, %s277
      %280 = vst [vmem:[#allocation2] sm:$0xff] 0.0
      %281 = vst [vmem:[#allocation2 + $0x8] sm:$0xff] 0.0
      %282 = vst [vmem:[#allocation2 + $0x10] sm:$0x3] 0.0
      %283 = vst [vmem:[#allocation2 + $0x18] sm:$0xff] 0.0
      %284 = vst [vmem:[#allocation2 + $0x20] sm:$0xff] 0.0
      %285 = vst [vmem:[#allocation2 + $0x28] sm:$0x3] 0.0
      %286 = vst [vmem:[#allocation2 + $0x30] sm:$0xff] 0.0
      %287 = vst [vmem:[#allocation2 + $0x38] sm:$0xff] 0.0
      %288 = vst [vmem:[#allocation2 + $0x40] sm:$0x3] 0.0
      %289 = vst [vmem:[#allocation2 + $0x48] sm:$0xff] 0.0
      %290 = vst [vmem:[#allocation2 + $0x50] sm:$0xff] 0.0
      %291 = vst [vmem:[#allocation2 + $0x58] sm:$0x3] 0.0
      %292 = vst [vmem:[#allocation2 + $0x60] sm:$0xff] 0.0
      %293 = vst [vmem:[#allocation2 + $0x68] sm:$0xff] 0.0
      %294 = vst [vmem:[#allocation2 + $0x70] sm:$0x3] 0.0
      %295 = vst [vmem:[#allocation2 + $0x78] sm:$0xff] 0.0
      %296 = vst [vmem:[#allocation2 + $0x80] sm:$0xff] 0.0
      %297 = vst [vmem:[#allocation2 + $0x88] sm:$0x3] 0.0
      %298 = vst [vmem:[#allocation2 + $0x90] sm:$0xff] 0.0
      %299 = vst [vmem:[#allocation2 + $0x98] sm:$0xff] 0.0
      %300 = vst [vmem:[#allocation2 + $0xa0] sm:$0x3] 0.0
      %301 = vst [vmem:[#allocation2 + $0xa8] sm:$0xff] 0.0
      %302 = vst [vmem:[#allocation2 + $0xb0] sm:$0xff] 0.0
      %303 = vst [vmem:[#allocation2 + $0xb8] sm:$0x3] 0.0
      %304 = vst [vmem:[#allocation2 + $0xc0] sm:$0xff] 0.0
      %305 = vst [vmem:[#allocation2 + $0xc8] sm:$0xff] 0.0
      %306 = vst [vmem:[#allocation2 + $0xd0] sm:$0x3] 0.0
      %307 = vst [vmem:[#allocation2 + $0xd8] sm:$0xff] 0.0
      %308 = vst [vmem:[#allocation2 + $0xe0] sm:$0xff] 0.0
      %309 = vst [vmem:[#allocation2 + $0xe8] sm:$0x3] 0.0
      %310 = vst [vmem:[#allocation2 + $0xf0] sm:$0xff] 0.0
      %311 = vst [vmem:[#allocation2 + $0xf8] sm:$0xff] 0.0
      %312 = vst [vmem:[#allocation2 + $0x100] sm:$0x3] 0.0
      %313 = vst [vmem:[#allocation2 + $0x108] sm:$0xff] 0.0
      %314 = vst [vmem:[#allocation2 + $0x110] sm:$0xff] 0.0
      %315 = vst [vmem:[#allocation2 + $0x118] sm:$0x3] 0.0
      %316 = vst [vmem:[#allocation2 + $0x120] sm:$0xff] 0.0
      %317 = vst [vmem:[#allocation2 + $0x128] sm:$0xff] 0.0
      %318 = vst [vmem:[#allocation2 + $0x130] sm:$0x3] 0.0
      %319 = vst [vmem:[#allocation2 + $0x138] sm:$0xff] 0.0
      %320 = vst [vmem:[#allocation2 + $0x140] sm:$0xff] 0.0
      %321 = vst [vmem:[#allocation2 + $0x148] sm:$0x3] 0.0
      %322 = vst [vmem:[#allocation2 + $0x150] sm:$0xff] 0.0
      %323 = vst [vmem:[#allocation2 + $0x158] sm:$0xff] 0.0
      %324 = vst [vmem:[#allocation2 + $0x160] sm:$0x3] 0.0
      %325 = vst [vmem:[#allocation2 + $0x168] sm:$0xff] 0.0
      %326 = vst [vmem:[#allocation2 + $0x170] sm:$0xff] 0.0
      %327 = vst [vmem:[#allocation2 + $0x178] sm:$0x3] 0.0
      %328 = vst [vmem:[#allocation2 + $0x180] sm:$0xff] 0.0
      %329 = vst [vmem:[#allocation2 + $0x188] sm:$0xff] 0.0
      %330 = vst [vmem:[#allocation2 + $0x190] sm:$0x3] 0.0
      %331 = vst [vmem:[#allocation2 + $0x198] sm:$0xff] 0.0
      %332 = vst [vmem:[#allocation2 + $0x1a0] sm:$0xff] 0.0
      %333 = vst [vmem:[#allocation2 + $0x1a8] sm:$0x3] 0.0
      %v334 = vld [vmem:[%s273] sm:$0xf]
      %v335 = vld [vmem:[%s273 + $0x4] sm:$0xf]
      %v336 = vld [vmem:[%s273 + $0x8] sm:$0xf]
      %v337 = vld [vmem:[%s273 + $0xc] sm:$0xf]
      %v338 = vld [vmem:[%s273 + $0x10] sm:$0xf]
      %v339 = vld [vmem:[%s273 + $0x14] sm:$0xf]
      %v340 = vld [vmem:[%s273 + $0x18] sm:$0xf]
      %v341 = vld [vmem:[%s273 + $0x1c] sm:$0xf]
      %v342 = vld [vmem:[%s273 + $0x20] sm:$0xf]
      %v343 = vld [vmem:[%s273 + $0x24] sm:$0xf]
      %v344 = vld [vmem:[%s273 + $0x28] sm:$0xf]
      %v345 = vld [vmem:[%s273 + $0x2c] sm:$0xf]
      %v346 = vld [vmem:[%s273 + $0x30] sm:$0xf]
      %v347 = vld [vmem:[%s273 + $0x34] sm:$0xf]
      %v348 = vld [vmem:[%s273 + $0x38] sm:$0xf]
      %v349 = vld [vmem:[%s273 + $0x3c] sm:$0xf]
      %v350 = vld [vmem:[%s273 + $0x40] sm:$0xf]
      %v351 = vld [vmem:[%s273 + $0x44] sm:$0xf]
      %v352 = vld [vmem:[%s273 + $0x48] sm:$0xf]
      %v353 = vld [vmem:[%s273 + $0x4c] sm:$0xf]
      %v354 = vld [vmem:[%s273 + $0x50] sm:$0xf]
      %v355 = vld [vmem:[%s273 + $0x54] sm:$0xf]
      %v356 = vld [vmem:[%s273 + $0x58] sm:$0xf]
      %v357 = vld [vmem:[%s273 + $0x5c] sm:$0xf]
      %v358 = vld [vmem:[%s273 + $0x60] sm:$0xf]
      %v359 = vld [vmem:[%s273 + $0x64] sm:$0xf]
      %v360 = vld [vmem:[%s273 + $0x68] sm:$0xf]
      %v361 = vld [vmem:[%s273 + $0x6c] sm:$0xf]
      %v362 = vld [vmem:[%s273 + $0x70] sm:$0xf]
      %v363 = vld [vmem:[%s273 + $0x74] sm:$0xf]
      %v364 = vld [vmem:[%s273 + $0x78] sm:$0xf]
      %v365 = vld [vmem:[%s273 + $0x7c] sm:$0xf]
      %v366 = vunpack.c.l.bf16 %v334
      %v367 = vunpack.c.l.bf16 %v335
      %v368 = vunpack.c.l.bf16 %v336
      %v369 = vunpack.c.l.bf16 %v337
      %v370 = vunpack.c.l.bf16 %v338
      %v371 = vunpack.c.l.bf16 %v339
      %v372 = vunpack.c.l.bf16 %v340
      %v373 = vunpack.c.l.bf16 %v341
      %v374 = vunpack.c.l.bf16 %v342
      %v375 = vunpack.c.l.bf16 %v343
      %v376 = vunpack.c.l.bf16 %v344
      %v377 = vunpack.c.l.bf16 %v345
      %v378 = vunpack.c.l.bf16 %v346
      %v379 = vunpack.c.l.bf16 %v347
      %v380 = vunpack.c.l.bf16 %v348
      %v381 = vunpack.c.l.bf16 %v349
      %v382 = vunpack.c.l.bf16 %v350
      %v383 = vunpack.c.l.bf16 %v351
      %v384 = vunpack.c.l.bf16 %v352
      %v385 = vunpack.c.l.bf16 %v353
      %v386 = vunpack.c.l.bf16 %v354
      %v387 = vunpack.c.l.bf16 %v355
      %v388 = vunpack.c.l.bf16 %v356
      %v389 = vunpack.c.l.bf16 %v357
      %v390 = vunpack.c.l.bf16 %v358
      %v391 = vunpack.c.l.bf16 %v359
      %v392 = vunpack.c.l.bf16 %v360
      %v393 = vunpack.c.l.bf16 %v361
      %v394 = vunpack.c.l.bf16 %v362
      %v395 = vunpack.c.l.bf16 %v363
      %v396 = vunpack.c.l.bf16 %v364
      %v397 = vunpack.c.l.bf16 %v365
      %s398 = scalar_lea.vmem [#allocation2], 24
      %vm399 = vcmask 31744
      %400 = vst.msk [vmem:[%s398 + $0x1] sm:$0xff] %vm399, %v366
      %401 = vst.msk [vmem:[%s398 + $0x9] sm:$0xff] %vm399, %v367
      %402 = vst.msk [vmem:[%s398 + $0x19] sm:$0xff] %vm399, %v368
      %403 = vst.msk [vmem:[%s398 + $0x21] sm:$0xff] %vm399, %v369
      %404 = vst.msk [vmem:[%s398 + $0x31] sm:$0xff] %vm399, %v370
      %405 = vst.msk [vmem:[%s398 + $0x39] sm:$0xff] %vm399, %v371
      %406 = vst.msk [vmem:[%s398 + $0x49] sm:$0xff] %vm399, %v372
      %407 = vst.msk [vmem:[%s398 + $0x51] sm:$0xff] %vm399, %v373
      %408 = vst.msk [vmem:[%s398 + $0x61] sm:$0xff] %vm399, %v374
      %409 = vst.msk [vmem:[%s398 + $0x69] sm:$0xff] %vm399, %v375
      %410 = vst.msk [vmem:[%s398 + $0x79] sm:$0xff] %vm399, %v376
      %411 = vst.msk [vmem:[%s398 + $0x81] sm:$0xff] %vm399, %v377
      %412 = vst.msk [vmem:[%s398 + $0x91] sm:$0xff] %vm399, %v378
      %413 = vst.msk [vmem:[%s398 + $0x99] sm:$0xff] %vm399, %v379
      %414 = vst.msk [vmem:[%s398 + $0xa9] sm:$0xff] %vm399, %v380
      %415 = vst.msk [vmem:[%s398 + $0xb1] sm:$0xff] %vm399, %v381
      %416 = vst.msk [vmem:[%s398 + $0xc1] sm:$0xff] %vm399, %v382
      %417 = vst.msk [vmem:[%s398 + $0xc9] sm:$0xff] %vm399, %v383
      %418 = vst.msk [vmem:[%s398 + $0xd9] sm:$0xff] %vm399, %v384
      %419 = vst.msk [vmem:[%s398 + $0xe1] sm:$0xff] %vm399, %v385
      %420 = vst.msk [vmem:[%s398 + $0xf1] sm:$0xff] %vm399, %v386
      %421 = vst.msk [vmem:[%s398 + $0xf9] sm:$0xff] %vm399, %v387
      %422 = vst.msk [vmem:[%s398 + $0x109] sm:$0xff] %vm399, %v388
      %423 = vst.msk [vmem:[%s398 + $0x111] sm:$0xff] %vm399, %v389
      %424 = vst.msk [vmem:[%s398 + $0x121] sm:$0xff] %vm399, %v390
      %425 = vst.msk [vmem:[%s398 + $0x129] sm:$0xff] %vm399, %v391
      %426 = vst.msk [vmem:[%s398 + $0x139] sm:$0xff] %vm399, %v392
      %427 = vst.msk [vmem:[%s398 + $0x141] sm:$0xff] %vm399, %v393
      %428 = vst.msk [vmem:[%s398 + $0x151] sm:$0xff] %vm399, %v394
      %429 = vst.msk [vmem:[%s398 + $0x159] sm:$0xff] %vm399, %v395
      %430 = vst.msk [vmem:[%s398 + $0x169] sm:$0xff] %vm399, %v396
      %431 = vst.msk [vmem:[%s398 + $0x171] sm:$0xff] %vm399, %v397
      %v432 = vld [vmem:[#allocation2] sm:$0xff]
      %v433 = vld [vmem:[#allocation2 + $0x8] sm:$0xff]
      %v434 = vld [vmem:[#allocation2 + $0x18] sm:$0xff]
      %v435 = vld [vmem:[#allocation2 + $0x20] sm:$0xff]
      %v436 = vld [vmem:[#allocation2 + $0x30] sm:$0xff]
      %v437 = vld [vmem:[#allocation2 + $0x38] sm:$0xff]
      %v438 = vld [vmem:[#allocation2 + $0x48] sm:$0xff]
      %v439 = vld [vmem:[#allocation2 + $0x50] sm:$0xff]
      %v440 = vld [vmem:[#allocation2 + $0x60] sm:$0xff]
      %v441 = vld [vmem:[#allocation2 + $0x68] sm:$0xff]
      %v442 = vld [vmem:[#allocation2 + $0x78] sm:$0xff]
      %v443 = vld [vmem:[#allocation2 + $0x80] sm:$0xff]
      %v444 = vld [vmem:[#allocation2 + $0x90] sm:$0xff]
      %v445 = vld [vmem:[#allocation2 + $0x98] sm:$0xff]
      %v446 = vld [vmem:[#allocation2 + $0xa8] sm:$0xff]
      %v447 = vld [vmem:[#allocation2 + $0xb0] sm:$0xff]
      %v448 = vld [vmem:[#allocation2 + $0xc0] sm:$0xff]
      %v449 = vld [vmem:[#allocation2 + $0xc8] sm:$0xff]
      %v450 = vld [vmem:[#allocation2 + $0xd8] sm:$0xff]
      %v451 = vld [vmem:[#allocation2 + $0xe0] sm:$0xff]
      %v452 = vld [vmem:[#allocation2 + $0xf0] sm:$0xff]
      %v453 = vld [vmem:[#allocation2 + $0xf8] sm:$0xff]
      %v454 = vld [vmem:[#allocation2 + $0x108] sm:$0xff]
      %v455 = vld [vmem:[#allocation2 + $0x110] sm:$0xff]
      %v456 = vld [vmem:[#allocation2 + $0x120] sm:$0xff]
      %v457 = vld [vmem:[#allocation2 + $0x128] sm:$0xff]
      %v458 = vld [vmem:[#allocation2 + $0x138] sm:$0xff]
      %v459 = vld [vmem:[#allocation2 + $0x140] sm:$0xff]
      %v460 = vld [vmem:[#allocation2 + $0x150] sm:$0xff]
      %v461 = vld [vmem:[#allocation2 + $0x158] sm:$0xff]
      %v462 = vld [vmem:[#allocation2 + $0x168] sm:$0xff]
      %v463 = vld [vmem:[#allocation2 + $0x170] sm:$0xff]
      %v464 = vpack.c.bf16 %v433, %v432
      %v465 = vpack.c.bf16 %v435, %v434
      %v466 = vpack.c.bf16 %v437, %v436
      %v467 = vpack.c.bf16 %v439, %v438
      %v468 = vpack.c.bf16 %v441, %v440
      %v469 = vpack.c.bf16 %v443, %v442
      %v470 = vpack.c.bf16 %v445, %v444
      %v471 = vpack.c.bf16 %v447, %v446
      %v472 = vpack.c.bf16 %v449, %v448
      %v473 = vpack.c.bf16 %v451, %v450
      %v474 = vpack.c.bf16 %v453, %v452
      %v475 = vpack.c.bf16 %v455, %v454
      %v476 = vpack.c.bf16 %v457, %v456
      %v477 = vpack.c.bf16 %v459, %v458
      %v478 = vpack.c.bf16 %v461, %v460
      %v479 = vpack.c.bf16 %v463, %v462
      %v496 = vunpack.c.l.b16 %v464
      %v497 = vunpack.c.h.b16 %v464
      %v498 = vunpack.c.l.b16 %v465
      %v499 = vunpack.c.h.b16 %v465
      %v500 = vunpack.c.l.b16 %v466
      %v501 = vunpack.c.h.b16 %v466
      %v502 = vunpack.c.l.b16 %v467
      %v503 = vunpack.c.h.b16 %v467
      %v504 = vunpack.c.l.b16 %v468
      %v505 = vunpack.c.h.b16 %v468
      %v506 = vunpack.c.l.b16 %v469
      %v507 = vunpack.c.h.b16 %v469
      %v508 = vunpack.c.l.b16 %v470
      %v509 = vunpack.c.h.b16 %v470
      %v510 = vunpack.c.l.b16 %v471
      %v511 = vunpack.c.h.b16 %v471
      %v512 = vunpack.c.l.b16 %v472
      %v513 = vunpack.c.h.b16 %v472
      %v514 = vunpack.c.l.b16 %v473
      %v515 = vunpack.c.h.b16 %v473
      %v516 = vunpack.c.l.b16 %v474
      %v517 = vunpack.c.h.b16 %v474
      %v518 = vunpack.c.l.b16 %v475
      %v519 = vunpack.c.h.b16 %v475
      %v520 = vunpack.c.l.b16 %v476
      %v521 = vunpack.c.h.b16 %v476
      %v522 = vunpack.c.l.b16 %v477
      %v523 = vunpack.c.h.b16 %v477
      %v524 = vunpack.c.l.b16 %v478
      %v525 = vunpack.c.h.b16 %v478
      %v526 = vunpack.c.l.b16 %v479
      %v527 = vunpack.c.h.b16 %v479
      %v528 = vpack.c.b16 %v496, %v496
      %v529 = vpack.c.b16 %v497, %v497
      %v530 = vpack.c.b16 %v498, %v498
      %v531 = vpack.c.b16 %v499, %v499
      %v532 = vpack.c.b16 %v500, %v500
      %v533 = vpack.c.b16 %v501, %v501
      %v534 = vpack.c.b16 %v502, %v502
      %v535 = vpack.c.b16 %v503, %v503
      %v536 = vpack.c.b16 %v504, %v504
      %v537 = vpack.c.b16 %v505, %v505
      %v538 = vpack.c.b16 %v506, %v506
      %v539 = vpack.c.b16 %v507, %v507
      %v540 = vpack.c.b16 %v508, %v508
      %v541 = vpack.c.b16 %v509, %v509
      %v542 = vpack.c.b16 %v510, %v510
      %v543 = vpack.c.b16 %v511, %v511
      %v544 = vpack.c.b16 %v512, %v512
      %v545 = vpack.c.b16 %v513, %v513
      %v546 = vpack.c.b16 %v514, %v514
      %v547 = vpack.c.b16 %v515, %v515
      %v548 = vpack.c.b16 %v516, %v516
      %v549 = vpack.c.b16 %v517, %v517
      %v550 = vpack.c.b16 %v518, %v518
      %v551 = vpack.c.b16 %v519, %v519
      %v552 = vpack.c.b16 %v520, %v520
      %v553 = vpack.c.b16 %v521, %v521
      %v554 = vpack.c.b16 %v522, %v522
      %v555 = vpack.c.b16 %v523, %v523
      %v556 = vpack.c.b16 %v524, %v524
      %v557 = vpack.c.b16 %v525, %v525
      %v558 = vpack.c.b16 %v526, %v526
      %v559 = vpack.c.b16 %v527, %v527
      %592 = vst [vmem:[#allocation3] sm:$0xf] %v528
      %593 = vst [vmem:[#allocation3 + $0x24] sm:$0xf] %v529
      %594 = vst [vmem:[#allocation3 + $0x48] sm:$0xf] %v530
      %595 = vst [vmem:[#allocation3 + $0x6c] sm:$0xf] %v531
      %596 = vst [vmem:[#allocation3 + $0x90] sm:$0xf] %v532
      %597 = vst [vmem:[#allocation3 + $0xb4] sm:$0xf] %v533
      %598 = vst [vmem:[#allocation3 + $0xd8] sm:$0xf] %v534
      %599 = vst [vmem:[#allocation3 + $0xfc] sm:$0xf] %v535
      %600 = vst [vmem:[#allocation3 + $0x120] sm:$0xf] %v536
      %601 = vst [vmem:[#allocation3 + $0x144] sm:$0xf] %v537
      %602 = vst [vmem:[#allocation3 + $0x168] sm:$0xf] %v538
      %603 = vst [vmem:[#allocation3 + $0x18c] sm:$0xf] %v539
      %604 = vst [vmem:[#allocation3 + $0x1b0] sm:$0xf] %v540
      %605 = vst [vmem:[#allocation3 + $0x1d4] sm:$0xf] %v541
      %606 = vst [vmem:[#allocation3 + $0x1f8] sm:$0xf] %v542
      %607 = vst [vmem:[#allocation3 + $0x21c] sm:$0xf] %v543
      %608 = vst [vmem:[#allocation3 + $0x240] sm:$0xf] %v544
      %609 = vst [vmem:[#allocation3 + $0x264] sm:$0xf] %v545
      %610 = vst [vmem:[#allocation3 + $0x288] sm:$0xf] %v546
      %611 = vst [vmem:[#allocation3 + $0x2ac] sm:$0xf] %v547
      %612 = vst [vmem:[#allocation3 + $0x2d0] sm:$0xf] %v548
      %613 = vst [vmem:[#allocation3 + $0x2f4] sm:$0xf] %v549
      %614 = vst [vmem:[#allocation3 + $0x318] sm:$0xf] %v550
      %615 = vst [vmem:[#allocation3 + $0x33c] sm:$0xf] %v551
      %616 = vst [vmem:[#allocation3 + $0x360] sm:$0xf] %v552
      %617 = vst [vmem:[#allocation3 + $0x384] sm:$0xf] %v553
      %618 = vst [vmem:[#allocation3 + $0x3a8] sm:$0xf] %v554
      %619 = vst [vmem:[#allocation3 + $0x3cc] sm:$0xf] %v555
      %620 = vst [vmem:[#allocation3 + $0x3f0] sm:$0xf] %v556
      %621 = vst [vmem:[#allocation3 + $0x414] sm:$0xf] %v557
      %622 = vst [vmem:[#allocation3 + $0x438] sm:$0xf] %v558
      %623 = vst [vmem:[#allocation3 + $0x45c] sm:$0xf] %v559
      %v624 = vld [vmem:[#allocation2 + $0x1] sm:$0xff]
      %v625 = vld [vmem:[#allocation2 + $0x9] sm:$0xff]
      %v626 = vld [vmem:[#allocation2 + $0x19] sm:$0xff]
      %v627 = vld [vmem:[#allocation2 + $0x21] sm:$0xff]
      %v628 = vld [vmem:[#allocation2 + $0x31] sm:$0xff]
      %v629 = vld [vmem:[#allocation2 + $0x39] sm:$0xff]
      %v630 = vld [vmem:[#allocation2 + $0x49] sm:$0xff]
      %v631 = vld [vmem:[#allocation2 + $0x51] sm:$0xff]
      %v632 = vld [vmem:[#allocation2 + $0x61] sm:$0xff]
      %v633 = vld [vmem:[#allocation2 + $0x69] sm:$0xff]
      %v634 = vld [vmem:[#allocation2 + $0x79] sm:$0xff]
      %v635 = vld [vmem:[#allocation2 + $0x81] sm:$0xff]
      %v636 = vld [vmem:[#allocation2 + $0x91] sm:$0xff]
      %v637 = vld [vmem:[#allocation2 + $0x99] sm:$0xff]
      %v638 = vld [vmem:[#allocation2 + $0xa9] sm:$0xff]
      %v639 = vld [vmem:[#allocation2 + $0xb1] sm:$0xff]
      %v640 = vld [vmem:[#allocation2 + $0xc1] sm:$0xff]
      %v641 = vld [vmem:[#allocation2 + $0xc9] sm:$0xff]
      %v642 = vld [vmem:[#allocation2 + $0xd9] sm:$0xff]
      %v643 = vld [vmem:[#allocation2 + $0xe1] sm:$0xff]
      %v644 = vld [vmem:[#allocation2 + $0xf1] sm:$0xff]
      %v645 = vld [vmem:[#allocation2 + $0xf9] sm:$0xff]
      %v646 = vld [vmem:[#allocation2 + $0x109] sm:$0xff]
      %v647 = vld [vmem:[#allocation2 + $0x111] sm:$0xff]
      %v648 = vld [vmem:[#allocation2 + $0x121] sm:$0xff]
      %v649 = vld [vmem:[#allocation2 + $0x129] sm:$0xff]
      %v650 = vld [vmem:[#allocation2 + $0x139] sm:$0xff]
      %v651 = vld [vmem:[#allocation2 + $0x141] sm:$0xff]
      %v652 = vld [vmem:[#allocation2 + $0x151] sm:$0xff]
      %v653 = vld [vmem:[#allocation2 + $0x159] sm:$0xff]
      %v654 = vld [vmem:[#allocation2 + $0x169] sm:$0xff]
      %v655 = vld [vmem:[#allocation2 + $0x171] sm:$0xff]
      %v656 = vpack.c.bf16 %v625, %v624
      %v657 = vpack.c.bf16 %v627, %v626
      %v658 = vpack.c.bf16 %v629, %v628
      %v659 = vpack.c.bf16 %v631, %v630
      %v660 = vpack.c.bf16 %v633, %v632
      %v661 = vpack.c.bf16 %v635, %v634
      %v662 = vpack.c.bf16 %v637, %v636
      %v663 = vpack.c.bf16 %v639, %v638
      %v664 = vpack.c.bf16 %v641, %v640
      %v665 = vpack.c.bf16 %v643, %v642
      %v666 = vpack.c.bf16 %v645, %v644
      %v667 = vpack.c.bf16 %v647, %v646
      %v668 = vpack.c.bf16 %v649, %v648
      %v669 = vpack.c.bf16 %v651, %v650
      %v670 = vpack.c.bf16 %v653, %v652
      %v671 = vpack.c.bf16 %v655, %v654
      %v688 = vunpack.c.l.b16 %v656
      %v689 = vunpack.c.h.b16 %v656
      %v690 = vunpack.c.l.b16 %v657
      %v691 = vunpack.c.h.b16 %v657
      %v692 = vunpack.c.l.b16 %v658
      %v693 = vunpack.c.h.b16 %v658
      %v694 = vunpack.c.l.b16 %v659
      %v695 = vunpack.c.h.b16 %v659
      %v696 = vunpack.c.l.b16 %v660
      %v697 = vunpack.c.h.b16 %v660
      %v698 = vunpack.c.l.b16 %v661
      %v699 = vunpack.c.h.b16 %v661
      %v700 = vunpack.c.l.b16 %v662
      %v701 = vunpack.c.h.b16 %v662
      %v702 = vunpack.c.l.b16 %v663
      %v703 = vunpack.c.h.b16 %v663
      %v704 = vunpack.c.l.b16 %v664
      %v705 = vunpack.c.h.b16 %v664
      %v706 = vunpack.c.l.b16 %v665
      %v707 = vunpack.c.h.b16 %v665
      %v708 = vunpack.c.l.b16 %v666
      %v709 = vunpack.c.h.b16 %v666
      %v710 = vunpack.c.l.b16 %v667
      %v711 = vunpack.c.h.b16 %v667
      %v712 = vunpack.c.l.b16 %v668
      %v713 = vunpack.c.h.b16 %v668
      %v714 = vunpack.c.l.b16 %v669
      %v715 = vunpack.c.h.b16 %v669
      %v716 = vunpack.c.l.b16 %v670
      %v717 = vunpack.c.h.b16 %v670
      %v718 = vunpack.c.l.b16 %v671
      %v719 = vunpack.c.h.b16 %v671
      %v720 = vpack.c.b16 %v688, %v688
      %v721 = vpack.c.b16 %v689, %v689
      %v722 = vpack.c.b16 %v690, %v690
      %v723 = vpack.c.b16 %v691, %v691
      %v724 = vpack.c.b16 %v692, %v692
      %v725 = vpack.c.b16 %v693, %v693
      %v726 = vpack.c.b16 %v694, %v694
      %v727 = vpack.c.b16 %v695, %v695
      %v728 = vpack.c.b16 %v696, %v696
      %v729 = vpack.c.b16 %v697, %v697
      %v730 = vpack.c.b16 %v698, %v698
      %v731 = vpack.c.b16 %v699, %v699
      %v732 = vpack.c.b16 %v700, %v700
      %v733 = vpack.c.b16 %v701, %v701
      %v734 = vpack.c.b16 %v702, %v702
      %v735 = vpack.c.b16 %v703, %v703
      %v736 = vpack.c.b16 %v704, %v704
      %v737 = vpack.c.b16 %v705, %v705
      %v738 = vpack.c.b16 %v706, %v706
      %v739 = vpack.c.b16 %v707, %v707
      %v740 = vpack.c.b16 %v708, %v708
      %v741 = vpack.c.b16 %v709, %v709
      %v742 = vpack.c.b16 %v710, %v710
      %v743 = vpack.c.b16 %v711, %v711
      %v744 = vpack.c.b16 %v712, %v712
      %v745 = vpack.c.b16 %v713, %v713
      %v746 = vpack.c.b16 %v714, %v714
      %v747 = vpack.c.b16 %v715, %v715
      %v748 = vpack.c.b16 %v716, %v716
      %v749 = vpack.c.b16 %v717, %v717
      %v750 = vpack.c.b16 %v718, %v718
      %v751 = vpack.c.b16 %v719, %v719
      %784 = vst [vmem:[#allocation3 + $0x4] sm:$0xf] %v720
      %785 = vst [vmem:[#allocation3 + $0x28] sm:$0xf] %v721
      %786 = vst [vmem:[#allocation3 + $0x4c] sm:$0xf] %v722
      %787 = vst [vmem:[#allocation3 + $0x70] sm:$0xf] %v723
      %788 = vst [vmem:[#allocation3 + $0x94] sm:$0xf] %v724
      %789 = vst [vmem:[#allocation3 + $0xb8] sm:$0xf] %v725
      %790 = vst [vmem:[#allocation3 + $0xdc] sm:$0xf] %v726
      %791 = vst [vmem:[#allocation3 + $0x100] sm:$0xf] %v727
      %792 = vst [vmem:[#allocation3 + $0x124] sm:$0xf] %v728
      %793 = vst [vmem:[#allocation3 + $0x148] sm:$0xf] %v729
      %794 = vst [vmem:[#allocation3 + $0x16c] sm:$0xf] %v730
      %795 = vst [vmem:[#allocation3 + $0x190] sm:$0xf] %v731
      %796 = vst [vmem:[#allocation3 + $0x1b4] sm:$0xf] %v732
      %797 = vst [vmem:[#allocation3 + $0x1d8] sm:$0xf] %v733
      %798 = vst [vmem:[#allocation3 + $0x1fc] sm:$0xf] %v734
      %799 = vst [vmem:[#allocation3 + $0x220] sm:$0xf] %v735
      %800 = vst [vmem:[#allocation3 + $0x244] sm:$0xf] %v736
      %801 = vst [vmem:[#allocation3 + $0x268] sm:$0xf] %v737
      %802 = vst [vmem:[#allocation3 + $0x28c] sm:$0xf] %v738
      %803 = vst [vmem:[#allocation3 + $0x2b0] sm:$0xf] %v739
      %804 = vst [vmem:[#allocation3 + $0x2d4] sm:$0xf] %v740
      %805 = vst [vmem:[#allocation3 + $0x2f8] sm:$0xf] %v741
      %806 = vst [vmem:[#allocation3 + $0x31c] sm:$0xf] %v742
      %807 = vst [vmem:[#allocation3 + $0x340] sm:$0xf] %v743
      %808 = vst [vmem:[#allocation3 + $0x364] sm:$0xf] %v744
      %809 = vst [vmem:[#allocation3 + $0x388] sm:$0xf] %v745
      %810 = vst [vmem:[#allocation3 + $0x3ac] sm:$0xf] %v746
      %811 = vst [vmem:[#allocation3 + $0x3d0] sm:$0xf] %v747
      %812 = vst [vmem:[#allocation3 + $0x3f4] sm:$0xf] %v748
      %813 = vst [vmem:[#allocation3 + $0x418] sm:$0xf] %v749
      %814 = vst [vmem:[#allocation3 + $0x43c] sm:$0xf] %v750
      %815 = vst [vmem:[#allocation3 + $0x460] sm:$0xf] %v751
      %v816 = vld [vmem:[#allocation2 + $0x2] sm:$0xff]
      %v817 = vld [vmem:[#allocation2 + $0xa] sm:$0xff]
      %v818 = vld [vmem:[#allocation2 + $0x1a] sm:$0xff]
      %v819 = vld [vmem:[#allocation2 + $0x22] sm:$0xff]
      %v820 = vld [vmem:[#allocation2 + $0x32] sm:$0xff]
      %v821 = vld [vmem:[#allocation2 + $0x3a] sm:$0xff]
      %v822 = vld [vmem:[#allocation2 + $0x4a] sm:$0xff]
      %v823 = vld [vmem:[#allocation2 + $0x52] sm:$0xff]
      %v824 = vld [vmem:[#allocation2 + $0x62] sm:$0xff]
      %v825 = vld [vmem:[#allocation2 + $0x6a] sm:$0xff]
      %v826 = vld [vmem:[#allocation2 + $0x7a] sm:$0xff]
      %v827 = vld [vmem:[#allocation2 + $0x82] sm:$0xff]
      %v828 = vld [vmem:[#allocation2 + $0x92] sm:$0xff]
      %v829 = vld [vmem:[#allocation2 + $0x9a] sm:$0xff]
      %v830 = vld [vmem:[#allocation2 + $0xaa] sm:$0xff]
      %v831 = vld [vmem:[#allocation2 + $0xb2] sm:$0xff]
      %v832 = vld [vmem:[#allocation2 + $0xc2] sm:$0xff]
      %v833 = vld [vmem:[#allocation2 + $0xca] sm:$0xff]
      %v834 = vld [vmem:[#allocation2 + $0xda] sm:$0xff]
      %v835 = vld [vmem:[#allocation2 + $0xe2] sm:$0xff]
      %v836 = vld [vmem:[#allocation2 + $0xf2] sm:$0xff]
      %v837 = vld [vmem:[#allocation2 + $0xfa] sm:$0xff]
      %v838 = vld [vmem:[#allocation2 + $0x10a] sm:$0xff]
      %v839 = vld [vmem:[#allocation2 + $0x112] sm:$0xff]
      %v840 = vld [vmem:[#allocation2 + $0x122] sm:$0xff]
      %v841 = vld [vmem:[#allocation2 + $0x12a] sm:$0xff]
      %v842 = vld [vmem:[#allocation2 + $0x13a] sm:$0xff]
      %v843 = vld [vmem:[#allocation2 + $0x142] sm:$0xff]
      %v844 = vld [vmem:[#allocation2 + $0x152] sm:$0xff]
      %v845 = vld [vmem:[#allocation2 + $0x15a] sm:$0xff]
      %v846 = vld [vmem:[#allocation2 + $0x16a] sm:$0xff]
      %v847 = vld [vmem:[#allocation2 + $0x172] sm:$0xff]
      %v848 = vpack.c.bf16 %v817, %v816
      %v849 = vpack.c.bf16 %v819, %v818
      %v850 = vpack.c.bf16 %v821, %v820
      %v851 = vpack.c.bf16 %v823, %v822
      %v852 = vpack.c.bf16 %v825, %v824
      %v853 = vpack.c.bf16 %v827, %v826
      %v854 = vpack.c.bf16 %v829, %v828
      %v855 = vpack.c.bf16 %v831, %v830
      %v856 = vpack.c.bf16 %v833, %v832
      %v857 = vpack.c.bf16 %v835, %v834
      %v858 = vpack.c.bf16 %v837, %v836
      %v859 = vpack.c.bf16 %v839, %v838
      %v860 = vpack.c.bf16 %v841, %v840
      %v861 = vpack.c.bf16 %v843, %v842
      %v862 = vpack.c.bf16 %v845, %v844
      %v863 = vpack.c.bf16 %v847, %v846
      %v880 = vunpack.c.l.b16 %v848
      %v881 = vunpack.c.h.b16 %v848
      %v882 = vunpack.c.l.b16 %v849
      %v883 = vunpack.c.h.b16 %v849
      %v884 = vunpack.c.l.b16 %v850
      %v885 = vunpack.c.h.b16 %v850
      %v886 = vunpack.c.l.b16 %v851
      %v887 = vunpack.c.h.b16 %v851
      %v888 = vunpack.c.l.b16 %v852
      %v889 = vunpack.c.h.b16 %v852
      %v890 = vunpack.c.l.b16 %v853
      %v891 = vunpack.c.h.b16 %v853
      %v892 = vunpack.c.l.b16 %v854
      %v893 = vunpack.c.h.b16 %v854
      %v894 = vunpack.c.l.b16 %v855
      %v895 = vunpack.c.h.b16 %v855
      %v896 = vunpack.c.l.b16 %v856
      %v897 = vunpack.c.h.b16 %v856
      %v898 = vunpack.c.l.b16 %v857
      %v899 = vunpack.c.h.b16 %v857
      %v900 = vunpack.c.l.b16 %v858
      %v901 = vunpack.c.h.b16 %v858
      %v902 = vunpack.c.l.b16 %v859
      %v903 = vunpack.c.h.b16 %v859
      %v904 = vunpack.c.l.b16 %v860
      %v905 = vunpack.c.h.b16 %v860
      %v906 = vunpack.c.l.b16 %v861
      %v907 = vunpack.c.h.b16 %v861
      %v908 = vunpack.c.l.b16 %v862
      %v909 = vunpack.c.h.b16 %v862
      %v910 = vunpack.c.l.b16 %v863
      %v911 = vunpack.c.h.b16 %v863
      %v912 = vpack.c.b16 %v880, %v880
      %v913 = vpack.c.b16 %v881, %v881
      %v914 = vpack.c.b16 %v882, %v882
      %v915 = vpack.c.b16 %v883, %v883
      %v916 = vpack.c.b16 %v884, %v884
      %v917 = vpack.c.b16 %v885, %v885
      %v918 = vpack.c.b16 %v886, %v886
      %v919 = vpack.c.b16 %v887, %v887
      %v920 = vpack.c.b16 %v888, %v888
      %v921 = vpack.c.b16 %v889, %v889
      %v922 = vpack.c.b16 %v890, %v890
      %v923 = vpack.c.b16 %v891, %v891
      %v924 = vpack.c.b16 %v892, %v892
      %v925 = vpack.c.b16 %v893, %v893
      %v926 = vpack.c.b16 %v894, %v894
      %v927 = vpack.c.b16 %v895, %v895
      %v928 = vpack.c.b16 %v896, %v896
      %v929 = vpack.c.b16 %v897, %v897
      %v930 = vpack.c.b16 %v898, %v898
      %v931 = vpack.c.b16 %v899, %v899
      %v932 = vpack.c.b16 %v900, %v900
      %v933 = vpack.c.b16 %v901, %v901
      %v934 = vpack.c.b16 %v902, %v902
      %v935 = vpack.c.b16 %v903, %v903
      %v936 = vpack.c.b16 %v904, %v904
      %v937 = vpack.c.b16 %v905, %v905
      %v938 = vpack.c.b16 %v906, %v906
      %v939 = vpack.c.b16 %v907, %v907
      %v940 = vpack.c.b16 %v908, %v908
      %v941 = vpack.c.b16 %v909, %v909
      %v942 = vpack.c.b16 %v910, %v910
      %v943 = vpack.c.b16 %v911, %v911
      %976 = vst [vmem:[#allocation3 + $0x8] sm:$0xf] %v912
      %977 = vst [vmem:[#allocation3 + $0x2c] sm:$0xf] %v913
      %978 = vst [vmem:[#allocation3 + $0x50] sm:$0xf] %v914
      %979 = vst [vmem:[#allocation3 + $0x74] sm:$0xf] %v915
      %980 = vst [vmem:[#allocation3 + $0x98] sm:$0xf] %v916
      %981 = vst [vmem:[#allocation3 + $0xbc] sm:$0xf] %v917
      %982 = vst [vmem:[#allocation3 + $0xe0] sm:$0xf] %v918
      %983 = vst [vmem:[#allocation3 + $0x104] sm:$0xf] %v919
      %984 = vst [vmem:[#allocation3 + $0x128] sm:$0xf] %v920
      %985 = vst [vmem:[#allocation3 + $0x14c] sm:$0xf] %v921
      %986 = vst [vmem:[#allocation3 + $0x170] sm:$0xf] %v922
      %987 = vst [vmem:[#allocation3 + $0x194] sm:$0xf] %v923
      %988 = vst [vmem:[#allocation3 + $0x1b8] sm:$0xf] %v924
      %989 = vst [vmem:[#allocation3 + $0x1dc] sm:$0xf] %v925
      %990 = vst [vmem:[#allocation3 + $0x200] sm:$0xf] %v926
      %991 = vst [vmem:[#allocation3 + $0x224] sm:$0xf] %v927
      %992 = vst [vmem:[#allocation3 + $0x248] sm:$0xf] %v928
      %993 = vst [vmem:[#allocation3 + $0x26c] sm:$0xf] %v929
      %994 = vst [vmem:[#allocation3 + $0x290] sm:$0xf] %v930
      %995 = vst [vmem:[#allocation3 + $0x2b4] sm:$0xf] %v931
      %996 = vst [vmem:[#allocation3 + $0x2d8] sm:$0xf] %v932
      %997 = vst [vmem:[#allocation3 + $0x2fc] sm:$0xf] %v933
      %998 = vst [vmem:[#allocation3 + $0x320] sm:$0xf] %v934
      %999 = vst [vmem:[#allocation3 + $0x344] sm:$0xf] %v935
      %1000 = vst [vmem:[#allocation3 + $0x368] sm:$0xf] %v936
      %1001 = vst [vmem:[#allocation3 + $0x38c] sm:$0xf] %v937
      %1002 = vst [vmem:[#allocation3 + $0x3b0] sm:$0xf] %v938
      %1003 = vst [vmem:[#allocation3 + $0x3d4] sm:$0xf] %v939
      %1004 = vst [vmem:[#allocation3 + $0x3f8] sm:$0xf] %v940
      %1005 = vst [vmem:[#allocation3 + $0x41c] sm:$0xf] %v941
      %1006 = vst [vmem:[#allocation3 + $0x440] sm:$0xf] %v942
      %1007 = vst [vmem:[#allocation3 + $0x464] sm:$0xf] %v943
      %v1008 = vld [vmem:[%s398] sm:$0xff]
      %v1009 = vld [vmem:[%s398 + $0x8] sm:$0xff]
      %v1010 = vld [vmem:[%s398 + $0x18] sm:$0xff]
      %v1011 = vld [vmem:[%s398 + $0x20] sm:$0xff]
      %v1012 = vld [vmem:[%s398 + $0x30] sm:$0xff]
      %v1013 = vld [vmem:[%s398 + $0x38] sm:$0xff]
      %v1014 = vld [vmem:[%s398 + $0x48] sm:$0xff]
      %v1015 = vld [vmem:[%s398 + $0x50] sm:$0xff]
      %v1016 = vld [vmem:[%s398 + $0x60] sm:$0xff]
      %v1017 = vld [vmem:[%s398 + $0x68] sm:$0xff]
      %v1018 = vld [vmem:[%s398 + $0x78] sm:$0xff]
      %v1019 = vld [vmem:[%s398 + $0x80] sm:$0xff]
      %v1020 = vld [vmem:[%s398 + $0x90] sm:$0xff]
      %v1021 = vld [vmem:[%s398 + $0x98] sm:$0xff]
      %v1022 = vld [vmem:[%s398 + $0xa8] sm:$0xff]
      %v1023 = vld [vmem:[%s398 + $0xb0] sm:$0xff]
      %v1024 = vld [vmem:[%s398 + $0xc0] sm:$0xff]
      %v1025 = vld [vmem:[%s398 + $0xc8] sm:$0xff]
      %v1026 = vld [vmem:[%s398 + $0xd8] sm:$0xff]
      %v1027 = vld [vmem:[%s398 + $0xe0] sm:$0xff]
      %v1028 = vld [vmem:[%s398 + $0xf0] sm:$0xff]
      %v1029 = vld [vmem:[%s398 + $0xf8] sm:$0xff]
      %v1030 = vld [vmem:[%s398 + $0x108] sm:$0xff]
      %v1031 = vld [vmem:[%s398 + $0x110] sm:$0xff]
      %v1032 = vld [vmem:[%s398 + $0x120] sm:$0xff]
      %v1033 = vld [vmem:[%s398 + $0x128] sm:$0xff]
      %v1034 = vld [vmem:[%s398 + $0x138] sm:$0xff]
      %v1035 = vld [vmem:[%s398 + $0x140] sm:$0xff]
      %v1036 = vld [vmem:[%s398 + $0x150] sm:$0xff]
      %v1037 = vld [vmem:[%s398 + $0x158] sm:$0xff]
      %v1038 = vld [vmem:[%s398 + $0x168] sm:$0xff]
      %v1039 = vld [vmem:[%s398 + $0x170] sm:$0xff]
      %v1040 = vpack.c.bf16 %v1009, %v1008
      %v1041 = vpack.c.bf16 %v1011, %v1010
      %v1042 = vpack.c.bf16 %v1013, %v1012
      %v1043 = vpack.c.bf16 %v1015, %v1014
      %v1044 = vpack.c.bf16 %v1017, %v1016
      %v1045 = vpack.c.bf16 %v1019, %v1018
      %v1046 = vpack.c.bf16 %v1021, %v1020
      %v1047 = vpack.c.bf16 %v1023, %v1022
      %v1048 = vpack.c.bf16 %v1025, %v1024
      %v1049 = vpack.c.bf16 %v1027, %v1026
      %v1050 = vpack.c.bf16 %v1029, %v1028
      %v1051 = vpack.c.bf16 %v1031, %v1030
      %v1052 = vpack.c.bf16 %v1033, %v1032
      %v1053 = vpack.c.bf16 %v1035, %v1034
      %v1054 = vpack.c.bf16 %v1037, %v1036
      %v1055 = vpack.c.bf16 %v1039, %v1038
      %v1072 = vunpack.c.l.b16 %v1040
      %v1073 = vunpack.c.h.b16 %v1040
      %v1074 = vunpack.c.l.b16 %v1041
      %v1075 = vunpack.c.h.b16 %v1041
      %v1076 = vunpack.c.l.b16 %v1042
      %v1077 = vunpack.c.h.b16 %v1042
      %v1078 = vunpack.c.l.b16 %v1043
      %v1079 = vunpack.c.h.b16 %v1043
      %v1080 = vunpack.c.l.b16 %v1044
      %v1081 = vunpack.c.h.b16 %v1044
      %v1082 = vunpack.c.l.b16 %v1045
      %v1083 = vunpack.c.h.b16 %v1045
      %v1084 = vunpack.c.l.b16 %v1046
      %v1085 = vunpack.c.h.b16 %v1046
      %v1086 = vunpack.c.l.b16 %v1047
      %v1087 = vunpack.c.h.b16 %v1047
      %v1088 = vunpack.c.l.b16 %v1048
      %v1089 = vunpack.c.h.b16 %v1048
      %v1090 = vunpack.c.l.b16 %v1049
      %v1091 = vunpack.c.h.b16 %v1049
      %v1092 = vunpack.c.l.b16 %v1050
      %v1093 = vunpack.c.h.b16 %v1050
      %v1094 = vunpack.c.l.b16 %v1051
      %v1095 = vunpack.c.h.b16 %v1051
      %v1096 = vunpack.c.l.b16 %v1052
      %v1097 = vunpack.c.h.b16 %v1052
      %v1098 = vunpack.c.l.b16 %v1053
      %v1099 = vunpack.c.h.b16 %v1053
      %v1100 = vunpack.c.l.b16 %v1054
      %v1101 = vunpack.c.h.b16 %v1054
      %v1102 = vunpack.c.l.b16 %v1055
      %v1103 = vunpack.c.h.b16 %v1055
      %v1104 = vpack.c.b16 %v1072, %v1072
      %v1105 = vpack.c.b16 %v1073, %v1073
      %v1106 = vpack.c.b16 %v1074, %v1074
      %v1107 = vpack.c.b16 %v1075, %v1075
      %v1108 = vpack.c.b16 %v1076, %v1076
      %v1109 = vpack.c.b16 %v1077, %v1077
      %v1110 = vpack.c.b16 %v1078, %v1078
      %v1111 = vpack.c.b16 %v1079, %v1079
      %v1112 = vpack.c.b16 %v1080, %v1080
      %v1113 = vpack.c.b16 %v1081, %v1081
      %v1114 = vpack.c.b16 %v1082, %v1082
      %v1115 = vpack.c.b16 %v1083, %v1083
      %v1116 = vpack.c.b16 %v1084, %v1084
      %v1117 = vpack.c.b16 %v1085, %v1085
      %v1118 = vpack.c.b16 %v1086, %v1086
      %v1119 = vpack.c.b16 %v1087, %v1087
      %v1120 = vpack.c.b16 %v1088, %v1088
      %v1121 = vpack.c.b16 %v1089, %v1089
      %v1122 = vpack.c.b16 %v1090, %v1090
      %v1123 = vpack.c.b16 %v1091, %v1091
      %v1124 = vpack.c.b16 %v1092, %v1092
      %v1125 = vpack.c.b16 %v1093, %v1093
      %v1126 = vpack.c.b16 %v1094, %v1094
      %v1127 = vpack.c.b16 %v1095, %v1095
      %v1128 = vpack.c.b16 %v1096, %v1096
      %v1129 = vpack.c.b16 %v1097, %v1097
      %v1130 = vpack.c.b16 %v1098, %v1098
      %v1131 = vpack.c.b16 %v1099, %v1099
      %v1132 = vpack.c.b16 %v1100, %v1100
      %v1133 = vpack.c.b16 %v1101, %v1101
      %v1134 = vpack.c.b16 %v1102, %v1102
      %v1135 = vpack.c.b16 %v1103, %v1103
      %1168 = vst [vmem:[#allocation3 + $0xc] sm:$0xf] %v1104
      %1169 = vst [vmem:[#allocation3 + $0x30] sm:$0xf] %v1105
      %1170 = vst [vmem:[#allocation3 + $0x54] sm:$0xf] %v1106
      %1171 = vst [vmem:[#allocation3 + $0x78] sm:$0xf] %v1107
      %1172 = vst [vmem:[#allocation3 + $0x9c] sm:$0xf] %v1108
      %1173 = vst [vmem:[#allocation3 + $0xc0] sm:$0xf] %v1109
      %1174 = vst [vmem:[#allocation3 + $0xe4] sm:$0xf] %v1110
      %1175 = vst [vmem:[#allocation3 + $0x108] sm:$0xf] %v1111
      %1176 = vst [vmem:[#allocation3 + $0x12c] sm:$0xf] %v1112
      %1177 = vst [vmem:[#allocation3 + $0x150] sm:$0xf] %v1113
      %1178 = vst [vmem:[#allocation3 + $0x174] sm:$0xf] %v1114
      %1179 = vst [vmem:[#allocation3 + $0x198] sm:$0xf] %v1115
      %1180 = vst [vmem:[#allocation3 + $0x1bc] sm:$0xf] %v1116
      %1181 = vst [vmem:[#allocation3 + $0x1e0] sm:$0xf] %v1117
      %1182 = vst [vmem:[#allocation3 + $0x204] sm:$0xf] %v1118
      %1183 = vst [vmem:[#allocation3 + $0x228] sm:$0xf] %v1119
      %1184 = vst [vmem:[#allocation3 + $0x24c] sm:$0xf] %v1120
      %1185 = vst [vmem:[#allocation3 + $0x270] sm:$0xf] %v1121
      %1186 = vst [vmem:[#allocation3 + $0x294] sm:$0xf] %v1122
      %1187 = vst [vmem:[#allocation3 + $0x2b8] sm:$0xf] %v1123
      %1188 = vst [vmem:[#allocation3 + $0x2dc] sm:$0xf] %v1124
      %1189 = vst [vmem:[#allocation3 + $0x300] sm:$0xf] %v1125
      %1190 = vst [vmem:[#allocation3 + $0x324] sm:$0xf] %v1126
      %1191 = vst [vmem:[#allocation3 + $0x348] sm:$0xf] %v1127
      %1192 = vst [vmem:[#allocation3 + $0x36c] sm:$0xf] %v1128
      %1193 = vst [vmem:[#allocation3 + $0x390] sm:$0xf] %v1129
      %1194 = vst [vmem:[#allocation3 + $0x3b4] sm:$0xf] %v1130
      %1195 = vst [vmem:[#allocation3 + $0x3d8] sm:$0xf] %v1131
      %1196 = vst [vmem:[#allocation3 + $0x3fc] sm:$0xf] %v1132
      %1197 = vst [vmem:[#allocation3 + $0x420] sm:$0xf] %v1133
      %1198 = vst [vmem:[#allocation3 + $0x444] sm:$0xf] %v1134
      %1199 = vst [vmem:[#allocation3 + $0x468] sm:$0xf] %v1135
      %v1200 = vld [vmem:[%s398 + $0x1] sm:$0xff]
      %v1201 = vld [vmem:[%s398 + $0x9] sm:$0xff]
      %v1202 = vld [vmem:[%s398 + $0x19] sm:$0xff]
      %v1203 = vld [vmem:[%s398 + $0x21] sm:$0xff]
      %v1204 = vld [vmem:[%s398 + $0x31] sm:$0xff]
      %v1205 = vld [vmem:[%s398 + $0x39] sm:$0xff]
      %v1206 = vld [vmem:[%s398 + $0x49] sm:$0xff]
      %v1207 = vld [vmem:[%s398 + $0x51] sm:$0xff]
      %v1208 = vld [vmem:[%s398 + $0x61] sm:$0xff]
      %v1209 = vld [vmem:[%s398 + $0x69] sm:$0xff]
      %v1210 = vld [vmem:[%s398 + $0x79] sm:$0xff]
      %v1211 = vld [vmem:[%s398 + $0x81] sm:$0xff]
      %v1212 = vld [vmem:[%s398 + $0x91] sm:$0xff]
      %v1213 = vld [vmem:[%s398 + $0x99] sm:$0xff]
      %v1214 = vld [vmem:[%s398 + $0xa9] sm:$0xff]
      %v1215 = vld [vmem:[%s398 + $0xb1] sm:$0xff]
      %v1216 = vld [vmem:[%s398 + $0xc1] sm:$0xff]
      %v1217 = vld [vmem:[%s398 + $0xc9] sm:$0xff]
      %v1218 = vld [vmem:[%s398 + $0xd9] sm:$0xff]
      %v1219 = vld [vmem:[%s398 + $0xe1] sm:$0xff]
      %v1220 = vld [vmem:[%s398 + $0xf1] sm:$0xff]
      %v1221 = vld [vmem:[%s398 + $0xf9] sm:$0xff]
      %v1222 = vld [vmem:[%s398 + $0x109] sm:$0xff]
      %v1223 = vld [vmem:[%s398 + $0x111] sm:$0xff]
      %v1224 = vld [vmem:[%s398 + $0x121] sm:$0xff]
      %v1225 = vld [vmem:[%s398 + $0x129] sm:$0xff]
      %v1226 = vld [vmem:[%s398 + $0x139] sm:$0xff]
      %v1227 = vld [vmem:[%s398 + $0x141] sm:$0xff]
      %v1228 = vld [vmem:[%s398 + $0x151] sm:$0xff]
      %v1229 = vld [vmem:[%s398 + $0x159] sm:$0xff]
      %v1230 = vld [vmem:[%s398 + $0x169] sm:$0xff]
      %v1231 = vld [vmem:[%s398 + $0x171] sm:$0xff]
      %v1232 = vpack.c.bf16 %v1201, %v1200
      %v1233 = vpack.c.bf16 %v1203, %v1202
      %v1234 = vpack.c.bf16 %v1205, %v1204
      %v1235 = vpack.c.bf16 %v1207, %v1206
      %v1236 = vpack.c.bf16 %v1209, %v1208
      %v1237 = vpack.c.bf16 %v1211, %v1210
      %v1238 = vpack.c.bf16 %v1213, %v1212
      %v1239 = vpack.c.bf16 %v1215, %v1214
      %v1240 = vpack.c.bf16 %v1217, %v1216
      %v1241 = vpack.c.bf16 %v1219, %v1218
      %v1242 = vpack.c.bf16 %v1221, %v1220
      %v1243 = vpack.c.bf16 %v1223, %v1222
      %v1244 = vpack.c.bf16 %v1225, %v1224
      %v1245 = vpack.c.bf16 %v1227, %v1226
      %v1246 = vpack.c.bf16 %v1229, %v1228
      %v1247 = vpack.c.bf16 %v1231, %v1230
      %v1264 = vunpack.c.l.b16 %v1232
      %v1265 = vunpack.c.h.b16 %v1232
      %v1266 = vunpack.c.l.b16 %v1233
      %v1267 = vunpack.c.h.b16 %v1233
      %v1268 = vunpack.c.l.b16 %v1234
      %v1269 = vunpack.c.h.b16 %v1234
      %v1270 = vunpack.c.l.b16 %v1235
      %v1271 = vunpack.c.h.b16 %v1235
      %v1272 = vunpack.c.l.b16 %v1236
      %v1273 = vunpack.c.h.b16 %v1236
      %v1274 = vunpack.c.l.b16 %v1237
      %v1275 = vunpack.c.h.b16 %v1237
      %v1276 = vunpack.c.l.b16 %v1238
      %v1277 = vunpack.c.h.b16 %v1238
      %v1278 = vunpack.c.l.b16 %v1239
      %v1279 = vunpack.c.h.b16 %v1239
      %v1280 = vunpack.c.l.b16 %v1240
      %v1281 = vunpack.c.h.b16 %v1240
      %v1282 = vunpack.c.l.b16 %v1241
      %v1283 = vunpack.c.h.b16 %v1241
      %v1284 = vunpack.c.l.b16 %v1242
      %v1285 = vunpack.c.h.b16 %v1242
      %v1286 = vunpack.c.l.b16 %v1243
      %v1287 = vunpack.c.h.b16 %v1243
      %v1288 = vunpack.c.l.b16 %v1244
      %v1289 = vunpack.c.h.b16 %v1244
      %v1290 = vunpack.c.l.b16 %v1245
      %v1291 = vunpack.c.h.b16 %v1245
      %v1292 = vunpack.c.l.b16 %v1246
      %v1293 = vunpack.c.h.b16 %v1246
      %v1294 = vunpack.c.l.b16 %v1247
      %v1295 = vunpack.c.h.b16 %v1247
      %v1296 = vpack.c.b16 %v1264, %v1264
      %v1297 = vpack.c.b16 %v1265, %v1265
      %v1298 = vpack.c.b16 %v1266, %v1266
      %v1299 = vpack.c.b16 %v1267, %v1267
      %v1300 = vpack.c.b16 %v1268, %v1268
      %v1301 = vpack.c.b16 %v1269, %v1269
      %v1302 = vpack.c.b16 %v1270, %v1270
      %v1303 = vpack.c.b16 %v1271, %v1271
      %v1304 = vpack.c.b16 %v1272, %v1272
      %v1305 = vpack.c.b16 %v1273, %v1273
      %v1306 = vpack.c.b16 %v1274, %v1274
      %v1307 = vpack.c.b16 %v1275, %v1275
      %v1308 = vpack.c.b16 %v1276, %v1276
      %v1309 = vpack.c.b16 %v1277, %v1277
      %v1310 = vpack.c.b16 %v1278, %v1278
      %v1311 = vpack.c.b16 %v1279, %v1279
      %v1312 = vpack.c.b16 %v1280, %v1280
      %v1313 = vpack.c.b16 %v1281, %v1281
      %v1314 = vpack.c.b16 %v1282, %v1282
      %v1315 = vpack.c.b16 %v1283, %v1283
      %v1316 = vpack.c.b16 %v1284, %v1284
      %v1317 = vpack.c.b16 %v1285, %v1285
      %v1318 = vpack.c.b16 %v1286, %v1286
      %v1319 = vpack.c.b16 %v1287, %v1287
      %v1320 = vpack.c.b16 %v1288, %v1288
      %v1321 = vpack.c.b16 %v1289, %v1289
      %v1322 = vpack.c.b16 %v1290, %v1290
      %v1323 = vpack.c.b16 %v1291, %v1291
      %v1324 = vpack.c.b16 %v1292, %v1292
      %v1325 = vpack.c.b16 %v1293, %v1293
      %v1326 = vpack.c.b16 %v1294, %v1294
      %v1327 = vpack.c.b16 %v1295, %v1295
      %1360 = vst [vmem:[#allocation3 + $0x10] sm:$0xf] %v1296
      %1361 = vst [vmem:[#allocation3 + $0x34] sm:$0xf] %v1297
      %1362 = vst [vmem:[#allocation3 + $0x58] sm:$0xf] %v1298
      %1363 = vst [vmem:[#allocation3 + $0x7c] sm:$0xf] %v1299
      %1364 = vst [vmem:[#allocation3 + $0xa0] sm:$0xf] %v1300
      %1365 = vst [vmem:[#allocation3 + $0xc4] sm:$0xf] %v1301
      %1366 = vst [vmem:[#allocation3 + $0xe8] sm:$0xf] %v1302
      %1367 = vst [vmem:[#allocation3 + $0x10c] sm:$0xf] %v1303
      %1368 = vst [vmem:[#allocation3 + $0x130] sm:$0xf] %v1304
      %1369 = vst [vmem:[#allocation3 + $0x154] sm:$0xf] %v1305
      %1370 = vst [vmem:[#allocation3 + $0x178] sm:$0xf] %v1306
      %1371 = vst [vmem:[#allocation3 + $0x19c] sm:$0xf] %v1307
      %1372 = vst [vmem:[#allocation3 + $0x1c0] sm:$0xf] %v1308
      %1373 = vst [vmem:[#allocation3 + $0x1e4] sm:$0xf] %v1309
      %1374 = vst [vmem:[#allocation3 + $0x208] sm:$0xf] %v1310
      %1375 = vst [vmem:[#allocation3 + $0x22c] sm:$0xf] %v1311
      %1376 = vst [vmem:[#allocation3 + $0x250] sm:$0xf] %v1312
      %1377 = vst [vmem:[#allocation3 + $0x274] sm:$0xf] %v1313
      %1378 = vst [vmem:[#allocation3 + $0x298] sm:$0xf] %v1314
      %1379 = vst [vmem:[#allocation3 + $0x2bc] sm:$0xf] %v1315
      %1380 = vst [vmem:[#allocation3 + $0x2e0] sm:$0xf] %v1316
      %1381 = vst [vmem:[#allocation3 + $0x304] sm:$0xf] %v1317
      %1382 = vst [vmem:[#allocation3 + $0x328] sm:$0xf] %v1318
      %1383 = vst [vmem:[#allocation3 + $0x34c] sm:$0xf] %v1319
      %1384 = vst [vmem:[#allocation3 + $0x370] sm:$0xf] %v1320
      %1385 = vst [vmem:[#allocation3 + $0x394] sm:$0xf] %v1321
      %1386 = vst [vmem:[#allocation3 + $0x3b8] sm:$0xf] %v1322
      %1387 = vst [vmem:[#allocation3 + $0x3dc] sm:$0xf] %v1323
      %1388 = vst [vmem:[#allocation3 + $0x400] sm:$0xf] %v1324
      %1389 = vst [vmem:[#allocation3 + $0x424] sm:$0xf] %v1325
      %1390 = vst [vmem:[#allocation3 + $0x448] sm:$0xf] %v1326
      %1391 = vst [vmem:[#allocation3 + $0x46c] sm:$0xf] %v1327
      %v1392 = vld [vmem:[%s398 + $0x2] sm:$0xff]
      %v1393 = vld [vmem:[%s398 + $0xa] sm:$0xff]
      %v1394 = vld [vmem:[%s398 + $0x1a] sm:$0xff]
      %v1395 = vld [vmem:[%s398 + $0x22] sm:$0xff]
      %v1396 = vld [vmem:[%s398 + $0x32] sm:$0xff]
      %v1397 = vld [vmem:[%s398 + $0x3a] sm:$0xff]
      %v1398 = vld [vmem:[%s398 + $0x4a] sm:$0xff]
      %v1399 = vld [vmem:[%s398 + $0x52] sm:$0xff]
      %v1400 = vld [vmem:[%s398 + $0x62] sm:$0xff]
      %v1401 = vld [vmem:[%s398 + $0x6a] sm:$0xff]
      %v1402 = vld [vmem:[%s398 + $0x7a] sm:$0xff]
      %v1403 = vld [vmem:[%s398 + $0x82] sm:$0xff]
      %v1404 = vld [vmem:[%s398 + $0x92] sm:$0xff]
      %v1405 = vld [vmem:[%s398 + $0x9a] sm:$0xff]
      %v1406 = vld [vmem:[%s398 + $0xaa] sm:$0xff]
      %v1407 = vld [vmem:[%s398 + $0xb2] sm:$0xff]
      %v1408 = vld [vmem:[%s398 + $0xc2] sm:$0xff]
      %v1409 = vld [vmem:[%s398 + $0xca] sm:$0xff]
      %v1410 = vld [vmem:[%s398 + $0xda] sm:$0xff]
      %v1411 = vld [vmem:[%s398 + $0xe2] sm:$0xff]
      %v1412 = vld [vmem:[%s398 + $0xf2] sm:$0xff]
      %v1413 = vld [vmem:[%s398 + $0xfa] sm:$0xff]
      %v1414 = vld [vmem:[%s398 + $0x10a] sm:$0xff]
      %v1415 = vld [vmem:[%s398 + $0x112] sm:$0xff]
      %v1416 = vld [vmem:[%s398 + $0x122] sm:$0xff]
      %v1417 = vld [vmem:[%s398 + $0x12a] sm:$0xff]
      %v1418 = vld [vmem:[%s398 + $0x13a] sm:$0xff]
      %v1419 = vld [vmem:[%s398 + $0x142] sm:$0xff]
      %v1420 = vld [vmem:[%s398 + $0x152] sm:$0xff]
      %v1421 = vld [vmem:[%s398 + $0x15a] sm:$0xff]
      %v1422 = vld [vmem:[%s398 + $0x16a] sm:$0xff]
      %v1423 = vld [vmem:[%s398 + $0x172] sm:$0xff]
      %v1424 = vpack.c.bf16 %v1393, %v1392
      %v1425 = vpack.c.bf16 %v1395, %v1394
      %v1426 = vpack.c.bf16 %v1397, %v1396
      %v1427 = vpack.c.bf16 %v1399, %v1398
      %v1428 = vpack.c.bf16 %v1401, %v1400
      %v1429 = vpack.c.bf16 %v1403, %v1402
      %v1430 = vpack.c.bf16 %v1405, %v1404
      %v1431 = vpack.c.bf16 %v1407, %v1406
      %v1432 = vpack.c.bf16 %v1409, %v1408
      %v1433 = vpack.c.bf16 %v1411, %v1410
      %v1434 = vpack.c.bf16 %v1413, %v1412
      %v1435 = vpack.c.bf16 %v1415, %v1414
      %v1436 = vpack.c.bf16 %v1417, %v1416
      %v1437 = vpack.c.bf16 %v1419, %v1418
      %v1438 = vpack.c.bf16 %v1421, %v1420
      %v1439 = vpack.c.bf16 %v1423, %v1422
      %v1456 = vunpack.c.l.b16 %v1424
      %v1457 = vunpack.c.h.b16 %v1424
      %v1458 = vunpack.c.l.b16 %v1425
      %v1459 = vunpack.c.h.b16 %v1425
      %v1460 = vunpack.c.l.b16 %v1426
      %v1461 = vunpack.c.h.b16 %v1426
      %v1462 = vunpack.c.l.b16 %v1427
      %v1463 = vunpack.c.h.b16 %v1427
      %v1464 = vunpack.c.l.b16 %v1428
      %v1465 = vunpack.c.h.b16 %v1428
      %v1466 = vunpack.c.l.b16 %v1429
      %v1467 = vunpack.c.h.b16 %v1429
      %v1468 = vunpack.c.l.b16 %v1430
      %v1469 = vunpack.c.h.b16 %v1430
      %v1470 = vunpack.c.l.b16 %v1431
      %v1471 = vunpack.c.h.b16 %v1431
      %v1472 = vunpack.c.l.b16 %v1432
      %v1473 = vunpack.c.h.b16 %v1432
      %v1474 = vunpack.c.l.b16 %v1433
      %v1475 = vunpack.c.h.b16 %v1433
      %v1476 = vunpack.c.l.b16 %v1434
      %v1477 = vunpack.c.h.b16 %v1434
      %v1478 = vunpack.c.l.b16 %v1435
      %v1479 = vunpack.c.h.b16 %v1435
      %v1480 = vunpack.c.l.b16 %v1436
      %v1481 = vunpack.c.h.b16 %v1436
      %v1482 = vunpack.c.l.b16 %v1437
      %v1483 = vunpack.c.h.b16 %v1437
      %v1484 = vunpack.c.l.b16 %v1438
      %v1485 = vunpack.c.h.b16 %v1438
      %v1486 = vunpack.c.l.b16 %v1439
      %v1487 = vunpack.c.h.b16 %v1439
      %v1488 = vpack.c.b16 %v1456, %v1456
      %v1489 = vpack.c.b16 %v1457, %v1457
      %v1490 = vpack.c.b16 %v1458, %v1458
      %v1491 = vpack.c.b16 %v1459, %v1459
      %v1492 = vpack.c.b16 %v1460, %v1460
      %v1493 = vpack.c.b16 %v1461, %v1461
      %v1494 = vpack.c.b16 %v1462, %v1462
      %v1495 = vpack.c.b16 %v1463, %v1463
      %v1496 = vpack.c.b16 %v1464, %v1464
      %v1497 = vpack.c.b16 %v1465, %v1465
      %v1498 = vpack.c.b16 %v1466, %v1466
      %v1499 = vpack.c.b16 %v1467, %v1467
      %v1500 = vpack.c.b16 %v1468, %v1468
      %v1501 = vpack.c.b16 %v1469, %v1469
      %v1502 = vpack.c.b16 %v1470, %v1470
      %v1503 = vpack.c.b16 %v1471, %v1471
      %v1504 = vpack.c.b16 %v1472, %v1472
      %v1505 = vpack.c.b16 %v1473, %v1473
      %v1506 = vpack.c.b16 %v1474, %v1474
      %v1507 = vpack.c.b16 %v1475, %v1475
      %v1508 = vpack.c.b16 %v1476, %v1476
      %v1509 = vpack.c.b16 %v1477, %v1477
      %v1510 = vpack.c.b16 %v1478, %v1478
      %v1511 = vpack.c.b16 %v1479, %v1479
      %v1512 = vpack.c.b16 %v1480, %v1480
      %v1513 = vpack.c.b16 %v1481, %v1481
      %v1514 = vpack.c.b16 %v1482, %v1482
      %v1515 = vpack.c.b16 %v1483, %v1483
      %v1516 = vpack.c.b16 %v1484, %v1484
      %v1517 = vpack.c.b16 %v1485, %v1485
      %v1518 = vpack.c.b16 %v1486, %v1486
      %v1519 = vpack.c.b16 %v1487, %v1487
      %1552 = vst [vmem:[#allocation3 + $0x14] sm:$0xf] %v1488
      %1553 = vst [vmem:[#allocation3 + $0x38] sm:$0xf] %v1489
      %1554 = vst [vmem:[#allocation3 + $0x5c] sm:$0xf] %v1490
      %1555 = vst [vmem:[#allocation3 + $0x80] sm:$0xf] %v1491
      %1556 = vst [vmem:[#allocation3 + $0xa4] sm:$0xf] %v1492
      %1557 = vst [vmem:[#allocation3 + $0xc8] sm:$0xf] %v1493
      %1558 = vst [vmem:[#allocation3 + $0xec] sm:$0xf] %v1494
      %1559 = vst [vmem:[#allocation3 + $0x110] sm:$0xf] %v1495
      %1560 = vst [vmem:[#allocation3 + $0x134] sm:$0xf] %v1496
      %1561 = vst [vmem:[#allocation3 + $0x158] sm:$0xf] %v1497
      %1562 = vst [vmem:[#allocation3 + $0x17c] sm:$0xf] %v1498
      %1563 = vst [vmem:[#allocation3 + $0x1a0] sm:$0xf] %v1499
      %1564 = vst [vmem:[#allocation3 + $0x1c4] sm:$0xf] %v1500
      %1565 = vst [vmem:[#allocation3 + $0x1e8] sm:$0xf] %v1501
      %1566 = vst [vmem:[#allocation3 + $0x20c] sm:$0xf] %v1502
      %1567 = vst [vmem:[#allocation3 + $0x230] sm:$0xf] %v1503
      %1568 = vst [vmem:[#allocation3 + $0x254] sm:$0xf] %v1504
      %1569 = vst [vmem:[#allocation3 + $0x278] sm:$0xf] %v1505
      %1570 = vst [vmem:[#allocation3 + $0x29c] sm:$0xf] %v1506
      %1571 = vst [vmem:[#allocation3 + $0x2c0] sm:$0xf] %v1507
      %1572 = vst [vmem:[#allocation3 + $0x2e4] sm:$0xf] %v1508
      %1573 = vst [vmem:[#allocation3 + $0x308] sm:$0xf] %v1509
      %1574 = vst [vmem:[#allocation3 + $0x32c] sm:$0xf] %v1510
      %1575 = vst [vmem:[#allocation3 + $0x350] sm:$0xf] %v1511
      %1576 = vst [vmem:[#allocation3 + $0x374] sm:$0xf] %v1512
      %1577 = vst [vmem:[#allocation3 + $0x398] sm:$0xf] %v1513
      %1578 = vst [vmem:[#allocation3 + $0x3bc] sm:$0xf] %v1514
      %1579 = vst [vmem:[#allocation3 + $0x3e0] sm:$0xf] %v1515
      %1580 = vst [vmem:[#allocation3 + $0x404] sm:$0xf] %v1516
      %1581 = vst [vmem:[#allocation3 + $0x428] sm:$0xf] %v1517
      %1582 = vst [vmem:[#allocation3 + $0x44c] sm:$0xf] %v1518
      %1583 = vst [vmem:[#allocation3 + $0x470] sm:$0xf] %v1519
      %s1584 = scalar_lea.vmem [#allocation2], 48
      %v1585 = vld [vmem:[%s1584] sm:$0xff]
      %v1586 = vld [vmem:[%s1584 + $0x8] sm:$0xff]
      %v1587 = vld [vmem:[%s1584 + $0x18] sm:$0xff]
      %v1588 = vld [vmem:[%s1584 + $0x20] sm:$0xff]
      %v1589 = vld [vmem:[%s1584 + $0x30] sm:$0xff]
      %v1590 = vld [vmem:[%s1584 + $0x38] sm:$0xff]
      %v1591 = vld [vmem:[%s1584 + $0x48] sm:$0xff]
      %v1592 = vld [vmem:[%s1584 + $0x50] sm:$0xff]
      %v1593 = vld [vmem:[%s1584 + $0x60] sm:$0xff]
      %v1594 = vld [vmem:[%s1584 + $0x68] sm:$0xff]
      %v1595 = vld [vmem:[%s1584 + $0x78] sm:$0xff]
      %v1596 = vld [vmem:[%s1584 + $0x80] sm:$0xff]
      %v1597 = vld [vmem:[%s1584 + $0x90] sm:$0xff]
      %v1598 = vld [vmem:[%s1584 + $0x98] sm:$0xff]
      %v1599 = vld [vmem:[%s1584 + $0xa8] sm:$0xff]
      %v1600 = vld [vmem:[%s1584 + $0xb0] sm:$0xff]
      %v1601 = vld [vmem:[%s1584 + $0xc0] sm:$0xff]
      %v1602 = vld [vmem:[%s1584 + $0xc8] sm:$0xff]
      %v1603 = vld [vmem:[%s1584 + $0xd8] sm:$0xff]
      %v1604 = vld [vmem:[%s1584 + $0xe0] sm:$0xff]
      %v1605 = vld [vmem:[%s1584 + $0xf0] sm:$0xff]
      %v1606 = vld [vmem:[%s1584 + $0xf8] sm:$0xff]
      %v1607 = vld [vmem:[%s1584 + $0x108] sm:$0xff]
      %v1608 = vld [vmem:[%s1584 + $0x110] sm:$0xff]
      %v1609 = vld [vmem:[%s1584 + $0x120] sm:$0xff]
      %v1610 = vld [vmem:[%s1584 + $0x128] sm:$0xff]
      %v1611 = vld [vmem:[%s1584 + $0x138] sm:$0xff]
      %v1612 = vld [vmem:[%s1584 + $0x140] sm:$0xff]
      %v1613 = vld [vmem:[%s1584 + $0x150] sm:$0xff]
      %v1614 = vld [vmem:[%s1584 + $0x158] sm:$0xff]
      %v1615 = vld [vmem:[%s1584 + $0x168] sm:$0xff]
      %v1616 = vld [vmem:[%s1584 + $0x170] sm:$0xff]
      %v1617 = vpack.c.bf16 %v1586, %v1585
      %v1618 = vpack.c.bf16 %v1588, %v1587
      %v1619 = vpack.c.bf16 %v1590, %v1589
      %v1620 = vpack.c.bf16 %v1592, %v1591
      %v1621 = vpack.c.bf16 %v1594, %v1593
      %v1622 = vpack.c.bf16 %v1596, %v1595
      %v1623 = vpack.c.bf16 %v1598, %v1597
      %v1624 = vpack.c.bf16 %v1600, %v1599
      %v1625 = vpack.c.bf16 %v1602, %v1601
      %v1626 = vpack.c.bf16 %v1604, %v1603
      %v1627 = vpack.c.bf16 %v1606, %v1605
      %v1628 = vpack.c.bf16 %v1608, %v1607
      %v1629 = vpack.c.bf16 %v1610, %v1609
      %v1630 = vpack.c.bf16 %v1612, %v1611
      %v1631 = vpack.c.bf16 %v1614, %v1613
      %v1632 = vpack.c.bf16 %v1616, %v1615
      %v1649 = vunpack.c.l.b16 %v1617
      %v1650 = vunpack.c.h.b16 %v1617
      %v1651 = vunpack.c.l.b16 %v1618
      %v1652 = vunpack.c.h.b16 %v1618
      %v1653 = vunpack.c.l.b16 %v1619
      %v1654 = vunpack.c.h.b16 %v1619
      %v1655 = vunpack.c.l.b16 %v1620
      %v1656 = vunpack.c.h.b16 %v1620
      %v1657 = vunpack.c.l.b16 %v1621
      %v1658 = vunpack.c.h.b16 %v1621
      %v1659 = vunpack.c.l.b16 %v1622
      %v1660 = vunpack.c.h.b16 %v1622
      %v1661 = vunpack.c.l.b16 %v1623
      %v1662 = vunpack.c.h.b16 %v1623
      %v1663 = vunpack.c.l.b16 %v1624
      %v1664 = vunpack.c.h.b16 %v1624
      %v1665 = vunpack.c.l.b16 %v1625
      %v1666 = vunpack.c.h.b16 %v1625
      %v1667 = vunpack.c.l.b16 %v1626
      %v1668 = vunpack.c.h.b16 %v1626
      %v1669 = vunpack.c.l.b16 %v1627
      %v1670 = vunpack.c.h.b16 %v1627
      %v1671 = vunpack.c.l.b16 %v1628
      %v1672 = vunpack.c.h.b16 %v1628
      %v1673 = vunpack.c.l.b16 %v1629
      %v1674 = vunpack.c.h.b16 %v1629
      %v1675 = vunpack.c.l.b16 %v1630
      %v1676 = vunpack.c.h.b16 %v1630
      %v1677 = vunpack.c.l.b16 %v1631
      %v1678 = vunpack.c.h.b16 %v1631
      %v1679 = vunpack.c.l.b16 %v1632
      %v1680 = vunpack.c.h.b16 %v1632
      %v1681 = vpack.c.b16 %v1649, %v1649
      %v1682 = vpack.c.b16 %v1650, %v1650
      %v1683 = vpack.c.b16 %v1651, %v1651
      %v1684 = vpack.c.b16 %v1652, %v1652
      %v1685 = vpack.c.b16 %v1653, %v1653
      %v1686 = vpack.c.b16 %v1654, %v1654
      %v1687 = vpack.c.b16 %v1655, %v1655
      %v1688 = vpack.c.b16 %v1656, %v1656
      %v1689 = vpack.c.b16 %v1657, %v1657
      %v1690 = vpack.c.b16 %v1658, %v1658
      %v1691 = vpack.c.b16 %v1659, %v1659
      %v1692 = vpack.c.b16 %v1660, %v1660
      %v1693 = vpack.c.b16 %v1661, %v1661
      %v1694 = vpack.c.b16 %v1662, %v1662
      %v1695 = vpack.c.b16 %v1663, %v1663
      %v1696 = vpack.c.b16 %v1664, %v1664
      %v1697 = vpack.c.b16 %v1665, %v1665
      %v1698 = vpack.c.b16 %v1666, %v1666
      %v1699 = vpack.c.b16 %v1667, %v1667
      %v1700 = vpack.c.b16 %v1668, %v1668
      %v1701 = vpack.c.b16 %v1669, %v1669
      %v1702 = vpack.c.b16 %v1670, %v1670
      %v1703 = vpack.c.b16 %v1671, %v1671
      %v1704 = vpack.c.b16 %v1672, %v1672
      %v1705 = vpack.c.b16 %v1673, %v1673
      %v1706 = vpack.c.b16 %v1674, %v1674
      %v1707 = vpack.c.b16 %v1675, %v1675
      %v1708 = vpack.c.b16 %v1676, %v1676
      %v1709 = vpack.c.b16 %v1677, %v1677
      %v1710 = vpack.c.b16 %v1678, %v1678
      %v1711 = vpack.c.b16 %v1679, %v1679
      %v1712 = vpack.c.b16 %v1680, %v1680
      %1745 = vst [vmem:[#allocation3 + $0x18] sm:$0xf] %v1681
      %1746 = vst [vmem:[#allocation3 + $0x3c] sm:$0xf] %v1682
      %1747 = vst [vmem:[#allocation3 + $0x60] sm:$0xf] %v1683
      %1748 = vst [vmem:[#allocation3 + $0x84] sm:$0xf] %v1684
      %1749 = vst [vmem:[#allocation3 + $0xa8] sm:$0xf] %v1685
      %1750 = vst [vmem:[#allocation3 + $0xcc] sm:$0xf] %v1686
      %1751 = vst [vmem:[#allocation3 + $0xf0] sm:$0xf] %v1687
      %1752 = vst [vmem:[#allocation3 + $0x114] sm:$0xf] %v1688
      %1753 = vst [vmem:[#allocation3 + $0x138] sm:$0xf] %v1689
      %1754 = vst [vmem:[#allocation3 + $0x15c] sm:$0xf] %v1690
      %1755 = vst [vmem:[#allocation3 + $0x180] sm:$0xf] %v1691
      %1756 = vst [vmem:[#allocation3 + $0x1a4] sm:$0xf] %v1692
      %1757 = vst [vmem:[#allocation3 + $0x1c8] sm:$0xf] %v1693
      %1758 = vst [vmem:[#allocation3 + $0x1ec] sm:$0xf] %v1694
      %1759 = vst [vmem:[#allocation3 + $0x210] sm:$0xf] %v1695
      %1760 = vst [vmem:[#allocation3 + $0x234] sm:$0xf] %v1696
      %1761 = vst [vmem:[#allocation3 + $0x258] sm:$0xf] %v1697
      %1762 = vst [vmem:[#allocation3 + $0x27c] sm:$0xf] %v1698
      %1763 = vst [vmem:[#allocation3 + $0x2a0] sm:$0xf] %v1699
      %1764 = vst [vmem:[#allocation3 + $0x2c4] sm:$0xf] %v1700
      %1765 = vst [vmem:[#allocation3 + $0x2e8] sm:$0xf] %v1701
      %1766 = vst [vmem:[#allocation3 + $0x30c] sm:$0xf] %v1702
      %1767 = vst [vmem:[#allocation3 + $0x330] sm:$0xf] %v1703
      %1768 = vst [vmem:[#allocation3 + $0x354] sm:$0xf] %v1704
      %1769 = vst [vmem:[#allocation3 + $0x378] sm:$0xf] %v1705
      %1770 = vst [vmem:[#allocation3 + $0x39c] sm:$0xf] %v1706
      %1771 = vst [vmem:[#allocation3 + $0x3c0] sm:$0xf] %v1707
      %1772 = vst [vmem:[#allocation3 + $0x3e4] sm:$0xf] %v1708
      %1773 = vst [vmem:[#allocation3 + $0x408] sm:$0xf] %v1709
      %1774 = vst [vmem:[#allocation3 + $0x42c] sm:$0xf] %v1710
      %1775 = vst [vmem:[#allocation3 + $0x450] sm:$0xf] %v1711
      %1776 = vst [vmem:[#allocation3 + $0x474] sm:$0xf] %v1712
      %v1777 = vld [vmem:[%s1584 + $0x1] sm:$0xff]
      %v1778 = vld [vmem:[%s1584 + $0x9] sm:$0xff]
      %v1779 = vld [vmem:[%s1584 + $0x19] sm:$0xff]
      %v1780 = vld [vmem:[%s1584 + $0x21] sm:$0xff]
      %v1781 = vld [vmem:[%s1584 + $0x31] sm:$0xff]
      %v1782 = vld [vmem:[%s1584 + $0x39] sm:$0xff]
      %v1783 = vld [vmem:[%s1584 + $0x49] sm:$0xff]
      %v1784 = vld [vmem:[%s1584 + $0x51] sm:$0xff]
      %v1785 = vld [vmem:[%s1584 + $0x61] sm:$0xff]
      %v1786 = vld [vmem:[%s1584 + $0x69] sm:$0xff]
      %v1787 = vld [vmem:[%s1584 + $0x79] sm:$0xff]
      %v1788 = vld [vmem:[%s1584 + $0x81] sm:$0xff]
      %v1789 = vld [vmem:[%s1584 + $0x91] sm:$0xff]
      %v1790 = vld [vmem:[%s1584 + $0x99] sm:$0xff]
      %v1791 = vld [vmem:[%s1584 + $0xa9] sm:$0xff]
      %v1792 = vld [vmem:[%s1584 + $0xb1] sm:$0xff]
      %v1793 = vld [vmem:[%s1584 + $0xc1] sm:$0xff]
      %v1794 = vld [vmem:[%s1584 + $0xc9] sm:$0xff]
      %v1795 = vld [vmem:[%s1584 + $0xd9] sm:$0xff]
      %v1796 = vld [vmem:[%s1584 + $0xe1] sm:$0xff]
      %v1797 = vld [vmem:[%s1584 + $0xf1] sm:$0xff]
      %v1798 = vld [vmem:[%s1584 + $0xf9] sm:$0xff]
      %v1799 = vld [vmem:[%s1584 + $0x109] sm:$0xff]
      %v1800 = vld [vmem:[%s1584 + $0x111] sm:$0xff]
      %v1801 = vld [vmem:[%s1584 + $0x121] sm:$0xff]
      %v1802 = vld [vmem:[%s1584 + $0x129] sm:$0xff]
      %v1803 = vld [vmem:[%s1584 + $0x139] sm:$0xff]
      %v1804 = vld [vmem:[%s1584 + $0x141] sm:$0xff]
      %v1805 = vld [vmem:[%s1584 + $0x151] sm:$0xff]
      %v1806 = vld [vmem:[%s1584 + $0x159] sm:$0xff]
      %v1807 = vld [vmem:[%s1584 + $0x169] sm:$0xff]
      %v1808 = vld [vmem:[%s1584 + $0x171] sm:$0xff]
      %v1809 = vpack.c.bf16 %v1778, %v1777
      %v1810 = vpack.c.bf16 %v1780, %v1779
      %v1811 = vpack.c.bf16 %v1782, %v1781
      %v1812 = vpack.c.bf16 %v1784, %v1783
      %v1813 = vpack.c.bf16 %v1786, %v1785
      %v1814 = vpack.c.bf16 %v1788, %v1787
      %v1815 = vpack.c.bf16 %v1790, %v1789
      %v1816 = vpack.c.bf16 %v1792, %v1791
      %v1817 = vpack.c.bf16 %v1794, %v1793
      %v1818 = vpack.c.bf16 %v1796, %v1795
      %v1819 = vpack.c.bf16 %v1798, %v1797
      %v1820 = vpack.c.bf16 %v1800, %v1799
      %v1821 = vpack.c.bf16 %v1802, %v1801
      %v1822 = vpack.c.bf16 %v1804, %v1803
      %v1823 = vpack.c.bf16 %v1806, %v1805
      %v1824 = vpack.c.bf16 %v1808, %v1807
      %v1841 = vunpack.c.l.b16 %v1809
      %v1842 = vunpack.c.h.b16 %v1809
      %v1843 = vunpack.c.l.b16 %v1810
      %v1844 = vunpack.c.h.b16 %v1810
      %v1845 = vunpack.c.l.b16 %v1811
      %v1846 = vunpack.c.h.b16 %v1811
      %v1847 = vunpack.c.l.b16 %v1812
      %v1848 = vunpack.c.h.b16 %v1812
      %v1849 = vunpack.c.l.b16 %v1813
      %v1850 = vunpack.c.h.b16 %v1813
      %v1851 = vunpack.c.l.b16 %v1814
      %v1852 = vunpack.c.h.b16 %v1814
      %v1853 = vunpack.c.l.b16 %v1815
      %v1854 = vunpack.c.h.b16 %v1815
      %v1855 = vunpack.c.l.b16 %v1816
      %v1856 = vunpack.c.h.b16 %v1816
      %v1857 = vunpack.c.l.b16 %v1817
      %v1858 = vunpack.c.h.b16 %v1817
      %v1859 = vunpack.c.l.b16 %v1818
      %v1860 = vunpack.c.h.b16 %v1818
      %v1861 = vunpack.c.l.b16 %v1819
      %v1862 = vunpack.c.h.b16 %v1819
      %v1863 = vunpack.c.l.b16 %v1820
      %v1864 = vunpack.c.h.b16 %v1820
      %v1865 = vunpack.c.l.b16 %v1821
      %v1866 = vunpack.c.h.b16 %v1821
      %v1867 = vunpack.c.l.b16 %v1822
      %v1868 = vunpack.c.h.b16 %v1822
      %v1869 = vunpack.c.l.b16 %v1823
      %v1870 = vunpack.c.h.b16 %v1823
      %v1871 = vunpack.c.l.b16 %v1824
      %v1872 = vunpack.c.h.b16 %v1824
      %v1873 = vpack.c.b16 %v1841, %v1841
      %v1874 = vpack.c.b16 %v1842, %v1842
      %v1875 = vpack.c.b16 %v1843, %v1843
      %v1876 = vpack.c.b16 %v1844, %v1844
      %v1877 = vpack.c.b16 %v1845, %v1845
      %v1878 = vpack.c.b16 %v1846, %v1846
      %v1879 = vpack.c.b16 %v1847, %v1847
      %v1880 = vpack.c.b16 %v1848, %v1848
      %v1881 = vpack.c.b16 %v1849, %v1849
      %v1882 = vpack.c.b16 %v1850, %v1850
      %v1883 = vpack.c.b16 %v1851, %v1851
      %v1884 = vpack.c.b16 %v1852, %v1852
      %v1885 = vpack.c.b16 %v1853, %v1853
      %v1886 = vpack.c.b16 %v1854, %v1854
      %v1887 = vpack.c.b16 %v1855, %v1855
      %v1888 = vpack.c.b16 %v1856, %v1856
      %v1889 = vpack.c.b16 %v1857, %v1857
      %v1890 = vpack.c.b16 %v1858, %v1858
      %v1891 = vpack.c.b16 %v1859, %v1859
      %v1892 = vpack.c.b16 %v1860, %v1860
      %v1893 = vpack.c.b16 %v1861, %v1861
      %v1894 = vpack.c.b16 %v1862, %v1862
      %v1895 = vpack.c.b16 %v1863, %v1863
      %v1896 = vpack.c.b16 %v1864, %v1864
      %v1897 = vpack.c.b16 %v1865, %v1865
      %v1898 = vpack.c.b16 %v1866, %v1866
      %v1899 = vpack.c.b16 %v1867, %v1867
      %v1900 = vpack.c.b16 %v1868, %v1868
      %v1901 = vpack.c.b16 %v1869, %v1869
      %v1902 = vpack.c.b16 %v1870, %v1870
      %v1903 = vpack.c.b16 %v1871, %v1871
      %v1904 = vpack.c.b16 %v1872, %v1872
      %1937 = vst [vmem:[#allocation3 + $0x1c] sm:$0xf] %v1873
      %1938 = vst [vmem:[#allocation3 + $0x40] sm:$0xf] %v1874
      %1939 = vst [vmem:[#allocation3 + $0x64] sm:$0xf] %v1875
      %1940 = vst [vmem:[#allocation3 + $0x88] sm:$0xf] %v1876
      %1941 = vst [vmem:[#allocation3 + $0xac] sm:$0xf] %v1877
      %1942 = vst [vmem:[#allocation3 + $0xd0] sm:$0xf] %v1878
      %1943 = vst [vmem:[#allocation3 + $0xf4] sm:$0xf] %v1879
      %1944 = vst [vmem:[#allocation3 + $0x118] sm:$0xf] %v1880
      %1945 = vst [vmem:[#allocation3 + $0x13c] sm:$0xf] %v1881
      %1946 = vst [vmem:[#allocation3 + $0x160] sm:$0xf] %v1882
      %1947 = vst [vmem:[#allocation3 + $0x184] sm:$0xf] %v1883
      %1948 = vst [vmem:[#allocation3 + $0x1a8] sm:$0xf] %v1884
      %1949 = vst [vmem:[#allocation3 + $0x1cc] sm:$0xf] %v1885
      %1950 = vst [vmem:[#allocation3 + $0x1f0] sm:$0xf] %v1886
      %1951 = vst [vmem:[#allocation3 + $0x214] sm:$0xf] %v1887
      %1952 = vst [vmem:[#allocation3 + $0x238] sm:$0xf] %v1888
      %1953 = vst [vmem:[#allocation3 + $0x25c] sm:$0xf] %v1889
      %1954 = vst [vmem:[#allocation3 + $0x280] sm:$0xf] %v1890
      %1955 = vst [vmem:[#allocation3 + $0x2a4] sm:$0xf] %v1891
      %1956 = vst [vmem:[#allocation3 + $0x2c8] sm:$0xf] %v1892
      %1957 = vst [vmem:[#allocation3 + $0x2ec] sm:$0xf] %v1893
      %1958 = vst [vmem:[#allocation3 + $0x310] sm:$0xf] %v1894
      %1959 = vst [vmem:[#allocation3 + $0x334] sm:$0xf] %v1895
      %1960 = vst [vmem:[#allocation3 + $0x358] sm:$0xf] %v1896
      %1961 = vst [vmem:[#allocation3 + $0x37c] sm:$0xf] %v1897
      %1962 = vst [vmem:[#allocation3 + $0x3a0] sm:$0xf] %v1898
      %1963 = vst [vmem:[#allocation3 + $0x3c4] sm:$0xf] %v1899
      %1964 = vst [vmem:[#allocation3 + $0x3e8] sm:$0xf] %v1900
      %1965 = vst [vmem:[#allocation3 + $0x40c] sm:$0xf] %v1901
      %1966 = vst [vmem:[#allocation3 + $0x430] sm:$0xf] %v1902
      %1967 = vst [vmem:[#allocation3 + $0x454] sm:$0xf] %v1903
      %1968 = vst [vmem:[#allocation3 + $0x478] sm:$0xf] %v1904
      %v1969 = vld [vmem:[%s1584 + $0x2] sm:$0xff]
      %v1970 = vld [vmem:[%s1584 + $0xa] sm:$0xff]
      %v1971 = vld [vmem:[%s1584 + $0x1a] sm:$0xff]
      %v1972 = vld [vmem:[%s1584 + $0x22] sm:$0xff]
      %v1973 = vld [vmem:[%s1584 + $0x32] sm:$0xff]
      %v1974 = vld [vmem:[%s1584 + $0x3a] sm:$0xff]
      %v1975 = vld [vmem:[%s1584 + $0x4a] sm:$0xff]
      %v1976 = vld [vmem:[%s1584 + $0x52] sm:$0xff]
      %v1977 = vld [vmem:[%s1584 + $0x62] sm:$0xff]
      %v1978 = vld [vmem:[%s1584 + $0x6a] sm:$0xff]
      %v1979 = vld [vmem:[%s1584 + $0x7a] sm:$0xff]
      %v1980 = vld [vmem:[%s1584 + $0x82] sm:$0xff]
      %v1981 = vld [vmem:[%s1584 + $0x92] sm:$0xff]
      %v1982 = vld [vmem:[%s1584 + $0x9a] sm:$0xff]
      %v1983 = vld [vmem:[%s1584 + $0xaa] sm:$0xff]
      %v1984 = vld [vmem:[%s1584 + $0xb2] sm:$0xff]
      %v1985 = vld [vmem:[%s1584 + $0xc2] sm:$0xff]
      %v1986 = vld [vmem:[%s1584 + $0xca] sm:$0xff]
      %v1987 = vld [vmem:[%s1584 + $0xda] sm:$0xff]
      %v1988 = vld [vmem:[%s1584 + $0xe2] sm:$0xff]
      %v1989 = vld [vmem:[%s1584 + $0xf2] sm:$0xff]
      %v1990 = vld [vmem:[%s1584 + $0xfa] sm:$0xff]
      %v1991 = vld [vmem:[%s1584 + $0x10a] sm:$0xff]
      %v1992 = vld [vmem:[%s1584 + $0x112] sm:$0xff]
      %v1993 = vld [vmem:[%s1584 + $0x122] sm:$0xff]
      %v1994 = vld [vmem:[%s1584 + $0x12a] sm:$0xff]
      %v1995 = vld [vmem:[%s1584 + $0x13a] sm:$0xff]
      %v1996 = vld [vmem:[%s1584 + $0x142] sm:$0xff]
      %v1997 = vld [vmem:[%s1584 + $0x152] sm:$0xff]
      %v1998 = vld [vmem:[%s1584 + $0x15a] sm:$0xff]
      %v1999 = vld [vmem:[%s1584 + $0x16a] sm:$0xff]
      %v2000 = vld [vmem:[%s1584 + $0x172] sm:$0xff]
      %v2001 = vpack.c.bf16 %v1970, %v1969
      %v2002 = vpack.c.bf16 %v1972, %v1971
      %v2003 = vpack.c.bf16 %v1974, %v1973
      %v2004 = vpack.c.bf16 %v1976, %v1975
      %v2005 = vpack.c.bf16 %v1978, %v1977
      %v2006 = vpack.c.bf16 %v1980, %v1979
      %v2007 = vpack.c.bf16 %v1982, %v1981
      %v2008 = vpack.c.bf16 %v1984, %v1983
      %v2009 = vpack.c.bf16 %v1986, %v1985
      %v2010 = vpack.c.bf16 %v1988, %v1987
      %v2011 = vpack.c.bf16 %v1990, %v1989
      %v2012 = vpack.c.bf16 %v1992, %v1991
      %v2013 = vpack.c.bf16 %v1994, %v1993
      %v2014 = vpack.c.bf16 %v1996, %v1995
      %v2015 = vpack.c.bf16 %v1998, %v1997
      %v2016 = vpack.c.bf16 %v2000, %v1999
      %v2033 = vunpack.c.l.b16 %v2001
      %v2034 = vunpack.c.h.b16 %v2001
      %v2035 = vunpack.c.l.b16 %v2002
      %v2036 = vunpack.c.h.b16 %v2002
      %v2037 = vunpack.c.l.b16 %v2003
      %v2038 = vunpack.c.h.b16 %v2003
      %v2039 = vunpack.c.l.b16 %v2004
      %v2040 = vunpack.c.h.b16 %v2004
      %v2041 = vunpack.c.l.b16 %v2005
      %v2042 = vunpack.c.h.b16 %v2005
      %v2043 = vunpack.c.l.b16 %v2006
      %v2044 = vunpack.c.h.b16 %v2006
      %v2045 = vunpack.c.l.b16 %v2007
      %v2046 = vunpack.c.h.b16 %v2007
      %v2047 = vunpack.c.l.b16 %v2008
      %v2048 = vunpack.c.h.b16 %v2008
      %v2049 = vunpack.c.l.b16 %v2009
      %v2050 = vunpack.c.h.b16 %v2009
      %v2051 = vunpack.c.l.b16 %v2010
      %v2052 = vunpack.c.h.b16 %v2010
      %v2053 = vunpack.c.l.b16 %v2011
      %v2054 = vunpack.c.h.b16 %v2011
      %v2055 = vunpack.c.l.b16 %v2012
      %v2056 = vunpack.c.h.b16 %v2012
      %v2057 = vunpack.c.l.b16 %v2013
      %v2058 = vunpack.c.h.b16 %v2013
      %v2059 = vunpack.c.l.b16 %v2014
      %v2060 = vunpack.c.h.b16 %v2014
      %v2061 = vunpack.c.l.b16 %v2015
      %v2062 = vunpack.c.h.b16 %v2015
      %v2063 = vunpack.c.l.b16 %v2016
      %v2064 = vunpack.c.h.b16 %v2016
      %v2065 = vpack.c.b16 %v2033, %v2033
      %v2066 = vpack.c.b16 %v2034, %v2034
      %v2067 = vpack.c.b16 %v2035, %v2035
      %v2068 = vpack.c.b16 %v2036, %v2036
      %v2069 = vpack.c.b16 %v2037, %v2037
      %v2070 = vpack.c.b16 %v2038, %v2038
      %v2071 = vpack.c.b16 %v2039, %v2039
      %v2072 = vpack.c.b16 %v2040, %v2040
      %v2073 = vpack.c.b16 %v2041, %v2041
      %v2074 = vpack.c.b16 %v2042, %v2042
      %v2075 = vpack.c.b16 %v2043, %v2043
      %v2076 = vpack.c.b16 %v2044, %v2044
      %v2077 = vpack.c.b16 %v2045, %v2045
      %v2078 = vpack.c.b16 %v2046, %v2046
      %v2079 = vpack.c.b16 %v2047, %v2047
      %v2080 = vpack.c.b16 %v2048, %v2048
      %v2081 = vpack.c.b16 %v2049, %v2049
      %v2082 = vpack.c.b16 %v2050, %v2050
      %v2083 = vpack.c.b16 %v2051, %v2051
      %v2084 = vpack.c.b16 %v2052, %v2052
      %v2085 = vpack.c.b16 %v2053, %v2053
      %v2086 = vpack.c.b16 %v2054, %v2054
      %v2087 = vpack.c.b16 %v2055, %v2055
      %v2088 = vpack.c.b16 %v2056, %v2056
      %v2089 = vpack.c.b16 %v2057, %v2057
      %v2090 = vpack.c.b16 %v2058, %v2058
      %v2091 = vpack.c.b16 %v2059, %v2059
      %v2092 = vpack.c.b16 %v2060, %v2060
      %v2093 = vpack.c.b16 %v2061, %v2061
      %v2094 = vpack.c.b16 %v2062, %v2062
      %v2095 = vpack.c.b16 %v2063, %v2063
      %v2096 = vpack.c.b16 %v2064, %v2064
      %2129 = vst [vmem:[#allocation3 + $0x20] sm:$0xf] %v2065
      %2130 = vst [vmem:[#allocation3 + $0x44] sm:$0xf] %v2066
      %2131 = vst [vmem:[#allocation3 + $0x68] sm:$0xf] %v2067
      %2132 = vst [vmem:[#allocation3 + $0x8c] sm:$0xf] %v2068
      %2133 = vst [vmem:[#allocation3 + $0xb0] sm:$0xf] %v2069
      %2134 = vst [vmem:[#allocation3 + $0xd4] sm:$0xf] %v2070
      %2135 = vst [vmem:[#allocation3 + $0xf8] sm:$0xf] %v2071
      %2136 = vst [vmem:[#allocation3 + $0x11c] sm:$0xf] %v2072
      %2137 = vst [vmem:[#allocation3 + $0x140] sm:$0xf] %v2073
      %2138 = vst [vmem:[#allocation3 + $0x164] sm:$0xf] %v2074
      %2139 = vst [vmem:[#allocation3 + $0x188] sm:$0xf] %v2075
      %2140 = vst [vmem:[#allocation3 + $0x1ac] sm:$0xf] %v2076
      %2141 = vst [vmem:[#allocation3 + $0x1d0] sm:$0xf] %v2077
      %2142 = vst [vmem:[#allocation3 + $0x1f4] sm:$0xf] %v2078
      %2143 = vst [vmem:[#allocation3 + $0x218] sm:$0xf] %v2079
      %2144 = vst [vmem:[#allocation3 + $0x23c] sm:$0xf] %v2080
      %2145 = vst [vmem:[#allocation3 + $0x260] sm:$0xf] %v2081
      %2146 = vst [vmem:[#allocation3 + $0x284] sm:$0xf] %v2082
      %2147 = vst [vmem:[#allocation3 + $0x2a8] sm:$0xf] %v2083
      %2148 = vst [vmem:[#allocation3 + $0x2cc] sm:$0xf] %v2084
      %2149 = vst [vmem:[#allocation3 + $0x2f0] sm:$0xf] %v2085
      %2150 = vst [vmem:[#allocation3 + $0x314] sm:$0xf] %v2086
      %2151 = vst [vmem:[#allocation3 + $0x338] sm:$0xf] %v2087
      %2152 = vst [vmem:[#allocation3 + $0x35c] sm:$0xf] %v2088
      %2153 = vst [vmem:[#allocation3 + $0x380] sm:$0xf] %v2089
      %2154 = vst [vmem:[#allocation3 + $0x3a4] sm:$0xf] %v2090
      %2155 = vst [vmem:[#allocation3 + $0x3c8] sm:$0xf] %v2091
      %2156 = vst [vmem:[#allocation3 + $0x3ec] sm:$0xf] %v2092
      %2157 = vst [vmem:[#allocation3 + $0x410] sm:$0xf] %v2093
      %2158 = vst [vmem:[#allocation3 + $0x434] sm:$0xf] %v2094
      %2159 = vst [vmem:[#allocation3 + $0x458] sm:$0xf] %v2095
      %2160 = vst [vmem:[#allocation3 + $0x47c] sm:$0xf] %v2096
      %v2161 = vld [vmem:[#allocation3] sm:$0xff]
      %v2162 = vld [vmem:[#allocation3 + $0x8] sm:$0xff]
      %v2163 = vld [vmem:[#allocation3 + $0x10] sm:$0xff]
      %v2164 = vld [vmem:[#allocation3 + $0x18] sm:$0xff]
      %v2165 = vld [vmem:[#allocation3 + $0x20] sm:$0xf]
      %v2166 = vld [vmem:[#allocation3 + $0x24] sm:$0xff]
      %v2167 = vld [vmem:[#allocation3 + $0x2c] sm:$0xff]
      %v2168 = vld [vmem:[#allocation3 + $0x34] sm:$0xff]
      %v2169 = vld [vmem:[#allocation3 + $0x3c] sm:$0xff]
      %v2170 = vld [vmem:[#allocation3 + $0x44] sm:$0xf]
      %v2171 = vld [vmem:[#allocation3 + $0x48] sm:$0xff]
      %v2172 = vld [vmem:[#allocation3 + $0x50] sm:$0xff]
      %v2173 = vld [vmem:[#allocation3 + $0x58] sm:$0xff]
      %v2174 = vld [vmem:[#allocation3 + $0x60] sm:$0xff]
      %v2175 = vld [vmem:[#allocation3 + $0x68] sm:$0xf]
      %v2176 = vld [vmem:[#allocation3 + $0x6c] sm:$0xff]
      %v2177 = vld [vmem:[#allocation3 + $0x74] sm:$0xff]
      %v2178 = vld [vmem:[#allocation3 + $0x7c] sm:$0xff]
      %v2179 = vld [vmem:[#allocation3 + $0x84] sm:$0xff]
      %v2180 = vld [vmem:[#allocation3 + $0x8c] sm:$0xf]
      %v2181 = vld [vmem:[#allocation3 + $0x90] sm:$0xff]
      %v2182 = vld [vmem:[#allocation3 + $0x98] sm:$0xff]
      %v2183 = vld [vmem:[#allocation3 + $0xa0] sm:$0xff]
      %v2184 = vld [vmem:[#allocation3 + $0xa8] sm:$0xff]
      %v2185 = vld [vmem:[#allocation3 + $0xb0] sm:$0xf]
      %v2186 = vld [vmem:[#allocation3 + $0xb4] sm:$0xff]
      %v2187 = vld [vmem:[#allocation3 + $0xbc] sm:$0xff]
      %v2188 = vld [vmem:[#allocation3 + $0xc4] sm:$0xff]
      %v2189 = vld [vmem:[#allocation3 + $0xcc] sm:$0xff]
      %v2190 = vld [vmem:[#allocation3 + $0xd4] sm:$0xf]
      %v2191 = vld [vmem:[#allocation3 + $0xd8] sm:$0xff]
      %v2192 = vld [vmem:[#allocation3 + $0xe0] sm:$0xff]
      %v2193 = vld [vmem:[#allocation3 + $0xe8] sm:$0xff]
      %v2194 = vld [vmem:[#allocation3 + $0xf0] sm:$0xff]
      %v2195 = vld [vmem:[#allocation3 + $0xf8] sm:$0xf]
      %v2196 = vld [vmem:[#allocation3 + $0xfc] sm:$0xff]
      %v2197 = vld [vmem:[#allocation3 + $0x104] sm:$0xff]
      %v2198 = vld [vmem:[#allocation3 + $0x10c] sm:$0xff]
      %v2199 = vld [vmem:[#allocation3 + $0x114] sm:$0xff]
      %v2200 = vld [vmem:[#allocation3 + $0x11c] sm:$0xf]
      %v2201 = vld [vmem:[#allocation3 + $0x120] sm:$0xff]
      %v2202 = vld [vmem:[#allocation3 + $0x128] sm:$0xff]
      %v2203 = vld [vmem:[#allocation3 + $0x130] sm:$0xff]
      %v2204 = vld [vmem:[#allocation3 + $0x138] sm:$0xff]
      %v2205 = vld [vmem:[#allocation3 + $0x140] sm:$0xf]
      %v2206 = vld [vmem:[#allocation3 + $0x144] sm:$0xff]
      %v2207 = vld [vmem:[#allocation3 + $0x14c] sm:$0xff]
      %v2208 = vld [vmem:[#allocation3 + $0x154] sm:$0xff]
      %v2209 = vld [vmem:[#allocation3 + $0x15c] sm:$0xff]
      %v2210 = vld [vmem:[#allocation3 + $0x164] sm:$0xf]
      %v2211 = vld [vmem:[#allocation3 + $0x168] sm:$0xff]
      %v2212 = vld [vmem:[#allocation3 + $0x170] sm:$0xff]
      %v2213 = vld [vmem:[#allocation3 + $0x178] sm:$0xff]
      %v2214 = vld [vmem:[#allocation3 + $0x180] sm:$0xff]
      %v2215 = vld [vmem:[#allocation3 + $0x188] sm:$0xf]
      %v2216 = vld [vmem:[#allocation3 + $0x18c] sm:$0xff]
      %v2217 = vld [vmem:[#allocation3 + $0x194] sm:$0xff]
      %v2218 = vld [vmem:[#allocation3 + $0x19c] sm:$0xff]
      %v2219 = vld [vmem:[#allocation3 + $0x1a4] sm:$0xff]
      %v2220 = vld [vmem:[#allocation3 + $0x1ac] sm:$0xf]
      %v2221 = vld [vmem:[#allocation3 + $0x1b0] sm:$0xff]
      %v2222 = vld [vmem:[#allocation3 + $0x1b8] sm:$0xff]
      %v2223 = vld [vmem:[#allocation3 + $0x1c0] sm:$0xff]
      %v2224 = vld [vmem:[#allocation3 + $0x1c8] sm:$0xff]
      %v2225 = vld [vmem:[#allocation3 + $0x1d0] sm:$0xf]
      %v2226 = vld [vmem:[#allocation3 + $0x1d4] sm:$0xff]
      %v2227 = vld [vmem:[#allocation3 + $0x1dc] sm:$0xff]
      %v2228 = vld [vmem:[#allocation3 + $0x1e4] sm:$0xff]
      %v2229 = vld [vmem:[#allocation3 + $0x1ec] sm:$0xff]
      %v2230 = vld [vmem:[#allocation3 + $0x1f4] sm:$0xf]
      %v2231 = vld [vmem:[#allocation3 + $0x1f8] sm:$0xff]
      %v2232 = vld [vmem:[#allocation3 + $0x200] sm:$0xff]
      %v2233 = vld [vmem:[#allocation3 + $0x208] sm:$0xff]
      %v2234 = vld [vmem:[#allocation3 + $0x210] sm:$0xff]
      %v2235 = vld [vmem:[#allocation3 + $0x218] sm:$0xf]
      %v2236 = vld [vmem:[#allocation3 + $0x21c] sm:$0xff]
      %v2237 = vld [vmem:[#allocation3 + $0x224] sm:$0xff]
      %v2238 = vld [vmem:[#allocation3 + $0x22c] sm:$0xff]
      %v2239 = vld [vmem:[#allocation3 + $0x234] sm:$0xff]
      %v2240 = vld [vmem:[#allocation3 + $0x23c] sm:$0xf]
      %v2241 = vld [vmem:[#allocation3 + $0x240] sm:$0xff]
      %v2242 = vld [vmem:[#allocation3 + $0x248] sm:$0xff]
      %v2243 = vld [vmem:[#allocation3 + $0x250] sm:$0xff]
      %v2244 = vld [vmem:[#allocation3 + $0x258] sm:$0xff]
      %v2245 = vld [vmem:[#allocation3 + $0x260] sm:$0xf]
      %v2246 = vld [vmem:[#allocation3 + $0x264] sm:$0xff]
      %v2247 = vld [vmem:[#allocation3 + $0x26c] sm:$0xff]
      %v2248 = vld [vmem:[#allocation3 + $0x274] sm:$0xff]
      %v2249 = vld [vmem:[#allocation3 + $0x27c] sm:$0xff]
      %v2250 = vld [vmem:[#allocation3 + $0x284] sm:$0xf]
      %v2251 = vld [vmem:[#allocation3 + $0x288] sm:$0xff]
      %v2252 = vld [vmem:[#allocation3 + $0x290] sm:$0xff]
      %v2253 = vld [vmem:[#allocation3 + $0x298] sm:$0xff]
      %v2254 = vld [vmem:[#allocation3 + $0x2a0] sm:$0xff]
      %v2255 = vld [vmem:[#allocation3 + $0x2a8] sm:$0xf]
      %v2256 = vld [vmem:[#allocation3 + $0x2ac] sm:$0xff]
      %v2257 = vld [vmem:[#allocation3 + $0x2b4] sm:$0xff]
      %v2258 = vld [vmem:[#allocation3 + $0x2bc] sm:$0xff]
      %v2259 = vld [vmem:[#allocation3 + $0x2c4] sm:$0xff]
      %v2260 = vld [vmem:[#allocation3 + $0x2cc] sm:$0xf]
      %v2261 = vld [vmem:[#allocation3 + $0x2d0] sm:$0xff]
      %v2262 = vld [vmem:[#allocation3 + $0x2d8] sm:$0xff]
      %v2263 = vld [vmem:[#allocation3 + $0x2e0] sm:$0xff]
      %v2264 = vld [vmem:[#allocation3 + $0x2e8] sm:$0xff]
      %v2265 = vld [vmem:[#allocation3 + $0x2f0] sm:$0xf]
      %v2266 = vld [vmem:[#allocation3 + $0x2f4] sm:$0xff]
      %v2267 = vld [vmem:[#allocation3 + $0x2fc] sm:$0xff]
      %v2268 = vld [vmem:[#allocation3 + $0x304] sm:$0xff]
      %v2269 = vld [vmem:[#allocation3 + $0x30c] sm:$0xff]
      %v2270 = vld [vmem:[#allocation3 + $0x314] sm:$0xf]
      %v2271 = vld [vmem:[#allocation3 + $0x318] sm:$0xff]
      %v2272 = vld [vmem:[#allocation3 + $0x320] sm:$0xff]
      %v2273 = vld [vmem:[#allocation3 + $0x328] sm:$0xff]
      %v2274 = vld [vmem:[#allocation3 + $0x330] sm:$0xff]
      %v2275 = vld [vmem:[#allocation3 + $0x338] sm:$0xf]
      %v2276 = vld [vmem:[#allocation3 + $0x33c] sm:$0xff]
      %v2277 = vld [vmem:[#allocation3 + $0x344] sm:$0xff]
      %v2278 = vld [vmem:[#allocation3 + $0x34c] sm:$0xff]
      %v2279 = vld [vmem:[#allocation3 + $0x354] sm:$0xff]
      %v2280 = vld [vmem:[#allocation3 + $0x35c] sm:$0xf]
      %v2281 = vld [vmem:[#allocation3 + $0x360] sm:$0xff]
      %v2282 = vld [vmem:[#allocation3 + $0x368] sm:$0xff]
      %v2283 = vld [vmem:[#allocation3 + $0x370] sm:$0xff]
      %v2284 = vld [vmem:[#allocation3 + $0x378] sm:$0xff]
      %v2285 = vld [vmem:[#allocation3 + $0x380] sm:$0xf]
      %v2286 = vld [vmem:[#allocation3 + $0x384] sm:$0xff]
      %v2287 = vld [vmem:[#allocation3 + $0x38c] sm:$0xff]
      %v2288 = vld [vmem:[#allocation3 + $0x394] sm:$0xff]
      %v2289 = vld [vmem:[#allocation3 + $0x39c] sm:$0xff]
      %v2290 = vld [vmem:[#allocation3 + $0x3a4] sm:$0xf]
      %v2291 = vld [vmem:[#allocation3 + $0x3a8] sm:$0xff]
      %v2292 = vld [vmem:[#allocation3 + $0x3b0] sm:$0xff]
      %v2293 = vld [vmem:[#allocation3 + $0x3b8] sm:$0xff]
      %v2294 = vld [vmem:[#allocation3 + $0x3c0] sm:$0xff]
      %v2295 = vld [vmem:[#allocation3 + $0x3c8] sm:$0xf]
      %v2296 = vld [vmem:[#allocation3 + $0x3cc] sm:$0xff]
      %v2297 = vld [vmem:[#allocation3 + $0x3d4] sm:$0xff]
      %v2298 = vld [vmem:[#allocation3 + $0x3dc] sm:$0xff]
      %v2299 = vld [vmem:[#allocation3 + $0x3e4] sm:$0xff]
      %v2300 = vld [vmem:[#allocation3 + $0x3ec] sm:$0xf]
      %v2301 = vld [vmem:[#allocation3 + $0x3f0] sm:$0xff]
      %v2302 = vld [vmem:[#allocation3 + $0x3f8] sm:$0xff]
      %v2303 = vld [vmem:[#allocation3 + $0x400] sm:$0xff]
      %v2304 = vld [vmem:[#allocation3 + $0x408] sm:$0xff]
      %v2305 = vld [vmem:[#allocation3 + $0x410] sm:$0xf]
      %v2306 = vld [vmem:[#allocation3 + $0x414] sm:$0xff]
      %v2307 = vld [vmem:[#allocation3 + $0x41c] sm:$0xff]
      %v2308 = vld [vmem:[#allocation3 + $0x424] sm:$0xff]
      %v2309 = vld [vmem:[#allocation3 + $0x42c] sm:$0xff]
      %v2310 = vld [vmem:[#allocation3 + $0x434] sm:$0xf]
      %v2311 = vld [vmem:[#allocation3 + $0x438] sm:$0xff]
      %v2312 = vld [vmem:[#allocation3 + $0x440] sm:$0xff]
      %v2313 = vld [vmem:[#allocation3 + $0x448] sm:$0xff]
      %v2314 = vld [vmem:[#allocation3 + $0x450] sm:$0xff]
      %v2315 = vld [vmem:[#allocation3 + $0x458] sm:$0xf]
      %v2316 = vld [vmem:[#allocation3 + $0x45c] sm:$0xff]
      %v2317 = vld [vmem:[#allocation3 + $0x464] sm:$0xff]
      %v2318 = vld [vmem:[#allocation3 + $0x46c] sm:$0xff]
      %v2319 = vld [vmem:[#allocation3 + $0x474] sm:$0xff]
      %v2320 = vld [vmem:[#allocation3 + $0x47c] sm:$0xf]
      %v2321 = vld [vmem:[%s1] sm:$0xf]
      %v2322 = vld [vmem:[%s1 + $0x4] sm:$0xf]
      %v2323 = vld [vmem:[%s1 + $0x8] sm:$0xf]
      %v2324 = vld [vmem:[%s1 + $0xc] sm:$0xf]
      %v2325 = vld [vmem:[%s1 + $0x10] sm:$0xf]
      %v2326 = vld [vmem:[%s1 + $0x14] sm:$0xf]
      %v2327 = vld [vmem:[%s1 + $0x18] sm:$0xf]
      %v2328 = vld [vmem:[%s1 + $0x1c] sm:$0xf]
      %v2329 = vld [vmem:[%s1 + $0x20] sm:$0xf]
      %v2330 = vld [vmem:[%s1 + $0x24] sm:$0xf]
      %v2331 = vld [vmem:[%s1 + $0x28] sm:$0xf]
      %v2332 = vld [vmem:[%s1 + $0x2c] sm:$0xf]
      %v2333 = vld [vmem:[%s1 + $0x30] sm:$0xf]
      %v2334 = vld [vmem:[%s1 + $0x34] sm:$0xf]
      %v2335 = vld [vmem:[%s1 + $0x38] sm:$0xf]
      %v2336 = vld [vmem:[%s1 + $0x3c] sm:$0xf]
      %v2337 = vld [vmem:[%s1 + $0x40] sm:$0xf]
      %v2338 = vld [vmem:[%s1 + $0x44] sm:$0xf]
      %v2339 = vld [vmem:[%s1 + $0x48] sm:$0xf]
      %v2340 = vld [vmem:[%s1 + $0x4c] sm:$0xf]
      %v2341 = vld [vmem:[%s1 + $0x50] sm:$0xf]
      %v2342 = vld [vmem:[%s1 + $0x54] sm:$0xf]
      %v2343 = vld [vmem:[%s1 + $0x58] sm:$0xf]
      %v2344 = vld [vmem:[%s1 + $0x5c] sm:$0xf]
      %v2345 = vld [vmem:[%s1 + $0x60] sm:$0xf]
      %v2346 = vld [vmem:[%s1 + $0x64] sm:$0xf]
      %v2347 = vld [vmem:[%s1 + $0x68] sm:$0xf]
      %v2348 = vld [vmem:[%s1 + $0x6c] sm:$0xf]
      %v2349 = vld [vmem:[%s1 + $0x70] sm:$0xf]
      %v2350 = vld [vmem:[%s1 + $0x74] sm:$0xf]
      %v2351 = vld [vmem:[%s1 + $0x78] sm:$0xf]
      %v2352 = vld [vmem:[%s1 + $0x7c] sm:$0xf]
      %v2353 = vld [vmem:[%s1 + $0x80] sm:$0xf]
      %v2354 = vld [vmem:[%s1 + $0x84] sm:$0xf]
      %v2355 = vld [vmem:[%s1 + $0x88] sm:$0xf]
      %v2356 = vld [vmem:[%s1 + $0x8c] sm:$0xf]
      %v2357 = vld [vmem:[%s1 + $0x90] sm:$0xf]
      %v2358 = vld [vmem:[%s1 + $0x94] sm:$0xf]
      %v2359 = vld [vmem:[%s1 + $0x98] sm:$0xf]
      %v2360 = vld [vmem:[%s1 + $0x9c] sm:$0xf]
      %v2361 = vld [vmem:[%s1 + $0xa0] sm:$0xf]
      %v2362 = vld [vmem:[%s1 + $0xa4] sm:$0xf]
      %v2363 = vld [vmem:[%s1 + $0xa8] sm:$0xf]
      %v2364 = vld [vmem:[%s1 + $0xac] sm:$0xf]
      %v2365 = vld [vmem:[%s1 + $0xb0] sm:$0xf]
      %v2366 = vld [vmem:[%s1 + $0xb4] sm:$0xf]
      %v2367 = vld [vmem:[%s1 + $0xb8] sm:$0xf]
      %v2368 = vld [vmem:[%s1 + $0xbc] sm:$0xf]
      %v2369 = vld [vmem:[%s1 + $0xc0] sm:$0xf]
      %v2370 = vld [vmem:[%s1 + $0xc4] sm:$0xf]
      %v2371 = vld [vmem:[%s1 + $0xc8] sm:$0xf]
      %v2372 = vld [vmem:[%s1 + $0xcc] sm:$0xf]
      %v2373 = vld [vmem:[%s1 + $0xd0] sm:$0xf]
      %v2374 = vld [vmem:[%s1 + $0xd4] sm:$0xf]
      %v2375 = vld [vmem:[%s1 + $0xd8] sm:$0xf]
      %v2376 = vld [vmem:[%s1 + $0xdc] sm:$0xf]
      %v2377 = vld [vmem:[%s1 + $0xe0] sm:$0xf]
      %v2378 = vld [vmem:[%s1 + $0xe4] sm:$0xf]
      %v2379 = vld [vmem:[%s1 + $0xe8] sm:$0xf]
      %v2380 = vld [vmem:[%s1 + $0xec] sm:$0xf]
      %v2381 = vld [vmem:[%s1 + $0xf0] sm:$0xf]
      %v2382 = vld [vmem:[%s1 + $0xf4] sm:$0xf]
      %v2383 = vld [vmem:[%s1 + $0xf8] sm:$0xf]
      %v2384 = vld [vmem:[%s1 + $0xfc] sm:$0xf]
      %v2385 = vld [vmem:[%s1 + $0x100] sm:$0xf]
      %v2386 = vld [vmem:[%s1 + $0x104] sm:$0xf]
      %v2387 = vld [vmem:[%s1 + $0x108] sm:$0xf]
      %v2388 = vld [vmem:[%s1 + $0x10c] sm:$0xf]
      %v2389 = vld [vmem:[%s1 + $0x110] sm:$0xf]
      %v2390 = vld [vmem:[%s1 + $0x114] sm:$0xf]
      %v2391 = vld [vmem:[%s1 + $0x118] sm:$0xf]
      %v2392 = vld [vmem:[%s1 + $0x11c] sm:$0xf]
      %v2393 = vld [vmem:[%s1 + $0x120] sm:$0xf]
      %v2394 = vld [vmem:[%s1 + $0x124] sm:$0xf]
      %v2395 = vld [vmem:[%s1 + $0x128] sm:$0xf]
      %v2396 = vld [vmem:[%s1 + $0x12c] sm:$0xf]
      %v2397 = vld [vmem:[%s1 + $0x130] sm:$0xf]
      %v2398 = vld [vmem:[%s1 + $0x134] sm:$0xf]
      %v2399 = vld [vmem:[%s1 + $0x138] sm:$0xf]
      %v2400 = vld [vmem:[%s1 + $0x13c] sm:$0xf]
      %v2401 = vld [vmem:[%s1 + $0x140] sm:$0xf]
      %v2402 = vld [vmem:[%s1 + $0x144] sm:$0xf]
      %v2403 = vld [vmem:[%s1 + $0x148] sm:$0xf]
      %v2404 = vld [vmem:[%s1 + $0x14c] sm:$0xf]
      %v2405 = vld [vmem:[%s1 + $0x150] sm:$0xf]
      %v2406 = vld [vmem:[%s1 + $0x154] sm:$0xf]
      %v2407 = vld [vmem:[%s1 + $0x158] sm:$0xf]
      %v2408 = vld [vmem:[%s1 + $0x15c] sm:$0xf]
      %v2409 = vld [vmem:[%s1 + $0x160] sm:$0xf]
      %v2410 = vld [vmem:[%s1 + $0x164] sm:$0xf]
      %v2411 = vld [vmem:[%s1 + $0x168] sm:$0xf]
      %v2412 = vld [vmem:[%s1 + $0x16c] sm:$0xf]
      %v2413 = vld [vmem:[%s1 + $0x170] sm:$0xf]
      %v2414 = vld [vmem:[%s1 + $0x174] sm:$0xf]
      %v2415 = vld [vmem:[%s1 + $0x178] sm:$0xf]
      %v2416 = vld [vmem:[%s1 + $0x17c] sm:$0xf]
      %v2417 = vld [vmem:[%s1 + $0x180] sm:$0xf]
      %v2418 = vld [vmem:[%s1 + $0x184] sm:$0xf]
      %v2419 = vld [vmem:[%s1 + $0x188] sm:$0xf]
      %v2420 = vld [vmem:[%s1 + $0x18c] sm:$0xf]
      %v2421 = vld [vmem:[%s1 + $0x190] sm:$0xf]
      %v2422 = vld [vmem:[%s1 + $0x194] sm:$0xf]
      %v2423 = vld [vmem:[%s1 + $0x198] sm:$0xf]
      %v2424 = vld [vmem:[%s1 + $0x19c] sm:$0xf]
      %v2425 = vld [vmem:[%s1 + $0x1a0] sm:$0xf]
      %v2426 = vld [vmem:[%s1 + $0x1a4] sm:$0xf]
      %v2427 = vld [vmem:[%s1 + $0x1a8] sm:$0xf]
      %v2428 = vld [vmem:[%s1 + $0x1ac] sm:$0xf]
      %v2429 = vld [vmem:[%s1 + $0x1b0] sm:$0xf]
      %v2430 = vld [vmem:[%s1 + $0x1b4] sm:$0xf]
      %v2431 = vld [vmem:[%s1 + $0x1b8] sm:$0xf]
      %v2432 = vld [vmem:[%s1 + $0x1bc] sm:$0xf]
      %v2433 = vld [vmem:[%s1 + $0x1c0] sm:$0xf]
      %v2434 = vld [vmem:[%s1 + $0x1c4] sm:$0xf]
      %v2435 = vld [vmem:[%s1 + $0x1c8] sm:$0xf]
      %v2436 = vld [vmem:[%s1 + $0x1cc] sm:$0xf]
      %v2437 = vld [vmem:[%s1 + $0x1d0] sm:$0xf]
      %v2438 = vld [vmem:[%s1 + $0x1d4] sm:$0xf]
      %v2439 = vld [vmem:[%s1 + $0x1d8] sm:$0xf]
      %v2440 = vld [vmem:[%s1 + $0x1dc] sm:$0xf]
      %v2441 = vld [vmem:[%s1 + $0x1e0] sm:$0xf]
      %v2442 = vld [vmem:[%s1 + $0x1e4] sm:$0xf]
      %v2443 = vld [vmem:[%s1 + $0x1e8] sm:$0xf]
      %v2444 = vld [vmem:[%s1 + $0x1ec] sm:$0xf]
      %v2445 = vld [vmem:[%s1 + $0x1f0] sm:$0xf]
      %v2446 = vld [vmem:[%s1 + $0x1f4] sm:$0xf]
      %v2447 = vld [vmem:[%s1 + $0x1f8] sm:$0xf]
      %v2448 = vld [vmem:[%s1 + $0x1fc] sm:$0xf]
      %v2449 = vld [vmem:[%s1 + $0x200] sm:$0xf]
      %v2450 = vld [vmem:[%s1 + $0x204] sm:$0xf]
      %v2451 = vld [vmem:[%s1 + $0x208] sm:$0xf]
      %v2452 = vld [vmem:[%s1 + $0x20c] sm:$0xf]
      %v2453 = vld [vmem:[%s1 + $0x210] sm:$0xf]
      %v2454 = vld [vmem:[%s1 + $0x214] sm:$0xf]
      %v2455 = vld [vmem:[%s1 + $0x218] sm:$0xf]
      %v2456 = vld [vmem:[%s1 + $0x21c] sm:$0xf]
      %v2457 = vld [vmem:[%s1 + $0x220] sm:$0xf]
      %v2458 = vld [vmem:[%s1 + $0x224] sm:$0xf]
      %v2459 = vld [vmem:[%s1 + $0x228] sm:$0xf]
      %v2460 = vld [vmem:[%s1 + $0x22c] sm:$0xf]
      %v2461 = vld [vmem:[%s1 + $0x230] sm:$0xf]
      %v2462 = vld [vmem:[%s1 + $0x234] sm:$0xf]
      %v2463 = vld [vmem:[%s1 + $0x238] sm:$0xf]
      %v2464 = vld [vmem:[%s1 + $0x23c] sm:$0xf]
      %v2625 = vunpack.c.l.b16 %v2161
      %v2626 = vunpack.c.h.b16 %v2161
      %v2627 = vunpack.c.l.b16 %v2162
      %v2628 = vunpack.c.h.b16 %v2162
      %v2629 = vunpack.c.l.b16 %v2163
      %v2630 = vunpack.c.h.b16 %v2163
      %v2631 = vunpack.c.l.b16 %v2164
      %v2632 = vunpack.c.h.b16 %v2164
      %v2633 = vunpack.c.l.b16 %v2165
      %v2634 = vunpack.c.l.b16 %v2166
      %v2635 = vunpack.c.h.b16 %v2166
      %v2636 = vunpack.c.l.b16 %v2167
      %v2637 = vunpack.c.h.b16 %v2167
      %v2638 = vunpack.c.l.b16 %v2168
      %v2639 = vunpack.c.h.b16 %v2168
      %v2640 = vunpack.c.l.b16 %v2169
      %v2641 = vunpack.c.h.b16 %v2169
      %v2642 = vunpack.c.l.b16 %v2170
      %v2643 = vunpack.c.l.b16 %v2171
      %v2644 = vunpack.c.h.b16 %v2171
      %v2645 = vunpack.c.l.b16 %v2172
      %v2646 = vunpack.c.h.b16 %v2172
      %v2647 = vunpack.c.l.b16 %v2173
      %v2648 = vunpack.c.h.b16 %v2173
      %v2649 = vunpack.c.l.b16 %v2174
      %v2650 = vunpack.c.h.b16 %v2174
      %v2651 = vunpack.c.l.b16 %v2175
      %v2652 = vunpack.c.l.b16 %v2176
      %v2653 = vunpack.c.h.b16 %v2176
      %v2654 = vunpack.c.l.b16 %v2177
      %v2655 = vunpack.c.h.b16 %v2177
      %v2656 = vunpack.c.l.b16 %v2178
      %v2657 = vunpack.c.h.b16 %v2178
      %v2658 = vunpack.c.l.b16 %v2179
      %v2659 = vunpack.c.h.b16 %v2179
      %v2660 = vunpack.c.l.b16 %v2180
      %v2661 = vunpack.c.l.b16 %v2181
      %v2662 = vunpack.c.h.b16 %v2181
      %v2663 = vunpack.c.l.b16 %v2182
      %v2664 = vunpack.c.h.b16 %v2182
      %v2665 = vunpack.c.l.b16 %v2183
      %v2666 = vunpack.c.h.b16 %v2183
      %v2667 = vunpack.c.l.b16 %v2184
      %v2668 = vunpack.c.h.b16 %v2184
      %v2669 = vunpack.c.l.b16 %v2185
      %v2670 = vunpack.c.l.b16 %v2186
      %v2671 = vunpack.c.h.b16 %v2186
      %v2672 = vunpack.c.l.b16 %v2187
      %v2673 = vunpack.c.h.b16 %v2187
      %v2674 = vunpack.c.l.b16 %v2188
      %v2675 = vunpack.c.h.b16 %v2188
      %v2676 = vunpack.c.l.b16 %v2189
      %v2677 = vunpack.c.h.b16 %v2189
      %v2678 = vunpack.c.l.b16 %v2190
      %v2679 = vunpack.c.l.b16 %v2191
      %v2680 = vunpack.c.h.b16 %v2191
      %v2681 = vunpack.c.l.b16 %v2192
      %v2682 = vunpack.c.h.b16 %v2192
      %v2683 = vunpack.c.l.b16 %v2193
      %v2684 = vunpack.c.h.b16 %v2193
      %v2685 = vunpack.c.l.b16 %v2194
      %v2686 = vunpack.c.h.b16 %v2194
      %v2687 = vunpack.c.l.b16 %v2195
      %v2688 = vunpack.c.l.b16 %v2196
      %v2689 = vunpack.c.h.b16 %v2196
      %v2690 = vunpack.c.l.b16 %v2197
      %v2691 = vunpack.c.h.b16 %v2197
      %v2692 = vunpack.c.l.b16 %v2198
      %v2693 = vunpack.c.h.b16 %v2198
      %v2694 = vunpack.c.l.b16 %v2199
      %v2695 = vunpack.c.h.b16 %v2199
      %v2696 = vunpack.c.l.b16 %v2200
      %v2697 = vunpack.c.l.b16 %v2201
      %v2698 = vunpack.c.h.b16 %v2201
      %v2699 = vunpack.c.l.b16 %v2202
      %v2700 = vunpack.c.h.b16 %v2202
      %v2701 = vunpack.c.l.b16 %v2203
      %v2702 = vunpack.c.h.b16 %v2203
      %v2703 = vunpack.c.l.b16 %v2204
      %v2704 = vunpack.c.h.b16 %v2204
      %v2705 = vunpack.c.l.b16 %v2205
      %v2706 = vunpack.c.l.b16 %v2206
      %v2707 = vunpack.c.h.b16 %v2206
      %v2708 = vunpack.c.l.b16 %v2207
      %v2709 = vunpack.c.h.b16 %v2207
      %v2710 = vunpack.c.l.b16 %v2208
      %v2711 = vunpack.c.h.b16 %v2208
      %v2712 = vunpack.c.l.b16 %v2209
      %v2713 = vunpack.c.h.b16 %v2209
      %v2714 = vunpack.c.l.b16 %v2210
      %v2715 = vunpack.c.l.b16 %v2211
      %v2716 = vunpack.c.h.b16 %v2211
      %v2717 = vunpack.c.l.b16 %v2212
      %v2718 = vunpack.c.h.b16 %v2212
      %v2719 = vunpack.c.l.b16 %v2213
      %v2720 = vunpack.c.h.b16 %v2213
      %v2721 = vunpack.c.l.b16 %v2214
      %v2722 = vunpack.c.h.b16 %v2214
      %v2723 = vunpack.c.l.b16 %v2215
      %v2724 = vunpack.c.l.b16 %v2216
      %v2725 = vunpack.c.h.b16 %v2216
      %v2726 = vunpack.c.l.b16 %v2217
      %v2727 = vunpack.c.h.b16 %v2217
      %v2728 = vunpack.c.l.b16 %v2218
      %v2729 = vunpack.c.h.b16 %v2218
      %v2730 = vunpack.c.l.b16 %v2219
      %v2731 = vunpack.c.h.b16 %v2219
      %v2732 = vunpack.c.l.b16 %v2220
      %v2733 = vunpack.c.l.b16 %v2221
      %v2734 = vunpack.c.h.b16 %v2221
      %v2735 = vunpack.c.l.b16 %v2222
      %v2736 = vunpack.c.h.b16 %v2222
      %v2737 = vunpack.c.l.b16 %v2223
      %v2738 = vunpack.c.h.b16 %v2223
      %v2739 = vunpack.c.l.b16 %v2224
      %v2740 = vunpack.c.h.b16 %v2224
      %v2741 = vunpack.c.l.b16 %v2225
      %v2742 = vunpack.c.l.b16 %v2226
      %v2743 = vunpack.c.h.b16 %v2226
      %v2744 = vunpack.c.l.b16 %v2227
      %v2745 = vunpack.c.h.b16 %v2227
      %v2746 = vunpack.c.l.b16 %v2228
      %v2747 = vunpack.c.h.b16 %v2228
      %v2748 = vunpack.c.l.b16 %v2229
      %v2749 = vunpack.c.h.b16 %v2229
      %v2750 = vunpack.c.l.b16 %v2230
      %v2751 = vunpack.c.l.b16 %v2231
      %v2752 = vunpack.c.h.b16 %v2231
      %v2753 = vunpack.c.l.b16 %v2232
      %v2754 = vunpack.c.h.b16 %v2232
      %v2755 = vunpack.c.l.b16 %v2233
      %v2756 = vunpack.c.h.b16 %v2233
      %v2757 = vunpack.c.l.b16 %v2234
      %v2758 = vunpack.c.h.b16 %v2234
      %v2759 = vunpack.c.l.b16 %v2235
      %v2760 = vunpack.c.l.b16 %v2236
      %v2761 = vunpack.c.h.b16 %v2236
      %v2762 = vunpack.c.l.b16 %v2237
      %v2763 = vunpack.c.h.b16 %v2237
      %v2764 = vunpack.c.l.b16 %v2238
      %v2765 = vunpack.c.h.b16 %v2238
      %v2766 = vunpack.c.l.b16 %v2239
      %v2767 = vunpack.c.h.b16 %v2239
      %v2768 = vunpack.c.l.b16 %v2240
      %v2769 = vunpack.c.l.b16 %v2241
      %v2770 = vunpack.c.h.b16 %v2241
      %v2771 = vunpack.c.l.b16 %v2242
      %v2772 = vunpack.c.h.b16 %v2242
      %v2773 = vunpack.c.l.b16 %v2243
      %v2774 = vunpack.c.h.b16 %v2243
      %v2775 = vunpack.c.l.b16 %v2244
      %v2776 = vunpack.c.h.b16 %v2244
      %v2777 = vunpack.c.l.b16 %v2245
      %v2778 = vunpack.c.l.b16 %v2246
      %v2779 = vunpack.c.h.b16 %v2246
      %v2780 = vunpack.c.l.b16 %v2247
      %v2781 = vunpack.c.h.b16 %v2247
      %v2782 = vunpack.c.l.b16 %v2248
      %v2783 = vunpack.c.h.b16 %v2248
      %v2784 = vunpack.c.l.b16 %v2249
      %v2785 = vunpack.c.h.b16 %v2249
      %v2786 = vunpack.c.l.b16 %v2250
      %v2787 = vunpack.c.l.b16 %v2251
      %v2788 = vunpack.c.h.b16 %v2251
      %v2789 = vunpack.c.l.b16 %v2252
      %v2790 = vunpack.c.h.b16 %v2252
      %v2791 = vunpack.c.l.b16 %v2253
      %v2792 = vunpack.c.h.b16 %v2253
      %v2793 = vunpack.c.l.b16 %v2254
      %v2794 = vunpack.c.h.b16 %v2254
      %v2795 = vunpack.c.l.b16 %v2255
      %v2796 = vunpack.c.l.b16 %v2256
      %v2797 = vunpack.c.h.b16 %v2256
      %v2798 = vunpack.c.l.b16 %v2257
      %v2799 = vunpack.c.h.b16 %v2257
      %v2800 = vunpack.c.l.b16 %v2258
      %v2801 = vunpack.c.h.b16 %v2258
      %v2802 = vunpack.c.l.b16 %v2259
      %v2803 = vunpack.c.h.b16 %v2259
      %v2804 = vunpack.c.l.b16 %v2260
      %v2805 = vunpack.c.l.b16 %v2261
      %v2806 = vunpack.c.h.b16 %v2261
      %v2807 = vunpack.c.l.b16 %v2262
      %v2808 = vunpack.c.h.b16 %v2262
      %v2809 = vunpack.c.l.b16 %v2263
      %v2810 = vunpack.c.h.b16 %v2263
      %v2811 = vunpack.c.l.b16 %v2264
      %v2812 = vunpack.c.h.b16 %v2264
      %v2813 = vunpack.c.l.b16 %v2265
      %v2814 = vunpack.c.l.b16 %v2266
      %v2815 = vunpack.c.h.b16 %v2266
      %v2816 = vunpack.c.l.b16 %v2267
      %v2817 = vunpack.c.h.b16 %v2267
      %v2818 = vunpack.c.l.b16 %v2268
      %v2819 = vunpack.c.h.b16 %v2268
      %v2820 = vunpack.c.l.b16 %v2269
      %v2821 = vunpack.c.h.b16 %v2269
      %v2822 = vunpack.c.l.b16 %v2270
      %v2823 = vunpack.c.l.b16 %v2271
      %v2824 = vunpack.c.h.b16 %v2271
      %v2825 = vunpack.c.l.b16 %v2272
      %v2826 = vunpack.c.h.b16 %v2272
      %v2827 = vunpack.c.l.b16 %v2273
      %v2828 = vunpack.c.h.b16 %v2273
      %v2829 = vunpack.c.l.b16 %v2274
      %v2830 = vunpack.c.h.b16 %v2274
      %v2831 = vunpack.c.l.b16 %v2275
      %v2832 = vunpack.c.l.b16 %v2276
      %v2833 = vunpack.c.h.b16 %v2276
      %v2834 = vunpack.c.l.b16 %v2277
      %v2835 = vunpack.c.h.b16 %v2277
      %v2836 = vunpack.c.l.b16 %v2278
      %v2837 = vunpack.c.h.b16 %v2278
      %v2838 = vunpack.c.l.b16 %v2279
      %v2839 = vunpack.c.h.b16 %v2279
      %v2840 = vunpack.c.l.b16 %v2280
      %v2841 = vunpack.c.l.b16 %v2281
      %v2842 = vunpack.c.h.b16 %v2281
      %v2843 = vunpack.c.l.b16 %v2282
      %v2844 = vunpack.c.h.b16 %v2282
      %v2845 = vunpack.c.l.b16 %v2283
      %v2846 = vunpack.c.h.b16 %v2283
      %v2847 = vunpack.c.l.b16 %v2284
      %v2848 = vunpack.c.h.b16 %v2284
      %v2849 = vunpack.c.l.b16 %v2285
      %v2850 = vunpack.c.l.b16 %v2286
      %v2851 = vunpack.c.h.b16 %v2286
      %v2852 = vunpack.c.l.b16 %v2287
      %v2853 = vunpack.c.h.b16 %v2287
      %v2854 = vunpack.c.l.b16 %v2288
      %v2855 = vunpack.c.h.b16 %v2288
      %v2856 = vunpack.c.l.b16 %v2289
      %v2857 = vunpack.c.h.b16 %v2289
      %v2858 = vunpack.c.l.b16 %v2290
      %v2859 = vunpack.c.l.b16 %v2291
      %v2860 = vunpack.c.h.b16 %v2291
      %v2861 = vunpack.c.l.b16 %v2292
      %v2862 = vunpack.c.h.b16 %v2292
      %v2863 = vunpack.c.l.b16 %v2293
      %v2864 = vunpack.c.h.b16 %v2293
      %v2865 = vunpack.c.l.b16 %v2294
      %v2866 = vunpack.c.h.b16 %v2294
      %v2867 = vunpack.c.l.b16 %v2295
      %v2868 = vunpack.c.l.b16 %v2296
      %v2869 = vunpack.c.h.b16 %v2296
      %v2870 = vunpack.c.l.b16 %v2297
      %v2871 = vunpack.c.h.b16 %v2297
      %v2872 = vunpack.c.l.b16 %v2298
      %v2873 = vunpack.c.h.b16 %v2298
      %v2874 = vunpack.c.l.b16 %v2299
      %v2875 = vunpack.c.h.b16 %v2299
      %v2876 = vunpack.c.l.b16 %v2300
      %v2877 = vunpack.c.l.b16 %v2301
      %v2878 = vunpack.c.h.b16 %v2301
      %v2879 = vunpack.c.l.b16 %v2302
      %v2880 = vunpack.c.h.b16 %v2302
      %v2881 = vunpack.c.l.b16 %v2303
      %v2882 = vunpack.c.h.b16 %v2303
      %v2883 = vunpack.c.l.b16 %v2304
      %v2884 = vunpack.c.h.b16 %v2304
      %v2885 = vunpack.c.l.b16 %v2305
      %v2886 = vunpack.c.l.b16 %v2306
      %v2887 = vunpack.c.h.b16 %v2306
      %v2888 = vunpack.c.l.b16 %v2307
      %v2889 = vunpack.c.h.b16 %v2307
      %v2890 = vunpack.c.l.b16 %v2308
      %v2891 = vunpack.c.h.b16 %v2308
      %v2892 = vunpack.c.l.b16 %v2309
      %v2893 = vunpack.c.h.b16 %v2309
      %v2894 = vunpack.c.l.b16 %v2310
      %v2895 = vunpack.c.l.b16 %v2311
      %v2896 = vunpack.c.h.b16 %v2311
      %v2897 = vunpack.c.l.b16 %v2312
      %v2898 = vunpack.c.h.b16 %v2312
      %v2899 = vunpack.c.l.b16 %v2313
      %v2900 = vunpack.c.h.b16 %v2313
      %v2901 = vunpack.c.l.b16 %v2314
      %v2902 = vunpack.c.h.b16 %v2314
      %v2903 = vunpack.c.l.b16 %v2315
      %v2904 = vunpack.c.l.b16 %v2316
      %v2905 = vunpack.c.h.b16 %v2316
      %v2906 = vunpack.c.l.b16 %v2317
      %v2907 = vunpack.c.h.b16 %v2317
      %v2908 = vunpack.c.l.b16 %v2318
      %v2909 = vunpack.c.h.b16 %v2318
      %v2910 = vunpack.c.l.b16 %v2319
      %v2911 = vunpack.c.h.b16 %v2319
      %v2912 = vunpack.c.l.b16 %v2320
      %v2913 = vpack.c.b16 %v2634, %v2625
      %v2914 = vpack.c.b16 %v2635, %v2626
      %v2915 = vpack.c.b16 %v2636, %v2627
      %v2916 = vpack.c.b16 %v2637, %v2628
      %v2917 = vpack.c.b16 %v2638, %v2629
      %v2918 = vpack.c.b16 %v2639, %v2630
      %v2919 = vpack.c.b16 %v2640, %v2631
      %v2920 = vpack.c.b16 %v2641, %v2632
      %v2921 = vpack.c.b16 %v2642, %v2633
      %v2922 = vpack.c.b16 %v2652, %v2643
      %v2923 = vpack.c.b16 %v2653, %v2644
      %v2924 = vpack.c.b16 %v2654, %v2645
      %v2925 = vpack.c.b16 %v2655, %v2646
      %v2926 = vpack.c.b16 %v2656, %v2647
      %v2927 = vpack.c.b16 %v2657, %v2648
      %v2928 = vpack.c.b16 %v2658, %v2649
      %v2929 = vpack.c.b16 %v2659, %v2650
      %v2930 = vpack.c.b16 %v2660, %v2651
      %v2931 = vpack.c.b16 %v2670, %v2661
      %v2932 = vpack.c.b16 %v2671, %v2662
      %v2933 = vpack.c.b16 %v2672, %v2663
      %v2934 = vpack.c.b16 %v2673, %v2664
      %v2935 = vpack.c.b16 %v2674, %v2665
      %v2936 = vpack.c.b16 %v2675, %v2666
      %v2937 = vpack.c.b16 %v2676, %v2667
      %v2938 = vpack.c.b16 %v2677, %v2668
      %v2939 = vpack.c.b16 %v2678, %v2669
      %v2940 = vpack.c.b16 %v2688, %v2679
      %v2941 = vpack.c.b16 %v2689, %v2680
      %v2942 = vpack.c.b16 %v2690, %v2681
      %v2943 = vpack.c.b16 %v2691, %v2682
      %v2944 = vpack.c.b16 %v2692, %v2683
      %v2945 = vpack.c.b16 %v2693, %v2684
      %v2946 = vpack.c.b16 %v2694, %v2685
      %v2947 = vpack.c.b16 %v2695, %v2686
      %v2948 = vpack.c.b16 %v2696, %v2687
      %v2949 = vpack.c.b16 %v2706, %v2697
      %v2950 = vpack.c.b16 %v2707, %v2698
      %v2951 = vpack.c.b16 %v2708, %v2699
      %v2952 = vpack.c.b16 %v2709, %v2700
      %v2953 = vpack.c.b16 %v2710, %v2701
      %v2954 = vpack.c.b16 %v2711, %v2702
      %v2955 = vpack.c.b16 %v2712, %v2703
      %v2956 = vpack.c.b16 %v2713, %v2704
      %v2957 = vpack.c.b16 %v2714, %v2705
      %v2958 = vpack.c.b16 %v2724, %v2715
      %v2959 = vpack.c.b16 %v2725, %v2716
      %v2960 = vpack.c.b16 %v2726, %v2717
      %v2961 = vpack.c.b16 %v2727, %v2718
      %v2962 = vpack.c.b16 %v2728, %v2719
      %v2963 = vpack.c.b16 %v2729, %v2720
      %v2964 = vpack.c.b16 %v2730, %v2721
      %v2965 = vpack.c.b16 %v2731, %v2722
      %v2966 = vpack.c.b16 %v2732, %v2723
      %v2967 = vpack.c.b16 %v2742, %v2733
      %v2968 = vpack.c.b16 %v2743, %v2734
      %v2969 = vpack.c.b16 %v2744, %v2735
      %v2970 = vpack.c.b16 %v2745, %v2736
      %v2971 = vpack.c.b16 %v2746, %v2737
      %v2972 = vpack.c.b16 %v2747, %v2738
      %v2973 = vpack.c.b16 %v2748, %v2739
      %v2974 = vpack.c.b16 %v2749, %v2740
      %v2975 = vpack.c.b16 %v2750, %v2741
      %v2976 = vpack.c.b16 %v2760, %v2751
      %v2977 = vpack.c.b16 %v2761, %v2752
      %v2978 = vpack.c.b16 %v2762, %v2753
      %v2979 = vpack.c.b16 %v2763, %v2754
      %v2980 = vpack.c.b16 %v2764, %v2755
      %v2981 = vpack.c.b16 %v2765, %v2756
      %v2982 = vpack.c.b16 %v2766, %v2757
      %v2983 = vpack.c.b16 %v2767, %v2758
      %v2984 = vpack.c.b16 %v2768, %v2759
      %v2985 = vpack.c.b16 %v2778, %v2769
      %v2986 = vpack.c.b16 %v2779, %v2770
      %v2987 = vpack.c.b16 %v2780, %v2771
      %v2988 = vpack.c.b16 %v2781, %v2772
      %v2989 = vpack.c.b16 %v2782, %v2773
      %v2990 = vpack.c.b16 %v2783, %v2774
      %v2991 = vpack.c.b16 %v2784, %v2775
      %v2992 = vpack.c.b16 %v2785, %v2776
      %v2993 = vpack.c.b16 %v2786, %v2777
      %v2994 = vpack.c.b16 %v2796, %v2787
      %v2995 = vpack.c.b16 %v2797, %v2788
      %v2996 = vpack.c.b16 %v2798, %v2789
      %v2997 = vpack.c.b16 %v2799, %v2790
      %v2998 = vpack.c.b16 %v2800, %v2791
      %v2999 = vpack.c.b16 %v2801, %v2792
      %v3000 = vpack.c.b16 %v2802, %v2793
      %v3001 = vpack.c.b16 %v2803, %v2794
      %v3002 = vpack.c.b16 %v2804, %v2795
      %v3003 = vpack.c.b16 %v2814, %v2805
      %v3004 = vpack.c.b16 %v2815, %v2806
      %v3005 = vpack.c.b16 %v2816, %v2807
      %v3006 = vpack.c.b16 %v2817, %v2808
      %v3007 = vpack.c.b16 %v2818, %v2809
      %v3008 = vpack.c.b16 %v2819, %v2810
      %v3009 = vpack.c.b16 %v2820, %v2811
      %v3010 = vpack.c.b16 %v2821, %v2812
      %v3011 = vpack.c.b16 %v2822, %v2813
      %v3012 = vpack.c.b16 %v2832, %v2823
      %v3013 = vpack.c.b16 %v2833, %v2824
      %v3014 = vpack.c.b16 %v2834, %v2825
      %v3015 = vpack.c.b16 %v2835, %v2826
      %v3016 = vpack.c.b16 %v2836, %v2827
      %v3017 = vpack.c.b16 %v2837, %v2828
      %v3018 = vpack.c.b16 %v2838, %v2829
      %v3019 = vpack.c.b16 %v2839, %v2830
      %v3020 = vpack.c.b16 %v2840, %v2831
      %v3021 = vpack.c.b16 %v2850, %v2841
      %v3022 = vpack.c.b16 %v2851, %v2842
      %v3023 = vpack.c.b16 %v2852, %v2843
      %v3024 = vpack.c.b16 %v2853, %v2844
      %v3025 = vpack.c.b16 %v2854, %v2845
      %v3026 = vpack.c.b16 %v2855, %v2846
      %v3027 = vpack.c.b16 %v2856, %v2847
      %v3028 = vpack.c.b16 %v2857, %v2848
      %v3029 = vpack.c.b16 %v2858, %v2849
      %v3030 = vpack.c.b16 %v2868, %v2859
      %v3031 = vpack.c.b16 %v2869, %v2860
      %v3032 = vpack.c.b16 %v2870, %v2861
      %v3033 = vpack.c.b16 %v2871, %v2862
      %v3034 = vpack.c.b16 %v2872, %v2863
      %v3035 = vpack.c.b16 %v2873, %v2864
      %v3036 = vpack.c.b16 %v2874, %v2865
      %v3037 = vpack.c.b16 %v2875, %v2866
      %v3038 = vpack.c.b16 %v2876, %v2867
      %v3039 = vpack.c.b16 %v2886, %v2877
      %v3040 = vpack.c.b16 %v2887, %v2878
      %v3041 = vpack.c.b16 %v2888, %v2879
      %v3042 = vpack.c.b16 %v2889, %v2880
      %v3043 = vpack.c.b16 %v2890, %v2881
      %v3044 = vpack.c.b16 %v2891, %v2882
      %v3045 = vpack.c.b16 %v2892, %v2883
      %v3046 = vpack.c.b16 %v2893, %v2884
      %v3047 = vpack.c.b16 %v2894, %v2885
      %v3048 = vpack.c.b16 %v2904, %v2895
      %v3049 = vpack.c.b16 %v2905, %v2896
      %v3050 = vpack.c.b16 %v2906, %v2897
      %v3051 = vpack.c.b16 %v2907, %v2898
      %v3052 = vpack.c.b16 %v2908, %v2899
      %v3053 = vpack.c.b16 %v2909, %v2900
      %v3054 = vpack.c.b16 %v2910, %v2901
      %v3055 = vpack.c.b16 %v2911, %v2902
      %v3056 = vpack.c.b16 %v2912, %v2903
      %v3345 = vunpack.c.l.b16 %v2321
      %v3346 = vunpack.c.l.b16 %v2322
      %v3347 = vunpack.c.l.b16 %v2323
      %v3348 = vunpack.c.l.b16 %v2324
      %v3349 = vunpack.c.l.b16 %v2325
      %v3350 = vunpack.c.l.b16 %v2326
      %v3351 = vunpack.c.l.b16 %v2327
      %v3352 = vunpack.c.l.b16 %v2328
      %v3353 = vunpack.c.l.b16 %v2329
      %v3354 = vunpack.c.l.b16 %v2330
      %v3355 = vunpack.c.l.b16 %v2331
      %v3356 = vunpack.c.l.b16 %v2332
      %v3357 = vunpack.c.l.b16 %v2333
      %v3358 = vunpack.c.l.b16 %v2334
      %v3359 = vunpack.c.l.b16 %v2335
      %v3360 = vunpack.c.l.b16 %v2336
      %v3361 = vunpack.c.l.b16 %v2337
      %v3362 = vunpack.c.l.b16 %v2338
      %v3363 = vunpack.c.l.b16 %v2339
      %v3364 = vunpack.c.l.b16 %v2340
      %v3365 = vunpack.c.l.b16 %v2341
      %v3366 = vunpack.c.l.b16 %v2342
      %v3367 = vunpack.c.l.b16 %v2343
      %v3368 = vunpack.c.l.b16 %v2344
      %v3369 = vunpack.c.l.b16 %v2345
      %v3370 = vunpack.c.l.b16 %v2346
      %v3371 = vunpack.c.l.b16 %v2347
      %v3372 = vunpack.c.l.b16 %v2348
      %v3373 = vunpack.c.l.b16 %v2349
      %v3374 = vunpack.c.l.b16 %v2350
      %v3375 = vunpack.c.l.b16 %v2351
      %v3376 = vunpack.c.l.b16 %v2352
      %v3377 = vunpack.c.l.b16 %v2353
      %v3378 = vunpack.c.l.b16 %v2354
      %v3379 = vunpack.c.l.b16 %v2355
      %v3380 = vunpack.c.l.b16 %v2356
      %v3381 = vunpack.c.l.b16 %v2357
      %v3382 = vunpack.c.l.b16 %v2358
      %v3383 = vunpack.c.l.b16 %v2359
      %v3384 = vunpack.c.l.b16 %v2360
      %v3385 = vunpack.c.l.b16 %v2361
      %v3386 = vunpack.c.l.b16 %v2362
      %v3387 = vunpack.c.l.b16 %v2363
      %v3388 = vunpack.c.l.b16 %v2364
      %v3389 = vunpack.c.l.b16 %v2365
      %v3390 = vunpack.c.l.b16 %v2366
      %v3391 = vunpack.c.l.b16 %v2367
      %v3392 = vunpack.c.l.b16 %v2368
      %v3393 = vunpack.c.l.b16 %v2369
      %v3394 = vunpack.c.l.b16 %v2370
      %v3395 = vunpack.c.l.b16 %v2371
      %v3396 = vunpack.c.l.b16 %v2372
      %v3397 = vunpack.c.l.b16 %v2373
      %v3398 = vunpack.c.l.b16 %v2374
      %v3399 = vunpack.c.l.b16 %v2375
      %v3400 = vunpack.c.l.b16 %v2376
      %v3401 = vunpack.c.l.b16 %v2377
      %v3402 = vunpack.c.l.b16 %v2378
      %v3403 = vunpack.c.l.b16 %v2379
      %v3404 = vunpack.c.l.b16 %v2380
      %v3405 = vunpack.c.l.b16 %v2381
      %v3406 = vunpack.c.l.b16 %v2382
      %v3407 = vunpack.c.l.b16 %v2383
      %v3408 = vunpack.c.l.b16 %v2384
      %v3409 = vunpack.c.l.b16 %v2385
      %v3410 = vunpack.c.l.b16 %v2386
      %v3411 = vunpack.c.l.b16 %v2387
      %v3412 = vunpack.c.l.b16 %v2388
      %v3413 = vunpack.c.l.b16 %v2389
      %v3414 = vunpack.c.l.b16 %v2390
      %v3415 = vunpack.c.l.b16 %v2391
      %v3416 = vunpack.c.l.b16 %v2392
      %v3417 = vunpack.c.l.b16 %v2393
      %v3418 = vunpack.c.l.b16 %v2394
      %v3419 = vunpack.c.l.b16 %v2395
      %v3420 = vunpack.c.l.b16 %v2396
      %v3421 = vunpack.c.l.b16 %v2397
      %v3422 = vunpack.c.l.b16 %v2398
      %v3423 = vunpack.c.l.b16 %v2399
      %v3424 = vunpack.c.l.b16 %v2400
      %v3425 = vunpack.c.l.b16 %v2401
      %v3426 = vunpack.c.l.b16 %v2402
      %v3427 = vunpack.c.l.b16 %v2403
      %v3428 = vunpack.c.l.b16 %v2404
      %v3429 = vunpack.c.l.b16 %v2405
      %v3430 = vunpack.c.l.b16 %v2406
      %v3431 = vunpack.c.l.b16 %v2407
      %v3432 = vunpack.c.l.b16 %v2408
      %v3433 = vunpack.c.l.b16 %v2409
      %v3434 = vunpack.c.l.b16 %v2410
      %v3435 = vunpack.c.l.b16 %v2411
      %v3436 = vunpack.c.l.b16 %v2412
      %v3437 = vunpack.c.l.b16 %v2413
      %v3438 = vunpack.c.l.b16 %v2414
      %v3439 = vunpack.c.l.b16 %v2415
      %v3440 = vunpack.c.l.b16 %v2416
      %v3441 = vunpack.c.l.b16 %v2417
      %v3442 = vunpack.c.l.b16 %v2418
      %v3443 = vunpack.c.l.b16 %v2419
      %v3444 = vunpack.c.l.b16 %v2420
      %v3445 = vunpack.c.l.b16 %v2421
      %v3446 = vunpack.c.l.b16 %v2422
      %v3447 = vunpack.c.l.b16 %v2423
      %v3448 = vunpack.c.l.b16 %v2424
      %v3449 = vunpack.c.l.b16 %v2425
      %v3450 = vunpack.c.l.b16 %v2426
      %v3451 = vunpack.c.l.b16 %v2427
      %v3452 = vunpack.c.l.b16 %v2428
      %v3453 = vunpack.c.l.b16 %v2429
      %v3454 = vunpack.c.l.b16 %v2430
      %v3455 = vunpack.c.l.b16 %v2431
      %v3456 = vunpack.c.l.b16 %v2432
      %v3457 = vunpack.c.l.b16 %v2433
      %v3458 = vunpack.c.l.b16 %v2434
      %v3459 = vunpack.c.l.b16 %v2435
      %v3460 = vunpack.c.l.b16 %v2436
      %v3461 = vunpack.c.l.b16 %v2437
      %v3462 = vunpack.c.l.b16 %v2438
      %v3463 = vunpack.c.l.b16 %v2439
      %v3464 = vunpack.c.l.b16 %v2440
      %v3465 = vunpack.c.l.b16 %v2441
      %v3466 = vunpack.c.l.b16 %v2442
      %v3467 = vunpack.c.l.b16 %v2443
      %v3468 = vunpack.c.l.b16 %v2444
      %v3469 = vunpack.c.l.b16 %v2445
      %v3470 = vunpack.c.l.b16 %v2446
      %v3471 = vunpack.c.l.b16 %v2447
      %v3472 = vunpack.c.l.b16 %v2448
      %v3473 = vunpack.c.l.b16 %v2449
      %v3474 = vunpack.c.l.b16 %v2450
      %v3475 = vunpack.c.l.b16 %v2451
      %v3476 = vunpack.c.l.b16 %v2452
      %v3477 = vunpack.c.l.b16 %v2453
      %v3478 = vunpack.c.l.b16 %v2454
      %v3479 = vunpack.c.l.b16 %v2455
      %v3480 = vunpack.c.l.b16 %v2456
      %v3481 = vunpack.c.l.b16 %v2457
      %v3482 = vunpack.c.l.b16 %v2458
      %v3483 = vunpack.c.l.b16 %v2459
      %v3484 = vunpack.c.l.b16 %v2460
      %v3485 = vunpack.c.l.b16 %v2461
      %v3486 = vunpack.c.l.b16 %v2462
      %v3487 = vunpack.c.l.b16 %v2463
      %v3488 = vunpack.c.l.b16 %v2464
      %v3489 = vpack.c.b16 %v3346, %v3345
      %v3490 = vpack.c.b16 %v3348, %v3347
      %v3491 = vpack.c.b16 %v3350, %v3349
      %v3492 = vpack.c.b16 %v3352, %v3351
      %v3493 = vpack.c.b16 %v3354, %v3353
      %v3494 = vpack.c.b16 %v3356, %v3355
      %v3495 = vpack.c.b16 %v3358, %v3357
      %v3496 = vpack.c.b16 %v3360, %v3359
      %v3497 = vpack.c.b16 %v3362, %v3361
      %v3498 = vpack.c.b16 %v3364, %v3363
      %v3499 = vpack.c.b16 %v3366, %v3365
      %v3500 = vpack.c.b16 %v3368, %v3367
      %v3501 = vpack.c.b16 %v3370, %v3369
      %v3502 = vpack.c.b16 %v3372, %v3371
      %v3503 = vpack.c.b16 %v3374, %v3373
      %v3504 = vpack.c.b16 %v3376, %v3375
      %v3505 = vpack.c.b16 %v3378, %v3377
      %v3506 = vpack.c.b16 %v3380, %v3379
      %v3507 = vpack.c.b16 %v3382, %v3381
      %v3508 = vpack.c.b16 %v3384, %v3383
      %v3509 = vpack.c.b16 %v3386, %v3385
      %v3510 = vpack.c.b16 %v3388, %v3387
      %v3511 = vpack.c.b16 %v3390, %v3389
      %v3512 = vpack.c.b16 %v3392, %v3391
      %v3513 = vpack.c.b16 %v3394, %v3393
      %v3514 = vpack.c.b16 %v3396, %v3395
      %v3515 = vpack.c.b16 %v3398, %v3397
      %v3516 = vpack.c.b16 %v3400, %v3399
      %v3517 = vpack.c.b16 %v3402, %v3401
      %v3518 = vpack.c.b16 %v3404, %v3403
      %v3519 = vpack.c.b16 %v3406, %v3405
      %v3520 = vpack.c.b16 %v3408, %v3407
      %v3521 = vpack.c.b16 %v3410, %v3409
      %v3522 = vpack.c.b16 %v3412, %v3411
      %v3523 = vpack.c.b16 %v3414, %v3413
      %v3524 = vpack.c.b16 %v3416, %v3415
      %v3525 = vpack.c.b16 %v3418, %v3417
      %v3526 = vpack.c.b16 %v3420, %v3419
      %v3527 = vpack.c.b16 %v3422, %v3421
      %v3528 = vpack.c.b16 %v3424, %v3423
      %v3529 = vpack.c.b16 %v3426, %v3425
      %v3530 = vpack.c.b16 %v3428, %v3427
      %v3531 = vpack.c.b16 %v3430, %v3429
      %v3532 = vpack.c.b16 %v3432, %v3431
      %v3533 = vpack.c.b16 %v3434, %v3433
      %v3534 = vpack.c.b16 %v3436, %v3435
      %v3535 = vpack.c.b16 %v3438, %v3437
      %v3536 = vpack.c.b16 %v3440, %v3439
      %v3537 = vpack.c.b16 %v3442, %v3441
      %v3538 = vpack.c.b16 %v3444, %v3443
      %v3539 = vpack.c.b16 %v3446, %v3445
      %v3540 = vpack.c.b16 %v3448, %v3447
      %v3541 = vpack.c.b16 %v3450, %v3449
      %v3542 = vpack.c.b16 %v3452, %v3451
      %v3543 = vpack.c.b16 %v3454, %v3453
      %v3544 = vpack.c.b16 %v3456, %v3455
      %v3545 = vpack.c.b16 %v3458, %v3457
      %v3546 = vpack.c.b16 %v3460, %v3459
      %v3547 = vpack.c.b16 %v3462, %v3461
      %v3548 = vpack.c.b16 %v3464, %v3463
      %v3549 = vpack.c.b16 %v3466, %v3465
      %v3550 = vpack.c.b16 %v3468, %v3467
      %v3551 = vpack.c.b16 %v3470, %v3469
      %v3552 = vpack.c.b16 %v3472, %v3471
      %v3553 = vpack.c.b16 %v3474, %v3473
      %v3554 = vpack.c.b16 %v3476, %v3475
      %v3555 = vpack.c.b16 %v3478, %v3477
      %v3556 = vpack.c.b16 %v3480, %v3479
      %v3557 = vpack.c.b16 %v3482, %v3481
      %v3558 = vpack.c.b16 %v3484, %v3483
      %v3559 = vpack.c.b16 %v3486, %v3485
      %v3560 = vpack.c.b16 %v3488, %v3487
      %3633 = vmatprep.subr.bf16.mxu0 0
      %3634 = vmatpush1.bf16.msra.mxu0 %v3496
      %3635 = vmatprep.subr.bf16.mxu0 0
      %3636 = vmatpush1.bf16.msra.mxu0 %v3495
      %3637 = vmatprep.subr.bf16.mxu0 0
      %3638 = vmatpush1.bf16.msra.mxu0 %v3494
      %3639 = vmatprep.subr.bf16.mxu0 0
      %3640 = vmatpush1.bf16.msra.mxu0 %v3493
      %3641 = vmatprep.subr.bf16.mxu0 0
      %3642 = vmatpush1.bf16.msra.mxu0 %v3492
      %3643 = vmatprep.subr.bf16.mxu0 0
      %3644 = vmatpush1.bf16.msra.mxu0 %v3491
      %3645 = vmatprep.subr.bf16.mxu0 0
      %3646 = vmatpush1.bf16.msra.mxu0 %v3490
      %3647 = vmatprep.subr.bf16.mxu0 0
      %3648 = vmatpush1.bf16.msra.mxu0 %v3489
      %3649 = vmatprep.subr.bf16.mxu0 0
      %3650 = vmatpush2.bf16.msra.mxu0 %v3504
      %3651 = vmatprep.subr.bf16.mxu0 0
      %3652 = vmatpush2.bf16.msra.mxu0 %v3503
      %3653 = vmatprep.subr.bf16.mxu0 0
      %3654 = vmatpush2.bf16.msra.mxu0 %v3502
      %3655 = vmatprep.subr.bf16.mxu0 0
      %3656 = vmatpush2.bf16.msra.mxu0 %v3501
      %3657 = vmatprep.subr.bf16.mxu0 0
      %3658 = vmatpush2.bf16.msra.mxu0 %v3500
      %3659 = vmatprep.subr.bf16.mxu0 0
      %3660 = vmatpush2.bf16.msra.mxu0 %v3499
      %3661 = vmatprep.subr.bf16.mxu0 0
      %3662 = vmatpush2.bf16.msra.mxu0 %v3498
      %3663 = vmatprep.subr.bf16.mxu0 0
      %3664 = vmatpush2.bf16.msra.mxu0 %v3497
      %3665 = vmatprep.mubr.bf16.mxu0 %v2914
      %3666 = vmatmul.mubr.bf16.gmra.mxu0 %v2913
      %v3667 = vpop.f32.mrf.mxu0
      %v3668 = vadd.f32 0.0, %v3667
      %v3669 = vpop.f32.mrf.mxu0
      %v3670 = vpop.f32.mrf.mxu0
      %v3671 = vadd.f32 0.0, %v3670
      %v3672 = vpop.f32.mrf.mxu0
      %3673 = vmatprep.mubr.bf16.mxu0 %v2923
      %3674 = vmatmul.mubr.bf16.gmra.mxu0 %v2922
      %v3675 = vpop.f32.mrf.mxu0
      %v3676 = vadd.f32 0.0, %v3675
      %v3677 = vpop.f32.mrf.mxu0
      %v3678 = vpop.f32.mrf.mxu0
      %v3679 = vadd.f32 0.0, %v3678
      %v3680 = vpop.f32.mrf.mxu0
      %3681 = vmatprep.mubr.bf16.mxu0 %v2932
      %3682 = vmatmul.mubr.bf16.gmra.mxu0 %v2931
      %v3683 = vpop.f32.mrf.mxu0
      %v3684 = vadd.f32 0.0, %v3683
      %v3685 = vpop.f32.mrf.mxu0
      %v3686 = vpop.f32.mrf.mxu0
      %v3687 = vadd.f32 0.0, %v3686
      %v3688 = vpop.f32.mrf.mxu0
      %3689 = vmatprep.mubr.bf16.mxu0 %v2941
      %3690 = vmatmul.mubr.bf16.gmra.mxu0 %v2940
      %v3691 = vpop.f32.mrf.mxu0
      %v3692 = vadd.f32 0.0, %v3691
      %v3693 = vpop.f32.mrf.mxu0
      %v3694 = vpop.f32.mrf.mxu0
      %v3695 = vadd.f32 0.0, %v3694
      %v3696 = vpop.f32.mrf.mxu0
      %3697 = vmatprep.mubr.bf16.mxu0 %v2950
      %3698 = vmatmul.mubr.bf16.gmra.mxu0 %v2949
      %v3699 = vpop.f32.mrf.mxu0
      %v3700 = vadd.f32 0.0, %v3699
      %v3701 = vpop.f32.mrf.mxu0
      %v3702 = vpop.f32.mrf.mxu0
      %v3703 = vadd.f32 0.0, %v3702
      %v3704 = vpop.f32.mrf.mxu0
      %3705 = vmatprep.mubr.bf16.mxu0 %v2959
      %3706 = vmatmul.mubr.bf16.gmra.mxu0 %v2958
      %v3707 = vpop.f32.mrf.mxu0
      %v3708 = vadd.f32 0.0, %v3707
      %v3709 = vpop.f32.mrf.mxu0
      %v3710 = vpop.f32.mrf.mxu0
      %v3711 = vadd.f32 0.0, %v3710
      %v3712 = vpop.f32.mrf.mxu0
      %3713 = vmatprep.mubr.bf16.mxu0 %v2968
      %3714 = vmatmul.mubr.bf16.gmra.mxu0 %v2967
      %v3715 = vpop.f32.mrf.mxu0
      %v3716 = vadd.f32 0.0, %v3715
      %v3717 = vpop.f32.mrf.mxu0
      %v3718 = vpop.f32.mrf.mxu0
      %v3719 = vadd.f32 0.0, %v3718
      %v3720 = vpop.f32.mrf.mxu0
      %3721 = vmatprep.mubr.bf16.mxu0 %v2977
      %3722 = vmatmul.mubr.bf16.gmra.mxu0 %v2976
      %v3723 = vpop.f32.mrf.mxu0
      %v3724 = vadd.f32 0.0, %v3723
      %v3725 = vpop.f32.mrf.mxu0
      %v3726 = vpop.f32.mrf.mxu0
      %v3727 = vadd.f32 0.0, %v3726
      %v3728 = vpop.f32.mrf.mxu0
      %3729 = vmatprep.mubr.bf16.mxu0 %v2986
      %3730 = vmatmul.mubr.bf16.gmra.mxu0 %v2985
      %v3731 = vpop.f32.mrf.mxu0
      %v3732 = vadd.f32 0.0, %v3731
      %v3733 = vpop.f32.mrf.mxu0
      %v3734 = vpop.f32.mrf.mxu0
      %v3735 = vadd.f32 0.0, %v3734
      %v3736 = vpop.f32.mrf.mxu0
      %3737 = vmatprep.mubr.bf16.mxu0 %v2995
      %3738 = vmatmul.mubr.bf16.gmra.mxu0 %v2994
      %v3739 = vpop.f32.mrf.mxu0
      %v3740 = vadd.f32 0.0, %v3739
      %v3741 = vpop.f32.mrf.mxu0
      %v3742 = vpop.f32.mrf.mxu0
      %v3743 = vadd.f32 0.0, %v3742
      %v3744 = vpop.f32.mrf.mxu0
      %3745 = vmatprep.mubr.bf16.mxu0 %v3004
      %3746 = vmatmul.mubr.bf16.gmra.mxu0 %v3003
      %v3747 = vpop.f32.mrf.mxu0
      %v3748 = vadd.f32 0.0, %v3747
      %v3749 = vpop.f32.mrf.mxu0
      %v3750 = vpop.f32.mrf.mxu0
      %v3751 = vadd.f32 0.0, %v3750
      %v3752 = vpop.f32.mrf.mxu0
      %3753 = vmatprep.mubr.bf16.mxu0 %v3013
      %3754 = vmatmul.mubr.bf16.gmra.mxu0 %v3012
      %v3755 = vpop.f32.mrf.mxu0
      %v3756 = vadd.f32 0.0, %v3755
      %v3757 = vpop.f32.mrf.mxu0
      %v3758 = vpop.f32.mrf.mxu0
      %v3759 = vadd.f32 0.0, %v3758
      %v3760 = vpop.f32.mrf.mxu0
      %3761 = vmatprep.mubr.bf16.mxu0 %v3022
      %3762 = vmatmul.mubr.bf16.gmra.mxu0 %v3021
      %v3763 = vpop.f32.mrf.mxu0
      %v3764 = vadd.f32 0.0, %v3763
      %v3765 = vpop.f32.mrf.mxu0
      %v3766 = vpop.f32.mrf.mxu0
      %v3767 = vadd.f32 0.0, %v3766
      %v3768 = vpop.f32.mrf.mxu0
      %3769 = vmatprep.mubr.bf16.mxu0 %v3031
      %3770 = vmatmul.mubr.bf16.gmra.mxu0 %v3030
      %v3771 = vpop.f32.mrf.mxu0
      %v3772 = vadd.f32 0.0, %v3771
      %v3773 = vpop.f32.mrf.mxu0
      %v3774 = vpop.f32.mrf.mxu0
      %v3775 = vadd.f32 0.0, %v3774
      %v3776 = vpop.f32.mrf.mxu0
      %3777 = vmatprep.mubr.bf16.mxu0 %v3040
      %3778 = vmatmul.mubr.bf16.gmra.mxu0 %v3039
      %v3779 = vpop.f32.mrf.mxu0
      %v3780 = vadd.f32 0.0, %v3779
      %v3781 = vpop.f32.mrf.mxu0
      %v3782 = vpop.f32.mrf.mxu0
      %v3783 = vadd.f32 0.0, %v3782
      %v3784 = vpop.f32.mrf.mxu0
      %3785 = vmatprep.mubr.bf16.mxu0 %v3049
      %3786 = vmatmul.mubr.bf16.gmra.mxu0 %v3048
      %v3787 = vpop.f32.mrf.mxu0
      %v3788 = vadd.f32 0.0, %v3787
      %v3789 = vpop.f32.mrf.mxu0
      %v3790 = vpop.f32.mrf.mxu0
      %v3791 = vadd.f32 0.0, %v3790
      %v3792 = vpop.f32.mrf.mxu0
      %3793 = vdwg.mxu0
      %3794 = vmatprep.subr.bf16.mxu0 0
      %3795 = vmatpush1.bf16.msra.mxu0 %v3512
      %3796 = vmatprep.subr.bf16.mxu0 0
      %3797 = vmatpush1.bf16.msra.mxu0 %v3511
      %3798 = vmatprep.subr.bf16.mxu0 0
      %3799 = vmatpush1.bf16.msra.mxu0 %v3510
      %3800 = vmatprep.subr.bf16.mxu0 0
      %3801 = vmatpush1.bf16.msra.mxu0 %v3509
      %3802 = vmatprep.subr.bf16.mxu0 0
      %3803 = vmatpush1.bf16.msra.mxu0 %v3508
      %3804 = vmatprep.subr.bf16.mxu0 0
      %3805 = vmatpush1.bf16.msra.mxu0 %v3507
      %3806 = vmatprep.subr.bf16.mxu0 0
      %3807 = vmatpush1.bf16.msra.mxu0 %v3506
      %3808 = vmatprep.subr.bf16.mxu0 0
      %3809 = vmatpush1.bf16.msra.mxu0 %v3505
      %3810 = vmatprep.subr.bf16.mxu0 0
      %3811 = vmatpush2.bf16.msra.mxu0 %v3520
      %3812 = vmatprep.subr.bf16.mxu0 0
      %3813 = vmatpush2.bf16.msra.mxu0 %v3519
      %3814 = vmatprep.subr.bf16.mxu0 0
      %3815 = vmatpush2.bf16.msra.mxu0 %v3518
      %3816 = vmatprep.subr.bf16.mxu0 0
      %3817 = vmatpush2.bf16.msra.mxu0 %v3517
      %3818 = vmatprep.subr.bf16.mxu0 0
      %3819 = vmatpush2.bf16.msra.mxu0 %v3516
      %3820 = vmatprep.subr.bf16.mxu0 0
      %3821 = vmatpush2.bf16.msra.mxu0 %v3515
      %3822 = vmatprep.subr.bf16.mxu0 0
      %3823 = vmatpush2.bf16.msra.mxu0 %v3514
      %3824 = vmatprep.subr.bf16.mxu0 0
      %3825 = vmatpush2.bf16.msra.mxu0 %v3513
      %3826 = vmatprep.mubr.bf16.mxu0 %v2916
      %3827 = vmatmul.mubr.bf16.gmra.mxu0 %v2915
      %v3828 = vpop.f32.mrf.mxu0
      %v3829 = vadd.f32 %v3668, %v3828
      %v3830 = vpop.f32.mrf.mxu0
      %v3831 = vpop.f32.mrf.mxu0
      %v3832 = vadd.f32 %v3671, %v3831
      %v3833 = vpop.f32.mrf.mxu0
      %3834 = vmatprep.mubr.bf16.mxu0 %v2925
      %3835 = vmatmul.mubr.bf16.gmra.mxu0 %v2924
      %v3836 = vpop.f32.mrf.mxu0
      %v3837 = vadd.f32 %v3676, %v3836
      %v3838 = vpop.f32.mrf.mxu0
      %v3839 = vpop.f32.mrf.mxu0
      %v3840 = vadd.f32 %v3679, %v3839
      %v3841 = vpop.f32.mrf.mxu0
      %3842 = vmatprep.mubr.bf16.mxu0 %v2934
      %3843 = vmatmul.mubr.bf16.gmra.mxu0 %v2933
      %v3844 = vpop.f32.mrf.mxu0
      %v3845 = vadd.f32 %v3684, %v3844
      %v3846 = vpop.f32.mrf.mxu0
      %v3847 = vpop.f32.mrf.mxu0
      %v3848 = vadd.f32 %v3687, %v3847
      %v3849 = vpop.f32.mrf.mxu0
      %3850 = vmatprep.mubr.bf16.mxu0 %v2943
      %3851 = vmatmul.mubr.bf16.gmra.mxu0 %v2942
      %v3852 = vpop.f32.mrf.mxu0
      %v3853 = vadd.f32 %v3692, %v3852
      %v3854 = vpop.f32.mrf.mxu0
      %v3855 = vpop.f32.mrf.mxu0
      %v3856 = vadd.f32 %v3695, %v3855
      %v3857 = vpop.f32.mrf.mxu0
      %3858 = vmatprep.mubr.bf16.mxu0 %v2952
      %3859 = vmatmul.mubr.bf16.gmra.mxu0 %v2951
      %v3860 = vpop.f32.mrf.mxu0
      %v3861 = vadd.f32 %v3700, %v3860
      %v3862 = vpop.f32.mrf.mxu0
      %v3863 = vpop.f32.mrf.mxu0
      %v3864 = vadd.f32 %v3703, %v3863
      %v3865 = vpop.f32.mrf.mxu0
      %3866 = vmatprep.mubr.bf16.mxu0 %v2961
      %3867 = vmatmul.mubr.bf16.gmra.mxu0 %v2960
      %v3868 = vpop.f32.mrf.mxu0
      %v3869 = vadd.f32 %v3708, %v3868
      %v3870 = vpop.f32.mrf.mxu0
      %v3871 = vpop.f32.mrf.mxu0
      %v3872 = vadd.f32 %v3711, %v3871
      %v3873 = vpop.f32.mrf.mxu0
      %3874 = vmatprep.mubr.bf16.mxu0 %v2970
      %3875 = vmatmul.mubr.bf16.gmra.mxu0 %v2969
      %v3876 = vpop.f32.mrf.mxu0
      %v3877 = vadd.f32 %v3716, %v3876
      %v3878 = vpop.f32.mrf.mxu0
      %v3879 = vpop.f32.mrf.mxu0
      %v3880 = vadd.f32 %v3719, %v3879
      %v3881 = vpop.f32.mrf.mxu0
      %3882 = vmatprep.mubr.bf16.mxu0 %v2979
      %3883 = vmatmul.mubr.bf16.gmra.mxu0 %v2978
      %v3884 = vpop.f32.mrf.mxu0
      %v3885 = vadd.f32 %v3724, %v3884
      %v3886 = vpop.f32.mrf.mxu0
      %v3887 = vpop.f32.mrf.mxu0
      %v3888 = vadd.f32 %v3727, %v3887
      %v3889 = vpop.f32.mrf.mxu0
      %3890 = vmatprep.mubr.bf16.mxu0 %v2988
      %3891 = vmatmul.mubr.bf16.gmra.mxu0 %v2987
      %v3892 = vpop.f32.mrf.mxu0
      %v3893 = vadd.f32 %v3732, %v3892
      %v3894 = vpop.f32.mrf.mxu0
      %v3895 = vpop.f32.mrf.mxu0
      %v3896 = vadd.f32 %v3735, %v3895
      %v3897 = vpop.f32.mrf.mxu0
      %3898 = vmatprep.mubr.bf16.mxu0 %v2997
      %3899 = vmatmul.mubr.bf16.gmra.mxu0 %v2996
      %v3900 = vpop.f32.mrf.mxu0
      %v3901 = vadd.f32 %v3740, %v3900
      %v3902 = vpop.f32.mrf.mxu0
      %v3903 = vpop.f32.mrf.mxu0
      %v3904 = vadd.f32 %v3743, %v3903
      %v3905 = vpop.f32.mrf.mxu0
      %3906 = vmatprep.mubr.bf16.mxu0 %v3006
      %3907 = vmatmul.mubr.bf16.gmra.mxu0 %v3005
      %v3908 = vpop.f32.mrf.mxu0
      %v3909 = vadd.f32 %v3748, %v3908
      %v3910 = vpop.f32.mrf.mxu0
      %v3911 = vpop.f32.mrf.mxu0
      %v3912 = vadd.f32 %v3751, %v3911
      %v3913 = vpop.f32.mrf.mxu0
      %3914 = vmatprep.mubr.bf16.mxu0 %v3015
      %3915 = vmatmul.mubr.bf16.gmra.mxu0 %v3014
      %v3916 = vpop.f32.mrf.mxu0
      %v3917 = vadd.f32 %v3756, %v3916
      %v3918 = vpop.f32.mrf.mxu0
      %v3919 = vpop.f32.mrf.mxu0
      %v3920 = vadd.f32 %v3759, %v3919
      %v3921 = vpop.f32.mrf.mxu0
      %3922 = vmatprep.mubr.bf16.mxu0 %v3024
      %3923 = vmatmul.mubr.bf16.gmra.mxu0 %v3023
      %v3924 = vpop.f32.mrf.mxu0
      %v3925 = vadd.f32 %v3764, %v3924
      %v3926 = vpop.f32.mrf.mxu0
      %v3927 = vpop.f32.mrf.mxu0
      %v3928 = vadd.f32 %v3767, %v3927
      %v3929 = vpop.f32.mrf.mxu0
      %3930 = vmatprep.mubr.bf16.mxu0 %v3033
      %3931 = vmatmul.mubr.bf16.gmra.mxu0 %v3032
      %v3932 = vpop.f32.mrf.mxu0
      %v3933 = vadd.f32 %v3772, %v3932
      %v3934 = vpop.f32.mrf.mxu0
      %v3935 = vpop.f32.mrf.mxu0
      %v3936 = vadd.f32 %v3775, %v3935
      %v3937 = vpop.f32.mrf.mxu0
      %3938 = vmatprep.mubr.bf16.mxu0 %v3042
      %3939 = vmatmul.mubr.bf16.gmra.mxu0 %v3041
      %v3940 = vpop.f32.mrf.mxu0
      %v3941 = vadd.f32 %v3780, %v3940
      %v3942 = vpop.f32.mrf.mxu0
      %v3943 = vpop.f32.mrf.mxu0
      %v3944 = vadd.f32 %v3783, %v3943
      %v3945 = vpop.f32.mrf.mxu0
      %3946 = vmatprep.mubr.bf16.mxu0 %v3051
      %3947 = vmatmul.mubr.bf16.gmra.mxu0 %v3050
      %v3948 = vpop.f32.mrf.mxu0
      %v3949 = vadd.f32 %v3788, %v3948
      %v3950 = vpop.f32.mrf.mxu0
      %v3951 = vpop.f32.mrf.mxu0
      %v3952 = vadd.f32 %v3791, %v3951
      %v3953 = vpop.f32.mrf.mxu0
      %3954 = vdwg.mxu0
      %3955 = vmatprep.subr.bf16.mxu0 0
      %3956 = vmatpush1.bf16.msra.mxu0 %v3528
      %3957 = vmatprep.subr.bf16.mxu0 0
      %3958 = vmatpush1.bf16.msra.mxu0 %v3527
      %3959 = vmatprep.subr.bf16.mxu0 0
      %3960 = vmatpush1.bf16.msra.mxu0 %v3526
      %3961 = vmatprep.subr.bf16.mxu0 0
      %3962 = vmatpush1.bf16.msra.mxu0 %v3525
      %3963 = vmatprep.subr.bf16.mxu0 0
      %3964 = vmatpush1.bf16.msra.mxu0 %v3524
      %3965 = vmatprep.subr.bf16.mxu0 0
      %3966 = vmatpush1.bf16.msra.mxu0 %v3523
      %3967 = vmatprep.subr.bf16.mxu0 0
      %3968 = vmatpush1.bf16.msra.mxu0 %v3522
      %3969 = vmatprep.subr.bf16.mxu0 0
      %3970 = vmatpush1.bf16.msra.mxu0 %v3521
      %3971 = vmatprep.subr.bf16.mxu0 0
      %3972 = vmatpush2.bf16.msra.mxu0 %v3536
      %3973 = vmatprep.subr.bf16.mxu0 0
      %3974 = vmatpush2.bf16.msra.mxu0 %v3535
      %3975 = vmatprep.subr.bf16.mxu0 0
      %3976 = vmatpush2.bf16.msra.mxu0 %v3534
      %3977 = vmatprep.subr.bf16.mxu0 0
      %3978 = vmatpush2.bf16.msra.mxu0 %v3533
      %3979 = vmatprep.subr.bf16.mxu0 0
      %3980 = vmatpush2.bf16.msra.mxu0 %v3532
      %3981 = vmatprep.subr.bf16.mxu0 0
      %3982 = vmatpush2.bf16.msra.mxu0 %v3531
      %3983 = vmatprep.subr.bf16.mxu0 0
      %3984 = vmatpush2.bf16.msra.mxu0 %v3530
      %3985 = vmatprep.subr.bf16.mxu0 0
      %3986 = vmatpush2.bf16.msra.mxu0 %v3529
      %3987 = vmatprep.mubr.bf16.mxu0 %v2918
      %3988 = vmatmul.mubr.bf16.gmra.mxu0 %v2917
      %v3989 = vpop.f32.mrf.mxu0
      %v3990 = vadd.f32 %v3829, %v3989
      %v3991 = vpop.f32.mrf.mxu0
      %v3992 = vpop.f32.mrf.mxu0
      %v3993 = vadd.f32 %v3832, %v3992
      %v3994 = vpop.f32.mrf.mxu0
      %3995 = vmatprep.mubr.bf16.mxu0 %v2927
      %3996 = vmatmul.mubr.bf16.gmra.mxu0 %v2926
      %v3997 = vpop.f32.mrf.mxu0
      %v3998 = vadd.f32 %v3837, %v3997
      %v3999 = vpop.f32.mrf.mxu0
      %v4000 = vpop.f32.mrf.mxu0
      %v4001 = vadd.f32 %v3840, %v4000
      %v4002 = vpop.f32.mrf.mxu0
      %4003 = vmatprep.mubr.bf16.mxu0 %v2936
      %4004 = vmatmul.mubr.bf16.gmra.mxu0 %v2935
      %v4005 = vpop.f32.mrf.mxu0
      %v4006 = vadd.f32 %v3845, %v4005
      %v4007 = vpop.f32.mrf.mxu0
      %v4008 = vpop.f32.mrf.mxu0
      %v4009 = vadd.f32 %v3848, %v4008
      %v4010 = vpop.f32.mrf.mxu0
      %4011 = vmatprep.mubr.bf16.mxu0 %v2945
      %4012 = vmatmul.mubr.bf16.gmra.mxu0 %v2944
      %v4013 = vpop.f32.mrf.mxu0
      %v4014 = vadd.f32 %v3853, %v4013
      %v4015 = vpop.f32.mrf.mxu0
      %v4016 = vpop.f32.mrf.mxu0
      %v4017 = vadd.f32 %v3856, %v4016
      %v4018 = vpop.f32.mrf.mxu0
      %4019 = vmatprep.mubr.bf16.mxu0 %v2954
      %4020 = vmatmul.mubr.bf16.gmra.mxu0 %v2953
      %v4021 = vpop.f32.mrf.mxu0
      %v4022 = vadd.f32 %v3861, %v4021
      %v4023 = vpop.f32.mrf.mxu0
      %v4024 = vpop.f32.mrf.mxu0
      %v4025 = vadd.f32 %v3864, %v4024
      %v4026 = vpop.f32.mrf.mxu0
      %4027 = vmatprep.mubr.bf16.mxu0 %v2963
      %4028 = vmatmul.mubr.bf16.gmra.mxu0 %v2962
      %v4029 = vpop.f32.mrf.mxu0
      %v4030 = vadd.f32 %v3869, %v4029
      %v4031 = vpop.f32.mrf.mxu0
      %v4032 = vpop.f32.mrf.mxu0
      %v4033 = vadd.f32 %v3872, %v4032
      %v4034 = vpop.f32.mrf.mxu0
      %4035 = vmatprep.mubr.bf16.mxu0 %v2972
      %4036 = vmatmul.mubr.bf16.gmra.mxu0 %v2971
      %v4037 = vpop.f32.mrf.mxu0
      %v4038 = vadd.f32 %v3877, %v4037
      %v4039 = vpop.f32.mrf.mxu0
      %v4040 = vpop.f32.mrf.mxu0
      %v4041 = vadd.f32 %v3880, %v4040
      %v4042 = vpop.f32.mrf.mxu0
      %4043 = vmatprep.mubr.bf16.mxu0 %v2981
      %4044 = vmatmul.mubr.bf16.gmra.mxu0 %v2980
      %v4045 = vpop.f32.mrf.mxu0
      %v4046 = vadd.f32 %v3885, %v4045
      %v4047 = vpop.f32.mrf.mxu0
      %v4048 = vpop.f32.mrf.mxu0
      %v4049 = vadd.f32 %v3888, %v4048
      %v4050 = vpop.f32.mrf.mxu0
      %4051 = vmatprep.mubr.bf16.mxu0 %v2990
      %4052 = vmatmul.mubr.bf16.gmra.mxu0 %v2989
      %v4053 = vpop.f32.mrf.mxu0
      %v4054 = vadd.f32 %v3893, %v4053
      %v4055 = vpop.f32.mrf.mxu0
      %v4056 = vpop.f32.mrf.mxu0
      %v4057 = vadd.f32 %v3896, %v4056
      %v4058 = vpop.f32.mrf.mxu0
      %4059 = vmatprep.mubr.bf16.mxu0 %v2999
      %4060 = vmatmul.mubr.bf16.gmra.mxu0 %v2998
      %v4061 = vpop.f32.mrf.mxu0
      %v4062 = vadd.f32 %v3901, %v4061
      %v4063 = vpop.f32.mrf.mxu0
      %v4064 = vpop.f32.mrf.mxu0
      %v4065 = vadd.f32 %v3904, %v4064
      %v4066 = vpop.f32.mrf.mxu0
      %4067 = vmatprep.mubr.bf16.mxu0 %v3008
      %4068 = vmatmul.mubr.bf16.gmra.mxu0 %v3007
      %v4069 = vpop.f32.mrf.mxu0
      %v4070 = vadd.f32 %v3909, %v4069
      %v4071 = vpop.f32.mrf.mxu0
      %v4072 = vpop.f32.mrf.mxu0
      %v4073 = vadd.f32 %v3912, %v4072
      %v4074 = vpop.f32.mrf.mxu0
      %4075 = vmatprep.mubr.bf16.mxu0 %v3017
      %4076 = vmatmul.mubr.bf16.gmra.mxu0 %v3016
      %v4077 = vpop.f32.mrf.mxu0
      %v4078 = vadd.f32 %v3917, %v4077
      %v4079 = vpop.f32.mrf.mxu0
      %v4080 = vpop.f32.mrf.mxu0
      %v4081 = vadd.f32 %v3920, %v4080
      %v4082 = vpop.f32.mrf.mxu0
      %4083 = vmatprep.mubr.bf16.mxu0 %v3026
      %4084 = vmatmul.mubr.bf16.gmra.mxu0 %v3025
      %v4085 = vpop.f32.mrf.mxu0
      %v4086 = vadd.f32 %v3925, %v4085
      %v4087 = vpop.f32.mrf.mxu0
      %v4088 = vpop.f32.mrf.mxu0
      %v4089 = vadd.f32 %v3928, %v4088
      %v4090 = vpop.f32.mrf.mxu0
      %4091 = vmatprep.mubr.bf16.mxu0 %v3035
      %4092 = vmatmul.mubr.bf16.gmra.mxu0 %v3034
      %v4093 = vpop.f32.mrf.mxu0
      %v4094 = vadd.f32 %v3933, %v4093
      %v4095 = vpop.f32.mrf.mxu0
      %v4096 = vpop.f32.mrf.mxu0
      %v4097 = vadd.f32 %v3936, %v4096
      %v4098 = vpop.f32.mrf.mxu0
      %4099 = vmatprep.mubr.bf16.mxu0 %v3044
      %4100 = vmatmul.mubr.bf16.gmra.mxu0 %v3043
      %v4101 = vpop.f32.mrf.mxu0
      %v4102 = vadd.f32 %v3941, %v4101
      %v4103 = vpop.f32.mrf.mxu0
      %v4104 = vpop.f32.mrf.mxu0
      %v4105 = vadd.f32 %v3944, %v4104
      %v4106 = vpop.f32.mrf.mxu0
      %4107 = vmatprep.mubr.bf16.mxu0 %v3053
      %4108 = vmatmul.mubr.bf16.gmra.mxu0 %v3052
      %v4109 = vpop.f32.mrf.mxu0
      %v4110 = vadd.f32 %v3949, %v4109
      %v4111 = vpop.f32.mrf.mxu0
      %v4112 = vpop.f32.mrf.mxu0
      %v4113 = vadd.f32 %v3952, %v4112
      %v4114 = vpop.f32.mrf.mxu0
      %4115 = vdwg.mxu0
      %4116 = vmatprep.subr.bf16.mxu0 0
      %4117 = vmatpush1.bf16.msra.mxu0 %v3544
      %4118 = vmatprep.subr.bf16.mxu0 0
      %4119 = vmatpush1.bf16.msra.mxu0 %v3543
      %4120 = vmatprep.subr.bf16.mxu0 0
      %4121 = vmatpush1.bf16.msra.mxu0 %v3542
      %4122 = vmatprep.subr.bf16.mxu0 0
      %4123 = vmatpush1.bf16.msra.mxu0 %v3541
      %4124 = vmatprep.subr.bf16.mxu0 0
      %4125 = vmatpush1.bf16.msra.mxu0 %v3540
      %4126 = vmatprep.subr.bf16.mxu0 0
      %4127 = vmatpush1.bf16.msra.mxu0 %v3539
      %4128 = vmatprep.subr.bf16.mxu0 0
      %4129 = vmatpush1.bf16.msra.mxu0 %v3538
      %4130 = vmatprep.subr.bf16.mxu0 0
      %4131 = vmatpush1.bf16.msra.mxu0 %v3537
      %4132 = vmatprep.subr.bf16.mxu0 0
      %4133 = vmatpush2.bf16.msra.mxu0 %v3552
      %4134 = vmatprep.subr.bf16.mxu0 0
      %4135 = vmatpush2.bf16.msra.mxu0 %v3551
      %4136 = vmatprep.subr.bf16.mxu0 0
      %4137 = vmatpush2.bf16.msra.mxu0 %v3550
      %4138 = vmatprep.subr.bf16.mxu0 0
      %4139 = vmatpush2.bf16.msra.mxu0 %v3549
      %4140 = vmatprep.subr.bf16.mxu0 0
      %4141 = vmatpush2.bf16.msra.mxu0 %v3548
      %4142 = vmatprep.subr.bf16.mxu0 0
      %4143 = vmatpush2.bf16.msra.mxu0 %v3547
      %4144 = vmatprep.subr.bf16.mxu0 0
      %4145 = vmatpush2.bf16.msra.mxu0 %v3546
      %4146 = vmatprep.subr.bf16.mxu0 0
      %4147 = vmatpush2.bf16.msra.mxu0 %v3545
      %4148 = vmatprep.mubr.bf16.mxu0 %v2920
      %4149 = vmatmul.mubr.bf16.gmra.mxu0 %v2919
      %v4150 = vpop.f32.mrf.mxu0
      %v4151 = vadd.f32 %v3990, %v4150
      %v4152 = vpop.f32.mrf.mxu0
      %v4153 = vpop.f32.mrf.mxu0
      %v4154 = vadd.f32 %v3993, %v4153
      %v4155 = vpop.f32.mrf.mxu0
      %4156 = vmatprep.mubr.bf16.mxu0 %v2929
      %4157 = vmatmul.mubr.bf16.gmra.mxu0 %v2928
      %v4158 = vpop.f32.mrf.mxu0
      %v4159 = vadd.f32 %v3998, %v4158
      %v4160 = vpop.f32.mrf.mxu0
      %v4161 = vpop.f32.mrf.mxu0
      %v4162 = vadd.f32 %v4001, %v4161
      %v4163 = vpop.f32.mrf.mxu0
      %4164 = vmatprep.mubr.bf16.mxu0 %v2938
      %4165 = vmatmul.mubr.bf16.gmra.mxu0 %v2937
      %v4166 = vpop.f32.mrf.mxu0
      %v4167 = vadd.f32 %v4006, %v4166
      %v4168 = vpop.f32.mrf.mxu0
      %v4169 = vpop.f32.mrf.mxu0
      %v4170 = vadd.f32 %v4009, %v4169
      %v4171 = vpop.f32.mrf.mxu0
      %4172 = vmatprep.mubr.bf16.mxu0 %v2947
      %4173 = vmatmul.mubr.bf16.gmra.mxu0 %v2946
      %v4174 = vpop.f32.mrf.mxu0
      %v4175 = vadd.f32 %v4014, %v4174
      %v4176 = vpop.f32.mrf.mxu0
      %v4177 = vpop.f32.mrf.mxu0
      %v4178 = vadd.f32 %v4017, %v4177
      %v4179 = vpop.f32.mrf.mxu0
      %4180 = vmatprep.mubr.bf16.mxu0 %v2956
      %4181 = vmatmul.mubr.bf16.gmra.mxu0 %v2955
      %v4182 = vpop.f32.mrf.mxu0
      %v4183 = vadd.f32 %v4022, %v4182
      %v4184 = vpop.f32.mrf.mxu0
      %v4185 = vpop.f32.mrf.mxu0
      %v4186 = vadd.f32 %v4025, %v4185
      %v4187 = vpop.f32.mrf.mxu0
      %4188 = vmatprep.mubr.bf16.mxu0 %v2965
      %4189 = vmatmul.mubr.bf16.gmra.mxu0 %v2964
      %v4190 = vpop.f32.mrf.mxu0
      %v4191 = vadd.f32 %v4030, %v4190
      %v4192 = vpop.f32.mrf.mxu0
      %v4193 = vpop.f32.mrf.mxu0
      %v4194 = vadd.f32 %v4033, %v4193
      %v4195 = vpop.f32.mrf.mxu0
      %4196 = vmatprep.mubr.bf16.mxu0 %v2974
      %4197 = vmatmul.mubr.bf16.gmra.mxu0 %v2973
      %v4198 = vpop.f32.mrf.mxu0
      %v4199 = vadd.f32 %v4038, %v4198
      %v4200 = vpop.f32.mrf.mxu0
      %v4201 = vpop.f32.mrf.mxu0
      %v4202 = vadd.f32 %v4041, %v4201
      %v4203 = vpop.f32.mrf.mxu0
      %4204 = vmatprep.mubr.bf16.mxu0 %v2983
      %4205 = vmatmul.mubr.bf16.gmra.mxu0 %v2982
      %v4206 = vpop.f32.mrf.mxu0
      %v4207 = vadd.f32 %v4046, %v4206
      %v4208 = vpop.f32.mrf.mxu0
      %v4209 = vpop.f32.mrf.mxu0
      %v4210 = vadd.f32 %v4049, %v4209
      %v4211 = vpop.f32.mrf.mxu0
      %4212 = vmatprep.mubr.bf16.mxu0 %v2992
      %4213 = vmatmul.mubr.bf16.gmra.mxu0 %v2991
      %v4214 = vpop.f32.mrf.mxu0
      %v4215 = vadd.f32 %v4054, %v4214
      %v4216 = vpop.f32.mrf.mxu0
      %v4217 = vpop.f32.mrf.mxu0
      %v4218 = vadd.f32 %v4057, %v4217
      %v4219 = vpop.f32.mrf.mxu0
      %4220 = vmatprep.mubr.bf16.mxu0 %v3001
      %4221 = vmatmul.mubr.bf16.gmra.mxu0 %v3000
      %v4222 = vpop.f32.mrf.mxu0
      %v4223 = vadd.f32 %v4062, %v4222
      %v4224 = vpop.f32.mrf.mxu0
      %v4225 = vpop.f32.mrf.mxu0
      %v4226 = vadd.f32 %v4065, %v4225
      %v4227 = vpop.f32.mrf.mxu0
      %4228 = vmatprep.mubr.bf16.mxu0 %v3010
      %4229 = vmatmul.mubr.bf16.gmra.mxu0 %v3009
      %v4230 = vpop.f32.mrf.mxu0
      %v4231 = vadd.f32 %v4070, %v4230
      %v4232 = vpop.f32.mrf.mxu0
      %v4233 = vpop.f32.mrf.mxu0
      %v4234 = vadd.f32 %v4073, %v4233
      %v4235 = vpop.f32.mrf.mxu0
      %4236 = vmatprep.mubr.bf16.mxu0 %v3019
      %4237 = vmatmul.mubr.bf16.gmra.mxu0 %v3018
      %v4238 = vpop.f32.mrf.mxu0
      %v4239 = vadd.f32 %v4078, %v4238
      %v4240 = vpop.f32.mrf.mxu0
      %v4241 = vpop.f32.mrf.mxu0
      %v4242 = vadd.f32 %v4081, %v4241
      %v4243 = vpop.f32.mrf.mxu0
      %4244 = vmatprep.mubr.bf16.mxu0 %v3028
      %4245 = vmatmul.mubr.bf16.gmra.mxu0 %v3027
      %v4246 = vpop.f32.mrf.mxu0
      %v4247 = vadd.f32 %v4086, %v4246
      %v4248 = vpop.f32.mrf.mxu0
      %v4249 = vpop.f32.mrf.mxu0
      %v4250 = vadd.f32 %v4089, %v4249
      %v4251 = vpop.f32.mrf.mxu0
      %4252 = vmatprep.mubr.bf16.mxu0 %v3037
      %4253 = vmatmul.mubr.bf16.gmra.mxu0 %v3036
      %v4254 = vpop.f32.mrf.mxu0
      %v4255 = vadd.f32 %v4094, %v4254
      %v4256 = vpop.f32.mrf.mxu0
      %v4257 = vpop.f32.mrf.mxu0
      %v4258 = vadd.f32 %v4097, %v4257
      %v4259 = vpop.f32.mrf.mxu0
      %4260 = vmatprep.mubr.bf16.mxu0 %v3046
      %4261 = vmatmul.mubr.bf16.gmra.mxu0 %v3045
      %v4262 = vpop.f32.mrf.mxu0
      %v4263 = vadd.f32 %v4102, %v4262
      %v4264 = vpop.f32.mrf.mxu0
      %v4265 = vpop.f32.mrf.mxu0
      %v4266 = vadd.f32 %v4105, %v4265
      %v4267 = vpop.f32.mrf.mxu0
      %4268 = vmatprep.mubr.bf16.mxu0 %v3055
      %4269 = vmatmul.mubr.bf16.gmra.mxu0 %v3054
      %v4270 = vpop.f32.mrf.mxu0
      %v4271 = vadd.f32 %v4110, %v4270
      %v4272 = vpop.f32.mrf.mxu0
      %v4273 = vpop.f32.mrf.mxu0
      %v4274 = vadd.f32 %v4113, %v4273
      %v4275 = vpop.f32.mrf.mxu0
      %4276 = vdwg.mxu0
      %4277 = vmatprep.subr.bf16.mxu0 0
      %4278 = vmatpush1.bf16.msra.mxu0 %v3560
      %4279 = vmatprep.subr.bf16.mxu0 0
      %4280 = vmatpush1.bf16.msra.mxu0 %v3559
      %4281 = vmatprep.subr.bf16.mxu0 0
      %4282 = vmatpush1.bf16.msra.mxu0 %v3558
      %4283 = vmatprep.subr.bf16.mxu0 0
      %4284 = vmatpush1.bf16.msra.mxu0 %v3557
      %4285 = vmatprep.subr.bf16.mxu0 0
      %4286 = vmatpush1.bf16.msra.mxu0 %v3556
      %4287 = vmatprep.subr.bf16.mxu0 0
      %4288 = vmatpush1.bf16.msra.mxu0 %v3555
      %4289 = vmatprep.subr.bf16.mxu0 0
      %4290 = vmatpush1.bf16.msra.mxu0 %v3554
      %4291 = vmatprep.subr.bf16.mxu0 0
      %4292 = vmatpush1.bf16.msra.mxu0 %v3553
      %4293 = vmatprep.subr.bf16.mxu0 0
      %4294 = vmatpush2.bf16.msra.mxu0 0
      %4295 = vmatprep.subr.bf16.mxu0 0
      %4296 = vmatpush2.bf16.msra.mxu0 0
      %4297 = vmatprep.subr.bf16.mxu0 0
      %4298 = vmatpush2.bf16.msra.mxu0 0
      %4299 = vmatprep.subr.bf16.mxu0 0
      %4300 = vmatpush2.bf16.msra.mxu0 0
      %4301 = vmatprep.subr.bf16.mxu0 0
      %4302 = vmatpush2.bf16.msra.mxu0 0
      %4303 = vmatprep.subr.bf16.mxu0 0
      %4304 = vmatpush2.bf16.msra.mxu0 0
      %4305 = vmatprep.subr.bf16.mxu0 0
      %4306 = vmatpush2.bf16.msra.mxu0 0
      %4307 = vmatprep.subr.bf16.mxu0 0
      %4308 = vmatpush2.bf16.msra.mxu0 0
      %4309 = vmatprep.mubr.bf16.mxu0 0
      %4310 = vmatmul.mubr.bf16.gmra.mxu0 %v2921
      %v4311 = vpop.f32.mrf.mxu0
      %v4312 = vadd.f32 %v4151, %v4311
      %v4313 = vpop.f32.mrf.mxu0
      %v4314 = vpop.f32.mrf.mxu0
      %v4315 = vadd.f32 %v4154, %v4314
      %v4316 = vpop.f32.mrf.mxu0
      %4317 = vmatprep.mubr.bf16.mxu0 0
      %4318 = vmatmul.mubr.bf16.gmra.mxu0 %v2930
      %v4319 = vpop.f32.mrf.mxu0
      %v4320 = vadd.f32 %v4159, %v4319
      %v4321 = vpop.f32.mrf.mxu0
      %v4322 = vpop.f32.mrf.mxu0
      %v4323 = vadd.f32 %v4162, %v4322
      %v4324 = vpop.f32.mrf.mxu0
      %4325 = vmatprep.mubr.bf16.mxu0 0
      %4326 = vmatmul.mubr.bf16.gmra.mxu0 %v2939
      %v4327 = vpop.f32.mrf.mxu0
      %v4328 = vadd.f32 %v4167, %v4327
      %v4329 = vpop.f32.mrf.mxu0
      %v4330 = vpop.f32.mrf.mxu0
      %v4331 = vadd.f32 %v4170, %v4330
      %v4332 = vpop.f32.mrf.mxu0
      %4333 = vmatprep.mubr.bf16.mxu0 0
      %4334 = vmatmul.mubr.bf16.gmra.mxu0 %v2948
      %v4335 = vpop.f32.mrf.mxu0
      %v4336 = vadd.f32 %v4175, %v4335
      %v4337 = vpop.f32.mrf.mxu0
      %v4338 = vpop.f32.mrf.mxu0
      %v4339 = vadd.f32 %v4178, %v4338
      %v4340 = vpop.f32.mrf.mxu0
      %4341 = vmatprep.mubr.bf16.mxu0 0
      %4342 = vmatmul.mubr.bf16.gmra.mxu0 %v2957
      %v4343 = vpop.f32.mrf.mxu0
      %v4344 = vadd.f32 %v4183, %v4343
      %v4345 = vpop.f32.mrf.mxu0
      %v4346 = vpop.f32.mrf.mxu0
      %v4347 = vadd.f32 %v4186, %v4346
      %v4348 = vpop.f32.mrf.mxu0
      %4349 = vmatprep.mubr.bf16.mxu0 0
      %4350 = vmatmul.mubr.bf16.gmra.mxu0 %v2966
      %v4351 = vpop.f32.mrf.mxu0
      %v4352 = vadd.f32 %v4191, %v4351
      %v4353 = vpop.f32.mrf.mxu0
      %v4354 = vpop.f32.mrf.mxu0
      %v4355 = vadd.f32 %v4194, %v4354
      %v4356 = vpop.f32.mrf.mxu0
      %4357 = vmatprep.mubr.bf16.mxu0 0
      %4358 = vmatmul.mubr.bf16.gmra.mxu0 %v2975
      %v4359 = vpop.f32.mrf.mxu0
      %v4360 = vadd.f32 %v4199, %v4359
      %v4361 = vpop.f32.mrf.mxu0
      %v4362 = vpop.f32.mrf.mxu0
      %v4363 = vadd.f32 %v4202, %v4362
      %v4364 = vpop.f32.mrf.mxu0
      %4365 = vmatprep.mubr.bf16.mxu0 0
      %4366 = vmatmul.mubr.bf16.gmra.mxu0 %v2984
      %v4367 = vpop.f32.mrf.mxu0
      %v4368 = vadd.f32 %v4207, %v4367
      %v4369 = vpop.f32.mrf.mxu0
      %v4370 = vpop.f32.mrf.mxu0
      %v4371 = vadd.f32 %v4210, %v4370
      %v4372 = vpop.f32.mrf.mxu0
      %4373 = vmatprep.mubr.bf16.mxu0 0
      %4374 = vmatmul.mubr.bf16.gmra.mxu0 %v2993
      %v4375 = vpop.f32.mrf.mxu0
      %v4376 = vadd.f32 %v4215, %v4375
      %v4377 = vpop.f32.mrf.mxu0
      %v4378 = vpop.f32.mrf.mxu0
      %v4379 = vadd.f32 %v4218, %v4378
      %v4380 = vpop.f32.mrf.mxu0
      %4381 = vmatprep.mubr.bf16.mxu0 0
      %4382 = vmatmul.mubr.bf16.gmra.mxu0 %v3002
      %v4383 = vpop.f32.mrf.mxu0
      %v4384 = vadd.f32 %v4223, %v4383
      %v4385 = vpop.f32.mrf.mxu0
      %v4386 = vpop.f32.mrf.mxu0
      %v4387 = vadd.f32 %v4226, %v4386
      %v4388 = vpop.f32.mrf.mxu0
      %4389 = vmatprep.mubr.bf16.mxu0 0
      %4390 = vmatmul.mubr.bf16.gmra.mxu0 %v3011
      %v4391 = vpop.f32.mrf.mxu0
      %v4392 = vadd.f32 %v4231, %v4391
      %v4393 = vpop.f32.mrf.mxu0
      %v4394 = vpop.f32.mrf.mxu0
      %v4395 = vadd.f32 %v4234, %v4394
      %v4396 = vpop.f32.mrf.mxu0
      %4397 = vmatprep.mubr.bf16.mxu0 0
      %4398 = vmatmul.mubr.bf16.gmra.mxu0 %v3020
      %v4399 = vpop.f32.mrf.mxu0
      %v4400 = vadd.f32 %v4239, %v4399
      %v4401 = vpop.f32.mrf.mxu0
      %v4402 = vpop.f32.mrf.mxu0
      %v4403 = vadd.f32 %v4242, %v4402
      %v4404 = vpop.f32.mrf.mxu0
      %4405 = vmatprep.mubr.bf16.mxu0 0
      %4406 = vmatmul.mubr.bf16.gmra.mxu0 %v3029
      %v4407 = vpop.f32.mrf.mxu0
      %v4408 = vadd.f32 %v4247, %v4407
      %v4409 = vpop.f32.mrf.mxu0
      %v4410 = vpop.f32.mrf.mxu0
      %v4411 = vadd.f32 %v4250, %v4410
      %v4412 = vpop.f32.mrf.mxu0
      %4413 = vmatprep.mubr.bf16.mxu0 0
      %4414 = vmatmul.mubr.bf16.gmra.mxu0 %v3038
      %v4415 = vpop.f32.mrf.mxu0
      %v4416 = vadd.f32 %v4255, %v4415
      %v4417 = vpop.f32.mrf.mxu0
      %v4418 = vpop.f32.mrf.mxu0
      %v4419 = vadd.f32 %v4258, %v4418
      %v4420 = vpop.f32.mrf.mxu0
      %4421 = vmatprep.mubr.bf16.mxu0 0
      %4422 = vmatmul.mubr.bf16.gmra.mxu0 %v3047
      %v4423 = vpop.f32.mrf.mxu0
      %v4424 = vadd.f32 %v4263, %v4423
      %v4425 = vpop.f32.mrf.mxu0
      %v4426 = vpop.f32.mrf.mxu0
      %v4427 = vadd.f32 %v4266, %v4426
      %v4428 = vpop.f32.mrf.mxu0
      %4429 = vmatprep.mubr.bf16.mxu0 0
      %4430 = vmatmul.mubr.bf16.gmra.mxu0 %v3056
      %v4431 = vpop.f32.mrf.mxu0
      %v4432 = vadd.f32 %v4271, %v4431
      %v4433 = vpop.f32.mrf.mxu0
      %v4434 = vpop.f32.mrf.mxu0
      %v4435 = vadd.f32 %v4274, %v4434
      %v4436 = vpop.f32.mrf.mxu0
      %4437 = vdwg.mxu0
      %v4438 = vld [vmem:[%s4] sm:$0x3]
      %v4439 = vlaneseq
      %v4440 = vshrl.u32 %v4439, 7
      %v4441 = vsub.s32 0, %v4440
      %v4442 = vrot.slane %v4438, %v4441
      %v4443 = vmul.f32 %v4312, %v4442
      %v4444 = vmul.f32 %v4315, %v4442
      %v4445 = vmul.f32 %v4320, %v4442
      %v4446 = vmul.f32 %v4323, %v4442
      %v4447 = vmul.f32 %v4328, %v4442
      %v4448 = vmul.f32 %v4331, %v4442
      %v4449 = vmul.f32 %v4336, %v4442
      %v4450 = vmul.f32 %v4339, %v4442
      %v4451 = vmul.f32 %v4344, %v4442
      %v4452 = vmul.f32 %v4347, %v4442
      %v4453 = vmul.f32 %v4352, %v4442
      %v4454 = vmul.f32 %v4355, %v4442
      %v4455 = vmul.f32 %v4360, %v4442
      %v4456 = vmul.f32 %v4363, %v4442
      %v4457 = vmul.f32 %v4368, %v4442
      %v4458 = vmul.f32 %v4371, %v4442
      %v4459 = vmul.f32 %v4376, %v4442
      %v4460 = vmul.f32 %v4379, %v4442
      %v4461 = vmul.f32 %v4384, %v4442
      %v4462 = vmul.f32 %v4387, %v4442
      %v4463 = vmul.f32 %v4392, %v4442
      %v4464 = vmul.f32 %v4395, %v4442
      %v4465 = vmul.f32 %v4400, %v4442
      %v4466 = vmul.f32 %v4403, %v4442
      %v4467 = vmul.f32 %v4408, %v4442
      %v4468 = vmul.f32 %v4411, %v4442
      %v4469 = vmul.f32 %v4416, %v4442
      %v4470 = vmul.f32 %v4419, %v4442
      %v4471 = vmul.f32 %v4424, %v4442
      %v4472 = vmul.f32 %v4427, %v4442
      %v4473 = vmul.f32 %v4432, %v4442
      %v4474 = vmul.f32 %v4435, %v4442
      %v4475 = vlaneseq
      %v4476 = vshrl.u32 %v4475, 7
      %v4477 = vsub.s32 1, %v4476
      %v4478 = vrot.slane %v4438, %v4477
      %v4479 = vadd.f32 %v4443, %v4478
      %v4480 = vadd.f32 %v4444, %v4478
      %v4481 = vadd.f32 %v4445, %v4478
      %v4482 = vadd.f32 %v4446, %v4478
      %v4483 = vadd.f32 %v4447, %v4478
      %v4484 = vadd.f32 %v4448, %v4478
      %v4485 = vadd.f32 %v4449, %v4478
      %v4486 = vadd.f32 %v4450, %v4478
      %v4487 = vadd.f32 %v4451, %v4478
      %v4488 = vadd.f32 %v4452, %v4478
      %v4489 = vadd.f32 %v4453, %v4478
      %v4490 = vadd.f32 %v4454, %v4478
      %v4491 = vadd.f32 %v4455, %v4478
      %v4492 = vadd.f32 %v4456, %v4478
      %v4493 = vadd.f32 %v4457, %v4478
      %v4494 = vadd.f32 %v4458, %v4478
      %v4495 = vadd.f32 %v4459, %v4478
      %v4496 = vadd.f32 %v4460, %v4478
      %v4497 = vadd.f32 %v4461, %v4478
      %v4498 = vadd.f32 %v4462, %v4478
      %v4499 = vadd.f32 %v4463, %v4478
      %v4500 = vadd.f32 %v4464, %v4478
      %v4501 = vadd.f32 %v4465, %v4478
      %v4502 = vadd.f32 %v4466, %v4478
      %v4503 = vadd.f32 %v4467, %v4478
      %v4504 = vadd.f32 %v4468, %v4478
      %v4505 = vadd.f32 %v4469, %v4478
      %v4506 = vadd.f32 %v4470, %v4478
      %v4507 = vadd.f32 %v4471, %v4478
      %v4508 = vadd.f32 %v4472, %v4478
      %v4509 = vadd.f32 %v4473, %v4478
      %v4510 = vadd.f32 %v4474, %v4478
      %v4511 = vmax.f32 %v4479, 0.0
      %v4512 = vmax.f32 %v4480, 0.0
      %v4513 = vmax.f32 %v4481, 0.0
      %v4514 = vmax.f32 %v4482, 0.0
      %v4515 = vmax.f32 %v4483, 0.0
      %v4516 = vmax.f32 %v4484, 0.0
      %v4517 = vmax.f32 %v4485, 0.0
      %v4518 = vmax.f32 %v4486, 0.0
      %v4519 = vmax.f32 %v4487, 0.0
      %v4520 = vmax.f32 %v4488, 0.0
      %v4521 = vmax.f32 %v4489, 0.0
      %v4522 = vmax.f32 %v4490, 0.0
      %v4523 = vmax.f32 %v4491, 0.0
      %v4524 = vmax.f32 %v4492, 0.0
      %v4525 = vmax.f32 %v4493, 0.0
      %v4526 = vmax.f32 %v4494, 0.0
      %v4527 = vmax.f32 %v4495, 0.0
      %v4528 = vmax.f32 %v4496, 0.0
      %v4529 = vmax.f32 %v4497, 0.0
      %v4530 = vmax.f32 %v4498, 0.0
      %v4531 = vmax.f32 %v4499, 0.0
      %v4532 = vmax.f32 %v4500, 0.0
      %v4533 = vmax.f32 %v4501, 0.0
      %v4534 = vmax.f32 %v4502, 0.0
      %v4535 = vmax.f32 %v4503, 0.0
      %v4536 = vmax.f32 %v4504, 0.0
      %v4537 = vmax.f32 %v4505, 0.0
      %v4538 = vmax.f32 %v4506, 0.0
      %v4539 = vmax.f32 %v4507, 0.0
      %v4540 = vmax.f32 %v4508, 0.0
      %v4541 = vmax.f32 %v4509, 0.0
      %v4542 = vmax.f32 %v4510, 0.0
      %4543 = vst [vmem:[#allocation4] sm:$0xff] 0.0
      %4544 = vst [vmem:[#allocation4 + $0x8] sm:$0xff] 0.0
      %4545 = vst [vmem:[#allocation4 + $0x10] sm:$0x3] 0.0
      %4546 = vst [vmem:[#allocation4 + $0x18] sm:$0xff] 0.0
      %4547 = vst [vmem:[#allocation4 + $0x20] sm:$0xff] 0.0
      %4548 = vst [vmem:[#allocation4 + $0x28] sm:$0x3] 0.0
      %4549 = vst [vmem:[#allocation4 + $0x30] sm:$0xff] 0.0
      %4550 = vst [vmem:[#allocation4 + $0x38] sm:$0xff] 0.0
      %4551 = vst [vmem:[#allocation4 + $0x40] sm:$0x3] 0.0
      %4552 = vst [vmem:[#allocation4 + $0x48] sm:$0xff] 0.0
      %4553 = vst [vmem:[#allocation4 + $0x50] sm:$0xff] 0.0
      %4554 = vst [vmem:[#allocation4 + $0x58] sm:$0x3] 0.0
      %4555 = vst [vmem:[#allocation4 + $0x60] sm:$0xff] 0.0
      %4556 = vst [vmem:[#allocation4 + $0x68] sm:$0xff] 0.0
      %4557 = vst [vmem:[#allocation4 + $0x70] sm:$0x3] 0.0
      %4558 = vst [vmem:[#allocation4 + $0x78] sm:$0xff] 0.0
      %4559 = vst [vmem:[#allocation4 + $0x80] sm:$0xff] 0.0
      %4560 = vst [vmem:[#allocation4 + $0x88] sm:$0x3] 0.0
      %4561 = vst [vmem:[#allocation4 + $0x90] sm:$0xff] 0.0
      %4562 = vst [vmem:[#allocation4 + $0x98] sm:$0xff] 0.0
      %4563 = vst [vmem:[#allocation4 + $0xa0] sm:$0x3] 0.0
      %4564 = vst [vmem:[#allocation4 + $0xa8] sm:$0xff] 0.0
      %4565 = vst [vmem:[#allocation4 + $0xb0] sm:$0xff] 0.0
      %4566 = vst [vmem:[#allocation4 + $0xb8] sm:$0x3] 0.0
      %4567 = vst [vmem:[#allocation4 + $0xc0] sm:$0xff] 0.0
      %4568 = vst [vmem:[#allocation4 + $0xc8] sm:$0xff] 0.0
      %4569 = vst [vmem:[#allocation4 + $0xd0] sm:$0x3] 0.0
      %4570 = vst [vmem:[#allocation4 + $0xd8] sm:$0xff] 0.0
      %4571 = vst [vmem:[#allocation4 + $0xe0] sm:$0xff] 0.0
      %4572 = vst [vmem:[#allocation4 + $0xe8] sm:$0x3] 0.0
      %4573 = vst [vmem:[#allocation4 + $0xf0] sm:$0xff] 0.0
      %4574 = vst [vmem:[#allocation4 + $0xf8] sm:$0xff] 0.0
      %4575 = vst [vmem:[#allocation4 + $0x100] sm:$0x3] 0.0
      %4576 = vst [vmem:[#allocation4 + $0x108] sm:$0xff] 0.0
      %4577 = vst [vmem:[#allocation4 + $0x110] sm:$0xff] 0.0
      %4578 = vst [vmem:[#allocation4 + $0x118] sm:$0x3] 0.0
      %4579 = vst [vmem:[#allocation4 + $0x120] sm:$0xff] 0.0
      %4580 = vst [vmem:[#allocation4 + $0x128] sm:$0xff] 0.0
      %4581 = vst [vmem:[#allocation4 + $0x130] sm:$0x3] 0.0
      %4582 = vst [vmem:[#allocation4 + $0x138] sm:$0xff] 0.0
      %4583 = vst [vmem:[#allocation4 + $0x140] sm:$0xff] 0.0
      %4584 = vst [vmem:[#allocation4 + $0x148] sm:$0x3] 0.0
      %4585 = vst [vmem:[#allocation4 + $0x150] sm:$0xff] 0.0
      %4586 = vst [vmem:[#allocation4 + $0x158] sm:$0xff] 0.0
      %4587 = vst [vmem:[#allocation4 + $0x160] sm:$0x3] 0.0
      %4588 = vst [vmem:[#allocation4 + $0x168] sm:$0xff] 0.0
      %4589 = vst [vmem:[#allocation4 + $0x170] sm:$0xff] 0.0
      %4590 = vst [vmem:[#allocation4 + $0x178] sm:$0x3] 0.0
      %4591 = vst [vmem:[#allocation4 + $0x180] sm:$0xff] 0.0
      %4592 = vst [vmem:[#allocation4 + $0x188] sm:$0xff] 0.0
      %4593 = vst [vmem:[#allocation4 + $0x190] sm:$0x3] 0.0
      %4594 = vst [vmem:[#allocation4 + $0x198] sm:$0xff] 0.0
      %4595 = vst [vmem:[#allocation4 + $0x1a0] sm:$0xff] 0.0
      %4596 = vst [vmem:[#allocation4 + $0x1a8] sm:$0x3] 0.0
      %s4597 = scalar_lea.vmem [#allocation4], 24
      %4598 = vst [vmem:[%s4597 + $0x1] sm:$0xff] %v4511
      %4599 = vst [vmem:[%s4597 + $0x9] sm:$0xff] %v4512
      %4600 = vst [vmem:[%s4597 + $0x19] sm:$0xff] %v4513
      %4601 = vst [vmem:[%s4597 + $0x21] sm:$0xff] %v4514
      %4602 = vst [vmem:[%s4597 + $0x31] sm:$0xff] %v4515
      %4603 = vst [vmem:[%s4597 + $0x39] sm:$0xff] %v4516
      %4604 = vst [vmem:[%s4597 + $0x49] sm:$0xff] %v4517
      %4605 = vst [vmem:[%s4597 + $0x51] sm:$0xff] %v4518
      %4606 = vst [vmem:[%s4597 + $0x61] sm:$0xff] %v4519
      %4607 = vst [vmem:[%s4597 + $0x69] sm:$0xff] %v4520
      %4608 = vst [vmem:[%s4597 + $0x79] sm:$0xff] %v4521
      %4609 = vst [vmem:[%s4597 + $0x81] sm:$0xff] %v4522
      %4610 = vst [vmem:[%s4597 + $0x91] sm:$0xff] %v4523
      %4611 = vst [vmem:[%s4597 + $0x99] sm:$0xff] %v4524
      %4612 = vst [vmem:[%s4597 + $0xa9] sm:$0xff] %v4525
      %4613 = vst [vmem:[%s4597 + $0xb1] sm:$0xff] %v4526
      %4614 = vst [vmem:[%s4597 + $0xc1] sm:$0xff] %v4527
      %4615 = vst [vmem:[%s4597 + $0xc9] sm:$0xff] %v4528
      %4616 = vst [vmem:[%s4597 + $0xd9] sm:$0xff] %v4529
      %4617 = vst [vmem:[%s4597 + $0xe1] sm:$0xff] %v4530
      %4618 = vst [vmem:[%s4597 + $0xf1] sm:$0xff] %v4531
      %4619 = vst [vmem:[%s4597 + $0xf9] sm:$0xff] %v4532
      %4620 = vst [vmem:[%s4597 + $0x109] sm:$0xff] %v4533
      %4621 = vst [vmem:[%s4597 + $0x111] sm:$0xff] %v4534
      %4622 = vst [vmem:[%s4597 + $0x121] sm:$0xff] %v4535
      %4623 = vst [vmem:[%s4597 + $0x129] sm:$0xff] %v4536
      %4624 = vst [vmem:[%s4597 + $0x139] sm:$0xff] %v4537
      %4625 = vst [vmem:[%s4597 + $0x141] sm:$0xff] %v4538
      %4626 = vst [vmem:[%s4597 + $0x151] sm:$0xff] %v4539
      %4627 = vst [vmem:[%s4597 + $0x159] sm:$0xff] %v4540
      %4628 = vst [vmem:[%s4597 + $0x169] sm:$0xff] %v4541
      %4629 = vst [vmem:[%s4597 + $0x171] sm:$0xff] %v4542
      %v4630 = vld [vmem:[#allocation4] sm:$0xff]
      %v4631 = vld [vmem:[#allocation4 + $0x8] sm:$0xff]
      %v4632 = vld [vmem:[#allocation4 + $0x18] sm:$0xff]
      %v4633 = vld [vmem:[#allocation4 + $0x20] sm:$0xff]
      %v4634 = vld [vmem:[#allocation4 + $0x30] sm:$0xff]
      %v4635 = vld [vmem:[#allocation4 + $0x38] sm:$0xff]
      %v4636 = vld [vmem:[#allocation4 + $0x48] sm:$0xff]
      %v4637 = vld [vmem:[#allocation4 + $0x50] sm:$0xff]
      %v4638 = vld [vmem:[#allocation4 + $0x60] sm:$0xff]
      %v4639 = vld [vmem:[#allocation4 + $0x68] sm:$0xff]
      %v4640 = vld [vmem:[#allocation4 + $0x78] sm:$0xff]
      %v4641 = vld [vmem:[#allocation4 + $0x80] sm:$0xff]
      %v4642 = vld [vmem:[#allocation4 + $0x90] sm:$0xff]
      %v4643 = vld [vmem:[#allocation4 + $0x98] sm:$0xff]
      %v4644 = vld [vmem:[#allocation4 + $0xa8] sm:$0xff]
      %v4645 = vld [vmem:[#allocation4 + $0xb0] sm:$0xff]
      %v4646 = vld [vmem:[#allocation4 + $0xc0] sm:$0xff]
      %v4647 = vld [vmem:[#allocation4 + $0xc8] sm:$0xff]
      %v4648 = vld [vmem:[#allocation4 + $0xd8] sm:$0xff]
      %v4649 = vld [vmem:[#allocation4 + $0xe0] sm:$0xff]
      %v4650 = vld [vmem:[#allocation4 + $0xf0] sm:$0xff]
      %v4651 = vld [vmem:[#allocation4 + $0xf8] sm:$0xff]
      %v4652 = vld [vmem:[#allocation4 + $0x108] sm:$0xff]
      %v4653 = vld [vmem:[#allocation4 + $0x110] sm:$0xff]
      %v4654 = vld [vmem:[#allocation4 + $0x120] sm:$0xff]
      %v4655 = vld [vmem:[#allocation4 + $0x128] sm:$0xff]
      %v4656 = vld [vmem:[#allocation4 + $0x138] sm:$0xff]
      %v4657 = vld [vmem:[#allocation4 + $0x140] sm:$0xff]
      %v4658 = vld [vmem:[#allocation4 + $0x150] sm:$0xff]
      %v4659 = vld [vmem:[#allocation4 + $0x158] sm:$0xff]
      %v4660 = vld [vmem:[#allocation4 + $0x168] sm:$0xff]
      %v4661 = vld [vmem:[#allocation4 + $0x170] sm:$0xff]
      %v4662 = vpack.c.bf16 %v4631, %v4630
      %v4663 = vpack.c.bf16 %v4633, %v4632
      %v4664 = vpack.c.bf16 %v4635, %v4634
      %v4665 = vpack.c.bf16 %v4637, %v4636
      %v4666 = vpack.c.bf16 %v4639, %v4638
      %v4667 = vpack.c.bf16 %v4641, %v4640
      %v4668 = vpack.c.bf16 %v4643, %v4642
      %v4669 = vpack.c.bf16 %v4645, %v4644
      %v4670 = vpack.c.bf16 %v4647, %v4646
      %v4671 = vpack.c.bf16 %v4649, %v4648
      %v4672 = vpack.c.bf16 %v4651, %v4650
      %v4673 = vpack.c.bf16 %v4653, %v4652
      %v4674 = vpack.c.bf16 %v4655, %v4654
      %v4675 = vpack.c.bf16 %v4657, %v4656
      %v4676 = vpack.c.bf16 %v4659, %v4658
      %v4677 = vpack.c.bf16 %v4661, %v4660
      %v4694 = vunpack.c.l.b16 %v4662
      %v4695 = vunpack.c.h.b16 %v4662
      %v4696 = vunpack.c.l.b16 %v4663
      %v4697 = vunpack.c.h.b16 %v4663
      %v4698 = vunpack.c.l.b16 %v4664
      %v4699 = vunpack.c.h.b16 %v4664
      %v4700 = vunpack.c.l.b16 %v4665
      %v4701 = vunpack.c.h.b16 %v4665
      %v4702 = vunpack.c.l.b16 %v4666
      %v4703 = vunpack.c.h.b16 %v4666
      %v4704 = vunpack.c.l.b16 %v4667
      %v4705 = vunpack.c.h.b16 %v4667
      %v4706 = vunpack.c.l.b16 %v4668
      %v4707 = vunpack.c.h.b16 %v4668
      %v4708 = vunpack.c.l.b16 %v4669
      %v4709 = vunpack.c.h.b16 %v4669
      %v4710 = vunpack.c.l.b16 %v4670
      %v4711 = vunpack.c.h.b16 %v4670
      %v4712 = vunpack.c.l.b16 %v4671
      %v4713 = vunpack.c.h.b16 %v4671
      %v4714 = vunpack.c.l.b16 %v4672
      %v4715 = vunpack.c.h.b16 %v4672
      %v4716 = vunpack.c.l.b16 %v4673
      %v4717 = vunpack.c.h.b16 %v4673
      %v4718 = vunpack.c.l.b16 %v4674
      %v4719 = vunpack.c.h.b16 %v4674
      %v4720 = vunpack.c.l.b16 %v4675
      %v4721 = vunpack.c.h.b16 %v4675
      %v4722 = vunpack.c.l.b16 %v4676
      %v4723 = vunpack.c.h.b16 %v4676
      %v4724 = vunpack.c.l.b16 %v4677
      %v4725 = vunpack.c.h.b16 %v4677
      %v4726 = vpack.c.b16 %v4694, %v4694
      %v4727 = vpack.c.b16 %v4695, %v4695
      %v4728 = vpack.c.b16 %v4696, %v4696
      %v4729 = vpack.c.b16 %v4697, %v4697
      %v4730 = vpack.c.b16 %v4698, %v4698
      %v4731 = vpack.c.b16 %v4699, %v4699
      %v4732 = vpack.c.b16 %v4700, %v4700
      %v4733 = vpack.c.b16 %v4701, %v4701
      %v4734 = vpack.c.b16 %v4702, %v4702
      %v4735 = vpack.c.b16 %v4703, %v4703
      %v4736 = vpack.c.b16 %v4704, %v4704
      %v4737 = vpack.c.b16 %v4705, %v4705
      %v4738 = vpack.c.b16 %v4706, %v4706
      %v4739 = vpack.c.b16 %v4707, %v4707
      %v4740 = vpack.c.b16 %v4708, %v4708
      %v4741 = vpack.c.b16 %v4709, %v4709
      %v4742 = vpack.c.b16 %v4710, %v4710
      %v4743 = vpack.c.b16 %v4711, %v4711
      %v4744 = vpack.c.b16 %v4712, %v4712
      %v4745 = vpack.c.b16 %v4713, %v4713
      %v4746 = vpack.c.b16 %v4714, %v4714
      %v4747 = vpack.c.b16 %v4715, %v4715
      %v4748 = vpack.c.b16 %v4716, %v4716
      %v4749 = vpack.c.b16 %v4717, %v4717
      %v4750 = vpack.c.b16 %v4718, %v4718
      %v4751 = vpack.c.b16 %v4719, %v4719
      %v4752 = vpack.c.b16 %v4720, %v4720
      %v4753 = vpack.c.b16 %v4721, %v4721
      %v4754 = vpack.c.b16 %v4722, %v4722
      %v4755 = vpack.c.b16 %v4723, %v4723
      %v4756 = vpack.c.b16 %v4724, %v4724
      %v4757 = vpack.c.b16 %v4725, %v4725
      %4790 = vst [vmem:[#allocation5] sm:$0xf] %v4726
      %4791 = vst [vmem:[#allocation5 + $0x24] sm:$0xf] %v4727
      %4792 = vst [vmem:[#allocation5 + $0x48] sm:$0xf] %v4728
      %4793 = vst [vmem:[#allocation5 + $0x6c] sm:$0xf] %v4729
      %4794 = vst [vmem:[#allocation5 + $0x90] sm:$0xf] %v4730
      %4795 = vst [vmem:[#allocation5 + $0xb4] sm:$0xf] %v4731
      %4796 = vst [vmem:[#allocation5 + $0xd8] sm:$0xf] %v4732
      %4797 = vst [vmem:[#allocation5 + $0xfc] sm:$0xf] %v4733
      %4798 = vst [vmem:[#allocation5 + $0x120] sm:$0xf] %v4734
      %4799 = vst [vmem:[#allocation5 + $0x144] sm:$0xf] %v4735
      %4800 = vst [vmem:[#allocation5 + $0x168] sm:$0xf] %v4736
      %4801 = vst [vmem:[#allocation5 + $0x18c] sm:$0xf] %v4737
      %4802 = vst [vmem:[#allocation5 + $0x1b0] sm:$0xf] %v4738
      %4803 = vst [vmem:[#allocation5 + $0x1d4] sm:$0xf] %v4739
      %4804 = vst [vmem:[#allocation5 + $0x1f8] sm:$0xf] %v4740
      %4805 = vst [vmem:[#allocation5 + $0x21c] sm:$0xf] %v4741
      %4806 = vst [vmem:[#allocation5 + $0x240] sm:$0xf] %v4742
      %4807 = vst [vmem:[#allocation5 + $0x264] sm:$0xf] %v4743
      %4808 = vst [vmem:[#allocation5 + $0x288] sm:$0xf] %v4744
      %4809 = vst [vmem:[#allocation5 + $0x2ac] sm:$0xf] %v4745
      %4810 = vst [vmem:[#allocation5 + $0x2d0] sm:$0xf] %v4746
      %4811 = vst [vmem:[#allocation5 + $0x2f4] sm:$0xf] %v4747
      %4812 = vst [vmem:[#allocation5 + $0x318] sm:$0xf] %v4748
      %4813 = vst [vmem:[#allocation5 + $0x33c] sm:$0xf] %v4749
      %4814 = vst [vmem:[#allocation5 + $0x360] sm:$0xf] %v4750
      %4815 = vst [vmem:[#allocation5 + $0x384] sm:$0xf] %v4751
      %4816 = vst [vmem:[#allocation5 + $0x3a8] sm:$0xf] %v4752
      %4817 = vst [vmem:[#allocation5 + $0x3cc] sm:$0xf] %v4753
      %4818 = vst [vmem:[#allocation5 + $0x3f0] sm:$0xf] %v4754
      %4819 = vst [vmem:[#allocation5 + $0x414] sm:$0xf] %v4755
      %4820 = vst [vmem:[#allocation5 + $0x438] sm:$0xf] %v4756
      %4821 = vst [vmem:[#allocation5 + $0x45c] sm:$0xf] %v4757
      %v4822 = vld [vmem:[#allocation4 + $0x1] sm:$0xff]
      %v4823 = vld [vmem:[#allocation4 + $0x9] sm:$0xff]
      %v4824 = vld [vmem:[#allocation4 + $0x19] sm:$0xff]
      %v4825 = vld [vmem:[#allocation4 + $0x21] sm:$0xff]
      %v4826 = vld [vmem:[#allocation4 + $0x31] sm:$0xff]
      %v4827 = vld [vmem:[#allocation4 + $0x39] sm:$0xff]
      %v4828 = vld [vmem:[#allocation4 + $0x49] sm:$0xff]
      %v4829 = vld [vmem:[#allocation4 + $0x51] sm:$0xff]
      %v4830 = vld [vmem:[#allocation4 + $0x61] sm:$0xff]
      %v4831 = vld [vmem:[#allocation4 + $0x69] sm:$0xff]
      %v4832 = vld [vmem:[#allocation4 + $0x79] sm:$0xff]
      %v4833 = vld [vmem:[#allocation4 + $0x81] sm:$0xff]
      %v4834 = vld [vmem:[#allocation4 + $0x91] sm:$0xff]
      %v4835 = vld [vmem:[#allocation4 + $0x99] sm:$0xff]
      %v4836 = vld [vmem:[#allocation4 + $0xa9] sm:$0xff]
      %v4837 = vld [vmem:[#allocation4 + $0xb1] sm:$0xff]
      %v4838 = vld [vmem:[#allocation4 + $0xc1] sm:$0xff]
      %v4839 = vld [vmem:[#allocation4 + $0xc9] sm:$0xff]
      %v4840 = vld [vmem:[#allocation4 + $0xd9] sm:$0xff]
      %v4841 = vld [vmem:[#allocation4 + $0xe1] sm:$0xff]
      %v4842 = vld [vmem:[#allocation4 + $0xf1] sm:$0xff]
      %v4843 = vld [vmem:[#allocation4 + $0xf9] sm:$0xff]
      %v4844 = vld [vmem:[#allocation4 + $0x109] sm:$0xff]
      %v4845 = vld [vmem:[#allocation4 + $0x111] sm:$0xff]
      %v4846 = vld [vmem:[#allocation4 + $0x121] sm:$0xff]
      %v4847 = vld [vmem:[#allocation4 + $0x129] sm:$0xff]
      %v4848 = vld [vmem:[#allocation4 + $0x139] sm:$0xff]
      %v4849 = vld [vmem:[#allocation4 + $0x141] sm:$0xff]
      %v4850 = vld [vmem:[#allocation4 + $0x151] sm:$0xff]
      %v4851 = vld [vmem:[#allocation4 + $0x159] sm:$0xff]
      %v4852 = vld [vmem:[#allocation4 + $0x169] sm:$0xff]
      %v4853 = vld [vmem:[#allocation4 + $0x171] sm:$0xff]
      %v4854 = vpack.c.bf16 %v4823, %v4822
      %v4855 = vpack.c.bf16 %v4825, %v4824
      %v4856 = vpack.c.bf16 %v4827, %v4826
      %v4857 = vpack.c.bf16 %v4829, %v4828
      %v4858 = vpack.c.bf16 %v4831, %v4830
      %v4859 = vpack.c.bf16 %v4833, %v4832
      %v4860 = vpack.c.bf16 %v4835, %v4834
      %v4861 = vpack.c.bf16 %v4837, %v4836
      %v4862 = vpack.c.bf16 %v4839, %v4838
      %v4863 = vpack.c.bf16 %v4841, %v4840
      %v4864 = vpack.c.bf16 %v4843, %v4842
      %v4865 = vpack.c.bf16 %v4845, %v4844
      %v4866 = vpack.c.bf16 %v4847, %v4846
      %v4867 = vpack.c.bf16 %v4849, %v4848
      %v4868 = vpack.c.bf16 %v4851, %v4850
      %v4869 = vpack.c.bf16 %v4853, %v4852
      %v4886 = vunpack.c.l.b16 %v4854
      %v4887 = vunpack.c.h.b16 %v4854
      %v4888 = vunpack.c.l.b16 %v4855
      %v4889 = vunpack.c.h.b16 %v4855
      %v4890 = vunpack.c.l.b16 %v4856
      %v4891 = vunpack.c.h.b16 %v4856
      %v4892 = vunpack.c.l.b16 %v4857
      %v4893 = vunpack.c.h.b16 %v4857
      %v4894 = vunpack.c.l.b16 %v4858
      %v4895 = vunpack.c.h.b16 %v4858
      %v4896 = vunpack.c.l.b16 %v4859
      %v4897 = vunpack.c.h.b16 %v4859
      %v4898 = vunpack.c.l.b16 %v4860
      %v4899 = vunpack.c.h.b16 %v4860
      %v4900 = vunpack.c.l.b16 %v4861
      %v4901 = vunpack.c.h.b16 %v4861
      %v4902 = vunpack.c.l.b16 %v4862
      %v4903 = vunpack.c.h.b16 %v4862
      %v4904 = vunpack.c.l.b16 %v4863
      %v4905 = vunpack.c.h.b16 %v4863
      %v4906 = vunpack.c.l.b16 %v4864
      %v4907 = vunpack.c.h.b16 %v4864
      %v4908 = vunpack.c.l.b16 %v4865
      %v4909 = vunpack.c.h.b16 %v4865
      %v4910 = vunpack.c.l.b16 %v4866
      %v4911 = vunpack.c.h.b16 %v4866
      %v4912 = vunpack.c.l.b16 %v4867
      %v4913 = vunpack.c.h.b16 %v4867
      %v4914 = vunpack.c.l.b16 %v4868
      %v4915 = vunpack.c.h.b16 %v4868
      %v4916 = vunpack.c.l.b16 %v4869
      %v4917 = vunpack.c.h.b16 %v4869
      %v4918 = vpack.c.b16 %v4886, %v4886
      %v4919 = vpack.c.b16 %v4887, %v4887
      %v4920 = vpack.c.b16 %v4888, %v4888
      %v4921 = vpack.c.b16 %v4889, %v4889
      %v4922 = vpack.c.b16 %v4890, %v4890
      %v4923 = vpack.c.b16 %v4891, %v4891
      %v4924 = vpack.c.b16 %v4892, %v4892
      %v4925 = vpack.c.b16 %v4893, %v4893
      %v4926 = vpack.c.b16 %v4894, %v4894
      %v4927 = vpack.c.b16 %v4895, %v4895
      %v4928 = vpack.c.b16 %v4896, %v4896
      %v4929 = vpack.c.b16 %v4897, %v4897
      %v4930 = vpack.c.b16 %v4898, %v4898
      %v4931 = vpack.c.b16 %v4899, %v4899
      %v4932 = vpack.c.b16 %v4900, %v4900
      %v4933 = vpack.c.b16 %v4901, %v4901
      %v4934 = vpack.c.b16 %v4902, %v4902
      %v4935 = vpack.c.b16 %v4903, %v4903
      %v4936 = vpack.c.b16 %v4904, %v4904
      %v4937 = vpack.c.b16 %v4905, %v4905
      %v4938 = vpack.c.b16 %v4906, %v4906
      %v4939 = vpack.c.b16 %v4907, %v4907
      %v4940 = vpack.c.b16 %v4908, %v4908
      %v4941 = vpack.c.b16 %v4909, %v4909
      %v4942 = vpack.c.b16 %v4910, %v4910
      %v4943 = vpack.c.b16 %v4911, %v4911
      %v4944 = vpack.c.b16 %v4912, %v4912
      %v4945 = vpack.c.b16 %v4913, %v4913
      %v4946 = vpack.c.b16 %v4914, %v4914
      %v4947 = vpack.c.b16 %v4915, %v4915
      %v4948 = vpack.c.b16 %v4916, %v4916
      %v4949 = vpack.c.b16 %v4917, %v4917
      %4982 = vst [vmem:[#allocation5 + $0x4] sm:$0xf] %v4918
      %4983 = vst [vmem:[#allocation5 + $0x28] sm:$0xf] %v4919
      %4984 = vst [vmem:[#allocation5 + $0x4c] sm:$0xf] %v4920
      %4985 = vst [vmem:[#allocation5 + $0x70] sm:$0xf] %v4921
      %4986 = vst [vmem:[#allocation5 + $0x94] sm:$0xf] %v4922
      %4987 = vst [vmem:[#allocation5 + $0xb8] sm:$0xf] %v4923
      %4988 = vst [vmem:[#allocation5 + $0xdc] sm:$0xf] %v4924
      %4989 = vst [vmem:[#allocation5 + $0x100] sm:$0xf] %v4925
      %4990 = vst [vmem:[#allocation5 + $0x124] sm:$0xf] %v4926
      %4991 = vst [vmem:[#allocation5 + $0x148] sm:$0xf] %v4927
      %4992 = vst [vmem:[#allocation5 + $0x16c] sm:$0xf] %v4928
      %4993 = vst [vmem:[#allocation5 + $0x190] sm:$0xf] %v4929
      %4994 = vst [vmem:[#allocation5 + $0x1b4] sm:$0xf] %v4930
      %4995 = vst [vmem:[#allocation5 + $0x1d8] sm:$0xf] %v4931
      %4996 = vst [vmem:[#allocation5 + $0x1fc] sm:$0xf] %v4932
      %4997 = vst [vmem:[#allocation5 + $0x220] sm:$0xf] %v4933
      %4998 = vst [vmem:[#allocation5 + $0x244] sm:$0xf] %v4934
      %4999 = vst [vmem:[#allocation5 + $0x268] sm:$0xf] %v4935
      %5000 = vst [vmem:[#allocation5 + $0x28c] sm:$0xf] %v4936
      %5001 = vst [vmem:[#allocation5 + $0x2b0] sm:$0xf] %v4937
      %5002 = vst [vmem:[#allocation5 + $0x2d4] sm:$0xf] %v4938
      %5003 = vst [vmem:[#allocation5 + $0x2f8] sm:$0xf] %v4939
      %5004 = vst [vmem:[#allocation5 + $0x31c] sm:$0xf] %v4940
      %5005 = vst [vmem:[#allocation5 + $0x340] sm:$0xf] %v4941
      %5006 = vst [vmem:[#allocation5 + $0x364] sm:$0xf] %v4942
      %5007 = vst [vmem:[#allocation5 + $0x388] sm:$0xf] %v4943
      %5008 = vst [vmem:[#allocation5 + $0x3ac] sm:$0xf] %v4944
      %5009 = vst [vmem:[#allocation5 + $0x3d0] sm:$0xf] %v4945
      %5010 = vst [vmem:[#allocation5 + $0x3f4] sm:$0xf] %v4946
      %5011 = vst [vmem:[#allocation5 + $0x418] sm:$0xf] %v4947
      %5012 = vst [vmem:[#allocation5 + $0x43c] sm:$0xf] %v4948
      %5013 = vst [vmem:[#allocation5 + $0x460] sm:$0xf] %v4949
      %v5014 = vld [vmem:[#allocation4 + $0x2] sm:$0xff]
      %v5015 = vld [vmem:[#allocation4 + $0xa] sm:$0xff]
      %v5016 = vld [vmem:[#allocation4 + $0x1a] sm:$0xff]
      %v5017 = vld [vmem:[#allocation4 + $0x22] sm:$0xff]
      %v5018 = vld [vmem:[#allocation4 + $0x32] sm:$0xff]
      %v5019 = vld [vmem:[#allocation4 + $0x3a] sm:$0xff]
      %v5020 = vld [vmem:[#allocation4 + $0x4a] sm:$0xff]
      %v5021 = vld [vmem:[#allocation4 + $0x52] sm:$0xff]
      %v5022 = vld [vmem:[#allocation4 + $0x62] sm:$0xff]
      %v5023 = vld [vmem:[#allocation4 + $0x6a] sm:$0xff]
      %v5024 = vld [vmem:[#allocation4 + $0x7a] sm:$0xff]
      %v5025 = vld [vmem:[#allocation4 + $0x82] sm:$0xff]
      %v5026 = vld [vmem:[#allocation4 + $0x92] sm:$0xff]
      %v5027 = vld [vmem:[#allocation4 + $0x9a] sm:$0xff]
      %v5028 = vld [vmem:[#allocation4 + $0xaa] sm:$0xff]
      %v5029 = vld [vmem:[#allocation4 + $0xb2] sm:$0xff]
      %v5030 = vld [vmem:[#allocation4 + $0xc2] sm:$0xff]
      %v5031 = vld [vmem:[#allocation4 + $0xca] sm:$0xff]
      %v5032 = vld [vmem:[#allocation4 + $0xda] sm:$0xff]
      %v5033 = vld [vmem:[#allocation4 + $0xe2] sm:$0xff]
      %v5034 = vld [vmem:[#allocation4 + $0xf2] sm:$0xff]
      %v5035 = vld [vmem:[#allocation4 + $0xfa] sm:$0xff]
      %v5036 = vld [vmem:[#allocation4 + $0x10a] sm:$0xff]
      %v5037 = vld [vmem:[#allocation4 + $0x112] sm:$0xff]
      %v5038 = vld [vmem:[#allocation4 + $0x122] sm:$0xff]
      %v5039 = vld [vmem:[#allocation4 + $0x12a] sm:$0xff]
      %v5040 = vld [vmem:[#allocation4 + $0x13a] sm:$0xff]
      %v5041 = vld [vmem:[#allocation4 + $0x142] sm:$0xff]
      %v5042 = vld [vmem:[#allocation4 + $0x152] sm:$0xff]
      %v5043 = vld [vmem:[#allocation4 + $0x15a] sm:$0xff]
      %v5044 = vld [vmem:[#allocation4 + $0x16a] sm:$0xff]
      %v5045 = vld [vmem:[#allocation4 + $0x172] sm:$0xff]
      %v5046 = vpack.c.bf16 %v5015, %v5014
      %v5047 = vpack.c.bf16 %v5017, %v5016
      %v5048 = vpack.c.bf16 %v5019, %v5018
      %v5049 = vpack.c.bf16 %v5021, %v5020
      %v5050 = vpack.c.bf16 %v5023, %v5022
      %v5051 = vpack.c.bf16 %v5025, %v5024
      %v5052 = vpack.c.bf16 %v5027, %v5026
      %v5053 = vpack.c.bf16 %v5029, %v5028
      %v5054 = vpack.c.bf16 %v5031, %v5030
      %v5055 = vpack.c.bf16 %v5033, %v5032
      %v5056 = vpack.c.bf16 %v5035, %v5034
      %v5057 = vpack.c.bf16 %v5037, %v5036
      %v5058 = vpack.c.bf16 %v5039, %v5038
      %v5059 = vpack.c.bf16 %v5041, %v5040
      %v5060 = vpack.c.bf16 %v5043, %v5042
      %v5061 = vpack.c.bf16 %v5045, %v5044
      %v5078 = vunpack.c.l.b16 %v5046
      %v5079 = vunpack.c.h.b16 %v5046
      %v5080 = vunpack.c.l.b16 %v5047
      %v5081 = vunpack.c.h.b16 %v5047
      %v5082 = vunpack.c.l.b16 %v5048
      %v5083 = vunpack.c.h.b16 %v5048
      %v5084 = vunpack.c.l.b16 %v5049
      %v5085 = vunpack.c.h.b16 %v5049
      %v5086 = vunpack.c.l.b16 %v5050
      %v5087 = vunpack.c.h.b16 %v5050
      %v5088 = vunpack.c.l.b16 %v5051
      %v5089 = vunpack.c.h.b16 %v5051
      %v5090 = vunpack.c.l.b16 %v5052
      %v5091 = vunpack.c.h.b16 %v5052
      %v5092 = vunpack.c.l.b16 %v5053
      %v5093 = vunpack.c.h.b16 %v5053
      %v5094 = vunpack.c.l.b16 %v5054
      %v5095 = vunpack.c.h.b16 %v5054
      %v5096 = vunpack.c.l.b16 %v5055
      %v5097 = vunpack.c.h.b16 %v5055
      %v5098 = vunpack.c.l.b16 %v5056
      %v5099 = vunpack.c.h.b16 %v5056
      %v5100 = vunpack.c.l.b16 %v5057
      %v5101 = vunpack.c.h.b16 %v5057
      %v5102 = vunpack.c.l.b16 %v5058
      %v5103 = vunpack.c.h.b16 %v5058
      %v5104 = vunpack.c.l.b16 %v5059
      %v5105 = vunpack.c.h.b16 %v5059
      %v5106 = vunpack.c.l.b16 %v5060
      %v5107 = vunpack.c.h.b16 %v5060
      %v5108 = vunpack.c.l.b16 %v5061
      %v5109 = vunpack.c.h.b16 %v5061
      %v5110 = vpack.c.b16 %v5078, %v5078
      %v5111 = vpack.c.b16 %v5079, %v5079
      %v5112 = vpack.c.b16 %v5080, %v5080
      %v5113 = vpack.c.b16 %v5081, %v5081
      %v5114 = vpack.c.b16 %v5082, %v5082
      %v5115 = vpack.c.b16 %v5083, %v5083
      %v5116 = vpack.c.b16 %v5084, %v5084
      %v5117 = vpack.c.b16 %v5085, %v5085
      %v5118 = vpack.c.b16 %v5086, %v5086
      %v5119 = vpack.c.b16 %v5087, %v5087
      %v5120 = vpack.c.b16 %v5088, %v5088
      %v5121 = vpack.c.b16 %v5089, %v5089
      %v5122 = vpack.c.b16 %v5090, %v5090
      %v5123 = vpack.c.b16 %v5091, %v5091
      %v5124 = vpack.c.b16 %v5092, %v5092
      %v5125 = vpack.c.b16 %v5093, %v5093
      %v5126 = vpack.c.b16 %v5094, %v5094
      %v5127 = vpack.c.b16 %v5095, %v5095
      %v5128 = vpack.c.b16 %v5096, %v5096
      %v5129 = vpack.c.b16 %v5097, %v5097
      %v5130 = vpack.c.b16 %v5098, %v5098
      %v5131 = vpack.c.b16 %v5099, %v5099
      %v5132 = vpack.c.b16 %v5100, %v5100
      %v5133 = vpack.c.b16 %v5101, %v5101
      %v5134 = vpack.c.b16 %v5102, %v5102
      %v5135 = vpack.c.b16 %v5103, %v5103
      %v5136 = vpack.c.b16 %v5104, %v5104
      %v5137 = vpack.c.b16 %v5105, %v5105
      %v5138 = vpack.c.b16 %v5106, %v5106
      %v5139 = vpack.c.b16 %v5107, %v5107
      %v5140 = vpack.c.b16 %v5108, %v5108
      %v5141 = vpack.c.b16 %v5109, %v5109
      %5174 = vst [vmem:[#allocation5 + $0x8] sm:$0xf] %v5110
      %5175 = vst [vmem:[#allocation5 + $0x2c] sm:$0xf] %v5111
      %5176 = vst [vmem:[#allocation5 + $0x50] sm:$0xf] %v5112
      %5177 = vst [vmem:[#allocation5 + $0x74] sm:$0xf] %v5113
      %5178 = vst [vmem:[#allocation5 + $0x98] sm:$0xf] %v5114
      %5179 = vst [vmem:[#allocation5 + $0xbc] sm:$0xf] %v5115
      %5180 = vst [vmem:[#allocation5 + $0xe0] sm:$0xf] %v5116
      %5181 = vst [vmem:[#allocation5 + $0x104] sm:$0xf] %v5117
      %5182 = vst [vmem:[#allocation5 + $0x128] sm:$0xf] %v5118
      %5183 = vst [vmem:[#allocation5 + $0x14c] sm:$0xf] %v5119
      %5184 = vst [vmem:[#allocation5 + $0x170] sm:$0xf] %v5120
      %5185 = vst [vmem:[#allocation5 + $0x194] sm:$0xf] %v5121
      %5186 = vst [vmem:[#allocation5 + $0x1b8] sm:$0xf] %v5122
      %5187 = vst [vmem:[#allocation5 + $0x1dc] sm:$0xf] %v5123
      %5188 = vst [vmem:[#allocation5 + $0x200] sm:$0xf] %v5124
      %5189 = vst [vmem:[#allocation5 + $0x224] sm:$0xf] %v5125
      %5190 = vst [vmem:[#allocation5 + $0x248] sm:$0xf] %v5126
      %5191 = vst [vmem:[#allocation5 + $0x26c] sm:$0xf] %v5127
      %5192 = vst [vmem:[#allocation5 + $0x290] sm:$0xf] %v5128
      %5193 = vst [vmem:[#allocation5 + $0x2b4] sm:$0xf] %v5129
      %5194 = vst [vmem:[#allocation5 + $0x2d8] sm:$0xf] %v5130
      %5195 = vst [vmem:[#allocation5 + $0x2fc] sm:$0xf] %v5131
      %5196 = vst [vmem:[#allocation5 + $0x320] sm:$0xf] %v5132
      %5197 = vst [vmem:[#allocation5 + $0x344] sm:$0xf] %v5133
      %5198 = vst [vmem:[#allocation5 + $0x368] sm:$0xf] %v5134
      %5199 = vst [vmem:[#allocation5 + $0x38c] sm:$0xf] %v5135
      %5200 = vst [vmem:[#allocation5 + $0x3b0] sm:$0xf] %v5136
      %5201 = vst [vmem:[#allocation5 + $0x3d4] sm:$0xf] %v5137
      %5202 = vst [vmem:[#allocation5 + $0x3f8] sm:$0xf] %v5138
      %5203 = vst [vmem:[#allocation5 + $0x41c] sm:$0xf] %v5139
      %5204 = vst [vmem:[#allocation5 + $0x440] sm:$0xf] %v5140
      %5205 = vst [vmem:[#allocation5 + $0x464] sm:$0xf] %v5141
      %v5206 = vld [vmem:[%s4597] sm:$0xff]
      %v5207 = vld [vmem:[%s4597 + $0x8] sm:$0xff]
      %v5208 = vld [vmem:[%s4597 + $0x18] sm:$0xff]
      %v5209 = vld [vmem:[%s4597 + $0x20] sm:$0xff]
      %v5210 = vld [vmem:[%s4597 + $0x30] sm:$0xff]
      %v5211 = vld [vmem:[%s4597 + $0x38] sm:$0xff]
      %v5212 = vld [vmem:[%s4597 + $0x48] sm:$0xff]
      %v5213 = vld [vmem:[%s4597 + $0x50] sm:$0xff]
      %v5214 = vld [vmem:[%s4597 + $0x60] sm:$0xff]
      %v5215 = vld [vmem:[%s4597 + $0x68] sm:$0xff]
      %v5216 = vld [vmem:[%s4597 + $0x78] sm:$0xff]
      %v5217 = vld [vmem:[%s4597 + $0x80] sm:$0xff]
      %v5218 = vld [vmem:[%s4597 + $0x90] sm:$0xff]
      %v5219 = vld [vmem:[%s4597 + $0x98] sm:$0xff]
      %v5220 = vld [vmem:[%s4597 + $0xa8] sm:$0xff]
      %v5221 = vld [vmem:[%s4597 + $0xb0] sm:$0xff]
      %v5222 = vld [vmem:[%s4597 + $0xc0] sm:$0xff]
      %v5223 = vld [vmem:[%s4597 + $0xc8] sm:$0xff]
      %v5224 = vld [vmem:[%s4597 + $0xd8] sm:$0xff]
      %v5225 = vld [vmem:[%s4597 + $0xe0] sm:$0xff]
      %v5226 = vld [vmem:[%s4597 + $0xf0] sm:$0xff]
      %v5227 = vld [vmem:[%s4597 + $0xf8] sm:$0xff]
      %v5228 = vld [vmem:[%s4597 + $0x108] sm:$0xff]
      %v5229 = vld [vmem:[%s4597 + $0x110] sm:$0xff]
      %v5230 = vld [vmem:[%s4597 + $0x120] sm:$0xff]
      %v5231 = vld [vmem:[%s4597 + $0x128] sm:$0xff]
      %v5232 = vld [vmem:[%s4597 + $0x138] sm:$0xff]
      %v5233 = vld [vmem:[%s4597 + $0x140] sm:$0xff]
      %v5234 = vld [vmem:[%s4597 + $0x150] sm:$0xff]
      %v5235 = vld [vmem:[%s4597 + $0x158] sm:$0xff]
      %v5236 = vld [vmem:[%s4597 + $0x168] sm:$0xff]
      %v5237 = vld [vmem:[%s4597 + $0x170] sm:$0xff]
      %v5238 = vpack.c.bf16 %v5207, %v5206
      %v5239 = vpack.c.bf16 %v5209, %v5208
      %v5240 = vpack.c.bf16 %v5211, %v5210
      %v5241 = vpack.c.bf16 %v5213, %v5212
      %v5242 = vpack.c.bf16 %v5215, %v5214
      %v5243 = vpack.c.bf16 %v5217, %v5216
      %v5244 = vpack.c.bf16 %v5219, %v5218
      %v5245 = vpack.c.bf16 %v5221, %v5220
      %v5246 = vpack.c.bf16 %v5223, %v5222
      %v5247 = vpack.c.bf16 %v5225, %v5224
      %v5248 = vpack.c.bf16 %v5227, %v5226
      %v5249 = vpack.c.bf16 %v5229, %v5228
      %v5250 = vpack.c.bf16 %v5231, %v5230
      %v5251 = vpack.c.bf16 %v5233, %v5232
      %v5252 = vpack.c.bf16 %v5235, %v5234
      %v5253 = vpack.c.bf16 %v5237, %v5236
      %v5270 = vunpack.c.l.b16 %v5238
      %v5271 = vunpack.c.h.b16 %v5238
      %v5272 = vunpack.c.l.b16 %v5239
      %v5273 = vunpack.c.h.b16 %v5239
      %v5274 = vunpack.c.l.b16 %v5240
      %v5275 = vunpack.c.h.b16 %v5240
      %v5276 = vunpack.c.l.b16 %v5241
      %v5277 = vunpack.c.h.b16 %v5241
      %v5278 = vunpack.c.l.b16 %v5242
      %v5279 = vunpack.c.h.b16 %v5242
      %v5280 = vunpack.c.l.b16 %v5243
      %v5281 = vunpack.c.h.b16 %v5243
      %v5282 = vunpack.c.l.b16 %v5244
      %v5283 = vunpack.c.h.b16 %v5244
      %v5284 = vunpack.c.l.b16 %v5245
      %v5285 = vunpack.c.h.b16 %v5245
      %v5286 = vunpack.c.l.b16 %v5246
      %v5287 = vunpack.c.h.b16 %v5246
      %v5288 = vunpack.c.l.b16 %v5247
      %v5289 = vunpack.c.h.b16 %v5247
      %v5290 = vunpack.c.l.b16 %v5248
      %v5291 = vunpack.c.h.b16 %v5248
      %v5292 = vunpack.c.l.b16 %v5249
      %v5293 = vunpack.c.h.b16 %v5249
      %v5294 = vunpack.c.l.b16 %v5250
      %v5295 = vunpack.c.h.b16 %v5250
      %v5296 = vunpack.c.l.b16 %v5251
      %v5297 = vunpack.c.h.b16 %v5251
      %v5298 = vunpack.c.l.b16 %v5252
      %v5299 = vunpack.c.h.b16 %v5252
      %v5300 = vunpack.c.l.b16 %v5253
      %v5301 = vunpack.c.h.b16 %v5253
      %v5302 = vpack.c.b16 %v5270, %v5270
      %v5303 = vpack.c.b16 %v5271, %v5271
      %v5304 = vpack.c.b16 %v5272, %v5272
      %v5305 = vpack.c.b16 %v5273, %v5273
      %v5306 = vpack.c.b16 %v5274, %v5274
      %v5307 = vpack.c.b16 %v5275, %v5275
      %v5308 = vpack.c.b16 %v5276, %v5276
      %v5309 = vpack.c.b16 %v5277, %v5277
      %v5310 = vpack.c.b16 %v5278, %v5278
      %v5311 = vpack.c.b16 %v5279, %v5279
      %v5312 = vpack.c.b16 %v5280, %v5280
      %v5313 = vpack.c.b16 %v5281, %v5281
      %v5314 = vpack.c.b16 %v5282, %v5282
      %v5315 = vpack.c.b16 %v5283, %v5283
      %v5316 = vpack.c.b16 %v5284, %v5284
      %v5317 = vpack.c.b16 %v5285, %v5285
      %v5318 = vpack.c.b16 %v5286, %v5286
      %v5319 = vpack.c.b16 %v5287, %v5287
      %v5320 = vpack.c.b16 %v5288, %v5288
      %v5321 = vpack.c.b16 %v5289, %v5289
      %v5322 = vpack.c.b16 %v5290, %v5290
      %v5323 = vpack.c.b16 %v5291, %v5291
      %v5324 = vpack.c.b16 %v5292, %v5292
      %v5325 = vpack.c.b16 %v5293, %v5293
      %v5326 = vpack.c.b16 %v5294, %v5294
      %v5327 = vpack.c.b16 %v5295, %v5295
      %v5328 = vpack.c.b16 %v5296, %v5296
      %v5329 = vpack.c.b16 %v5297, %v5297
      %v5330 = vpack.c.b16 %v5298, %v5298
      %v5331 = vpack.c.b16 %v5299, %v5299
      %v5332 = vpack.c.b16 %v5300, %v5300
      %v5333 = vpack.c.b16 %v5301, %v5301
      %5366 = vst [vmem:[#allocation5 + $0xc] sm:$0xf] %v5302
      %5367 = vst [vmem:[#allocation5 + $0x30] sm:$0xf] %v5303
      %5368 = vst [vmem:[#allocation5 + $0x54] sm:$0xf] %v5304
      %5369 = vst [vmem:[#allocation5 + $0x78] sm:$0xf] %v5305
      %5370 = vst [vmem:[#allocation5 + $0x9c] sm:$0xf] %v5306
      %5371 = vst [vmem:[#allocation5 + $0xc0] sm:$0xf] %v5307
      %5372 = vst [vmem:[#allocation5 + $0xe4] sm:$0xf] %v5308
      %5373 = vst [vmem:[#allocation5 + $0x108] sm:$0xf] %v5309
      %5374 = vst [vmem:[#allocation5 + $0x12c] sm:$0xf] %v5310
      %5375 = vst [vmem:[#allocation5 + $0x150] sm:$0xf] %v5311
      %5376 = vst [vmem:[#allocation5 + $0x174] sm:$0xf] %v5312
      %5377 = vst [vmem:[#allocation5 + $0x198] sm:$0xf] %v5313
      %5378 = vst [vmem:[#allocation5 + $0x1bc] sm:$0xf] %v5314
      %5379 = vst [vmem:[#allocation5 + $0x1e0] sm:$0xf] %v5315
      %5380 = vst [vmem:[#allocation5 + $0x204] sm:$0xf] %v5316
      %5381 = vst [vmem:[#allocation5 + $0x228] sm:$0xf] %v5317
      %5382 = vst [vmem:[#allocation5 + $0x24c] sm:$0xf] %v5318
      %5383 = vst [vmem:[#allocation5 + $0x270] sm:$0xf] %v5319
      %5384 = vst [vmem:[#allocation5 + $0x294] sm:$0xf] %v5320
      %5385 = vst [vmem:[#allocation5 + $0x2b8] sm:$0xf] %v5321
      %5386 = vst [vmem:[#allocation5 + $0x2dc] sm:$0xf] %v5322
      %5387 = vst [vmem:[#allocation5 + $0x300] sm:$0xf] %v5323
      %5388 = vst [vmem:[#allocation5 + $0x324] sm:$0xf] %v5324
      %5389 = vst [vmem:[#allocation5 + $0x348] sm:$0xf] %v5325
      %5390 = vst [vmem:[#allocation5 + $0x36c] sm:$0xf] %v5326
      %5391 = vst [vmem:[#allocation5 + $0x390] sm:$0xf] %v5327
      %5392 = vst [vmem:[#allocation5 + $0x3b4] sm:$0xf] %v5328
      %5393 = vst [vmem:[#allocation5 + $0x3d8] sm:$0xf] %v5329
      %5394 = vst [vmem:[#allocation5 + $0x3fc] sm:$0xf] %v5330
      %5395 = vst [vmem:[#allocation5 + $0x420] sm:$0xf] %v5331
      %5396 = vst [vmem:[#allocation5 + $0x444] sm:$0xf] %v5332
      %5397 = vst [vmem:[#allocation5 + $0x468] sm:$0xf] %v5333
      %v5398 = vld [vmem:[%s4597 + $0x1] sm:$0xff]
      %v5399 = vld [vmem:[%s4597 + $0x9] sm:$0xff]
      %v5400 = vld [vmem:[%s4597 + $0x19] sm:$0xff]
      %v5401 = vld [vmem:[%s4597 + $0x21] sm:$0xff]
      %v5402 = vld [vmem:[%s4597 + $0x31] sm:$0xff]
      %v5403 = vld [vmem:[%s4597 + $0x39] sm:$0xff]
      %v5404 = vld [vmem:[%s4597 + $0x49] sm:$0xff]
      %v5405 = vld [vmem:[%s4597 + $0x51] sm:$0xff]
      %v5406 = vld [vmem:[%s4597 + $0x61] sm:$0xff]
      %v5407 = vld [vmem:[%s4597 + $0x69] sm:$0xff]
      %v5408 = vld [vmem:[%s4597 + $0x79] sm:$0xff]
      %v5409 = vld [vmem:[%s4597 + $0x81] sm:$0xff]
      %v5410 = vld [vmem:[%s4597 + $0x91] sm:$0xff]
      %v5411 = vld [vmem:[%s4597 + $0x99] sm:$0xff]
      %v5412 = vld [vmem:[%s4597 + $0xa9] sm:$0xff]
      %v5413 = vld [vmem:[%s4597 + $0xb1] sm:$0xff]
      %v5414 = vld [vmem:[%s4597 + $0xc1] sm:$0xff]
      %v5415 = vld [vmem:[%s4597 + $0xc9] sm:$0xff]
      %v5416 = vld [vmem:[%s4597 + $0xd9] sm:$0xff]
      %v5417 = vld [vmem:[%s4597 + $0xe1] sm:$0xff]
      %v5418 = vld [vmem:[%s4597 + $0xf1] sm:$0xff]
      %v5419 = vld [vmem:[%s4597 + $0xf9] sm:$0xff]
      %v5420 = vld [vmem:[%s4597 + $0x109] sm:$0xff]
      %v5421 = vld [vmem:[%s4597 + $0x111] sm:$0xff]
      %v5422 = vld [vmem:[%s4597 + $0x121] sm:$0xff]
      %v5423 = vld [vmem:[%s4597 + $0x129] sm:$0xff]
      %v5424 = vld [vmem:[%s4597 + $0x139] sm:$0xff]
      %v5425 = vld [vmem:[%s4597 + $0x141] sm:$0xff]
      %v5426 = vld [vmem:[%s4597 + $0x151] sm:$0xff]
      %v5427 = vld [vmem:[%s4597 + $0x159] sm:$0xff]
      %v5428 = vld [vmem:[%s4597 + $0x169] sm:$0xff]
      %v5429 = vld [vmem:[%s4597 + $0x171] sm:$0xff]
      %v5430 = vpack.c.bf16 %v5399, %v5398
      %v5431 = vpack.c.bf16 %v5401, %v5400
      %v5432 = vpack.c.bf16 %v5403, %v5402
      %v5433 = vpack.c.bf16 %v5405, %v5404
      %v5434 = vpack.c.bf16 %v5407, %v5406
      %v5435 = vpack.c.bf16 %v5409, %v5408
      %v5436 = vpack.c.bf16 %v5411, %v5410
      %v5437 = vpack.c.bf16 %v5413, %v5412
      %v5438 = vpack.c.bf16 %v5415, %v5414
      %v5439 = vpack.c.bf16 %v5417, %v5416
      %v5440 = vpack.c.bf16 %v5419, %v5418
      %v5441 = vpack.c.bf16 %v5421, %v5420
      %v5442 = vpack.c.bf16 %v5423, %v5422
      %v5443 = vpack.c.bf16 %v5425, %v5424
      %v5444 = vpack.c.bf16 %v5427, %v5426
      %v5445 = vpack.c.bf16 %v5429, %v5428
      %v5462 = vunpack.c.l.b16 %v5430
      %v5463 = vunpack.c.h.b16 %v5430
      %v5464 = vunpack.c.l.b16 %v5431
      %v5465 = vunpack.c.h.b16 %v5431
      %v5466 = vunpack.c.l.b16 %v5432
      %v5467 = vunpack.c.h.b16 %v5432
      %v5468 = vunpack.c.l.b16 %v5433
      %v5469 = vunpack.c.h.b16 %v5433
      %v5470 = vunpack.c.l.b16 %v5434
      %v5471 = vunpack.c.h.b16 %v5434
      %v5472 = vunpack.c.l.b16 %v5435
      %v5473 = vunpack.c.h.b16 %v5435
      %v5474 = vunpack.c.l.b16 %v5436
      %v5475 = vunpack.c.h.b16 %v5436
      %v5476 = vunpack.c.l.b16 %v5437
      %v5477 = vunpack.c.h.b16 %v5437
      %v5478 = vunpack.c.l.b16 %v5438
      %v5479 = vunpack.c.h.b16 %v5438
      %v5480 = vunpack.c.l.b16 %v5439
      %v5481 = vunpack.c.h.b16 %v5439
      %v5482 = vunpack.c.l.b16 %v5440
      %v5483 = vunpack.c.h.b16 %v5440
      %v5484 = vunpack.c.l.b16 %v5441
      %v5485 = vunpack.c.h.b16 %v5441
      %v5486 = vunpack.c.l.b16 %v5442
      %v5487 = vunpack.c.h.b16 %v5442
      %v5488 = vunpack.c.l.b16 %v5443
      %v5489 = vunpack.c.h.b16 %v5443
      %v5490 = vunpack.c.l.b16 %v5444
      %v5491 = vunpack.c.h.b16 %v5444
      %v5492 = vunpack.c.l.b16 %v5445
      %v5493 = vunpack.c.h.b16 %v5445
      %v5494 = vpack.c.b16 %v5462, %v5462
      %v5495 = vpack.c.b16 %v5463, %v5463
      %v5496 = vpack.c.b16 %v5464, %v5464
      %v5497 = vpack.c.b16 %v5465, %v5465
      %v5498 = vpack.c.b16 %v5466, %v5466
      %v5499 = vpack.c.b16 %v5467, %v5467
      %v5500 = vpack.c.b16 %v5468, %v5468
      %v5501 = vpack.c.b16 %v5469, %v5469
      %v5502 = vpack.c.b16 %v5470, %v5470
      %v5503 = vpack.c.b16 %v5471, %v5471
      %v5504 = vpack.c.b16 %v5472, %v5472
      %v5505 = vpack.c.b16 %v5473, %v5473
      %v5506 = vpack.c.b16 %v5474, %v5474
      %v5507 = vpack.c.b16 %v5475, %v5475
      %v5508 = vpack.c.b16 %v5476, %v5476
      %v5509 = vpack.c.b16 %v5477, %v5477
      %v5510 = vpack.c.b16 %v5478, %v5478
      %v5511 = vpack.c.b16 %v5479, %v5479
      %v5512 = vpack.c.b16 %v5480, %v5480
      %v5513 = vpack.c.b16 %v5481, %v5481
      %v5514 = vpack.c.b16 %v5482, %v5482
      %v5515 = vpack.c.b16 %v5483, %v5483
      %v5516 = vpack.c.b16 %v5484, %v5484
      %v5517 = vpack.c.b16 %v5485, %v5485
      %v5518 = vpack.c.b16 %v5486, %v5486
      %v5519 = vpack.c.b16 %v5487, %v5487
      %v5520 = vpack.c.b16 %v5488, %v5488
      %v5521 = vpack.c.b16 %v5489, %v5489
      %v5522 = vpack.c.b16 %v5490, %v5490
      %v5523 = vpack.c.b16 %v5491, %v5491
      %v5524 = vpack.c.b16 %v5492, %v5492
      %v5525 = vpack.c.b16 %v5493, %v5493
      %5558 = vst [vmem:[#allocation5 + $0x10] sm:$0xf] %v5494
      %5559 = vst [vmem:[#allocation5 + $0x34] sm:$0xf] %v5495
      %5560 = vst [vmem:[#allocation5 + $0x58] sm:$0xf] %v5496
      %5561 = vst [vmem:[#allocation5 + $0x7c] sm:$0xf] %v5497
      %5562 = vst [vmem:[#allocation5 + $0xa0] sm:$0xf] %v5498
      %5563 = vst [vmem:[#allocation5 + $0xc4] sm:$0xf] %v5499
      %5564 = vst [vmem:[#allocation5 + $0xe8] sm:$0xf] %v5500
      %5565 = vst [vmem:[#allocation5 + $0x10c] sm:$0xf] %v5501
      %5566 = vst [vmem:[#allocation5 + $0x130] sm:$0xf] %v5502
      %5567 = vst [vmem:[#allocation5 + $0x154] sm:$0xf] %v5503
      %5568 = vst [vmem:[#allocation5 + $0x178] sm:$0xf] %v5504
      %5569 = vst [vmem:[#allocation5 + $0x19c] sm:$0xf] %v5505
      %5570 = vst [vmem:[#allocation5 + $0x1c0] sm:$0xf] %v5506
      %5571 = vst [vmem:[#allocation5 + $0x1e4] sm:$0xf] %v5507
      %5572 = vst [vmem:[#allocation5 + $0x208] sm:$0xf] %v5508
      %5573 = vst [vmem:[#allocation5 + $0x22c] sm:$0xf] %v5509
      %5574 = vst [vmem:[#allocation5 + $0x250] sm:$0xf] %v5510
      %5575 = vst [vmem:[#allocation5 + $0x274] sm:$0xf] %v5511
      %5576 = vst [vmem:[#allocation5 + $0x298] sm:$0xf] %v5512
      %5577 = vst [vmem:[#allocation5 + $0x2bc] sm:$0xf] %v5513
      %5578 = vst [vmem:[#allocation5 + $0x2e0] sm:$0xf] %v5514
      %5579 = vst [vmem:[#allocation5 + $0x304] sm:$0xf] %v5515
      %5580 = vst [vmem:[#allocation5 + $0x328] sm:$0xf] %v5516
      %5581 = vst [vmem:[#allocation5 + $0x34c] sm:$0xf] %v5517
      %5582 = vst [vmem:[#allocation5 + $0x370] sm:$0xf] %v5518
      %5583 = vst [vmem:[#allocation5 + $0x394] sm:$0xf] %v5519
      %5584 = vst [vmem:[#allocation5 + $0x3b8] sm:$0xf] %v5520
      %5585 = vst [vmem:[#allocation5 + $0x3dc] sm:$0xf] %v5521
      %5586 = vst [vmem:[#allocation5 + $0x400] sm:$0xf] %v5522
      %5587 = vst [vmem:[#allocation5 + $0x424] sm:$0xf] %v5523
      %5588 = vst [vmem:[#allocation5 + $0x448] sm:$0xf] %v5524
      %5589 = vst [vmem:[#allocation5 + $0x46c] sm:$0xf] %v5525
      %v5590 = vld [vmem:[%s4597 + $0x2] sm:$0xff]
      %v5591 = vld [vmem:[%s4597 + $0xa] sm:$0xff]
      %v5592 = vld [vmem:[%s4597 + $0x1a] sm:$0xff]
      %v5593 = vld [vmem:[%s4597 + $0x22] sm:$0xff]
      %v5594 = vld [vmem:[%s4597 + $0x32] sm:$0xff]
      %v5595 = vld [vmem:[%s4597 + $0x3a] sm:$0xff]
      %v5596 = vld [vmem:[%s4597 + $0x4a] sm:$0xff]
      %v5597 = vld [vmem:[%s4597 + $0x52] sm:$0xff]
      %v5598 = vld [vmem:[%s4597 + $0x62] sm:$0xff]
      %v5599 = vld [vmem:[%s4597 + $0x6a] sm:$0xff]
      %v5600 = vld [vmem:[%s4597 + $0x7a] sm:$0xff]
      %v5601 = vld [vmem:[%s4597 + $0x82] sm:$0xff]
      %v5602 = vld [vmem:[%s4597 + $0x92] sm:$0xff]
      %v5603 = vld [vmem:[%s4597 + $0x9a] sm:$0xff]
      %v5604 = vld [vmem:[%s4597 + $0xaa] sm:$0xff]
      %v5605 = vld [vmem:[%s4597 + $0xb2] sm:$0xff]
      %v5606 = vld [vmem:[%s4597 + $0xc2] sm:$0xff]
      %v5607 = vld [vmem:[%s4597 + $0xca] sm:$0xff]
      %v5608 = vld [vmem:[%s4597 + $0xda] sm:$0xff]
      %v5609 = vld [vmem:[%s4597 + $0xe2] sm:$0xff]
      %v5610 = vld [vmem:[%s4597 + $0xf2] sm:$0xff]
      %v5611 = vld [vmem:[%s4597 + $0xfa] sm:$0xff]
      %v5612 = vld [vmem:[%s4597 + $0x10a] sm:$0xff]
      %v5613 = vld [vmem:[%s4597 + $0x112] sm:$0xff]
      %v5614 = vld [vmem:[%s4597 + $0x122] sm:$0xff]
      %v5615 = vld [vmem:[%s4597 + $0x12a] sm:$0xff]
      %v5616 = vld [vmem:[%s4597 + $0x13a] sm:$0xff]
      %v5617 = vld [vmem:[%s4597 + $0x142] sm:$0xff]
      %v5618 = vld [vmem:[%s4597 + $0x152] sm:$0xff]
      %v5619 = vld [vmem:[%s4597 + $0x15a] sm:$0xff]
      %v5620 = vld [vmem:[%s4597 + $0x16a] sm:$0xff]
      %v5621 = vld [vmem:[%s4597 + $0x172] sm:$0xff]
      %v5622 = vpack.c.bf16 %v5591, %v5590
      %v5623 = vpack.c.bf16 %v5593, %v5592
      %v5624 = vpack.c.bf16 %v5595, %v5594
      %v5625 = vpack.c.bf16 %v5597, %v5596
      %v5626 = vpack.c.bf16 %v5599, %v5598
      %v5627 = vpack.c.bf16 %v5601, %v5600
      %v5628 = vpack.c.bf16 %v5603, %v5602
      %v5629 = vpack.c.bf16 %v5605, %v5604
      %v5630 = vpack.c.bf16 %v5607, %v5606
      %v5631 = vpack.c.bf16 %v5609, %v5608
      %v5632 = vpack.c.bf16 %v5611, %v5610
      %v5633 = vpack.c.bf16 %v5613, %v5612
      %v5634 = vpack.c.bf16 %v5615, %v5614
      %v5635 = vpack.c.bf16 %v5617, %v5616
      %v5636 = vpack.c.bf16 %v5619, %v5618
      %v5637 = vpack.c.bf16 %v5621, %v5620
      %v5654 = vunpack.c.l.b16 %v5622
      %v5655 = vunpack.c.h.b16 %v5622
      %v5656 = vunpack.c.l.b16 %v5623
      %v5657 = vunpack.c.h.b16 %v5623
      %v5658 = vunpack.c.l.b16 %v5624
      %v5659 = vunpack.c.h.b16 %v5624
      %v5660 = vunpack.c.l.b16 %v5625
      %v5661 = vunpack.c.h.b16 %v5625
      %v5662 = vunpack.c.l.b16 %v5626
      %v5663 = vunpack.c.h.b16 %v5626
      %v5664 = vunpack.c.l.b16 %v5627
      %v5665 = vunpack.c.h.b16 %v5627
      %v5666 = vunpack.c.l.b16 %v5628
      %v5667 = vunpack.c.h.b16 %v5628
      %v5668 = vunpack.c.l.b16 %v5629
      %v5669 = vunpack.c.h.b16 %v5629
      %v5670 = vunpack.c.l.b16 %v5630
      %v5671 = vunpack.c.h.b16 %v5630
      %v5672 = vunpack.c.l.b16 %v5631
      %v5673 = vunpack.c.h.b16 %v5631
      %v5674 = vunpack.c.l.b16 %v5632
      %v5675 = vunpack.c.h.b16 %v5632
      %v5676 = vunpack.c.l.b16 %v5633
      %v5677 = vunpack.c.h.b16 %v5633
      %v5678 = vunpack.c.l.b16 %v5634
      %v5679 = vunpack.c.h.b16 %v5634
      %v5680 = vunpack.c.l.b16 %v5635
      %v5681 = vunpack.c.h.b16 %v5635
      %v5682 = vunpack.c.l.b16 %v5636
      %v5683 = vunpack.c.h.b16 %v5636
      %v5684 = vunpack.c.l.b16 %v5637
      %v5685 = vunpack.c.h.b16 %v5637
      %v5686 = vpack.c.b16 %v5654, %v5654
      %v5687 = vpack.c.b16 %v5655, %v5655
      %v5688 = vpack.c.b16 %v5656, %v5656
      %v5689 = vpack.c.b16 %v5657, %v5657
      %v5690 = vpack.c.b16 %v5658, %v5658
      %v5691 = vpack.c.b16 %v5659, %v5659
      %v5692 = vpack.c.b16 %v5660, %v5660
      %v5693 = vpack.c.b16 %v5661, %v5661
      %v5694 = vpack.c.b16 %v5662, %v5662
      %v5695 = vpack.c.b16 %v5663, %v5663
      %v5696 = vpack.c.b16 %v5664, %v5664
      %v5697 = vpack.c.b16 %v5665, %v5665
      %v5698 = vpack.c.b16 %v5666, %v5666
      %v5699 = vpack.c.b16 %v5667, %v5667
      %v5700 = vpack.c.b16 %v5668, %v5668
      %v5701 = vpack.c.b16 %v5669, %v5669
      %v5702 = vpack.c.b16 %v5670, %v5670
      %v5703 = vpack.c.b16 %v5671, %v5671
      %v5704 = vpack.c.b16 %v5672, %v5672
      %v5705 = vpack.c.b16 %v5673, %v5673
      %v5706 = vpack.c.b16 %v5674, %v5674
      %v5707 = vpack.c.b16 %v5675, %v5675
      %v5708 = vpack.c.b16 %v5676, %v5676
      %v5709 = vpack.c.b16 %v5677, %v5677
      %v5710 = vpack.c.b16 %v5678, %v5678
      %v5711 = vpack.c.b16 %v5679, %v5679
      %v5712 = vpack.c.b16 %v5680, %v5680
      %v5713 = vpack.c.b16 %v5681, %v5681
      %v5714 = vpack.c.b16 %v5682, %v5682
      %v5715 = vpack.c.b16 %v5683, %v5683
      %v5716 = vpack.c.b16 %v5684, %v5684
      %v5717 = vpack.c.b16 %v5685, %v5685
      %5750 = vst [vmem:[#allocation5 + $0x14] sm:$0xf] %v5686
      %5751 = vst [vmem:[#allocation5 + $0x38] sm:$0xf] %v5687
      %5752 = vst [vmem:[#allocation5 + $0x5c] sm:$0xf] %v5688
      %5753 = vst [vmem:[#allocation5 + $0x80] sm:$0xf] %v5689
      %5754 = vst [vmem:[#allocation5 + $0xa4] sm:$0xf] %v5690
      %5755 = vst [vmem:[#allocation5 + $0xc8] sm:$0xf] %v5691
      %5756 = vst [vmem:[#allocation5 + $0xec] sm:$0xf] %v5692
      %5757 = vst [vmem:[#allocation5 + $0x110] sm:$0xf] %v5693
      %5758 = vst [vmem:[#allocation5 + $0x134] sm:$0xf] %v5694
      %5759 = vst [vmem:[#allocation5 + $0x158] sm:$0xf] %v5695
      %5760 = vst [vmem:[#allocation5 + $0x17c] sm:$0xf] %v5696
      %5761 = vst [vmem:[#allocation5 + $0x1a0] sm:$0xf] %v5697
      %5762 = vst [vmem:[#allocation5 + $0x1c4] sm:$0xf] %v5698
      %5763 = vst [vmem:[#allocation5 + $0x1e8] sm:$0xf] %v5699
      %5764 = vst [vmem:[#allocation5 + $0x20c] sm:$0xf] %v5700
      %5765 = vst [vmem:[#allocation5 + $0x230] sm:$0xf] %v5701
      %5766 = vst [vmem:[#allocation5 + $0x254] sm:$0xf] %v5702
      %5767 = vst [vmem:[#allocation5 + $0x278] sm:$0xf] %v5703
      %5768 = vst [vmem:[#allocation5 + $0x29c] sm:$0xf] %v5704
      %5769 = vst [vmem:[#allocation5 + $0x2c0] sm:$0xf] %v5705
      %5770 = vst [vmem:[#allocation5 + $0x2e4] sm:$0xf] %v5706
      %5771 = vst [vmem:[#allocation5 + $0x308] sm:$0xf] %v5707
      %5772 = vst [vmem:[#allocation5 + $0x32c] sm:$0xf] %v5708
      %5773 = vst [vmem:[#allocation5 + $0x350] sm:$0xf] %v5709
      %5774 = vst [vmem:[#allocation5 + $0x374] sm:$0xf] %v5710
      %5775 = vst [vmem:[#allocation5 + $0x398] sm:$0xf] %v5711
      %5776 = vst [vmem:[#allocation5 + $0x3bc] sm:$0xf] %v5712
      %5777 = vst [vmem:[#allocation5 + $0x3e0] sm:$0xf] %v5713
      %5778 = vst [vmem:[#allocation5 + $0x404] sm:$0xf] %v5714
      %5779 = vst [vmem:[#allocation5 + $0x428] sm:$0xf] %v5715
      %5780 = vst [vmem:[#allocation5 + $0x44c] sm:$0xf] %v5716
      %5781 = vst [vmem:[#allocation5 + $0x470] sm:$0xf] %v5717
      %s5782 = scalar_lea.vmem [#allocation4], 48
      %v5783 = vld [vmem:[%s5782] sm:$0xff]
      %v5784 = vld [vmem:[%s5782 + $0x8] sm:$0xff]
      %v5785 = vld [vmem:[%s5782 + $0x18] sm:$0xff]
      %v5786 = vld [vmem:[%s5782 + $0x20] sm:$0xff]
      %v5787 = vld [vmem:[%s5782 + $0x30] sm:$0xff]
      %v5788 = vld [vmem:[%s5782 + $0x38] sm:$0xff]
      %v5789 = vld [vmem:[%s5782 + $0x48] sm:$0xff]
      %v5790 = vld [vmem:[%s5782 + $0x50] sm:$0xff]
      %v5791 = vld [vmem:[%s5782 + $0x60] sm:$0xff]
      %v5792 = vld [vmem:[%s5782 + $0x68] sm:$0xff]
      %v5793 = vld [vmem:[%s5782 + $0x78] sm:$0xff]
      %v5794 = vld [vmem:[%s5782 + $0x80] sm:$0xff]
      %v5795 = vld [vmem:[%s5782 + $0x90] sm:$0xff]
      %v5796 = vld [vmem:[%s5782 + $0x98] sm:$0xff]
      %v5797 = vld [vmem:[%s5782 + $0xa8] sm:$0xff]
      %v5798 = vld [vmem:[%s5782 + $0xb0] sm:$0xff]
      %v5799 = vld [vmem:[%s5782 + $0xc0] sm:$0xff]
      %v5800 = vld [vmem:[%s5782 + $0xc8] sm:$0xff]
      %v5801 = vld [vmem:[%s5782 + $0xd8] sm:$0xff]
      %v5802 = vld [vmem:[%s5782 + $0xe0] sm:$0xff]
      %v5803 = vld [vmem:[%s5782 + $0xf0] sm:$0xff]
      %v5804 = vld [vmem:[%s5782 + $0xf8] sm:$0xff]
      %v5805 = vld [vmem:[%s5782 + $0x108] sm:$0xff]
      %v5806 = vld [vmem:[%s5782 + $0x110] sm:$0xff]
      %v5807 = vld [vmem:[%s5782 + $0x120] sm:$0xff]
      %v5808 = vld [vmem:[%s5782 + $0x128] sm:$0xff]
      %v5809 = vld [vmem:[%s5782 + $0x138] sm:$0xff]
      %v5810 = vld [vmem:[%s5782 + $0x140] sm:$0xff]
      %v5811 = vld [vmem:[%s5782 + $0x150] sm:$0xff]
      %v5812 = vld [vmem:[%s5782 + $0x158] sm:$0xff]
      %v5813 = vld [vmem:[%s5782 + $0x168] sm:$0xff]
      %v5814 = vld [vmem:[%s5782 + $0x170] sm:$0xff]
      %v5815 = vpack.c.bf16 %v5784, %v5783
      %v5816 = vpack.c.bf16 %v5786, %v5785
      %v5817 = vpack.c.bf16 %v5788, %v5787
      %v5818 = vpack.c.bf16 %v5790, %v5789
      %v5819 = vpack.c.bf16 %v5792, %v5791
      %v5820 = vpack.c.bf16 %v5794, %v5793
      %v5821 = vpack.c.bf16 %v5796, %v5795
      %v5822 = vpack.c.bf16 %v5798, %v5797
      %v5823 = vpack.c.bf16 %v5800, %v5799
      %v5824 = vpack.c.bf16 %v5802, %v5801
      %v5825 = vpack.c.bf16 %v5804, %v5803
      %v5826 = vpack.c.bf16 %v5806, %v5805
      %v5827 = vpack.c.bf16 %v5808, %v5807
      %v5828 = vpack.c.bf16 %v5810, %v5809
      %v5829 = vpack.c.bf16 %v5812, %v5811
      %v5830 = vpack.c.bf16 %v5814, %v5813
      %v5847 = vunpack.c.l.b16 %v5815
      %v5848 = vunpack.c.h.b16 %v5815
      %v5849 = vunpack.c.l.b16 %v5816
      %v5850 = vunpack.c.h.b16 %v5816
      %v5851 = vunpack.c.l.b16 %v5817
      %v5852 = vunpack.c.h.b16 %v5817
      %v5853 = vunpack.c.l.b16 %v5818
      %v5854 = vunpack.c.h.b16 %v5818
      %v5855 = vunpack.c.l.b16 %v5819
      %v5856 = vunpack.c.h.b16 %v5819
      %v5857 = vunpack.c.l.b16 %v5820
      %v5858 = vunpack.c.h.b16 %v5820
      %v5859 = vunpack.c.l.b16 %v5821
      %v5860 = vunpack.c.h.b16 %v5821
      %v5861 = vunpack.c.l.b16 %v5822
      %v5862 = vunpack.c.h.b16 %v5822
      %v5863 = vunpack.c.l.b16 %v5823
      %v5864 = vunpack.c.h.b16 %v5823
      %v5865 = vunpack.c.l.b16 %v5824
      %v5866 = vunpack.c.h.b16 %v5824
      %v5867 = vunpack.c.l.b16 %v5825
      %v5868 = vunpack.c.h.b16 %v5825
      %v5869 = vunpack.c.l.b16 %v5826
      %v5870 = vunpack.c.h.b16 %v5826
      %v5871 = vunpack.c.l.b16 %v5827
      %v5872 = vunpack.c.h.b16 %v5827
      %v5873 = vunpack.c.l.b16 %v5828
      %v5874 = vunpack.c.h.b16 %v5828
      %v5875 = vunpack.c.l.b16 %v5829
      %v5876 = vunpack.c.h.b16 %v5829
      %v5877 = vunpack.c.l.b16 %v5830
      %v5878 = vunpack.c.h.b16 %v5830
      %v5879 = vpack.c.b16 %v5847, %v5847
      %v5880 = vpack.c.b16 %v5848, %v5848
      %v5881 = vpack.c.b16 %v5849, %v5849
      %v5882 = vpack.c.b16 %v5850, %v5850
      %v5883 = vpack.c.b16 %v5851, %v5851
      %v5884 = vpack.c.b16 %v5852, %v5852
      %v5885 = vpack.c.b16 %v5853, %v5853
      %v5886 = vpack.c.b16 %v5854, %v5854
      %v5887 = vpack.c.b16 %v5855, %v5855
      %v5888 = vpack.c.b16 %v5856, %v5856
      %v5889 = vpack.c.b16 %v5857, %v5857
      %v5890 = vpack.c.b16 %v5858, %v5858
      %v5891 = vpack.c.b16 %v5859, %v5859
      %v5892 = vpack.c.b16 %v5860, %v5860
      %v5893 = vpack.c.b16 %v5861, %v5861
      %v5894 = vpack.c.b16 %v5862, %v5862
      %v5895 = vpack.c.b16 %v5863, %v5863
      %v5896 = vpack.c.b16 %v5864, %v5864
      %v5897 = vpack.c.b16 %v5865, %v5865
      %v5898 = vpack.c.b16 %v5866, %v5866
      %v5899 = vpack.c.b16 %v5867, %v5867
      %v5900 = vpack.c.b16 %v5868, %v5868
      %v5901 = vpack.c.b16 %v5869, %v5869
      %v5902 = vpack.c.b16 %v5870, %v5870
      %v5903 = vpack.c.b16 %v5871, %v5871
      %v5904 = vpack.c.b16 %v5872, %v5872
      %v5905 = vpack.c.b16 %v5873, %v5873
      %v5906 = vpack.c.b16 %v5874, %v5874
      %v5907 = vpack.c.b16 %v5875, %v5875
      %v5908 = vpack.c.b16 %v5876, %v5876
      %v5909 = vpack.c.b16 %v5877, %v5877
      %v5910 = vpack.c.b16 %v5878, %v5878
      %5943 = vst [vmem:[#allocation5 + $0x18] sm:$0xf] %v5879
      %5944 = vst [vmem:[#allocation5 + $0x3c] sm:$0xf] %v5880
      %5945 = vst [vmem:[#allocation5 + $0x60] sm:$0xf] %v5881
      %5946 = vst [vmem:[#allocation5 + $0x84] sm:$0xf] %v5882
      %5947 = vst [vmem:[#allocation5 + $0xa8] sm:$0xf] %v5883
      %5948 = vst [vmem:[#allocation5 + $0xcc] sm:$0xf] %v5884
      %5949 = vst [vmem:[#allocation5 + $0xf0] sm:$0xf] %v5885
      %5950 = vst [vmem:[#allocation5 + $0x114] sm:$0xf] %v5886
      %5951 = vst [vmem:[#allocation5 + $0x138] sm:$0xf] %v5887
      %5952 = vst [vmem:[#allocation5 + $0x15c] sm:$0xf] %v5888
      %5953 = vst [vmem:[#allocation5 + $0x180] sm:$0xf] %v5889
      %5954 = vst [vmem:[#allocation5 + $0x1a4] sm:$0xf] %v5890
      %5955 = vst [vmem:[#allocation5 + $0x1c8] sm:$0xf] %v5891
      %5956 = vst [vmem:[#allocation5 + $0x1ec] sm:$0xf] %v5892
      %5957 = vst [vmem:[#allocation5 + $0x210] sm:$0xf] %v5893
      %5958 = vst [vmem:[#allocation5 + $0x234] sm:$0xf] %v5894
      %5959 = vst [vmem:[#allocation5 + $0x258] sm:$0xf] %v5895
      %5960 = vst [vmem:[#allocation5 + $0x27c] sm:$0xf] %v5896
      %5961 = vst [vmem:[#allocation5 + $0x2a0] sm:$0xf] %v5897
      %5962 = vst [vmem:[#allocation5 + $0x2c4] sm:$0xf] %v5898
      %5963 = vst [vmem:[#allocation5 + $0x2e8] sm:$0xf] %v5899
      %5964 = vst [vmem:[#allocation5 + $0x30c] sm:$0xf] %v5900
      %5965 = vst [vmem:[#allocation5 + $0x330] sm:$0xf] %v5901
      %5966 = vst [vmem:[#allocation5 + $0x354] sm:$0xf] %v5902
      %5967 = vst [vmem:[#allocation5 + $0x378] sm:$0xf] %v5903
      %5968 = vst [vmem:[#allocation5 + $0x39c] sm:$0xf] %v5904
      %5969 = vst [vmem:[#allocation5 + $0x3c0] sm:$0xf] %v5905
      %5970 = vst [vmem:[#allocation5 + $0x3e4] sm:$0xf] %v5906
      %5971 = vst [vmem:[#allocation5 + $0x408] sm:$0xf] %v5907
      %5972 = vst [vmem:[#allocation5 + $0x42c] sm:$0xf] %v5908
      %5973 = vst [vmem:[#allocation5 + $0x450] sm:$0xf] %v5909
      %5974 = vst [vmem:[#allocation5 + $0x474] sm:$0xf] %v5910
      %v5975 = vld [vmem:[%s5782 + $0x1] sm:$0xff]
      %v5976 = vld [vmem:[%s5782 + $0x9] sm:$0xff]
      %v5977 = vld [vmem:[%s5782 + $0x19] sm:$0xff]
      %v5978 = vld [vmem:[%s5782 + $0x21] sm:$0xff]
      %v5979 = vld [vmem:[%s5782 + $0x31] sm:$0xff]
      %v5980 = vld [vmem:[%s5782 + $0x39] sm:$0xff]
      %v5981 = vld [vmem:[%s5782 + $0x49] sm:$0xff]
      %v5982 = vld [vmem:[%s5782 + $0x51] sm:$0xff]
      %v5983 = vld [vmem:[%s5782 + $0x61] sm:$0xff]
      %v5984 = vld [vmem:[%s5782 + $0x69] sm:$0xff]
      %v5985 = vld [vmem:[%s5782 + $0x79] sm:$0xff]
      %v5986 = vld [vmem:[%s5782 + $0x81] sm:$0xff]
      %v5987 = vld [vmem:[%s5782 + $0x91] sm:$0xff]
      %v5988 = vld [vmem:[%s5782 + $0x99] sm:$0xff]
      %v5989 = vld [vmem:[%s5782 + $0xa9] sm:$0xff]
      %v5990 = vld [vmem:[%s5782 + $0xb1] sm:$0xff]
      %v5991 = vld [vmem:[%s5782 + $0xc1] sm:$0xff]
      %v5992 = vld [vmem:[%s5782 + $0xc9] sm:$0xff]
      %v5993 = vld [vmem:[%s5782 + $0xd9] sm:$0xff]
      %v5994 = vld [vmem:[%s5782 + $0xe1] sm:$0xff]
      %v5995 = vld [vmem:[%s5782 + $0xf1] sm:$0xff]
      %v5996 = vld [vmem:[%s5782 + $0xf9] sm:$0xff]
      %v5997 = vld [vmem:[%s5782 + $0x109] sm:$0xff]
      %v5998 = vld [vmem:[%s5782 + $0x111] sm:$0xff]
      %v5999 = vld [vmem:[%s5782 + $0x121] sm:$0xff]
      %v6000 = vld [vmem:[%s5782 + $0x129] sm:$0xff]
      %v6001 = vld [vmem:[%s5782 + $0x139] sm:$0xff]
      %v6002 = vld [vmem:[%s5782 + $0x141] sm:$0xff]
      %v6003 = vld [vmem:[%s5782 + $0x151] sm:$0xff]
      %v6004 = vld [vmem:[%s5782 + $0x159] sm:$0xff]
      %v6005 = vld [vmem:[%s5782 + $0x169] sm:$0xff]
      %v6006 = vld [vmem:[%s5782 + $0x171] sm:$0xff]
      %v6007 = vpack.c.bf16 %v5976, %v5975
      %v6008 = vpack.c.bf16 %v5978, %v5977
      %v6009 = vpack.c.bf16 %v5980, %v5979
      %v6010 = vpack.c.bf16 %v5982, %v5981
      %v6011 = vpack.c.bf16 %v5984, %v5983
      %v6012 = vpack.c.bf16 %v5986, %v5985
      %v6013 = vpack.c.bf16 %v5988, %v5987
      %v6014 = vpack.c.bf16 %v5990, %v5989
      %v6015 = vpack.c.bf16 %v5992, %v5991
      %v6016 = vpack.c.bf16 %v5994, %v5993
      %v6017 = vpack.c.bf16 %v5996, %v5995
      %v6018 = vpack.c.bf16 %v5998, %v5997
      %v6019 = vpack.c.bf16 %v6000, %v5999
      %v6020 = vpack.c.bf16 %v6002, %v6001
      %v6021 = vpack.c.bf16 %v6004, %v6003
      %v6022 = vpack.c.bf16 %v6006, %v6005
      %v6039 = vunpack.c.l.b16 %v6007
      %v6040 = vunpack.c.h.b16 %v6007
      %v6041 = vunpack.c.l.b16 %v6008
      %v6042 = vunpack.c.h.b16 %v6008
      %v6043 = vunpack.c.l.b16 %v6009
      %v6044 = vunpack.c.h.b16 %v6009
      %v6045 = vunpack.c.l.b16 %v6010
      %v6046 = vunpack.c.h.b16 %v6010
      %v6047 = vunpack.c.l.b16 %v6011
      %v6048 = vunpack.c.h.b16 %v6011
      %v6049 = vunpack.c.l.b16 %v6012
      %v6050 = vunpack.c.h.b16 %v6012
      %v6051 = vunpack.c.l.b16 %v6013
      %v6052 = vunpack.c.h.b16 %v6013
      %v6053 = vunpack.c.l.b16 %v6014
      %v6054 = vunpack.c.h.b16 %v6014
      %v6055 = vunpack.c.l.b16 %v6015
      %v6056 = vunpack.c.h.b16 %v6015
      %v6057 = vunpack.c.l.b16 %v6016
      %v6058 = vunpack.c.h.b16 %v6016
      %v6059 = vunpack.c.l.b16 %v6017
      %v6060 = vunpack.c.h.b16 %v6017
      %v6061 = vunpack.c.l.b16 %v6018
      %v6062 = vunpack.c.h.b16 %v6018
      %v6063 = vunpack.c.l.b16 %v6019
      %v6064 = vunpack.c.h.b16 %v6019
      %v6065 = vunpack.c.l.b16 %v6020
      %v6066 = vunpack.c.h.b16 %v6020
      %v6067 = vunpack.c.l.b16 %v6021
      %v6068 = vunpack.c.h.b16 %v6021
      %v6069 = vunpack.c.l.b16 %v6022
      %v6070 = vunpack.c.h.b16 %v6022
      %v6071 = vpack.c.b16 %v6039, %v6039
      %v6072 = vpack.c.b16 %v6040, %v6040
      %v6073 = vpack.c.b16 %v6041, %v6041
      %v6074 = vpack.c.b16 %v6042, %v6042
      %v6075 = vpack.c.b16 %v6043, %v6043
      %v6076 = vpack.c.b16 %v6044, %v6044
      %v6077 = vpack.c.b16 %v6045, %v6045
      %v6078 = vpack.c.b16 %v6046, %v6046
      %v6079 = vpack.c.b16 %v6047, %v6047
      %v6080 = vpack.c.b16 %v6048, %v6048
      %v6081 = vpack.c.b16 %v6049, %v6049
      %v6082 = vpack.c.b16 %v6050, %v6050
      %v6083 = vpack.c.b16 %v6051, %v6051
      %v6084 = vpack.c.b16 %v6052, %v6052
      %v6085 = vpack.c.b16 %v6053, %v6053
      %v6086 = vpack.c.b16 %v6054, %v6054
      %v6087 = vpack.c.b16 %v6055, %v6055
      %v6088 = vpack.c.b16 %v6056, %v6056
      %v6089 = vpack.c.b16 %v6057, %v6057
      %v6090 = vpack.c.b16 %v6058, %v6058
      %v6091 = vpack.c.b16 %v6059, %v6059
      %v6092 = vpack.c.b16 %v6060, %v6060
      %v6093 = vpack.c.b16 %v6061, %v6061
      %v6094 = vpack.c.b16 %v6062, %v6062
      %v6095 = vpack.c.b16 %v6063, %v6063
      %v6096 = vpack.c.b16 %v6064, %v6064
      %v6097 = vpack.c.b16 %v6065, %v6065
      %v6098 = vpack.c.b16 %v6066, %v6066
      %v6099 = vpack.c.b16 %v6067, %v6067
      %v6100 = vpack.c.b16 %v6068, %v6068
      %v6101 = vpack.c.b16 %v6069, %v6069
      %v6102 = vpack.c.b16 %v6070, %v6070
      %6135 = vst [vmem:[#allocation5 + $0x1c] sm:$0xf] %v6071
      %6136 = vst [vmem:[#allocation5 + $0x40] sm:$0xf] %v6072
      %6137 = vst [vmem:[#allocation5 + $0x64] sm:$0xf] %v6073
      %6138 = vst [vmem:[#allocation5 + $0x88] sm:$0xf] %v6074
      %6139 = vst [vmem:[#allocation5 + $0xac] sm:$0xf] %v6075
      %6140 = vst [vmem:[#allocation5 + $0xd0] sm:$0xf] %v6076
      %6141 = vst [vmem:[#allocation5 + $0xf4] sm:$0xf] %v6077
      %6142 = vst [vmem:[#allocation5 + $0x118] sm:$0xf] %v6078
      %6143 = vst [vmem:[#allocation5 + $0x13c] sm:$0xf] %v6079
      %6144 = vst [vmem:[#allocation5 + $0x160] sm:$0xf] %v6080
      %6145 = vst [vmem:[#allocation5 + $0x184] sm:$0xf] %v6081
      %6146 = vst [vmem:[#allocation5 + $0x1a8] sm:$0xf] %v6082
      %6147 = vst [vmem:[#allocation5 + $0x1cc] sm:$0xf] %v6083
      %6148 = vst [vmem:[#allocation5 + $0x1f0] sm:$0xf] %v6084
      %6149 = vst [vmem:[#allocation5 + $0x214] sm:$0xf] %v6085
      %6150 = vst [vmem:[#allocation5 + $0x238] sm:$0xf] %v6086
      %6151 = vst [vmem:[#allocation5 + $0x25c] sm:$0xf] %v6087
      %6152 = vst [vmem:[#allocation5 + $0x280] sm:$0xf] %v6088
      %6153 = vst [vmem:[#allocation5 + $0x2a4] sm:$0xf] %v6089
      %6154 = vst [vmem:[#allocation5 + $0x2c8] sm:$0xf] %v6090
      %6155 = vst [vmem:[#allocation5 + $0x2ec] sm:$0xf] %v6091
      %6156 = vst [vmem:[#allocation5 + $0x310] sm:$0xf] %v6092
      %6157 = vst [vmem:[#allocation5 + $0x334] sm:$0xf] %v6093
      %6158 = vst [vmem:[#allocation5 + $0x358] sm:$0xf] %v6094
      %6159 = vst [vmem:[#allocation5 + $0x37c] sm:$0xf] %v6095
      %6160 = vst [vmem:[#allocation5 + $0x3a0] sm:$0xf] %v6096
      %6161 = vst [vmem:[#allocation5 + $0x3c4] sm:$0xf] %v6097
      %6162 = vst [vmem:[#allocation5 + $0x3e8] sm:$0xf] %v6098
      %6163 = vst [vmem:[#allocation5 + $0x40c] sm:$0xf] %v6099
      %6164 = vst [vmem:[#allocation5 + $0x430] sm:$0xf] %v6100
      %6165 = vst [vmem:[#allocation5 + $0x454] sm:$0xf] %v6101
      %6166 = vst [vmem:[#allocation5 + $0x478] sm:$0xf] %v6102
      %v6167 = vld [vmem:[%s5782 + $0x2] sm:$0xff]
      %v6168 = vld [vmem:[%s5782 + $0xa] sm:$0xff]
      %v6169 = vld [vmem:[%s5782 + $0x1a] sm:$0xff]
      %v6170 = vld [vmem:[%s5782 + $0x22] sm:$0xff]
      %v6171 = vld [vmem:[%s5782 + $0x32] sm:$0xff]
      %v6172 = vld [vmem:[%s5782 + $0x3a] sm:$0xff]
      %v6173 = vld [vmem:[%s5782 + $0x4a] sm:$0xff]
      %v6174 = vld [vmem:[%s5782 + $0x52] sm:$0xff]
      %v6175 = vld [vmem:[%s5782 + $0x62] sm:$0xff]
      %v6176 = vld [vmem:[%s5782 + $0x6a] sm:$0xff]
      %v6177 = vld [vmem:[%s5782 + $0x7a] sm:$0xff]
      %v6178 = vld [vmem:[%s5782 + $0x82] sm:$0xff]
      %v6179 = vld [vmem:[%s5782 + $0x92] sm:$0xff]
      %v6180 = vld [vmem:[%s5782 + $0x9a] sm:$0xff]
      %v6181 = vld [vmem:[%s5782 + $0xaa] sm:$0xff]
      %v6182 = vld [vmem:[%s5782 + $0xb2] sm:$0xff]
      %v6183 = vld [vmem:[%s5782 + $0xc2] sm:$0xff]
      %v6184 = vld [vmem:[%s5782 + $0xca] sm:$0xff]
      %v6185 = vld [vmem:[%s5782 + $0xda] sm:$0xff]
      %v6186 = vld [vmem:[%s5782 + $0xe2] sm:$0xff]
      %v6187 = vld [vmem:[%s5782 + $0xf2] sm:$0xff]
      %v6188 = vld [vmem:[%s5782 + $0xfa] sm:$0xff]
      %v6189 = vld [vmem:[%s5782 + $0x10a] sm:$0xff]
      %v6190 = vld [vmem:[%s5782 + $0x112] sm:$0xff]
      %v6191 = vld [vmem:[%s5782 + $0x122] sm:$0xff]
      %v6192 = vld [vmem:[%s5782 + $0x12a] sm:$0xff]
      %v6193 = vld [vmem:[%s5782 + $0x13a] sm:$0xff]
      %v6194 = vld [vmem:[%s5782 + $0x142] sm:$0xff]
      %v6195 = vld [vmem:[%s5782 + $0x152] sm:$0xff]
      %v6196 = vld [vmem:[%s5782 + $0x15a] sm:$0xff]
      %v6197 = vld [vmem:[%s5782 + $0x16a] sm:$0xff]
      %v6198 = vld [vmem:[%s5782 + $0x172] sm:$0xff]
      %v6199 = vpack.c.bf16 %v6168, %v6167
      %v6200 = vpack.c.bf16 %v6170, %v6169
      %v6201 = vpack.c.bf16 %v6172, %v6171
      %v6202 = vpack.c.bf16 %v6174, %v6173
      %v6203 = vpack.c.bf16 %v6176, %v6175
      %v6204 = vpack.c.bf16 %v6178, %v6177
      %v6205 = vpack.c.bf16 %v6180, %v6179
      %v6206 = vpack.c.bf16 %v6182, %v6181
      %v6207 = vpack.c.bf16 %v6184, %v6183
      %v6208 = vpack.c.bf16 %v6186, %v6185
      %v6209 = vpack.c.bf16 %v6188, %v6187
      %v6210 = vpack.c.bf16 %v6190, %v6189
      %v6211 = vpack.c.bf16 %v6192, %v6191
      %v6212 = vpack.c.bf16 %v6194, %v6193
      %v6213 = vpack.c.bf16 %v6196, %v6195
      %v6214 = vpack.c.bf16 %v6198, %v6197
      %v6231 = vunpack.c.l.b16 %v6199
      %v6232 = vunpack.c.h.b16 %v6199
      %v6233 = vunpack.c.l.b16 %v6200
      %v6234 = vunpack.c.h.b16 %v6200
      %v6235 = vunpack.c.l.b16 %v6201
      %v6236 = vunpack.c.h.b16 %v6201
      %v6237 = vunpack.c.l.b16 %v6202
      %v6238 = vunpack.c.h.b16 %v6202
      %v6239 = vunpack.c.l.b16 %v6203
      %v6240 = vunpack.c.h.b16 %v6203
      %v6241 = vunpack.c.l.b16 %v6204
      %v6242 = vunpack.c.h.b16 %v6204
      %v6243 = vunpack.c.l.b16 %v6205
      %v6244 = vunpack.c.h.b16 %v6205
      %v6245 = vunpack.c.l.b16 %v6206
      %v6246 = vunpack.c.h.b16 %v6206
      %v6247 = vunpack.c.l.b16 %v6207
      %v6248 = vunpack.c.h.b16 %v6207
      %v6249 = vunpack.c.l.b16 %v6208
      %v6250 = vunpack.c.h.b16 %v6208
      %v6251 = vunpack.c.l.b16 %v6209
      %v6252 = vunpack.c.h.b16 %v6209
      %v6253 = vunpack.c.l.b16 %v6210
      %v6254 = vunpack.c.h.b16 %v6210
      %v6255 = vunpack.c.l.b16 %v6211
      %v6256 = vunpack.c.h.b16 %v6211
      %v6257 = vunpack.c.l.b16 %v6212
      %v6258 = vunpack.c.h.b16 %v6212
      %v6259 = vunpack.c.l.b16 %v6213
      %v6260 = vunpack.c.h.b16 %v6213
      %v6261 = vunpack.c.l.b16 %v6214
      %v6262 = vunpack.c.h.b16 %v6214
      %v6263 = vpack.c.b16 %v6231, %v6231
      %v6264 = vpack.c.b16 %v6232, %v6232
      %v6265 = vpack.c.b16 %v6233, %v6233
      %v6266 = vpack.c.b16 %v6234, %v6234
      %v6267 = vpack.c.b16 %v6235, %v6235
      %v6268 = vpack.c.b16 %v6236, %v6236
      %v6269 = vpack.c.b16 %v6237, %v6237
      %v6270 = vpack.c.b16 %v6238, %v6238
      %v6271 = vpack.c.b16 %v6239, %v6239
      %v6272 = vpack.c.b16 %v6240, %v6240
      %v6273 = vpack.c.b16 %v6241, %v6241
      %v6274 = vpack.c.b16 %v6242, %v6242
      %v6275 = vpack.c.b16 %v6243, %v6243
      %v6276 = vpack.c.b16 %v6244, %v6244
      %v6277 = vpack.c.b16 %v6245, %v6245
      %v6278 = vpack.c.b16 %v6246, %v6246
      %v6279 = vpack.c.b16 %v6247, %v6247
      %v6280 = vpack.c.b16 %v6248, %v6248
      %v6281 = vpack.c.b16 %v6249, %v6249
      %v6282 = vpack.c.b16 %v6250, %v6250
      %v6283 = vpack.c.b16 %v6251, %v6251
      %v6284 = vpack.c.b16 %v6252, %v6252
      %v6285 = vpack.c.b16 %v6253, %v6253
      %v6286 = vpack.c.b16 %v6254, %v6254
      %v6287 = vpack.c.b16 %v6255, %v6255
      %v6288 = vpack.c.b16 %v6256, %v6256
      %v6289 = vpack.c.b16 %v6257, %v6257
      %v6290 = vpack.c.b16 %v6258, %v6258
      %v6291 = vpack.c.b16 %v6259, %v6259
      %v6292 = vpack.c.b16 %v6260, %v6260
      %v6293 = vpack.c.b16 %v6261, %v6261
      %v6294 = vpack.c.b16 %v6262, %v6262
      %6327 = vst [vmem:[#allocation5 + $0x20] sm:$0xf] %v6263
      %6328 = vst [vmem:[#allocation5 + $0x44] sm:$0xf] %v6264
      %6329 = vst [vmem:[#allocation5 + $0x68] sm:$0xf] %v6265
      %6330 = vst [vmem:[#allocation5 + $0x8c] sm:$0xf] %v6266
      %6331 = vst [vmem:[#allocation5 + $0xb0] sm:$0xf] %v6267
      %6332 = vst [vmem:[#allocation5 + $0xd4] sm:$0xf] %v6268
      %6333 = vst [vmem:[#allocation5 + $0xf8] sm:$0xf] %v6269
      %6334 = vst [vmem:[#allocation5 + $0x11c] sm:$0xf] %v6270
      %6335 = vst [vmem:[#allocation5 + $0x140] sm:$0xf] %v6271
      %6336 = vst [vmem:[#allocation5 + $0x164] sm:$0xf] %v6272
      %6337 = vst [vmem:[#allocation5 + $0x188] sm:$0xf] %v6273
      %6338 = vst [vmem:[#allocation5 + $0x1ac] sm:$0xf] %v6274
      %6339 = vst [vmem:[#allocation5 + $0x1d0] sm:$0xf] %v6275
      %6340 = vst [vmem:[#allocation5 + $0x1f4] sm:$0xf] %v6276
      %6341 = vst [vmem:[#allocation5 + $0x218] sm:$0xf] %v6277
      %6342 = vst [vmem:[#allocation5 + $0x23c] sm:$0xf] %v6278
      %6343 = vst [vmem:[#allocation5 + $0x260] sm:$0xf] %v6279
      %6344 = vst [vmem:[#allocation5 + $0x284] sm:$0xf] %v6280
      %6345 = vst [vmem:[#allocation5 + $0x2a8] sm:$0xf] %v6281
      %6346 = vst [vmem:[#allocation5 + $0x2cc] sm:$0xf] %v6282
      %6347 = vst [vmem:[#allocation5 + $0x2f0] sm:$0xf] %v6283
      %6348 = vst [vmem:[#allocation5 + $0x314] sm:$0xf] %v6284
      %6349 = vst [vmem:[#allocation5 + $0x338] sm:$0xf] %v6285
      %6350 = vst [vmem:[#allocation5 + $0x35c] sm:$0xf] %v6286
      %6351 = vst [vmem:[#allocation5 + $0x380] sm:$0xf] %v6287
      %6352 = vst [vmem:[#allocation5 + $0x3a4] sm:$0xf] %v6288
      %6353 = vst [vmem:[#allocation5 + $0x3c8] sm:$0xf] %v6289
      %6354 = vst [vmem:[#allocation5 + $0x3ec] sm:$0xf] %v6290
      %6355 = vst [vmem:[#allocation5 + $0x410] sm:$0xf] %v6291
      %6356 = vst [vmem:[#allocation5 + $0x434] sm:$0xf] %v6292
      %6357 = vst [vmem:[#allocation5 + $0x458] sm:$0xf] %v6293
      %6358 = vst [vmem:[#allocation5 + $0x47c] sm:$0xf] %v6294
      %v6359 = vld [vmem:[#allocation5] sm:$0xff]
      %v6360 = vld [vmem:[#allocation5 + $0x8] sm:$0xff]
      %v6361 = vld [vmem:[#allocation5 + $0x10] sm:$0xff]
      %v6362 = vld [vmem:[#allocation5 + $0x18] sm:$0xff]
      %v6363 = vld [vmem:[#allocation5 + $0x20] sm:$0xf]
      %v6364 = vld [vmem:[#allocation5 + $0x24] sm:$0xff]
      %v6365 = vld [vmem:[#allocation5 + $0x2c] sm:$0xff]
      %v6366 = vld [vmem:[#allocation5 + $0x34] sm:$0xff]
      %v6367 = vld [vmem:[#allocation5 + $0x3c] sm:$0xff]
      %v6368 = vld [vmem:[#allocation5 + $0x44] sm:$0xf]
      %v6369 = vld [vmem:[#allocation5 + $0x48] sm:$0xff]
      %v6370 = vld [vmem:[#allocation5 + $0x50] sm:$0xff]
      %v6371 = vld [vmem:[#allocation5 + $0x58] sm:$0xff]
      %v6372 = vld [vmem:[#allocation5 + $0x60] sm:$0xff]
      %v6373 = vld [vmem:[#allocation5 + $0x68] sm:$0xf]
      %v6374 = vld [vmem:[#allocation5 + $0x6c] sm:$0xff]
      %v6375 = vld [vmem:[#allocation5 + $0x74] sm:$0xff]
      %v6376 = vld [vmem:[#allocation5 + $0x7c] sm:$0xff]
      %v6377 = vld [vmem:[#allocation5 + $0x84] sm:$0xff]
      %v6378 = vld [vmem:[#allocation5 + $0x8c] sm:$0xf]
      %v6379 = vld [vmem:[#allocation5 + $0x90] sm:$0xff]
      %v6380 = vld [vmem:[#allocation5 + $0x98] sm:$0xff]
      %v6381 = vld [vmem:[#allocation5 + $0xa0] sm:$0xff]
      %v6382 = vld [vmem:[#allocation5 + $0xa8] sm:$0xff]
      %v6383 = vld [vmem:[#allocation5 + $0xb0] sm:$0xf]
      %v6384 = vld [vmem:[#allocation5 + $0xb4] sm:$0xff]
      %v6385 = vld [vmem:[#allocation5 + $0xbc] sm:$0xff]
      %v6386 = vld [vmem:[#allocation5 + $0xc4] sm:$0xff]
      %v6387 = vld [vmem:[#allocation5 + $0xcc] sm:$0xff]
      %v6388 = vld [vmem:[#allocation5 + $0xd4] sm:$0xf]
      %v6389 = vld [vmem:[#allocation5 + $0xd8] sm:$0xff]
      %v6390 = vld [vmem:[#allocation5 + $0xe0] sm:$0xff]
      %v6391 = vld [vmem:[#allocation5 + $0xe8] sm:$0xff]
      %v6392 = vld [vmem:[#allocation5 + $0xf0] sm:$0xff]
      %v6393 = vld [vmem:[#allocation5 + $0xf8] sm:$0xf]
      %v6394 = vld [vmem:[#allocation5 + $0xfc] sm:$0xff]
      %v6395 = vld [vmem:[#allocation5 + $0x104] sm:$0xff]
      %v6396 = vld [vmem:[#allocation5 + $0x10c] sm:$0xff]
      %v6397 = vld [vmem:[#allocation5 + $0x114] sm:$0xff]
      %v6398 = vld [vmem:[#allocation5 + $0x11c] sm:$0xf]
      %v6399 = vld [vmem:[#allocation5 + $0x120] sm:$0xff]
      %v6400 = vld [vmem:[#allocation5 + $0x128] sm:$0xff]
      %v6401 = vld [vmem:[#allocation5 + $0x130] sm:$0xff]
      %v6402 = vld [vmem:[#allocation5 + $0x138] sm:$0xff]
      %v6403 = vld [vmem:[#allocation5 + $0x140] sm:$0xf]
      %v6404 = vld [vmem:[#allocation5 + $0x144] sm:$0xff]
      %v6405 = vld [vmem:[#allocation5 + $0x14c] sm:$0xff]
      %v6406 = vld [vmem:[#allocation5 + $0x154] sm:$0xff]
      %v6407 = vld [vmem:[#allocation5 + $0x15c] sm:$0xff]
      %v6408 = vld [vmem:[#allocation5 + $0x164] sm:$0xf]
      %v6409 = vld [vmem:[#allocation5 + $0x168] sm:$0xff]
      %v6410 = vld [vmem:[#allocation5 + $0x170] sm:$0xff]
      %v6411 = vld [vmem:[#allocation5 + $0x178] sm:$0xff]
      %v6412 = vld [vmem:[#allocation5 + $0x180] sm:$0xff]
      %v6413 = vld [vmem:[#allocation5 + $0x188] sm:$0xf]
      %v6414 = vld [vmem:[#allocation5 + $0x18c] sm:$0xff]
      %v6415 = vld [vmem:[#allocation5 + $0x194] sm:$0xff]
      %v6416 = vld [vmem:[#allocation5 + $0x19c] sm:$0xff]
      %v6417 = vld [vmem:[#allocation5 + $0x1a4] sm:$0xff]
      %v6418 = vld [vmem:[#allocation5 + $0x1ac] sm:$0xf]
      %v6419 = vld [vmem:[#allocation5 + $0x1b0] sm:$0xff]
      %v6420 = vld [vmem:[#allocation5 + $0x1b8] sm:$0xff]
      %v6421 = vld [vmem:[#allocation5 + $0x1c0] sm:$0xff]
      %v6422 = vld [vmem:[#allocation5 + $0x1c8] sm:$0xff]
      %v6423 = vld [vmem:[#allocation5 + $0x1d0] sm:$0xf]
      %v6424 = vld [vmem:[#allocation5 + $0x1d4] sm:$0xff]
      %v6425 = vld [vmem:[#allocation5 + $0x1dc] sm:$0xff]
      %v6426 = vld [vmem:[#allocation5 + $0x1e4] sm:$0xff]
      %v6427 = vld [vmem:[#allocation5 + $0x1ec] sm:$0xff]
      %v6428 = vld [vmem:[#allocation5 + $0x1f4] sm:$0xf]
      %v6429 = vld [vmem:[#allocation5 + $0x1f8] sm:$0xff]
      %v6430 = vld [vmem:[#allocation5 + $0x200] sm:$0xff]
      %v6431 = vld [vmem:[#allocation5 + $0x208] sm:$0xff]
      %v6432 = vld [vmem:[#allocation5 + $0x210] sm:$0xff]
      %v6433 = vld [vmem:[#allocation5 + $0x218] sm:$0xf]
      %v6434 = vld [vmem:[#allocation5 + $0x21c] sm:$0xff]
      %v6435 = vld [vmem:[#allocation5 + $0x224] sm:$0xff]
      %v6436 = vld [vmem:[#allocation5 + $0x22c] sm:$0xff]
      %v6437 = vld [vmem:[#allocation5 + $0x234] sm:$0xff]
      %v6438 = vld [vmem:[#allocation5 + $0x23c] sm:$0xf]
      %v6439 = vld [vmem:[#allocation5 + $0x240] sm:$0xff]
      %v6440 = vld [vmem:[#allocation5 + $0x248] sm:$0xff]
      %v6441 = vld [vmem:[#allocation5 + $0x250] sm:$0xff]
      %v6442 = vld [vmem:[#allocation5 + $0x258] sm:$0xff]
      %v6443 = vld [vmem:[#allocation5 + $0x260] sm:$0xf]
      %v6444 = vld [vmem:[#allocation5 + $0x264] sm:$0xff]
      %v6445 = vld [vmem:[#allocation5 + $0x26c] sm:$0xff]
      %v6446 = vld [vmem:[#allocation5 + $0x274] sm:$0xff]
      %v6447 = vld [vmem:[#allocation5 + $0x27c] sm:$0xff]
      %v6448 = vld [vmem:[#allocation5 + $0x284] sm:$0xf]
      %v6449 = vld [vmem:[#allocation5 + $0x288] sm:$0xff]
      %v6450 = vld [vmem:[#allocation5 + $0x290] sm:$0xff]
      %v6451 = vld [vmem:[#allocation5 + $0x298] sm:$0xff]
      %v6452 = vld [vmem:[#allocation5 + $0x2a0] sm:$0xff]
      %v6453 = vld [vmem:[#allocation5 + $0x2a8] sm:$0xf]
      %v6454 = vld [vmem:[#allocation5 + $0x2ac] sm:$0xff]
      %v6455 = vld [vmem:[#allocation5 + $0x2b4] sm:$0xff]
      %v6456 = vld [vmem:[#allocation5 + $0x2bc] sm:$0xff]
      %v6457 = vld [vmem:[#allocation5 + $0x2c4] sm:$0xff]
      %v6458 = vld [vmem:[#allocation5 + $0x2cc] sm:$0xf]
      %v6459 = vld [vmem:[#allocation5 + $0x2d0] sm:$0xff]
      %v6460 = vld [vmem:[#allocation5 + $0x2d8] sm:$0xff]
      %v6461 = vld [vmem:[#allocation5 + $0x2e0] sm:$0xff]
      %v6462 = vld [vmem:[#allocation5 + $0x2e8] sm:$0xff]
      %v6463 = vld [vmem:[#allocation5 + $0x2f0] sm:$0xf]
      %v6464 = vld [vmem:[#allocation5 + $0x2f4] sm:$0xff]
      %v6465 = vld [vmem:[#allocation5 + $0x2fc] sm:$0xff]
      %v6466 = vld [vmem:[#allocation5 + $0x304] sm:$0xff]
      %v6467 = vld [vmem:[#allocation5 + $0x30c] sm:$0xff]
      %v6468 = vld [vmem:[#allocation5 + $0x314] sm:$0xf]
      %v6469 = vld [vmem:[#allocation5 + $0x318] sm:$0xff]
      %v6470 = vld [vmem:[#allocation5 + $0x320] sm:$0xff]
      %v6471 = vld [vmem:[#allocation5 + $0x328] sm:$0xff]
      %v6472 = vld [vmem:[#allocation5 + $0x330] sm:$0xff]
      %v6473 = vld [vmem:[#allocation5 + $0x338] sm:$0xf]
      %v6474 = vld [vmem:[#allocation5 + $0x33c] sm:$0xff]
      %v6475 = vld [vmem:[#allocation5 + $0x344] sm:$0xff]
      %v6476 = vld [vmem:[#allocation5 + $0x34c] sm:$0xff]
      %v6477 = vld [vmem:[#allocation5 + $0x354] sm:$0xff]
      %v6478 = vld [vmem:[#allocation5 + $0x35c] sm:$0xf]
      %v6479 = vld [vmem:[#allocation5 + $0x360] sm:$0xff]
      %v6480 = vld [vmem:[#allocation5 + $0x368] sm:$0xff]
      %v6481 = vld [vmem:[#allocation5 + $0x370] sm:$0xff]
      %v6482 = vld [vmem:[#allocation5 + $0x378] sm:$0xff]
      %v6483 = vld [vmem:[#allocation5 + $0x380] sm:$0xf]
      %v6484 = vld [vmem:[#allocation5 + $0x384] sm:$0xff]
      %v6485 = vld [vmem:[#allocation5 + $0x38c] sm:$0xff]
      %v6486 = vld [vmem:[#allocation5 + $0x394] sm:$0xff]
      %v6487 = vld [vmem:[#allocation5 + $0x39c] sm:$0xff]
      %v6488 = vld [vmem:[#allocation5 + $0x3a4] sm:$0xf]
      %v6489 = vld [vmem:[#allocation5 + $0x3a8] sm:$0xff]
      %v6490 = vld [vmem:[#allocation5 + $0x3b0] sm:$0xff]
      %v6491 = vld [vmem:[#allocation5 + $0x3b8] sm:$0xff]
      %v6492 = vld [vmem:[#allocation5 + $0x3c0] sm:$0xff]
      %v6493 = vld [vmem:[#allocation5 + $0x3c8] sm:$0xf]
      %v6494 = vld [vmem:[#allocation5 + $0x3cc] sm:$0xff]
      %v6495 = vld [vmem:[#allocation5 + $0x3d4] sm:$0xff]
      %v6496 = vld [vmem:[#allocation5 + $0x3dc] sm:$0xff]
      %v6497 = vld [vmem:[#allocation5 + $0x3e4] sm:$0xff]
      %v6498 = vld [vmem:[#allocation5 + $0x3ec] sm:$0xf]
      %v6499 = vld [vmem:[#allocation5 + $0x3f0] sm:$0xff]
      %v6500 = vld [vmem:[#allocation5 + $0x3f8] sm:$0xff]
      %v6501 = vld [vmem:[#allocation5 + $0x400] sm:$0xff]
      %v6502 = vld [vmem:[#allocation5 + $0x408] sm:$0xff]
      %v6503 = vld [vmem:[#allocation5 + $0x410] sm:$0xf]
      %v6504 = vld [vmem:[#allocation5 + $0x414] sm:$0xff]
      %v6505 = vld [vmem:[#allocation5 + $0x41c] sm:$0xff]
      %v6506 = vld [vmem:[#allocation5 + $0x424] sm:$0xff]
      %v6507 = vld [vmem:[#allocation5 + $0x42c] sm:$0xff]
      %v6508 = vld [vmem:[#allocation5 + $0x434] sm:$0xf]
      %v6509 = vld [vmem:[#allocation5 + $0x438] sm:$0xff]
      %v6510 = vld [vmem:[#allocation5 + $0x440] sm:$0xff]
      %v6511 = vld [vmem:[#allocation5 + $0x448] sm:$0xff]
      %v6512 = vld [vmem:[#allocation5 + $0x450] sm:$0xff]
      %v6513 = vld [vmem:[#allocation5 + $0x458] sm:$0xf]
      %v6514 = vld [vmem:[#allocation5 + $0x45c] sm:$0xff]
      %v6515 = vld [vmem:[#allocation5 + $0x464] sm:$0xff]
      %v6516 = vld [vmem:[#allocation5 + $0x46c] sm:$0xff]
      %v6517 = vld [vmem:[#allocation5 + $0x474] sm:$0xff]
      %v6518 = vld [vmem:[#allocation5 + $0x47c] sm:$0xf]
      %v6519 = vld [vmem:[%s2] sm:$0xf]
      %v6520 = vld [vmem:[%s2 + $0x4] sm:$0xf]
      %v6521 = vld [vmem:[%s2 + $0x8] sm:$0xf]
      %v6522 = vld [vmem:[%s2 + $0xc] sm:$0xf]
      %v6523 = vld [vmem:[%s2 + $0x10] sm:$0xf]
      %v6524 = vld [vmem:[%s2 + $0x14] sm:$0xf]
      %v6525 = vld [vmem:[%s2 + $0x18] sm:$0xf]
      %v6526 = vld [vmem:[%s2 + $0x1c] sm:$0xf]
      %v6527 = vld [vmem:[%s2 + $0x20] sm:$0xf]
      %v6528 = vld [vmem:[%s2 + $0x24] sm:$0xf]
      %v6529 = vld [vmem:[%s2 + $0x28] sm:$0xf]
      %v6530 = vld [vmem:[%s2 + $0x2c] sm:$0xf]
      %v6531 = vld [vmem:[%s2 + $0x30] sm:$0xf]
      %v6532 = vld [vmem:[%s2 + $0x34] sm:$0xf]
      %v6533 = vld [vmem:[%s2 + $0x38] sm:$0xf]
      %v6534 = vld [vmem:[%s2 + $0x3c] sm:$0xf]
      %v6535 = vld [vmem:[%s2 + $0x40] sm:$0xf]
      %v6536 = vld [vmem:[%s2 + $0x44] sm:$0xf]
      %v6537 = vld [vmem:[%s2 + $0x48] sm:$0xf]
      %v6538 = vld [vmem:[%s2 + $0x4c] sm:$0xf]
      %v6539 = vld [vmem:[%s2 + $0x50] sm:$0xf]
      %v6540 = vld [vmem:[%s2 + $0x54] sm:$0xf]
      %v6541 = vld [vmem:[%s2 + $0x58] sm:$0xf]
      %v6542 = vld [vmem:[%s2 + $0x5c] sm:$0xf]
      %v6543 = vld [vmem:[%s2 + $0x60] sm:$0xf]
      %v6544 = vld [vmem:[%s2 + $0x64] sm:$0xf]
      %v6545 = vld [vmem:[%s2 + $0x68] sm:$0xf]
      %v6546 = vld [vmem:[%s2 + $0x6c] sm:$0xf]
      %v6547 = vld [vmem:[%s2 + $0x70] sm:$0xf]
      %v6548 = vld [vmem:[%s2 + $0x74] sm:$0xf]
      %v6549 = vld [vmem:[%s2 + $0x78] sm:$0xf]
      %v6550 = vld [vmem:[%s2 + $0x7c] sm:$0xf]
      %v6551 = vld [vmem:[%s2 + $0x80] sm:$0xf]
      %v6552 = vld [vmem:[%s2 + $0x84] sm:$0xf]
      %v6553 = vld [vmem:[%s2 + $0x88] sm:$0xf]
      %v6554 = vld [vmem:[%s2 + $0x8c] sm:$0xf]
      %v6555 = vld [vmem:[%s2 + $0x90] sm:$0xf]
      %v6556 = vld [vmem:[%s2 + $0x94] sm:$0xf]
      %v6557 = vld [vmem:[%s2 + $0x98] sm:$0xf]
      %v6558 = vld [vmem:[%s2 + $0x9c] sm:$0xf]
      %v6559 = vld [vmem:[%s2 + $0xa0] sm:$0xf]
      %v6560 = vld [vmem:[%s2 + $0xa4] sm:$0xf]
      %v6561 = vld [vmem:[%s2 + $0xa8] sm:$0xf]
      %v6562 = vld [vmem:[%s2 + $0xac] sm:$0xf]
      %v6563 = vld [vmem:[%s2 + $0xb0] sm:$0xf]
      %v6564 = vld [vmem:[%s2 + $0xb4] sm:$0xf]
      %v6565 = vld [vmem:[%s2 + $0xb8] sm:$0xf]
      %v6566 = vld [vmem:[%s2 + $0xbc] sm:$0xf]
      %v6567 = vld [vmem:[%s2 + $0xc0] sm:$0xf]
      %v6568 = vld [vmem:[%s2 + $0xc4] sm:$0xf]
      %v6569 = vld [vmem:[%s2 + $0xc8] sm:$0xf]
      %v6570 = vld [vmem:[%s2 + $0xcc] sm:$0xf]
      %v6571 = vld [vmem:[%s2 + $0xd0] sm:$0xf]
      %v6572 = vld [vmem:[%s2 + $0xd4] sm:$0xf]
      %v6573 = vld [vmem:[%s2 + $0xd8] sm:$0xf]
      %v6574 = vld [vmem:[%s2 + $0xdc] sm:$0xf]
      %v6575 = vld [vmem:[%s2 + $0xe0] sm:$0xf]
      %v6576 = vld [vmem:[%s2 + $0xe4] sm:$0xf]
      %v6577 = vld [vmem:[%s2 + $0xe8] sm:$0xf]
      %v6578 = vld [vmem:[%s2 + $0xec] sm:$0xf]
      %v6579 = vld [vmem:[%s2 + $0xf0] sm:$0xf]
      %v6580 = vld [vmem:[%s2 + $0xf4] sm:$0xf]
      %v6581 = vld [vmem:[%s2 + $0xf8] sm:$0xf]
      %v6582 = vld [vmem:[%s2 + $0xfc] sm:$0xf]
      %v6583 = vld [vmem:[%s2 + $0x100] sm:$0xf]
      %v6584 = vld [vmem:[%s2 + $0x104] sm:$0xf]
      %v6585 = vld [vmem:[%s2 + $0x108] sm:$0xf]
      %v6586 = vld [vmem:[%s2 + $0x10c] sm:$0xf]
      %v6587 = vld [vmem:[%s2 + $0x110] sm:$0xf]
      %v6588 = vld [vmem:[%s2 + $0x114] sm:$0xf]
      %v6589 = vld [vmem:[%s2 + $0x118] sm:$0xf]
      %v6590 = vld [vmem:[%s2 + $0x11c] sm:$0xf]
      %v6591 = vld [vmem:[%s2 + $0x120] sm:$0xf]
      %v6592 = vld [vmem:[%s2 + $0x124] sm:$0xf]
      %v6593 = vld [vmem:[%s2 + $0x128] sm:$0xf]
      %v6594 = vld [vmem:[%s2 + $0x12c] sm:$0xf]
      %v6595 = vld [vmem:[%s2 + $0x130] sm:$0xf]
      %v6596 = vld [vmem:[%s2 + $0x134] sm:$0xf]
      %v6597 = vld [vmem:[%s2 + $0x138] sm:$0xf]
      %v6598 = vld [vmem:[%s2 + $0x13c] sm:$0xf]
      %v6599 = vld [vmem:[%s2 + $0x140] sm:$0xf]
      %v6600 = vld [vmem:[%s2 + $0x144] sm:$0xf]
      %v6601 = vld [vmem:[%s2 + $0x148] sm:$0xf]
      %v6602 = vld [vmem:[%s2 + $0x14c] sm:$0xf]
      %v6603 = vld [vmem:[%s2 + $0x150] sm:$0xf]
      %v6604 = vld [vmem:[%s2 + $0x154] sm:$0xf]
      %v6605 = vld [vmem:[%s2 + $0x158] sm:$0xf]
      %v6606 = vld [vmem:[%s2 + $0x15c] sm:$0xf]
      %v6607 = vld [vmem:[%s2 + $0x160] sm:$0xf]
      %v6608 = vld [vmem:[%s2 + $0x164] sm:$0xf]
      %v6609 = vld [vmem:[%s2 + $0x168] sm:$0xf]
      %v6610 = vld [vmem:[%s2 + $0x16c] sm:$0xf]
      %v6611 = vld [vmem:[%s2 + $0x170] sm:$0xf]
      %v6612 = vld [vmem:[%s2 + $0x174] sm:$0xf]
      %v6613 = vld [vmem:[%s2 + $0x178] sm:$0xf]
      %v6614 = vld [vmem:[%s2 + $0x17c] sm:$0xf]
      %v6615 = vld [vmem:[%s2 + $0x180] sm:$0xf]
      %v6616 = vld [vmem:[%s2 + $0x184] sm:$0xf]
      %v6617 = vld [vmem:[%s2 + $0x188] sm:$0xf]
      %v6618 = vld [vmem:[%s2 + $0x18c] sm:$0xf]
      %v6619 = vld [vmem:[%s2 + $0x190] sm:$0xf]
      %v6620 = vld [vmem:[%s2 + $0x194] sm:$0xf]
      %v6621 = vld [vmem:[%s2 + $0x198] sm:$0xf]
      %v6622 = vld [vmem:[%s2 + $0x19c] sm:$0xf]
      %v6623 = vld [vmem:[%s2 + $0x1a0] sm:$0xf]
      %v6624 = vld [vmem:[%s2 + $0x1a4] sm:$0xf]
      %v6625 = vld [vmem:[%s2 + $0x1a8] sm:$0xf]
      %v6626 = vld [vmem:[%s2 + $0x1ac] sm:$0xf]
      %v6627 = vld [vmem:[%s2 + $0x1b0] sm:$0xf]
      %v6628 = vld [vmem:[%s2 + $0x1b4] sm:$0xf]
      %v6629 = vld [vmem:[%s2 + $0x1b8] sm:$0xf]
      %v6630 = vld [vmem:[%s2 + $0x1bc] sm:$0xf]
      %v6631 = vld [vmem:[%s2 + $0x1c0] sm:$0xf]
      %v6632 = vld [vmem:[%s2 + $0x1c4] sm:$0xf]
      %v6633 = vld [vmem:[%s2 + $0x1c8] sm:$0xf]
      %v6634 = vld [vmem:[%s2 + $0x1cc] sm:$0xf]
      %v6635 = vld [vmem:[%s2 + $0x1d0] sm:$0xf]
      %v6636 = vld [vmem:[%s2 + $0x1d4] sm:$0xf]
      %v6637 = vld [vmem:[%s2 + $0x1d8] sm:$0xf]
      %v6638 = vld [vmem:[%s2 + $0x1dc] sm:$0xf]
      %v6639 = vld [vmem:[%s2 + $0x1e0] sm:$0xf]
      %v6640 = vld [vmem:[%s2 + $0x1e4] sm:$0xf]
      %v6641 = vld [vmem:[%s2 + $0x1e8] sm:$0xf]
      %v6642 = vld [vmem:[%s2 + $0x1ec] sm:$0xf]
      %v6643 = vld [vmem:[%s2 + $0x1f0] sm:$0xf]
      %v6644 = vld [vmem:[%s2 + $0x1f4] sm:$0xf]
      %v6645 = vld [vmem:[%s2 + $0x1f8] sm:$0xf]
      %v6646 = vld [vmem:[%s2 + $0x1fc] sm:$0xf]
      %v6647 = vld [vmem:[%s2 + $0x200] sm:$0xf]
      %v6648 = vld [vmem:[%s2 + $0x204] sm:$0xf]
      %v6649 = vld [vmem:[%s2 + $0x208] sm:$0xf]
      %v6650 = vld [vmem:[%s2 + $0x20c] sm:$0xf]
      %v6651 = vld [vmem:[%s2 + $0x210] sm:$0xf]
      %v6652 = vld [vmem:[%s2 + $0x214] sm:$0xf]
      %v6653 = vld [vmem:[%s2 + $0x218] sm:$0xf]
      %v6654 = vld [vmem:[%s2 + $0x21c] sm:$0xf]
      %v6655 = vld [vmem:[%s2 + $0x220] sm:$0xf]
      %v6656 = vld [vmem:[%s2 + $0x224] sm:$0xf]
      %v6657 = vld [vmem:[%s2 + $0x228] sm:$0xf]
      %v6658 = vld [vmem:[%s2 + $0x22c] sm:$0xf]
      %v6659 = vld [vmem:[%s2 + $0x230] sm:$0xf]
      %v6660 = vld [vmem:[%s2 + $0x234] sm:$0xf]
      %v6661 = vld [vmem:[%s2 + $0x238] sm:$0xf]
      %v6662 = vld [vmem:[%s2 + $0x23c] sm:$0xf]
      %v6823 = vunpack.c.l.b16 %v6359
      %v6824 = vunpack.c.h.b16 %v6359
      %v6825 = vunpack.c.l.b16 %v6360
      %v6826 = vunpack.c.h.b16 %v6360
      %v6827 = vunpack.c.l.b16 %v6361
      %v6828 = vunpack.c.h.b16 %v6361
      %v6829 = vunpack.c.l.b16 %v6362
      %v6830 = vunpack.c.h.b16 %v6362
      %v6831 = vunpack.c.l.b16 %v6363
      %v6832 = vunpack.c.l.b16 %v6364
      %v6833 = vunpack.c.h.b16 %v6364
      %v6834 = vunpack.c.l.b16 %v6365
      %v6835 = vunpack.c.h.b16 %v6365
      %v6836 = vunpack.c.l.b16 %v6366
      %v6837 = vunpack.c.h.b16 %v6366
      %v6838 = vunpack.c.l.b16 %v6367
      %v6839 = vunpack.c.h.b16 %v6367
      %v6840 = vunpack.c.l.b16 %v6368
      %v6841 = vunpack.c.l.b16 %v6369
      %v6842 = vunpack.c.h.b16 %v6369
      %v6843 = vunpack.c.l.b16 %v6370
      %v6844 = vunpack.c.h.b16 %v6370
      %v6845 = vunpack.c.l.b16 %v6371
      %v6846 = vunpack.c.h.b16 %v6371
      %v6847 = vunpack.c.l.b16 %v6372
      %v6848 = vunpack.c.h.b16 %v6372
      %v6849 = vunpack.c.l.b16 %v6373
      %v6850 = vunpack.c.l.b16 %v6374
      %v6851 = vunpack.c.h.b16 %v6374
      %v6852 = vunpack.c.l.b16 %v6375
      %v6853 = vunpack.c.h.b16 %v6375
      %v6854 = vunpack.c.l.b16 %v6376
      %v6855 = vunpack.c.h.b16 %v6376
      %v6856 = vunpack.c.l.b16 %v6377
      %v6857 = vunpack.c.h.b16 %v6377
      %v6858 = vunpack.c.l.b16 %v6378
      %v6859 = vunpack.c.l.b16 %v6379
      %v6860 = vunpack.c.h.b16 %v6379
      %v6861 = vunpack.c.l.b16 %v6380
      %v6862 = vunpack.c.h.b16 %v6380
      %v6863 = vunpack.c.l.b16 %v6381
      %v6864 = vunpack.c.h.b16 %v6381
      %v6865 = vunpack.c.l.b16 %v6382
      %v6866 = vunpack.c.h.b16 %v6382
      %v6867 = vunpack.c.l.b16 %v6383
      %v6868 = vunpack.c.l.b16 %v6384
      %v6869 = vunpack.c.h.b16 %v6384
      %v6870 = vunpack.c.l.b16 %v6385
      %v6871 = vunpack.c.h.b16 %v6385
      %v6872 = vunpack.c.l.b16 %v6386
      %v6873 = vunpack.c.h.b16 %v6386
      %v6874 = vunpack.c.l.b16 %v6387
      %v6875 = vunpack.c.h.b16 %v6387
      %v6876 = vunpack.c.l.b16 %v6388
      %v6877 = vunpack.c.l.b16 %v6389
      %v6878 = vunpack.c.h.b16 %v6389
      %v6879 = vunpack.c.l.b16 %v6390
      %v6880 = vunpack.c.h.b16 %v6390
      %v6881 = vunpack.c.l.b16 %v6391
      %v6882 = vunpack.c.h.b16 %v6391
      %v6883 = vunpack.c.l.b16 %v6392
      %v6884 = vunpack.c.h.b16 %v6392
      %v6885 = vunpack.c.l.b16 %v6393
      %v6886 = vunpack.c.l.b16 %v6394
      %v6887 = vunpack.c.h.b16 %v6394
      %v6888 = vunpack.c.l.b16 %v6395
      %v6889 = vunpack.c.h.b16 %v6395
      %v6890 = vunpack.c.l.b16 %v6396
      %v6891 = vunpack.c.h.b16 %v6396
      %v6892 = vunpack.c.l.b16 %v6397
      %v6893 = vunpack.c.h.b16 %v6397
      %v6894 = vunpack.c.l.b16 %v6398
      %v6895 = vunpack.c.l.b16 %v6399
      %v6896 = vunpack.c.h.b16 %v6399
      %v6897 = vunpack.c.l.b16 %v6400
      %v6898 = vunpack.c.h.b16 %v6400
      %v6899 = vunpack.c.l.b16 %v6401
      %v6900 = vunpack.c.h.b16 %v6401
      %v6901 = vunpack.c.l.b16 %v6402
      %v6902 = vunpack.c.h.b16 %v6402
      %v6903 = vunpack.c.l.b16 %v6403
      %v6904 = vunpack.c.l.b16 %v6404
      %v6905 = vunpack.c.h.b16 %v6404
      %v6906 = vunpack.c.l.b16 %v6405
      %v6907 = vunpack.c.h.b16 %v6405
      %v6908 = vunpack.c.l.b16 %v6406
      %v6909 = vunpack.c.h.b16 %v6406
      %v6910 = vunpack.c.l.b16 %v6407
      %v6911 = vunpack.c.h.b16 %v6407
      %v6912 = vunpack.c.l.b16 %v6408
      %v6913 = vunpack.c.l.b16 %v6409
      %v6914 = vunpack.c.h.b16 %v6409
      %v6915 = vunpack.c.l.b16 %v6410
      %v6916 = vunpack.c.h.b16 %v6410
      %v6917 = vunpack.c.l.b16 %v6411
      %v6918 = vunpack.c.h.b16 %v6411
      %v6919 = vunpack.c.l.b16 %v6412
      %v6920 = vunpack.c.h.b16 %v6412
      %v6921 = vunpack.c.l.b16 %v6413
      %v6922 = vunpack.c.l.b16 %v6414
      %v6923 = vunpack.c.h.b16 %v6414
      %v6924 = vunpack.c.l.b16 %v6415
      %v6925 = vunpack.c.h.b16 %v6415
      %v6926 = vunpack.c.l.b16 %v6416
      %v6927 = vunpack.c.h.b16 %v6416
      %v6928 = vunpack.c.l.b16 %v6417
      %v6929 = vunpack.c.h.b16 %v6417
      %v6930 = vunpack.c.l.b16 %v6418
      %v6931 = vunpack.c.l.b16 %v6419
      %v6932 = vunpack.c.h.b16 %v6419
      %v6933 = vunpack.c.l.b16 %v6420
      %v6934 = vunpack.c.h.b16 %v6420
      %v6935 = vunpack.c.l.b16 %v6421
      %v6936 = vunpack.c.h.b16 %v6421
      %v6937 = vunpack.c.l.b16 %v6422
      %v6938 = vunpack.c.h.b16 %v6422
      %v6939 = vunpack.c.l.b16 %v6423
      %v6940 = vunpack.c.l.b16 %v6424
      %v6941 = vunpack.c.h.b16 %v6424
      %v6942 = vunpack.c.l.b16 %v6425
      %v6943 = vunpack.c.h.b16 %v6425
      %v6944 = vunpack.c.l.b16 %v6426
      %v6945 = vunpack.c.h.b16 %v6426
      %v6946 = vunpack.c.l.b16 %v6427
      %v6947 = vunpack.c.h.b16 %v6427
      %v6948 = vunpack.c.l.b16 %v6428
      %v6949 = vunpack.c.l.b16 %v6429
      %v6950 = vunpack.c.h.b16 %v6429
      %v6951 = vunpack.c.l.b16 %v6430
      %v6952 = vunpack.c.h.b16 %v6430
      %v6953 = vunpack.c.l.b16 %v6431
      %v6954 = vunpack.c.h.b16 %v6431
      %v6955 = vunpack.c.l.b16 %v6432
      %v6956 = vunpack.c.h.b16 %v6432
      %v6957 = vunpack.c.l.b16 %v6433
      %v6958 = vunpack.c.l.b16 %v6434
      %v6959 = vunpack.c.h.b16 %v6434
      %v6960 = vunpack.c.l.b16 %v6435
      %v6961 = vunpack.c.h.b16 %v6435
      %v6962 = vunpack.c.l.b16 %v6436
      %v6963 = vunpack.c.h.b16 %v6436
      %v6964 = vunpack.c.l.b16 %v6437
      %v6965 = vunpack.c.h.b16 %v6437
      %v6966 = vunpack.c.l.b16 %v6438
      %v6967 = vunpack.c.l.b16 %v6439
      %v6968 = vunpack.c.h.b16 %v6439
      %v6969 = vunpack.c.l.b16 %v6440
      %v6970 = vunpack.c.h.b16 %v6440
      %v6971 = vunpack.c.l.b16 %v6441
      %v6972 = vunpack.c.h.b16 %v6441
      %v6973 = vunpack.c.l.b16 %v6442
      %v6974 = vunpack.c.h.b16 %v6442
      %v6975 = vunpack.c.l.b16 %v6443
      %v6976 = vunpack.c.l.b16 %v6444
      %v6977 = vunpack.c.h.b16 %v6444
      %v6978 = vunpack.c.l.b16 %v6445
      %v6979 = vunpack.c.h.b16 %v6445
      %v6980 = vunpack.c.l.b16 %v6446
      %v6981 = vunpack.c.h.b16 %v6446
      %v6982 = vunpack.c.l.b16 %v6447
      %v6983 = vunpack.c.h.b16 %v6447
      %v6984 = vunpack.c.l.b16 %v6448
      %v6985 = vunpack.c.l.b16 %v6449
      %v6986 = vunpack.c.h.b16 %v6449
      %v6987 = vunpack.c.l.b16 %v6450
      %v6988 = vunpack.c.h.b16 %v6450
      %v6989 = vunpack.c.l.b16 %v6451
      %v6990 = vunpack.c.h.b16 %v6451
      %v6991 = vunpack.c.l.b16 %v6452
      %v6992 = vunpack.c.h.b16 %v6452
      %v6993 = vunpack.c.l.b16 %v6453
      %v6994 = vunpack.c.l.b16 %v6454
      %v6995 = vunpack.c.h.b16 %v6454
      %v6996 = vunpack.c.l.b16 %v6455
      %v6997 = vunpack.c.h.b16 %v6455
      %v6998 = vunpack.c.l.b16 %v6456
      %v6999 = vunpack.c.h.b16 %v6456
      %v7000 = vunpack.c.l.b16 %v6457
      %v7001 = vunpack.c.h.b16 %v6457
      %v7002 = vunpack.c.l.b16 %v6458
      %v7003 = vunpack.c.l.b16 %v6459
      %v7004 = vunpack.c.h.b16 %v6459
      %v7005 = vunpack.c.l.b16 %v6460
      %v7006 = vunpack.c.h.b16 %v6460
      %v7007 = vunpack.c.l.b16 %v6461
      %v7008 = vunpack.c.h.b16 %v6461
      %v7009 = vunpack.c.l.b16 %v6462
      %v7010 = vunpack.c.h.b16 %v6462
      %v7011 = vunpack.c.l.b16 %v6463
      %v7012 = vunpack.c.l.b16 %v6464
      %v7013 = vunpack.c.h.b16 %v6464
      %v7014 = vunpack.c.l.b16 %v6465
      %v7015 = vunpack.c.h.b16 %v6465
      %v7016 = vunpack.c.l.b16 %v6466
      %v7017 = vunpack.c.h.b16 %v6466
      %v7018 = vunpack.c.l.b16 %v6467
      %v7019 = vunpack.c.h.b16 %v6467
      %v7020 = vunpack.c.l.b16 %v6468
      %v7021 = vunpack.c.l.b16 %v6469
      %v7022 = vunpack.c.h.b16 %v6469
      %v7023 = vunpack.c.l.b16 %v6470
      %v7024 = vunpack.c.h.b16 %v6470
      %v7025 = vunpack.c.l.b16 %v6471
      %v7026 = vunpack.c.h.b16 %v6471
      %v7027 = vunpack.c.l.b16 %v6472
      %v7028 = vunpack.c.h.b16 %v6472
      %v7029 = vunpack.c.l.b16 %v6473
      %v7030 = vunpack.c.l.b16 %v6474
      %v7031 = vunpack.c.h.b16 %v6474
      %v7032 = vunpack.c.l.b16 %v6475
      %v7033 = vunpack.c.h.b16 %v6475
      %v7034 = vunpack.c.l.b16 %v6476
      %v7035 = vunpack.c.h.b16 %v6476
      %v7036 = vunpack.c.l.b16 %v6477
      %v7037 = vunpack.c.h.b16 %v6477
      %v7038 = vunpack.c.l.b16 %v6478
      %v7039 = vunpack.c.l.b16 %v6479
      %v7040 = vunpack.c.h.b16 %v6479
      %v7041 = vunpack.c.l.b16 %v6480
      %v7042 = vunpack.c.h.b16 %v6480
      %v7043 = vunpack.c.l.b16 %v6481
      %v7044 = vunpack.c.h.b16 %v6481
      %v7045 = vunpack.c.l.b16 %v6482
      %v7046 = vunpack.c.h.b16 %v6482
      %v7047 = vunpack.c.l.b16 %v6483
      %v7048 = vunpack.c.l.b16 %v6484
      %v7049 = vunpack.c.h.b16 %v6484
      %v7050 = vunpack.c.l.b16 %v6485
      %v7051 = vunpack.c.h.b16 %v6485
      %v7052 = vunpack.c.l.b16 %v6486
      %v7053 = vunpack.c.h.b16 %v6486
      %v7054 = vunpack.c.l.b16 %v6487
      %v7055 = vunpack.c.h.b16 %v6487
      %v7056 = vunpack.c.l.b16 %v6488
      %v7057 = vunpack.c.l.b16 %v6489
      %v7058 = vunpack.c.h.b16 %v6489
      %v7059 = vunpack.c.l.b16 %v6490
      %v7060 = vunpack.c.h.b16 %v6490
      %v7061 = vunpack.c.l.b16 %v6491
      %v7062 = vunpack.c.h.b16 %v6491
      %v7063 = vunpack.c.l.b16 %v6492
      %v7064 = vunpack.c.h.b16 %v6492
      %v7065 = vunpack.c.l.b16 %v6493
      %v7066 = vunpack.c.l.b16 %v6494
      %v7067 = vunpack.c.h.b16 %v6494
      %v7068 = vunpack.c.l.b16 %v6495
      %v7069 = vunpack.c.h.b16 %v6495
      %v7070 = vunpack.c.l.b16 %v6496
      %v7071 = vunpack.c.h.b16 %v6496
      %v7072 = vunpack.c.l.b16 %v6497
      %v7073 = vunpack.c.h.b16 %v6497
      %v7074 = vunpack.c.l.b16 %v6498
      %v7075 = vunpack.c.l.b16 %v6499
      %v7076 = vunpack.c.h.b16 %v6499
      %v7077 = vunpack.c.l.b16 %v6500
      %v7078 = vunpack.c.h.b16 %v6500
      %v7079 = vunpack.c.l.b16 %v6501
      %v7080 = vunpack.c.h.b16 %v6501
      %v7081 = vunpack.c.l.b16 %v6502
      %v7082 = vunpack.c.h.b16 %v6502
      %v7083 = vunpack.c.l.b16 %v6503
      %v7084 = vunpack.c.l.b16 %v6504
      %v7085 = vunpack.c.h.b16 %v6504
      %v7086 = vunpack.c.l.b16 %v6505
      %v7087 = vunpack.c.h.b16 %v6505
      %v7088 = vunpack.c.l.b16 %v6506
      %v7089 = vunpack.c.h.b16 %v6506
      %v7090 = vunpack.c.l.b16 %v6507
      %v7091 = vunpack.c.h.b16 %v6507
      %v7092 = vunpack.c.l.b16 %v6508
      %v7093 = vunpack.c.l.b16 %v6509
      %v7094 = vunpack.c.h.b16 %v6509
      %v7095 = vunpack.c.l.b16 %v6510
      %v7096 = vunpack.c.h.b16 %v6510
      %v7097 = vunpack.c.l.b16 %v6511
      %v7098 = vunpack.c.h.b16 %v6511
      %v7099 = vunpack.c.l.b16 %v6512
      %v7100 = vunpack.c.h.b16 %v6512
      %v7101 = vunpack.c.l.b16 %v6513
      %v7102 = vunpack.c.l.b16 %v6514
      %v7103 = vunpack.c.h.b16 %v6514
      %v7104 = vunpack.c.l.b16 %v6515
      %v7105 = vunpack.c.h.b16 %v6515
      %v7106 = vunpack.c.l.b16 %v6516
      %v7107 = vunpack.c.h.b16 %v6516
      %v7108 = vunpack.c.l.b16 %v6517
      %v7109 = vunpack.c.h.b16 %v6517
      %v7110 = vunpack.c.l.b16 %v6518
      %v7111 = vpack.c.b16 %v6832, %v6823
      %v7112 = vpack.c.b16 %v6833, %v6824
      %v7113 = vpack.c.b16 %v6834, %v6825
      %v7114 = vpack.c.b16 %v6835, %v6826
      %v7115 = vpack.c.b16 %v6836, %v6827
      %v7116 = vpack.c.b16 %v6837, %v6828
      %v7117 = vpack.c.b16 %v6838, %v6829
      %v7118 = vpack.c.b16 %v6839, %v6830
      %v7119 = vpack.c.b16 %v6840, %v6831
      %v7120 = vpack.c.b16 %v6850, %v6841
      %v7121 = vpack.c.b16 %v6851, %v6842
      %v7122 = vpack.c.b16 %v6852, %v6843
      %v7123 = vpack.c.b16 %v6853, %v6844
      %v7124 = vpack.c.b16 %v6854, %v6845
      %v7125 = vpack.c.b16 %v6855, %v6846
      %v7126 = vpack.c.b16 %v6856, %v6847
      %v7127 = vpack.c.b16 %v6857, %v6848
      %v7128 = vpack.c.b16 %v6858, %v6849
      %v7129 = vpack.c.b16 %v6868, %v6859
      %v7130 = vpack.c.b16 %v6869, %v6860
      %v7131 = vpack.c.b16 %v6870, %v6861
      %v7132 = vpack.c.b16 %v6871, %v6862
      %v7133 = vpack.c.b16 %v6872, %v6863
      %v7134 = vpack.c.b16 %v6873, %v6864
      %v7135 = vpack.c.b16 %v6874, %v6865
      %v7136 = vpack.c.b16 %v6875, %v6866
      %v7137 = vpack.c.b16 %v6876, %v6867
      %v7138 = vpack.c.b16 %v6886, %v6877
      %v7139 = vpack.c.b16 %v6887, %v6878
      %v7140 = vpack.c.b16 %v6888, %v6879
      %v7141 = vpack.c.b16 %v6889, %v6880
      %v7142 = vpack.c.b16 %v6890, %v6881
      %v7143 = vpack.c.b16 %v6891, %v6882
      %v7144 = vpack.c.b16 %v6892, %v6883
      %v7145 = vpack.c.b16 %v6893, %v6884
      %v7146 = vpack.c.b16 %v6894, %v6885
      %v7147 = vpack.c.b16 %v6904, %v6895
      %v7148 = vpack.c.b16 %v6905, %v6896
      %v7149 = vpack.c.b16 %v6906, %v6897
      %v7150 = vpack.c.b16 %v6907, %v6898
      %v7151 = vpack.c.b16 %v6908, %v6899
      %v7152 = vpack.c.b16 %v6909, %v6900
      %v7153 = vpack.c.b16 %v6910, %v6901
      %v7154 = vpack.c.b16 %v6911, %v6902
      %v7155 = vpack.c.b16 %v6912, %v6903
      %v7156 = vpack.c.b16 %v6922, %v6913
      %v7157 = vpack.c.b16 %v6923, %v6914
      %v7158 = vpack.c.b16 %v6924, %v6915
      %v7159 = vpack.c.b16 %v6925, %v6916
      %v7160 = vpack.c.b16 %v6926, %v6917
      %v7161 = vpack.c.b16 %v6927, %v6918
      %v7162 = vpack.c.b16 %v6928, %v6919
      %v7163 = vpack.c.b16 %v6929, %v6920
      %v7164 = vpack.c.b16 %v6930, %v6921
      %v7165 = vpack.c.b16 %v6940, %v6931
      %v7166 = vpack.c.b16 %v6941, %v6932
      %v7167 = vpack.c.b16 %v6942, %v6933
      %v7168 = vpack.c.b16 %v6943, %v6934
      %v7169 = vpack.c.b16 %v6944, %v6935
      %v7170 = vpack.c.b16 %v6945, %v6936
      %v7171 = vpack.c.b16 %v6946, %v6937
      %v7172 = vpack.c.b16 %v6947, %v6938
      %v7173 = vpack.c.b16 %v6948, %v6939
      %v7174 = vpack.c.b16 %v6958, %v6949
      %v7175 = vpack.c.b16 %v6959, %v6950
      %v7176 = vpack.c.b16 %v6960, %v6951
      %v7177 = vpack.c.b16 %v6961, %v6952
      %v7178 = vpack.c.b16 %v6962, %v6953
      %v7179 = vpack.c.b16 %v6963, %v6954
      %v7180 = vpack.c.b16 %v6964, %v6955
      %v7181 = vpack.c.b16 %v6965, %v6956
      %v7182 = vpack.c.b16 %v6966, %v6957
      %v7183 = vpack.c.b16 %v6976, %v6967
      %v7184 = vpack.c.b16 %v6977, %v6968
      %v7185 = vpack.c.b16 %v6978, %v6969
      %v7186 = vpack.c.b16 %v6979, %v6970
      %v7187 = vpack.c.b16 %v6980, %v6971
      %v7188 = vpack.c.b16 %v6981, %v6972
      %v7189 = vpack.c.b16 %v6982, %v6973
      %v7190 = vpack.c.b16 %v6983, %v6974
      %v7191 = vpack.c.b16 %v6984, %v6975
      %v7192 = vpack.c.b16 %v6994, %v6985
      %v7193 = vpack.c.b16 %v6995, %v6986
      %v7194 = vpack.c.b16 %v6996, %v6987
      %v7195 = vpack.c.b16 %v6997, %v6988
      %v7196 = vpack.c.b16 %v6998, %v6989
      %v7197 = vpack.c.b16 %v6999, %v6990
      %v7198 = vpack.c.b16 %v7000, %v6991
      %v7199 = vpack.c.b16 %v7001, %v6992
      %v7200 = vpack.c.b16 %v7002, %v6993
      %v7201 = vpack.c.b16 %v7012, %v7003
      %v7202 = vpack.c.b16 %v7013, %v7004
      %v7203 = vpack.c.b16 %v7014, %v7005
      %v7204 = vpack.c.b16 %v7015, %v7006
      %v7205 = vpack.c.b16 %v7016, %v7007
      %v7206 = vpack.c.b16 %v7017, %v7008
      %v7207 = vpack.c.b16 %v7018, %v7009
      %v7208 = vpack.c.b16 %v7019, %v7010
      %v7209 = vpack.c.b16 %v7020, %v7011
      %v7210 = vpack.c.b16 %v7030, %v7021
      %v7211 = vpack.c.b16 %v7031, %v7022
      %v7212 = vpack.c.b16 %v7032, %v7023
      %v7213 = vpack.c.b16 %v7033, %v7024
      %v7214 = vpack.c.b16 %v7034, %v7025
      %v7215 = vpack.c.b16 %v7035, %v7026
      %v7216 = vpack.c.b16 %v7036, %v7027
      %v7217 = vpack.c.b16 %v7037, %v7028
      %v7218 = vpack.c.b16 %v7038, %v7029
      %v7219 = vpack.c.b16 %v7048, %v7039
      %v7220 = vpack.c.b16 %v7049, %v7040
      %v7221 = vpack.c.b16 %v7050, %v7041
      %v7222 = vpack.c.b16 %v7051, %v7042
      %v7223 = vpack.c.b16 %v7052, %v7043
      %v7224 = vpack.c.b16 %v7053, %v7044
      %v7225 = vpack.c.b16 %v7054, %v7045
      %v7226 = vpack.c.b16 %v7055, %v7046
      %v7227 = vpack.c.b16 %v7056, %v7047
      %v7228 = vpack.c.b16 %v7066, %v7057
      %v7229 = vpack.c.b16 %v7067, %v7058
      %v7230 = vpack.c.b16 %v7068, %v7059
      %v7231 = vpack.c.b16 %v7069, %v7060
      %v7232 = vpack.c.b16 %v7070, %v7061
      %v7233 = vpack.c.b16 %v7071, %v7062
      %v7234 = vpack.c.b16 %v7072, %v7063
      %v7235 = vpack.c.b16 %v7073, %v7064
      %v7236 = vpack.c.b16 %v7074, %v7065
      %v7237 = vpack.c.b16 %v7084, %v7075
      %v7238 = vpack.c.b16 %v7085, %v7076
      %v7239 = vpack.c.b16 %v7086, %v7077
      %v7240 = vpack.c.b16 %v7087, %v7078
      %v7241 = vpack.c.b16 %v7088, %v7079
      %v7242 = vpack.c.b16 %v7089, %v7080
      %v7243 = vpack.c.b16 %v7090, %v7081
      %v7244 = vpack.c.b16 %v7091, %v7082
      %v7245 = vpack.c.b16 %v7092, %v7083
      %v7246 = vpack.c.b16 %v7102, %v7093
      %v7247 = vpack.c.b16 %v7103, %v7094
      %v7248 = vpack.c.b16 %v7104, %v7095
      %v7249 = vpack.c.b16 %v7105, %v7096
      %v7250 = vpack.c.b16 %v7106, %v7097
      %v7251 = vpack.c.b16 %v7107, %v7098
      %v7252 = vpack.c.b16 %v7108, %v7099
      %v7253 = vpack.c.b16 %v7109, %v7100
      %v7254 = vpack.c.b16 %v7110, %v7101
      %v7543 = vunpack.c.l.b16 %v6519
      %v7544 = vunpack.c.l.b16 %v6520
      %v7545 = vunpack.c.l.b16 %v6521
      %v7546 = vunpack.c.l.b16 %v6522
      %v7547 = vunpack.c.l.b16 %v6523
      %v7548 = vunpack.c.l.b16 %v6524
      %v7549 = vunpack.c.l.b16 %v6525
      %v7550 = vunpack.c.l.b16 %v6526
      %v7551 = vunpack.c.l.b16 %v6527
      %v7552 = vunpack.c.l.b16 %v6528
      %v7553 = vunpack.c.l.b16 %v6529
      %v7554 = vunpack.c.l.b16 %v6530
      %v7555 = vunpack.c.l.b16 %v6531
      %v7556 = vunpack.c.l.b16 %v6532
      %v7557 = vunpack.c.l.b16 %v6533
      %v7558 = vunpack.c.l.b16 %v6534
      %v7559 = vunpack.c.l.b16 %v6535
      %v7560 = vunpack.c.l.b16 %v6536
      %v7561 = vunpack.c.l.b16 %v6537
      %v7562 = vunpack.c.l.b16 %v6538
      %v7563 = vunpack.c.l.b16 %v6539
      %v7564 = vunpack.c.l.b16 %v6540
      %v7565 = vunpack.c.l.b16 %v6541
      %v7566 = vunpack.c.l.b16 %v6542
      %v7567 = vunpack.c.l.b16 %v6543
      %v7568 = vunpack.c.l.b16 %v6544
      %v7569 = vunpack.c.l.b16 %v6545
      %v7570 = vunpack.c.l.b16 %v6546
      %v7571 = vunpack.c.l.b16 %v6547
      %v7572 = vunpack.c.l.b16 %v6548
      %v7573 = vunpack.c.l.b16 %v6549
      %v7574 = vunpack.c.l.b16 %v6550
      %v7575 = vunpack.c.l.b16 %v6551
      %v7576 = vunpack.c.l.b16 %v6552
      %v7577 = vunpack.c.l.b16 %v6553
      %v7578 = vunpack.c.l.b16 %v6554
      %v7579 = vunpack.c.l.b16 %v6555
      %v7580 = vunpack.c.l.b16 %v6556
      %v7581 = vunpack.c.l.b16 %v6557
      %v7582 = vunpack.c.l.b16 %v6558
      %v7583 = vunpack.c.l.b16 %v6559
      %v7584 = vunpack.c.l.b16 %v6560
      %v7585 = vunpack.c.l.b16 %v6561
      %v7586 = vunpack.c.l.b16 %v6562
      %v7587 = vunpack.c.l.b16 %v6563
      %v7588 = vunpack.c.l.b16 %v6564
      %v7589 = vunpack.c.l.b16 %v6565
      %v7590 = vunpack.c.l.b16 %v6566
      %v7591 = vunpack.c.l.b16 %v6567
      %v7592 = vunpack.c.l.b16 %v6568
      %v7593 = vunpack.c.l.b16 %v6569
      %v7594 = vunpack.c.l.b16 %v6570
      %v7595 = vunpack.c.l.b16 %v6571
      %v7596 = vunpack.c.l.b16 %v6572
      %v7597 = vunpack.c.l.b16 %v6573
      %v7598 = vunpack.c.l.b16 %v6574
      %v7599 = vunpack.c.l.b16 %v6575
      %v7600 = vunpack.c.l.b16 %v6576
      %v7601 = vunpack.c.l.b16 %v6577
      %v7602 = vunpack.c.l.b16 %v6578
      %v7603 = vunpack.c.l.b16 %v6579
      %v7604 = vunpack.c.l.b16 %v6580
      %v7605 = vunpack.c.l.b16 %v6581
      %v7606 = vunpack.c.l.b16 %v6582
      %v7607 = vunpack.c.l.b16 %v6583
      %v7608 = vunpack.c.l.b16 %v6584
      %v7609 = vunpack.c.l.b16 %v6585
      %v7610 = vunpack.c.l.b16 %v6586
      %v7611 = vunpack.c.l.b16 %v6587
      %v7612 = vunpack.c.l.b16 %v6588
      %v7613 = vunpack.c.l.b16 %v6589
      %v7614 = vunpack.c.l.b16 %v6590
      %v7615 = vunpack.c.l.b16 %v6591
      %v7616 = vunpack.c.l.b16 %v6592
      %v7617 = vunpack.c.l.b16 %v6593
      %v7618 = vunpack.c.l.b16 %v6594
      %v7619 = vunpack.c.l.b16 %v6595
      %v7620 = vunpack.c.l.b16 %v6596
      %v7621 = vunpack.c.l.b16 %v6597
      %v7622 = vunpack.c.l.b16 %v6598
      %v7623 = vunpack.c.l.b16 %v6599
      %v7624 = vunpack.c.l.b16 %v6600
      %v7625 = vunpack.c.l.b16 %v6601
      %v7626 = vunpack.c.l.b16 %v6602
      %v7627 = vunpack.c.l.b16 %v6603
      %v7628 = vunpack.c.l.b16 %v6604
      %v7629 = vunpack.c.l.b16 %v6605
      %v7630 = vunpack.c.l.b16 %v6606
      %v7631 = vunpack.c.l.b16 %v6607
      %v7632 = vunpack.c.l.b16 %v6608
      %v7633 = vunpack.c.l.b16 %v6609
      %v7634 = vunpack.c.l.b16 %v6610
      %v7635 = vunpack.c.l.b16 %v6611
      %v7636 = vunpack.c.l.b16 %v6612
      %v7637 = vunpack.c.l.b16 %v6613
      %v7638 = vunpack.c.l.b16 %v6614
      %v7639 = vunpack.c.l.b16 %v6615
      %v7640 = vunpack.c.l.b16 %v6616
      %v7641 = vunpack.c.l.b16 %v6617
      %v7642 = vunpack.c.l.b16 %v6618
      %v7643 = vunpack.c.l.b16 %v6619
      %v7644 = vunpack.c.l.b16 %v6620
      %v7645 = vunpack.c.l.b16 %v6621
      %v7646 = vunpack.c.l.b16 %v6622
      %v7647 = vunpack.c.l.b16 %v6623
      %v7648 = vunpack.c.l.b16 %v6624
      %v7649 = vunpack.c.l.b16 %v6625
      %v7650 = vunpack.c.l.b16 %v6626
      %v7651 = vunpack.c.l.b16 %v6627
      %v7652 = vunpack.c.l.b16 %v6628
      %v7653 = vunpack.c.l.b16 %v6629
      %v7654 = vunpack.c.l.b16 %v6630
      %v7655 = vunpack.c.l.b16 %v6631
      %v7656 = vunpack.c.l.b16 %v6632
      %v7657 = vunpack.c.l.b16 %v6633
      %v7658 = vunpack.c.l.b16 %v6634
      %v7659 = vunpack.c.l.b16 %v6635
      %v7660 = vunpack.c.l.b16 %v6636
      %v7661 = vunpack.c.l.b16 %v6637
      %v7662 = vunpack.c.l.b16 %v6638
      %v7663 = vunpack.c.l.b16 %v6639
      %v7664 = vunpack.c.l.b16 %v6640
      %v7665 = vunpack.c.l.b16 %v6641
      %v7666 = vunpack.c.l.b16 %v6642
      %v7667 = vunpack.c.l.b16 %v6643
      %v7668 = vunpack.c.l.b16 %v6644
      %v7669 = vunpack.c.l.b16 %v6645
      %v7670 = vunpack.c.l.b16 %v6646
      %v7671 = vunpack.c.l.b16 %v6647
      %v7672 = vunpack.c.l.b16 %v6648
      %v7673 = vunpack.c.l.b16 %v6649
      %v7674 = vunpack.c.l.b16 %v6650
      %v7675 = vunpack.c.l.b16 %v6651
      %v7676 = vunpack.c.l.b16 %v6652
      %v7677 = vunpack.c.l.b16 %v6653
      %v7678 = vunpack.c.l.b16 %v6654
      %v7679 = vunpack.c.l.b16 %v6655
      %v7680 = vunpack.c.l.b16 %v6656
      %v7681 = vunpack.c.l.b16 %v6657
      %v7682 = vunpack.c.l.b16 %v6658
      %v7683 = vunpack.c.l.b16 %v6659
      %v7684 = vunpack.c.l.b16 %v6660
      %v7685 = vunpack.c.l.b16 %v6661
      %v7686 = vunpack.c.l.b16 %v6662
      %v7687 = vpack.c.b16 %v7544, %v7543
      %v7688 = vpack.c.b16 %v7546, %v7545
      %v7689 = vpack.c.b16 %v7548, %v7547
      %v7690 = vpack.c.b16 %v7550, %v7549
      %v7691 = vpack.c.b16 %v7552, %v7551
      %v7692 = vpack.c.b16 %v7554, %v7553
      %v7693 = vpack.c.b16 %v7556, %v7555
      %v7694 = vpack.c.b16 %v7558, %v7557
      %v7695 = vpack.c.b16 %v7560, %v7559
      %v7696 = vpack.c.b16 %v7562, %v7561
      %v7697 = vpack.c.b16 %v7564, %v7563
      %v7698 = vpack.c.b16 %v7566, %v7565
      %v7699 = vpack.c.b16 %v7568, %v7567
      %v7700 = vpack.c.b16 %v7570, %v7569
      %v7701 = vpack.c.b16 %v7572, %v7571
      %v7702 = vpack.c.b16 %v7574, %v7573
      %v7703 = vpack.c.b16 %v7576, %v7575
      %v7704 = vpack.c.b16 %v7578, %v7577
      %v7705 = vpack.c.b16 %v7580, %v7579
      %v7706 = vpack.c.b16 %v7582, %v7581
      %v7707 = vpack.c.b16 %v7584, %v7583
      %v7708 = vpack.c.b16 %v7586, %v7585
      %v7709 = vpack.c.b16 %v7588, %v7587
      %v7710 = vpack.c.b16 %v7590, %v7589
      %v7711 = vpack.c.b16 %v7592, %v7591
      %v7712 = vpack.c.b16 %v7594, %v7593
      %v7713 = vpack.c.b16 %v7596, %v7595
      %v7714 = vpack.c.b16 %v7598, %v7597
      %v7715 = vpack.c.b16 %v7600, %v7599
      %v7716 = vpack.c.b16 %v7602, %v7601
      %v7717 = vpack.c.b16 %v7604, %v7603
      %v7718 = vpack.c.b16 %v7606, %v7605
      %v7719 = vpack.c.b16 %v7608, %v7607
      %v7720 = vpack.c.b16 %v7610, %v7609
      %v7721 = vpack.c.b16 %v7612, %v7611
      %v7722 = vpack.c.b16 %v7614, %v7613
      %v7723 = vpack.c.b16 %v7616, %v7615
      %v7724 = vpack.c.b16 %v7618, %v7617
      %v7725 = vpack.c.b16 %v7620, %v7619
      %v7726 = vpack.c.b16 %v7622, %v7621
      %v7727 = vpack.c.b16 %v7624, %v7623
      %v7728 = vpack.c.b16 %v7626, %v7625
      %v7729 = vpack.c.b16 %v7628, %v7627
      %v7730 = vpack.c.b16 %v7630, %v7629
      %v7731 = vpack.c.b16 %v7632, %v7631
      %v7732 = vpack.c.b16 %v7634, %v7633
      %v7733 = vpack.c.b16 %v7636, %v7635
      %v7734 = vpack.c.b16 %v7638, %v7637
      %v7735 = vpack.c.b16 %v7640, %v7639
      %v7736 = vpack.c.b16 %v7642, %v7641
      %v7737 = vpack.c.b16 %v7644, %v7643
      %v7738 = vpack.c.b16 %v7646, %v7645
      %v7739 = vpack.c.b16 %v7648, %v7647
      %v7740 = vpack.c.b16 %v7650, %v7649
      %v7741 = vpack.c.b16 %v7652, %v7651
      %v7742 = vpack.c.b16 %v7654, %v7653
      %v7743 = vpack.c.b16 %v7656, %v7655
      %v7744 = vpack.c.b16 %v7658, %v7657
      %v7745 = vpack.c.b16 %v7660, %v7659
      %v7746 = vpack.c.b16 %v7662, %v7661
      %v7747 = vpack.c.b16 %v7664, %v7663
      %v7748 = vpack.c.b16 %v7666, %v7665
      %v7749 = vpack.c.b16 %v7668, %v7667
      %v7750 = vpack.c.b16 %v7670, %v7669
      %v7751 = vpack.c.b16 %v7672, %v7671
      %v7752 = vpack.c.b16 %v7674, %v7673
      %v7753 = vpack.c.b16 %v7676, %v7675
      %v7754 = vpack.c.b16 %v7678, %v7677
      %v7755 = vpack.c.b16 %v7680, %v7679
      %v7756 = vpack.c.b16 %v7682, %v7681
      %v7757 = vpack.c.b16 %v7684, %v7683
      %v7758 = vpack.c.b16 %v7686, %v7685
      %7831 = vmatprep.subr.bf16.mxu0 0
      %7832 = vmatpush1.bf16.msra.mxu0 %v7694
      %7833 = vmatprep.subr.bf16.mxu0 0
      %7834 = vmatpush1.bf16.msra.mxu0 %v7693
      %7835 = vmatprep.subr.bf16.mxu0 0
      %7836 = vmatpush1.bf16.msra.mxu0 %v7692
      %7837 = vmatprep.subr.bf16.mxu0 0
      %7838 = vmatpush1.bf16.msra.mxu0 %v7691
      %7839 = vmatprep.subr.bf16.mxu0 0
      %7840 = vmatpush1.bf16.msra.mxu0 %v7690
      %7841 = vmatprep.subr.bf16.mxu0 0
      %7842 = vmatpush1.bf16.msra.mxu0 %v7689
      %7843 = vmatprep.subr.bf16.mxu0 0
      %7844 = vmatpush1.bf16.msra.mxu0 %v7688
      %7845 = vmatprep.subr.bf16.mxu0 0
      %7846 = vmatpush1.bf16.msra.mxu0 %v7687
      %7847 = vmatprep.subr.bf16.mxu0 0
      %7848 = vmatpush2.bf16.msra.mxu0 %v7702
      %7849 = vmatprep.subr.bf16.mxu0 0
      %7850 = vmatpush2.bf16.msra.mxu0 %v7701
      %7851 = vmatprep.subr.bf16.mxu0 0
      %7852 = vmatpush2.bf16.msra.mxu0 %v7700
      %7853 = vmatprep.subr.bf16.mxu0 0
      %7854 = vmatpush2.bf16.msra.mxu0 %v7699
      %7855 = vmatprep.subr.bf16.mxu0 0
      %7856 = vmatpush2.bf16.msra.mxu0 %v7698
      %7857 = vmatprep.subr.bf16.mxu0 0
      %7858 = vmatpush2.bf16.msra.mxu0 %v7697
      %7859 = vmatprep.subr.bf16.mxu0 0
      %7860 = vmatpush2.bf16.msra.mxu0 %v7696
      %7861 = vmatprep.subr.bf16.mxu0 0
      %7862 = vmatpush2.bf16.msra.mxu0 %v7695
      %7863 = vmatprep.mubr.bf16.mxu0 %v7112
      %7864 = vmatmul.mubr.bf16.gmra.mxu0 %v7111
      %v7865 = vpop.f32.mrf.mxu0
      %v7866 = vadd.f32 0.0, %v7865
      %v7867 = vpop.f32.mrf.mxu0
      %v7868 = vpop.f32.mrf.mxu0
      %v7869 = vadd.f32 0.0, %v7868
      %v7870 = vpop.f32.mrf.mxu0
      %7871 = vmatprep.mubr.bf16.mxu0 %v7121
      %7872 = vmatmul.mubr.bf16.gmra.mxu0 %v7120
      %v7873 = vpop.f32.mrf.mxu0
      %v7874 = vadd.f32 0.0, %v7873
      %v7875 = vpop.f32.mrf.mxu0
      %v7876 = vpop.f32.mrf.mxu0
      %v7877 = vadd.f32 0.0, %v7876
      %v7878 = vpop.f32.mrf.mxu0
      %7879 = vmatprep.mubr.bf16.mxu0 %v7130
      %7880 = vmatmul.mubr.bf16.gmra.mxu0 %v7129
      %v7881 = vpop.f32.mrf.mxu0
      %v7882 = vadd.f32 0.0, %v7881
      %v7883 = vpop.f32.mrf.mxu0
      %v7884 = vpop.f32.mrf.mxu0
      %v7885 = vadd.f32 0.0, %v7884
      %v7886 = vpop.f32.mrf.mxu0
      %7887 = vmatprep.mubr.bf16.mxu0 %v7139
      %7888 = vmatmul.mubr.bf16.gmra.mxu0 %v7138
      %v7889 = vpop.f32.mrf.mxu0
      %v7890 = vadd.f32 0.0, %v7889
      %v7891 = vpop.f32.mrf.mxu0
      %v7892 = vpop.f32.mrf.mxu0
      %v7893 = vadd.f32 0.0, %v7892
      %v7894 = vpop.f32.mrf.mxu0
      %7895 = vmatprep.mubr.bf16.mxu0 %v7148
      %7896 = vmatmul.mubr.bf16.gmra.mxu0 %v7147
      %v7897 = vpop.f32.mrf.mxu0
      %v7898 = vadd.f32 0.0, %v7897
      %v7899 = vpop.f32.mrf.mxu0
      %v7900 = vpop.f32.mrf.mxu0
      %v7901 = vadd.f32 0.0, %v7900
      %v7902 = vpop.f32.mrf.mxu0
      %7903 = vmatprep.mubr.bf16.mxu0 %v7157
      %7904 = vmatmul.mubr.bf16.gmra.mxu0 %v7156
      %v7905 = vpop.f32.mrf.mxu0
      %v7906 = vadd.f32 0.0, %v7905
      %v7907 = vpop.f32.mrf.mxu0
      %v7908 = vpop.f32.mrf.mxu0
      %v7909 = vadd.f32 0.0, %v7908
      %v7910 = vpop.f32.mrf.mxu0
      %7911 = vmatprep.mubr.bf16.mxu0 %v7166
      %7912 = vmatmul.mubr.bf16.gmra.mxu0 %v7165
      %v7913 = vpop.f32.mrf.mxu0
      %v7914 = vadd.f32 0.0, %v7913
      %v7915 = vpop.f32.mrf.mxu0
      %v7916 = vpop.f32.mrf.mxu0
      %v7917 = vadd.f32 0.0, %v7916
      %v7918 = vpop.f32.mrf.mxu0
      %7919 = vmatprep.mubr.bf16.mxu0 %v7175
      %7920 = vmatmul.mubr.bf16.gmra.mxu0 %v7174
      %v7921 = vpop.f32.mrf.mxu0
      %v7922 = vadd.f32 0.0, %v7921
      %v7923 = vpop.f32.mrf.mxu0
      %v7924 = vpop.f32.mrf.mxu0
      %v7925 = vadd.f32 0.0, %v7924
      %v7926 = vpop.f32.mrf.mxu0
      %7927 = vmatprep.mubr.bf16.mxu0 %v7184
      %7928 = vmatmul.mubr.bf16.gmra.mxu0 %v7183
      %v7929 = vpop.f32.mrf.mxu0
      %v7930 = vadd.f32 0.0, %v7929
      %v7931 = vpop.f32.mrf.mxu0
      %v7932 = vpop.f32.mrf.mxu0
      %v7933 = vadd.f32 0.0, %v7932
      %v7934 = vpop.f32.mrf.mxu0
      %7935 = vmatprep.mubr.bf16.mxu0 %v7193
      %7936 = vmatmul.mubr.bf16.gmra.mxu0 %v7192
      %v7937 = vpop.f32.mrf.mxu0
      %v7938 = vadd.f32 0.0, %v7937
      %v7939 = vpop.f32.mrf.mxu0
      %v7940 = vpop.f32.mrf.mxu0
      %v7941 = vadd.f32 0.0, %v7940
      %v7942 = vpop.f32.mrf.mxu0
      %7943 = vmatprep.mubr.bf16.mxu0 %v7202
      %7944 = vmatmul.mubr.bf16.gmra.mxu0 %v7201
      %v7945 = vpop.f32.mrf.mxu0
      %v7946 = vadd.f32 0.0, %v7945
      %v7947 = vpop.f32.mrf.mxu0
      %v7948 = vpop.f32.mrf.mxu0
      %v7949 = vadd.f32 0.0, %v7948
      %v7950 = vpop.f32.mrf.mxu0
      %7951 = vmatprep.mubr.bf16.mxu0 %v7211
      %7952 = vmatmul.mubr.bf16.gmra.mxu0 %v7210
      %v7953 = vpop.f32.mrf.mxu0
      %v7954 = vadd.f32 0.0, %v7953
      %v7955 = vpop.f32.mrf.mxu0
      %v7956 = vpop.f32.mrf.mxu0
      %v7957 = vadd.f32 0.0, %v7956
      %v7958 = vpop.f32.mrf.mxu0
      %7959 = vmatprep.mubr.bf16.mxu0 %v7220
      %7960 = vmatmul.mubr.bf16.gmra.mxu0 %v7219
      %v7961 = vpop.f32.mrf.mxu0
      %v7962 = vadd.f32 0.0, %v7961
      %v7963 = vpop.f32.mrf.mxu0
      %v7964 = vpop.f32.mrf.mxu0
      %v7965 = vadd.f32 0.0, %v7964
      %v7966 = vpop.f32.mrf.mxu0
      %7967 = vmatprep.mubr.bf16.mxu0 %v7229
      %7968 = vmatmul.mubr.bf16.gmra.mxu0 %v7228
      %v7969 = vpop.f32.mrf.mxu0
      %v7970 = vadd.f32 0.0, %v7969
      %v7971 = vpop.f32.mrf.mxu0
      %v7972 = vpop.f32.mrf.mxu0
      %v7973 = vadd.f32 0.0, %v7972
      %v7974 = vpop.f32.mrf.mxu0
      %7975 = vmatprep.mubr.bf16.mxu0 %v7238
      %7976 = vmatmul.mubr.bf16.gmra.mxu0 %v7237
      %v7977 = vpop.f32.mrf.mxu0
      %v7978 = vadd.f32 0.0, %v7977
      %v7979 = vpop.f32.mrf.mxu0
      %v7980 = vpop.f32.mrf.mxu0
      %v7981 = vadd.f32 0.0, %v7980
      %v7982 = vpop.f32.mrf.mxu0
      %7983 = vmatprep.mubr.bf16.mxu0 %v7247
      %7984 = vmatmul.mubr.bf16.gmra.mxu0 %v7246
      %v7985 = vpop.f32.mrf.mxu0
      %v7986 = vadd.f32 0.0, %v7985
      %v7987 = vpop.f32.mrf.mxu0
      %v7988 = vpop.f32.mrf.mxu0
      %v7989 = vadd.f32 0.0, %v7988
      %v7990 = vpop.f32.mrf.mxu0
      %7991 = vdwg.mxu0
      %7992 = vmatprep.subr.bf16.mxu0 0
      %7993 = vmatpush1.bf16.msra.mxu0 %v7710
      %7994 = vmatprep.subr.bf16.mxu0 0
      %7995 = vmatpush1.bf16.msra.mxu0 %v7709
      %7996 = vmatprep.subr.bf16.mxu0 0
      %7997 = vmatpush1.bf16.msra.mxu0 %v7708
      %7998 = vmatprep.subr.bf16.mxu0 0
      %7999 = vmatpush1.bf16.msra.mxu0 %v7707
      %8000 = vmatprep.subr.bf16.mxu0 0
      %8001 = vmatpush1.bf16.msra.mxu0 %v7706
      %8002 = vmatprep.subr.bf16.mxu0 0
      %8003 = vmatpush1.bf16.msra.mxu0 %v7705
      %8004 = vmatprep.subr.bf16.mxu0 0
      %8005 = vmatpush1.bf16.msra.mxu0 %v7704
      %8006 = vmatprep.subr.bf16.mxu0 0
      %8007 = vmatpush1.bf16.msra.mxu0 %v7703
      %8008 = vmatprep.subr.bf16.mxu0 0
      %8009 = vmatpush2.bf16.msra.mxu0 %v7718
      %8010 = vmatprep.subr.bf16.mxu0 0
      %8011 = vmatpush2.bf16.msra.mxu0 %v7717
      %8012 = vmatprep.subr.bf16.mxu0 0
      %8013 = vmatpush2.bf16.msra.mxu0 %v7716
      %8014 = vmatprep.subr.bf16.mxu0 0
      %8015 = vmatpush2.bf16.msra.mxu0 %v7715
      %8016 = vmatprep.subr.bf16.mxu0 0
      %8017 = vmatpush2.bf16.msra.mxu0 %v7714
      %8018 = vmatprep.subr.bf16.mxu0 0
      %8019 = vmatpush2.bf16.msra.mxu0 %v7713
      %8020 = vmatprep.subr.bf16.mxu0 0
      %8021 = vmatpush2.bf16.msra.mxu0 %v7712
      %8022 = vmatprep.subr.bf16.mxu0 0
      %8023 = vmatpush2.bf16.msra.mxu0 %v7711
      %8024 = vmatprep.mubr.bf16.mxu0 %v7114
      %8025 = vmatmul.mubr.bf16.gmra.mxu0 %v7113
      %v8026 = vpop.f32.mrf.mxu0
      %v8027 = vadd.f32 %v7866, %v8026
      %v8028 = vpop.f32.mrf.mxu0
      %v8029 = vpop.f32.mrf.mxu0
      %v8030 = vadd.f32 %v7869, %v8029
      %v8031 = vpop.f32.mrf.mxu0
      %8032 = vmatprep.mubr.bf16.mxu0 %v7123
      %8033 = vmatmul.mubr.bf16.gmra.mxu0 %v7122
      %v8034 = vpop.f32.mrf.mxu0
      %v8035 = vadd.f32 %v7874, %v8034
      %v8036 = vpop.f32.mrf.mxu0
      %v8037 = vpop.f32.mrf.mxu0
      %v8038 = vadd.f32 %v7877, %v8037
      %v8039 = vpop.f32.mrf.mxu0
      %8040 = vmatprep.mubr.bf16.mxu0 %v7132
      %8041 = vmatmul.mubr.bf16.gmra.mxu0 %v7131
      %v8042 = vpop.f32.mrf.mxu0
      %v8043 = vadd.f32 %v7882, %v8042
      %v8044 = vpop.f32.mrf.mxu0
      %v8045 = vpop.f32.mrf.mxu0
      %v8046 = vadd.f32 %v7885, %v8045
      %v8047 = vpop.f32.mrf.mxu0
      %8048 = vmatprep.mubr.bf16.mxu0 %v7141
      %8049 = vmatmul.mubr.bf16.gmra.mxu0 %v7140
      %v8050 = vpop.f32.mrf.mxu0
      %v8051 = vadd.f32 %v7890, %v8050
      %v8052 = vpop.f32.mrf.mxu0
      %v8053 = vpop.f32.mrf.mxu0
      %v8054 = vadd.f32 %v7893, %v8053
      %v8055 = vpop.f32.mrf.mxu0
      %8056 = vmatprep.mubr.bf16.mxu0 %v7150
      %8057 = vmatmul.mubr.bf16.gmra.mxu0 %v7149
      %v8058 = vpop.f32.mrf.mxu0
      %v8059 = vadd.f32 %v7898, %v8058
      %v8060 = vpop.f32.mrf.mxu0
      %v8061 = vpop.f32.mrf.mxu0
      %v8062 = vadd.f32 %v7901, %v8061
      %v8063 = vpop.f32.mrf.mxu0
      %8064 = vmatprep.mubr.bf16.mxu0 %v7159
      %8065 = vmatmul.mubr.bf16.gmra.mxu0 %v7158
      %v8066 = vpop.f32.mrf.mxu0
      %v8067 = vadd.f32 %v7906, %v8066
      %v8068 = vpop.f32.mrf.mxu0
      %v8069 = vpop.f32.mrf.mxu0
      %v8070 = vadd.f32 %v7909, %v8069
      %v8071 = vpop.f32.mrf.mxu0
      %8072 = vmatprep.mubr.bf16.mxu0 %v7168
      %8073 = vmatmul.mubr.bf16.gmra.mxu0 %v7167
      %v8074 = vpop.f32.mrf.mxu0
      %v8075 = vadd.f32 %v7914, %v8074
      %v8076 = vpop.f32.mrf.mxu0
      %v8077 = vpop.f32.mrf.mxu0
      %v8078 = vadd.f32 %v7917, %v8077
      %v8079 = vpop.f32.mrf.mxu0
      %8080 = vmatprep.mubr.bf16.mxu0 %v7177
      %8081 = vmatmul.mubr.bf16.gmra.mxu0 %v7176
      %v8082 = vpop.f32.mrf.mxu0
      %v8083 = vadd.f32 %v7922, %v8082
      %v8084 = vpop.f32.mrf.mxu0
      %v8085 = vpop.f32.mrf.mxu0
      %v8086 = vadd.f32 %v7925, %v8085
      %v8087 = vpop.f32.mrf.mxu0
      %8088 = vmatprep.mubr.bf16.mxu0 %v7186
      %8089 = vmatmul.mubr.bf16.gmra.mxu0 %v7185
      %v8090 = vpop.f32.mrf.mxu0
      %v8091 = vadd.f32 %v7930, %v8090
      %v8092 = vpop.f32.mrf.mxu0
      %v8093 = vpop.f32.mrf.mxu0
      %v8094 = vadd.f32 %v7933, %v8093
      %v8095 = vpop.f32.mrf.mxu0
      %8096 = vmatprep.mubr.bf16.mxu0 %v7195
      %8097 = vmatmul.mubr.bf16.gmra.mxu0 %v7194
      %v8098 = vpop.f32.mrf.mxu0
      %v8099 = vadd.f32 %v7938, %v8098
      %v8100 = vpop.f32.mrf.mxu0
      %v8101 = vpop.f32.mrf.mxu0
      %v8102 = vadd.f32 %v7941, %v8101
      %v8103 = vpop.f32.mrf.mxu0
      %8104 = vmatprep.mubr.bf16.mxu0 %v7204
      %8105 = vmatmul.mubr.bf16.gmra.mxu0 %v7203
      %v8106 = vpop.f32.mrf.mxu0
      %v8107 = vadd.f32 %v7946, %v8106
      %v8108 = vpop.f32.mrf.mxu0
      %v8109 = vpop.f32.mrf.mxu0
      %v8110 = vadd.f32 %v7949, %v8109
      %v8111 = vpop.f32.mrf.mxu0
      %8112 = vmatprep.mubr.bf16.mxu0 %v7213
      %8113 = vmatmul.mubr.bf16.gmra.mxu0 %v7212
      %v8114 = vpop.f32.mrf.mxu0
      %v8115 = vadd.f32 %v7954, %v8114
      %v8116 = vpop.f32.mrf.mxu0
      %v8117 = vpop.f32.mrf.mxu0
      %v8118 = vadd.f32 %v7957, %v8117
      %v8119 = vpop.f32.mrf.mxu0
      %8120 = vmatprep.mubr.bf16.mxu0 %v7222
      %8121 = vmatmul.mubr.bf16.gmra.mxu0 %v7221
      %v8122 = vpop.f32.mrf.mxu0
      %v8123 = vadd.f32 %v7962, %v8122
      %v8124 = vpop.f32.mrf.mxu0
      %v8125 = vpop.f32.mrf.mxu0
      %v8126 = vadd.f32 %v7965, %v8125
      %v8127 = vpop.f32.mrf.mxu0
      %8128 = vmatprep.mubr.bf16.mxu0 %v7231
      %8129 = vmatmul.mubr.bf16.gmra.mxu0 %v7230
      %v8130 = vpop.f32.mrf.mxu0
      %v8131 = vadd.f32 %v7970, %v8130
      %v8132 = vpop.f32.mrf.mxu0
      %v8133 = vpop.f32.mrf.mxu0
      %v8134 = vadd.f32 %v7973, %v8133
      %v8135 = vpop.f32.mrf.mxu0
      %8136 = vmatprep.mubr.bf16.mxu0 %v7240
      %8137 = vmatmul.mubr.bf16.gmra.mxu0 %v7239
      %v8138 = vpop.f32.mrf.mxu0
      %v8139 = vadd.f32 %v7978, %v8138
      %v8140 = vpop.f32.mrf.mxu0
      %v8141 = vpop.f32.mrf.mxu0
      %v8142 = vadd.f32 %v7981, %v8141
      %v8143 = vpop.f32.mrf.mxu0
      %8144 = vmatprep.mubr.bf16.mxu0 %v7249
      %8145 = vmatmul.mubr.bf16.gmra.mxu0 %v7248
      %v8146 = vpop.f32.mrf.mxu0
      %v8147 = vadd.f32 %v7986, %v8146
      %v8148 = vpop.f32.mrf.mxu0
      %v8149 = vpop.f32.mrf.mxu0
      %v8150 = vadd.f32 %v7989, %v8149
      %v8151 = vpop.f32.mrf.mxu0
      %8152 = vdwg.mxu0
      %8153 = vmatprep.subr.bf16.mxu0 0
      %8154 = vmatpush1.bf16.msra.mxu0 %v7726
      %8155 = vmatprep.subr.bf16.mxu0 0
      %8156 = vmatpush1.bf16.msra.mxu0 %v7725
      %8157 = vmatprep.subr.bf16.mxu0 0
      %8158 = vmatpush1.bf16.msra.mxu0 %v7724
      %8159 = vmatprep.subr.bf16.mxu0 0
      %8160 = vmatpush1.bf16.msra.mxu0 %v7723
      %8161 = vmatprep.subr.bf16.mxu0 0
      %8162 = vmatpush1.bf16.msra.mxu0 %v7722
      %8163 = vmatprep.subr.bf16.mxu0 0
      %8164 = vmatpush1.bf16.msra.mxu0 %v7721
      %8165 = vmatprep.subr.bf16.mxu0 0
      %8166 = vmatpush1.bf16.msra.mxu0 %v7720
      %8167 = vmatprep.subr.bf16.mxu0 0
      %8168 = vmatpush1.bf16.msra.mxu0 %v7719
      %8169 = vmatprep.subr.bf16.mxu0 0
      %8170 = vmatpush2.bf16.msra.mxu0 %v7734
      %8171 = vmatprep.subr.bf16.mxu0 0
      %8172 = vmatpush2.bf16.msra.mxu0 %v7733
      %8173 = vmatprep.subr.bf16.mxu0 0
      %8174 = vmatpush2.bf16.msra.mxu0 %v7732
      %8175 = vmatprep.subr.bf16.mxu0 0
      %8176 = vmatpush2.bf16.msra.mxu0 %v7731
      %8177 = vmatprep.subr.bf16.mxu0 0
      %8178 = vmatpush2.bf16.msra.mxu0 %v7730
      %8179 = vmatprep.subr.bf16.mxu0 0
      %8180 = vmatpush2.bf16.msra.mxu0 %v7729
      %8181 = vmatprep.subr.bf16.mxu0 0
      %8182 = vmatpush2.bf16.msra.mxu0 %v7728
      %8183 = vmatprep.subr.bf16.mxu0 0
      %8184 = vmatpush2.bf16.msra.mxu0 %v7727
      %8185 = vmatprep.mubr.bf16.mxu0 %v7116
      %8186 = vmatmul.mubr.bf16.gmra.mxu0 %v7115
      %v8187 = vpop.f32.mrf.mxu0
      %v8188 = vadd.f32 %v8027, %v8187
      %v8189 = vpop.f32.mrf.mxu0
      %v8190 = vpop.f32.mrf.mxu0
      %v8191 = vadd.f32 %v8030, %v8190
      %v8192 = vpop.f32.mrf.mxu0
      %8193 = vmatprep.mubr.bf16.mxu0 %v7125
      %8194 = vmatmul.mubr.bf16.gmra.mxu0 %v7124
      %v8195 = vpop.f32.mrf.mxu0
      %v8196 = vadd.f32 %v8035, %v8195
      %v8197 = vpop.f32.mrf.mxu0
      %v8198 = vpop.f32.mrf.mxu0
      %v8199 = vadd.f32 %v8038, %v8198
      %v8200 = vpop.f32.mrf.mxu0
      %8201 = vmatprep.mubr.bf16.mxu0 %v7134
      %8202 = vmatmul.mubr.bf16.gmra.mxu0 %v7133
      %v8203 = vpop.f32.mrf.mxu0
      %v8204 = vadd.f32 %v8043, %v8203
      %v8205 = vpop.f32.mrf.mxu0
      %v8206 = vpop.f32.mrf.mxu0
      %v8207 = vadd.f32 %v8046, %v8206
      %v8208 = vpop.f32.mrf.mxu0
      %8209 = vmatprep.mubr.bf16.mxu0 %v7143
      %8210 = vmatmul.mubr.bf16.gmra.mxu0 %v7142
      %v8211 = vpop.f32.mrf.mxu0
      %v8212 = vadd.f32 %v8051, %v8211
      %v8213 = vpop.f32.mrf.mxu0
      %v8214 = vpop.f32.mrf.mxu0
      %v8215 = vadd.f32 %v8054, %v8214
      %v8216 = vpop.f32.mrf.mxu0
      %8217 = vmatprep.mubr.bf16.mxu0 %v7152
      %8218 = vmatmul.mubr.bf16.gmra.mxu0 %v7151
      %v8219 = vpop.f32.mrf.mxu0
      %v8220 = vadd.f32 %v8059, %v8219
      %v8221 = vpop.f32.mrf.mxu0
      %v8222 = vpop.f32.mrf.mxu0
      %v8223 = vadd.f32 %v8062, %v8222
      %v8224 = vpop.f32.mrf.mxu0
      %8225 = vmatprep.mubr.bf16.mxu0 %v7161
      %8226 = vmatmul.mubr.bf16.gmra.mxu0 %v7160
      %v8227 = vpop.f32.mrf.mxu0
      %v8228 = vadd.f32 %v8067, %v8227
      %v8229 = vpop.f32.mrf.mxu0
      %v8230 = vpop.f32.mrf.mxu0
      %v8231 = vadd.f32 %v8070, %v8230
      %v8232 = vpop.f32.mrf.mxu0
      %8233 = vmatprep.mubr.bf16.mxu0 %v7170
      %8234 = vmatmul.mubr.bf16.gmra.mxu0 %v7169
      %v8235 = vpop.f32.mrf.mxu0
      %v8236 = vadd.f32 %v8075, %v8235
      %v8237 = vpop.f32.mrf.mxu0
      %v8238 = vpop.f32.mrf.mxu0
      %v8239 = vadd.f32 %v8078, %v8238
      %v8240 = vpop.f32.mrf.mxu0
      %8241 = vmatprep.mubr.bf16.mxu0 %v7179
      %8242 = vmatmul.mubr.bf16.gmra.mxu0 %v7178
      %v8243 = vpop.f32.mrf.mxu0
      %v8244 = vadd.f32 %v8083, %v8243
      %v8245 = vpop.f32.mrf.mxu0
      %v8246 = vpop.f32.mrf.mxu0
      %v8247 = vadd.f32 %v8086, %v8246
      %v8248 = vpop.f32.mrf.mxu0
      %8249 = vmatprep.mubr.bf16.mxu0 %v7188
      %8250 = vmatmul.mubr.bf16.gmra.mxu0 %v7187
      %v8251 = vpop.f32.mrf.mxu0
      %v8252 = vadd.f32 %v8091, %v8251
      %v8253 = vpop.f32.mrf.mxu0
      %v8254 = vpop.f32.mrf.mxu0
      %v8255 = vadd.f32 %v8094, %v8254
      %v8256 = vpop.f32.mrf.mxu0
      %8257 = vmatprep.mubr.bf16.mxu0 %v7197
      %8258 = vmatmul.mubr.bf16.gmra.mxu0 %v7196
      %v8259 = vpop.f32.mrf.mxu0
      %v8260 = vadd.f32 %v8099, %v8259
      %v8261 = vpop.f32.mrf.mxu0
      %v8262 = vpop.f32.mrf.mxu0
      %v8263 = vadd.f32 %v8102, %v8262
      %v8264 = vpop.f32.mrf.mxu0
      %8265 = vmatprep.mubr.bf16.mxu0 %v7206
      %8266 = vmatmul.mubr.bf16.gmra.mxu0 %v7205
      %v8267 = vpop.f32.mrf.mxu0
      %v8268 = vadd.f32 %v8107, %v8267
      %v8269 = vpop.f32.mrf.mxu0
      %v8270 = vpop.f32.mrf.mxu0
      %v8271 = vadd.f32 %v8110, %v8270
      %v8272 = vpop.f32.mrf.mxu0
      %8273 = vmatprep.mubr.bf16.mxu0 %v7215
      %8274 = vmatmul.mubr.bf16.gmra.mxu0 %v7214
      %v8275 = vpop.f32.mrf.mxu0
      %v8276 = vadd.f32 %v8115, %v8275
      %v8277 = vpop.f32.mrf.mxu0
      %v8278 = vpop.f32.mrf.mxu0
      %v8279 = vadd.f32 %v8118, %v8278
      %v8280 = vpop.f32.mrf.mxu0
      %8281 = vmatprep.mubr.bf16.mxu0 %v7224
      %8282 = vmatmul.mubr.bf16.gmra.mxu0 %v7223
      %v8283 = vpop.f32.mrf.mxu0
      %v8284 = vadd.f32 %v8123, %v8283
      %v8285 = vpop.f32.mrf.mxu0
      %v8286 = vpop.f32.mrf.mxu0
      %v8287 = vadd.f32 %v8126, %v8286
      %v8288 = vpop.f32.mrf.mxu0
      %8289 = vmatprep.mubr.bf16.mxu0 %v7233
      %8290 = vmatmul.mubr.bf16.gmra.mxu0 %v7232
      %v8291 = vpop.f32.mrf.mxu0
      %v8292 = vadd.f32 %v8131, %v8291
      %v8293 = vpop.f32.mrf.mxu0
      %v8294 = vpop.f32.mrf.mxu0
      %v8295 = vadd.f32 %v8134, %v8294
      %v8296 = vpop.f32.mrf.mxu0
      %8297 = vmatprep.mubr.bf16.mxu0 %v7242
      %8298 = vmatmul.mubr.bf16.gmra.mxu0 %v7241
      %v8299 = vpop.f32.mrf.mxu0
      %v8300 = vadd.f32 %v8139, %v8299
      %v8301 = vpop.f32.mrf.mxu0
      %v8302 = vpop.f32.mrf.mxu0
      %v8303 = vadd.f32 %v8142, %v8302
      %v8304 = vpop.f32.mrf.mxu0
      %8305 = vmatprep.mubr.bf16.mxu0 %v7251
      %8306 = vmatmul.mubr.bf16.gmra.mxu0 %v7250
      %v8307 = vpop.f32.mrf.mxu0
      %v8308 = vadd.f32 %v8147, %v8307
      %v8309 = vpop.f32.mrf.mxu0
      %v8310 = vpop.f32.mrf.mxu0
      %v8311 = vadd.f32 %v8150, %v8310
      %v8312 = vpop.f32.mrf.mxu0
      %8313 = vdwg.mxu0
      %8314 = vmatprep.subr.bf16.mxu0 0
      %8315 = vmatpush1.bf16.msra.mxu0 %v7742
      %8316 = vmatprep.subr.bf16.mxu0 0
      %8317 = vmatpush1.bf16.msra.mxu0 %v7741
      %8318 = vmatprep.subr.bf16.mxu0 0
      %8319 = vmatpush1.bf16.msra.mxu0 %v7740
      %8320 = vmatprep.subr.bf16.mxu0 0
      %8321 = vmatpush1.bf16.msra.mxu0 %v7739
      %8322 = vmatprep.subr.bf16.mxu0 0
      %8323 = vmatpush1.bf16.msra.mxu0 %v7738
      %8324 = vmatprep.subr.bf16.mxu0 0
      %8325 = vmatpush1.bf16.msra.mxu0 %v7737
      %8326 = vmatprep.subr.bf16.mxu0 0
      %8327 = vmatpush1.bf16.msra.mxu0 %v7736
      %8328 = vmatprep.subr.bf16.mxu0 0
      %8329 = vmatpush1.bf16.msra.mxu0 %v7735
      %8330 = vmatprep.subr.bf16.mxu0 0
      %8331 = vmatpush2.bf16.msra.mxu0 %v7750
      %8332 = vmatprep.subr.bf16.mxu0 0
      %8333 = vmatpush2.bf16.msra.mxu0 %v7749
      %8334 = vmatprep.subr.bf16.mxu0 0
      %8335 = vmatpush2.bf16.msra.mxu0 %v7748
      %8336 = vmatprep.subr.bf16.mxu0 0
      %8337 = vmatpush2.bf16.msra.mxu0 %v7747
      %8338 = vmatprep.subr.bf16.mxu0 0
      %8339 = vmatpush2.bf16.msra.mxu0 %v7746
      %8340 = vmatprep.subr.bf16.mxu0 0
      %8341 = vmatpush2.bf16.msra.mxu0 %v7745
      %8342 = vmatprep.subr.bf16.mxu0 0
      %8343 = vmatpush2.bf16.msra.mxu0 %v7744
      %8344 = vmatprep.subr.bf16.mxu0 0
      %8345 = vmatpush2.bf16.msra.mxu0 %v7743
      %8346 = vmatprep.mubr.bf16.mxu0 %v7118
      %8347 = vmatmul.mubr.bf16.gmra.mxu0 %v7117
      %v8348 = vpop.f32.mrf.mxu0
      %v8349 = vadd.f32 %v8188, %v8348
      %v8350 = vpop.f32.mrf.mxu0
      %v8351 = vpop.f32.mrf.mxu0
      %v8352 = vadd.f32 %v8191, %v8351
      %v8353 = vpop.f32.mrf.mxu0
      %8354 = vmatprep.mubr.bf16.mxu0 %v7127
      %8355 = vmatmul.mubr.bf16.gmra.mxu0 %v7126
      %v8356 = vpop.f32.mrf.mxu0
      %v8357 = vadd.f32 %v8196, %v8356
      %v8358 = vpop.f32.mrf.mxu0
      %v8359 = vpop.f32.mrf.mxu0
      %v8360 = vadd.f32 %v8199, %v8359
      %v8361 = vpop.f32.mrf.mxu0
      %8362 = vmatprep.mubr.bf16.mxu0 %v7136
      %8363 = vmatmul.mubr.bf16.gmra.mxu0 %v7135
      %v8364 = vpop.f32.mrf.mxu0
      %v8365 = vadd.f32 %v8204, %v8364
      %v8366 = vpop.f32.mrf.mxu0
      %v8367 = vpop.f32.mrf.mxu0
      %v8368 = vadd.f32 %v8207, %v8367
      %v8369 = vpop.f32.mrf.mxu0
      %8370 = vmatprep.mubr.bf16.mxu0 %v7145
      %8371 = vmatmul.mubr.bf16.gmra.mxu0 %v7144
      %v8372 = vpop.f32.mrf.mxu0
      %v8373 = vadd.f32 %v8212, %v8372
      %v8374 = vpop.f32.mrf.mxu0
      %v8375 = vpop.f32.mrf.mxu0
      %v8376 = vadd.f32 %v8215, %v8375
      %v8377 = vpop.f32.mrf.mxu0
      %8378 = vmatprep.mubr.bf16.mxu0 %v7154
      %8379 = vmatmul.mubr.bf16.gmra.mxu0 %v7153
      %v8380 = vpop.f32.mrf.mxu0
      %v8381 = vadd.f32 %v8220, %v8380
      %v8382 = vpop.f32.mrf.mxu0
      %v8383 = vpop.f32.mrf.mxu0
      %v8384 = vadd.f32 %v8223, %v8383
      %v8385 = vpop.f32.mrf.mxu0
      %8386 = vmatprep.mubr.bf16.mxu0 %v7163
      %8387 = vmatmul.mubr.bf16.gmra.mxu0 %v7162
      %v8388 = vpop.f32.mrf.mxu0
      %v8389 = vadd.f32 %v8228, %v8388
      %v8390 = vpop.f32.mrf.mxu0
      %v8391 = vpop.f32.mrf.mxu0
      %v8392 = vadd.f32 %v8231, %v8391
      %v8393 = vpop.f32.mrf.mxu0
      %8394 = vmatprep.mubr.bf16.mxu0 %v7172
      %8395 = vmatmul.mubr.bf16.gmra.mxu0 %v7171
      %v8396 = vpop.f32.mrf.mxu0
      %v8397 = vadd.f32 %v8236, %v8396
      %v8398 = vpop.f32.mrf.mxu0
      %v8399 = vpop.f32.mrf.mxu0
      %v8400 = vadd.f32 %v8239, %v8399
      %v8401 = vpop.f32.mrf.mxu0
      %8402 = vmatprep.mubr.bf16.mxu0 %v7181
      %8403 = vmatmul.mubr.bf16.gmra.mxu0 %v7180
      %v8404 = vpop.f32.mrf.mxu0
      %v8405 = vadd.f32 %v8244, %v8404
      %v8406 = vpop.f32.mrf.mxu0
      %v8407 = vpop.f32.mrf.mxu0
      %v8408 = vadd.f32 %v8247, %v8407
      %v8409 = vpop.f32.mrf.mxu0
      %8410 = vmatprep.mubr.bf16.mxu0 %v7190
      %8411 = vmatmul.mubr.bf16.gmra.mxu0 %v7189
      %v8412 = vpop.f32.mrf.mxu0
      %v8413 = vadd.f32 %v8252, %v8412
      %v8414 = vpop.f32.mrf.mxu0
      %v8415 = vpop.f32.mrf.mxu0
      %v8416 = vadd.f32 %v8255, %v8415
      %v8417 = vpop.f32.mrf.mxu0
      %8418 = vmatprep.mubr.bf16.mxu0 %v7199
      %8419 = vmatmul.mubr.bf16.gmra.mxu0 %v7198
      %v8420 = vpop.f32.mrf.mxu0
      %v8421 = vadd.f32 %v8260, %v8420
      %v8422 = vpop.f32.mrf.mxu0
      %v8423 = vpop.f32.mrf.mxu0
      %v8424 = vadd.f32 %v8263, %v8423
      %v8425 = vpop.f32.mrf.mxu0
      %8426 = vmatprep.mubr.bf16.mxu0 %v7208
      %8427 = vmatmul.mubr.bf16.gmra.mxu0 %v7207
      %v8428 = vpop.f32.mrf.mxu0
      %v8429 = vadd.f32 %v8268, %v8428
      %v8430 = vpop.f32.mrf.mxu0
      %v8431 = vpop.f32.mrf.mxu0
      %v8432 = vadd.f32 %v8271, %v8431
      %v8433 = vpop.f32.mrf.mxu0
      %8434 = vmatprep.mubr.bf16.mxu0 %v7217
      %8435 = vmatmul.mubr.bf16.gmra.mxu0 %v7216
      %v8436 = vpop.f32.mrf.mxu0
      %v8437 = vadd.f32 %v8276, %v8436
      %v8438 = vpop.f32.mrf.mxu0
      %v8439 = vpop.f32.mrf.mxu0
      %v8440 = vadd.f32 %v8279, %v8439
      %v8441 = vpop.f32.mrf.mxu0
      %8442 = vmatprep.mubr.bf16.mxu0 %v7226
      %8443 = vmatmul.mubr.bf16.gmra.mxu0 %v7225
      %v8444 = vpop.f32.mrf.mxu0
      %v8445 = vadd.f32 %v8284, %v8444
      %v8446 = vpop.f32.mrf.mxu0
      %v8447 = vpop.f32.mrf.mxu0
      %v8448 = vadd.f32 %v8287, %v8447
      %v8449 = vpop.f32.mrf.mxu0
      %8450 = vmatprep.mubr.bf16.mxu0 %v7235
      %8451 = vmatmul.mubr.bf16.gmra.mxu0 %v7234
      %v8452 = vpop.f32.mrf.mxu0
      %v8453 = vadd.f32 %v8292, %v8452
      %v8454 = vpop.f32.mrf.mxu0
      %v8455 = vpop.f32.mrf.mxu0
      %v8456 = vadd.f32 %v8295, %v8455
      %v8457 = vpop.f32.mrf.mxu0
      %8458 = vmatprep.mubr.bf16.mxu0 %v7244
      %8459 = vmatmul.mubr.bf16.gmra.mxu0 %v7243
      %v8460 = vpop.f32.mrf.mxu0
      %v8461 = vadd.f32 %v8300, %v8460
      %v8462 = vpop.f32.mrf.mxu0
      %v8463 = vpop.f32.mrf.mxu0
      %v8464 = vadd.f32 %v8303, %v8463
      %v8465 = vpop.f32.mrf.mxu0
      %8466 = vmatprep.mubr.bf16.mxu0 %v7253
      %8467 = vmatmul.mubr.bf16.gmra.mxu0 %v7252
      %v8468 = vpop.f32.mrf.mxu0
      %v8469 = vadd.f32 %v8308, %v8468
      %v8470 = vpop.f32.mrf.mxu0
      %v8471 = vpop.f32.mrf.mxu0
      %v8472 = vadd.f32 %v8311, %v8471
      %v8473 = vpop.f32.mrf.mxu0
      %8474 = vdwg.mxu0
      %8475 = vmatprep.subr.bf16.mxu0 0
      %8476 = vmatpush1.bf16.msra.mxu0 %v7758
      %8477 = vmatprep.subr.bf16.mxu0 0
      %8478 = vmatpush1.bf16.msra.mxu0 %v7757
      %8479 = vmatprep.subr.bf16.mxu0 0
      %8480 = vmatpush1.bf16.msra.mxu0 %v7756
      %8481 = vmatprep.subr.bf16.mxu0 0
      %8482 = vmatpush1.bf16.msra.mxu0 %v7755
      %8483 = vmatprep.subr.bf16.mxu0 0
      %8484 = vmatpush1.bf16.msra.mxu0 %v7754
      %8485 = vmatprep.subr.bf16.mxu0 0
      %8486 = vmatpush1.bf16.msra.mxu0 %v7753
      %8487 = vmatprep.subr.bf16.mxu0 0
      %8488 = vmatpush1.bf16.msra.mxu0 %v7752
      %8489 = vmatprep.subr.bf16.mxu0 0
      %8490 = vmatpush1.bf16.msra.mxu0 %v7751
      %8491 = vmatprep.subr.bf16.mxu0 0
      %8492 = vmatpush2.bf16.msra.mxu0 0
      %8493 = vmatprep.subr.bf16.mxu0 0
      %8494 = vmatpush2.bf16.msra.mxu0 0
      %8495 = vmatprep.subr.bf16.mxu0 0
      %8496 = vmatpush2.bf16.msra.mxu0 0
      %8497 = vmatprep.subr.bf16.mxu0 0
      %8498 = vmatpush2.bf16.msra.mxu0 0
      %8499 = vmatprep.subr.bf16.mxu0 0
      %8500 = vmatpush2.bf16.msra.mxu0 0
      %8501 = vmatprep.subr.bf16.mxu0 0
      %8502 = vmatpush2.bf16.msra.mxu0 0
      %8503 = vmatprep.subr.bf16.mxu0 0
      %8504 = vmatpush2.bf16.msra.mxu0 0
      %8505 = vmatprep.subr.bf16.mxu0 0
      %8506 = vmatpush2.bf16.msra.mxu0 0
      %8507 = vmatprep.mubr.bf16.mxu0 0
      %8508 = vmatmul.mubr.bf16.gmra.mxu0 %v7119
      %v8509 = vpop.f32.mrf.mxu0
      %v8510 = vadd.f32 %v8349, %v8509
      %v8511 = vpop.f32.mrf.mxu0
      %v8512 = vpop.f32.mrf.mxu0
      %v8513 = vadd.f32 %v8352, %v8512
      %v8514 = vpop.f32.mrf.mxu0
      %8515 = vmatprep.mubr.bf16.mxu0 0
      %8516 = vmatmul.mubr.bf16.gmra.mxu0 %v7128
      %v8517 = vpop.f32.mrf.mxu0
      %v8518 = vadd.f32 %v8357, %v8517
      %v8519 = vpop.f32.mrf.mxu0
      %v8520 = vpop.f32.mrf.mxu0
      %v8521 = vadd.f32 %v8360, %v8520
      %v8522 = vpop.f32.mrf.mxu0
      %8523 = vmatprep.mubr.bf16.mxu0 0
      %8524 = vmatmul.mubr.bf16.gmra.mxu0 %v7137
      %v8525 = vpop.f32.mrf.mxu0
      %v8526 = vadd.f32 %v8365, %v8525
      %v8527 = vpop.f32.mrf.mxu0
      %v8528 = vpop.f32.mrf.mxu0
      %v8529 = vadd.f32 %v8368, %v8528
      %v8530 = vpop.f32.mrf.mxu0
      %8531 = vmatprep.mubr.bf16.mxu0 0
      %8532 = vmatmul.mubr.bf16.gmra.mxu0 %v7146
      %v8533 = vpop.f32.mrf.mxu0
      %v8534 = vadd.f32 %v8373, %v8533
      %v8535 = vpop.f32.mrf.mxu0
      %v8536 = vpop.f32.mrf.mxu0
      %v8537 = vadd.f32 %v8376, %v8536
      %v8538 = vpop.f32.mrf.mxu0
      %8539 = vmatprep.mubr.bf16.mxu0 0
      %8540 = vmatmul.mubr.bf16.gmra.mxu0 %v7155
      %v8541 = vpop.f32.mrf.mxu0
      %v8542 = vadd.f32 %v8381, %v8541
      %v8543 = vpop.f32.mrf.mxu0
      %v8544 = vpop.f32.mrf.mxu0
      %v8545 = vadd.f32 %v8384, %v8544
      %v8546 = vpop.f32.mrf.mxu0
      %8547 = vmatprep.mubr.bf16.mxu0 0
      %8548 = vmatmul.mubr.bf16.gmra.mxu0 %v7164
      %v8549 = vpop.f32.mrf.mxu0
      %v8550 = vadd.f32 %v8389, %v8549
      %v8551 = vpop.f32.mrf.mxu0
      %v8552 = vpop.f32.mrf.mxu0
      %v8553 = vadd.f32 %v8392, %v8552
      %v8554 = vpop.f32.mrf.mxu0
      %8555 = vmatprep.mubr.bf16.mxu0 0
      %8556 = vmatmul.mubr.bf16.gmra.mxu0 %v7173
      %v8557 = vpop.f32.mrf.mxu0
      %v8558 = vadd.f32 %v8397, %v8557
      %v8559 = vpop.f32.mrf.mxu0
      %v8560 = vpop.f32.mrf.mxu0
      %v8561 = vadd.f32 %v8400, %v8560
      %v8562 = vpop.f32.mrf.mxu0
      %8563 = vmatprep.mubr.bf16.mxu0 0
      %8564 = vmatmul.mubr.bf16.gmra.mxu0 %v7182
      %v8565 = vpop.f32.mrf.mxu0
      %v8566 = vadd.f32 %v8405, %v8565
      %v8567 = vpop.f32.mrf.mxu0
      %v8568 = vpop.f32.mrf.mxu0
      %v8569 = vadd.f32 %v8408, %v8568
      %v8570 = vpop.f32.mrf.mxu0
      %8571 = vmatprep.mubr.bf16.mxu0 0
      %8572 = vmatmul.mubr.bf16.gmra.mxu0 %v7191
      %v8573 = vpop.f32.mrf.mxu0
      %v8574 = vadd.f32 %v8413, %v8573
      %v8575 = vpop.f32.mrf.mxu0
      %v8576 = vpop.f32.mrf.mxu0
      %v8577 = vadd.f32 %v8416, %v8576
      %v8578 = vpop.f32.mrf.mxu0
      %8579 = vmatprep.mubr.bf16.mxu0 0
      %8580 = vmatmul.mubr.bf16.gmra.mxu0 %v7200
      %v8581 = vpop.f32.mrf.mxu0
      %v8582 = vadd.f32 %v8421, %v8581
      %v8583 = vpop.f32.mrf.mxu0
      %v8584 = vpop.f32.mrf.mxu0
      %v8585 = vadd.f32 %v8424, %v8584
      %v8586 = vpop.f32.mrf.mxu0
      %8587 = vmatprep.mubr.bf16.mxu0 0
      %8588 = vmatmul.mubr.bf16.gmra.mxu0 %v7209
      %v8589 = vpop.f32.mrf.mxu0
      %v8590 = vadd.f32 %v8429, %v8589
      %v8591 = vpop.f32.mrf.mxu0
      %v8592 = vpop.f32.mrf.mxu0
      %v8593 = vadd.f32 %v8432, %v8592
      %v8594 = vpop.f32.mrf.mxu0
      %8595 = vmatprep.mubr.bf16.mxu0 0
      %8596 = vmatmul.mubr.bf16.gmra.mxu0 %v7218
      %v8597 = vpop.f32.mrf.mxu0
      %v8598 = vadd.f32 %v8437, %v8597
      %v8599 = vpop.f32.mrf.mxu0
      %v8600 = vpop.f32.mrf.mxu0
      %v8601 = vadd.f32 %v8440, %v8600
      %v8602 = vpop.f32.mrf.mxu0
      %8603 = vmatprep.mubr.bf16.mxu0 0
      %8604 = vmatmul.mubr.bf16.gmra.mxu0 %v7227
      %v8605 = vpop.f32.mrf.mxu0
      %v8606 = vadd.f32 %v8445, %v8605
      %v8607 = vpop.f32.mrf.mxu0
      %v8608 = vpop.f32.mrf.mxu0
      %v8609 = vadd.f32 %v8448, %v8608
      %v8610 = vpop.f32.mrf.mxu0
      %8611 = vmatprep.mubr.bf16.mxu0 0
      %8612 = vmatmul.mubr.bf16.gmra.mxu0 %v7236
      %v8613 = vpop.f32.mrf.mxu0
      %v8614 = vadd.f32 %v8453, %v8613
      %v8615 = vpop.f32.mrf.mxu0
      %v8616 = vpop.f32.mrf.mxu0
      %v8617 = vadd.f32 %v8456, %v8616
      %v8618 = vpop.f32.mrf.mxu0
      %8619 = vmatprep.mubr.bf16.mxu0 0
      %8620 = vmatmul.mubr.bf16.gmra.mxu0 %v7245
      %v8621 = vpop.f32.mrf.mxu0
      %v8622 = vadd.f32 %v8461, %v8621
      %v8623 = vpop.f32.mrf.mxu0
      %v8624 = vpop.f32.mrf.mxu0
      %v8625 = vadd.f32 %v8464, %v8624
      %v8626 = vpop.f32.mrf.mxu0
      %8627 = vmatprep.mubr.bf16.mxu0 0
      %8628 = vmatmul.mubr.bf16.gmra.mxu0 %v7254
      %v8629 = vpop.f32.mrf.mxu0
      %v8630 = vadd.f32 %v8469, %v8629
      %v8631 = vpop.f32.mrf.mxu0
      %v8632 = vpop.f32.mrf.mxu0
      %v8633 = vadd.f32 %v8472, %v8632
      %v8634 = vpop.f32.mrf.mxu0
      %8635 = vdwg.mxu0
      %v8636 = vld [vmem:[%s5] sm:$0x3]
      %v8637 = vlaneseq
      %v8638 = vshrl.u32 %v8637, 7
      %v8639 = vsub.s32 0, %v8638
      %v8640 = vrot.slane %v8636, %v8639
      %v8641 = vmul.f32 %v8510, %v8640
      %v8642 = vmul.f32 %v8513, %v8640
      %v8643 = vmul.f32 %v8518, %v8640
      %v8644 = vmul.f32 %v8521, %v8640
      %v8645 = vmul.f32 %v8526, %v8640
      %v8646 = vmul.f32 %v8529, %v8640
      %v8647 = vmul.f32 %v8534, %v8640
      %v8648 = vmul.f32 %v8537, %v8640
      %v8649 = vmul.f32 %v8542, %v8640
      %v8650 = vmul.f32 %v8545, %v8640
      %v8651 = vmul.f32 %v8550, %v8640
      %v8652 = vmul.f32 %v8553, %v8640
      %v8653 = vmul.f32 %v8558, %v8640
      %v8654 = vmul.f32 %v8561, %v8640
      %v8655 = vmul.f32 %v8566, %v8640
      %v8656 = vmul.f32 %v8569, %v8640
      %v8657 = vmul.f32 %v8574, %v8640
      %v8658 = vmul.f32 %v8577, %v8640
      %v8659 = vmul.f32 %v8582, %v8640
      %v8660 = vmul.f32 %v8585, %v8640
      %v8661 = vmul.f32 %v8590, %v8640
      %v8662 = vmul.f32 %v8593, %v8640
      %v8663 = vmul.f32 %v8598, %v8640
      %v8664 = vmul.f32 %v8601, %v8640
      %v8665 = vmul.f32 %v8606, %v8640
      %v8666 = vmul.f32 %v8609, %v8640
      %v8667 = vmul.f32 %v8614, %v8640
      %v8668 = vmul.f32 %v8617, %v8640
      %v8669 = vmul.f32 %v8622, %v8640
      %v8670 = vmul.f32 %v8625, %v8640
      %v8671 = vmul.f32 %v8630, %v8640
      %v8672 = vmul.f32 %v8633, %v8640
      %v8673 = vlaneseq
      %v8674 = vshrl.u32 %v8673, 7
      %v8675 = vsub.s32 1, %v8674
      %v8676 = vrot.slane %v8636, %v8675
      %v8677 = vadd.f32 %v8641, %v8676
      %v8678 = vadd.f32 %v8642, %v8676
      %v8679 = vadd.f32 %v8643, %v8676
      %v8680 = vadd.f32 %v8644, %v8676
      %v8681 = vadd.f32 %v8645, %v8676
      %v8682 = vadd.f32 %v8646, %v8676
      %v8683 = vadd.f32 %v8647, %v8676
      %v8684 = vadd.f32 %v8648, %v8676
      %v8685 = vadd.f32 %v8649, %v8676
      %v8686 = vadd.f32 %v8650, %v8676
      %v8687 = vadd.f32 %v8651, %v8676
      %v8688 = vadd.f32 %v8652, %v8676
      %v8689 = vadd.f32 %v8653, %v8676
      %v8690 = vadd.f32 %v8654, %v8676
      %v8691 = vadd.f32 %v8655, %v8676
      %v8692 = vadd.f32 %v8656, %v8676
      %v8693 = vadd.f32 %v8657, %v8676
      %v8694 = vadd.f32 %v8658, %v8676
      %v8695 = vadd.f32 %v8659, %v8676
      %v8696 = vadd.f32 %v8660, %v8676
      %v8697 = vadd.f32 %v8661, %v8676
      %v8698 = vadd.f32 %v8662, %v8676
      %v8699 = vadd.f32 %v8663, %v8676
      %v8700 = vadd.f32 %v8664, %v8676
      %v8701 = vadd.f32 %v8665, %v8676
      %v8702 = vadd.f32 %v8666, %v8676
      %v8703 = vadd.f32 %v8667, %v8676
      %v8704 = vadd.f32 %v8668, %v8676
      %v8705 = vadd.f32 %v8669, %v8676
      %v8706 = vadd.f32 %v8670, %v8676
      %v8707 = vadd.f32 %v8671, %v8676
      %v8708 = vadd.f32 %v8672, %v8676
      %v8709 = vld [vmem:[%s398 + $0x1] sm:$0xff]
      %v8710 = vld [vmem:[%s398 + $0x9] sm:$0xff]
      %v8711 = vld [vmem:[%s398 + $0x19] sm:$0xff]
      %v8712 = vld [vmem:[%s398 + $0x21] sm:$0xff]
      %v8713 = vld [vmem:[%s398 + $0x31] sm:$0xff]
      %v8714 = vld [vmem:[%s398 + $0x39] sm:$0xff]
      %v8715 = vld [vmem:[%s398 + $0x49] sm:$0xff]
      %v8716 = vld [vmem:[%s398 + $0x51] sm:$0xff]
      %v8717 = vld [vmem:[%s398 + $0x61] sm:$0xff]
      %v8718 = vld [vmem:[%s398 + $0x69] sm:$0xff]
      %v8719 = vld [vmem:[%s398 + $0x79] sm:$0xff]
      %v8720 = vld [vmem:[%s398 + $0x81] sm:$0xff]
      %v8721 = vld [vmem:[%s398 + $0x91] sm:$0xff]
      %v8722 = vld [vmem:[%s398 + $0x99] sm:$0xff]
      %v8723 = vld [vmem:[%s398 + $0xa9] sm:$0xff]
      %v8724 = vld [vmem:[%s398 + $0xb1] sm:$0xff]
      %v8725 = vld [vmem:[%s398 + $0xc1] sm:$0xff]
      %v8726 = vld [vmem:[%s398 + $0xc9] sm:$0xff]
      %v8727 = vld [vmem:[%s398 + $0xd9] sm:$0xff]
      %v8728 = vld [vmem:[%s398 + $0xe1] sm:$0xff]
      %v8729 = vld [vmem:[%s398 + $0xf1] sm:$0xff]
      %v8730 = vld [vmem:[%s398 + $0xf9] sm:$0xff]
      %v8731 = vld [vmem:[%s398 + $0x109] sm:$0xff]
      %v8732 = vld [vmem:[%s398 + $0x111] sm:$0xff]
      %v8733 = vld [vmem:[%s398 + $0x121] sm:$0xff]
      %v8734 = vld [vmem:[%s398 + $0x129] sm:$0xff]
      %v8735 = vld [vmem:[%s398 + $0x139] sm:$0xff]
      %v8736 = vld [vmem:[%s398 + $0x141] sm:$0xff]
      %v8737 = vld [vmem:[%s398 + $0x151] sm:$0xff]
      %v8738 = vld [vmem:[%s398 + $0x159] sm:$0xff]
      %v8739 = vld [vmem:[%s398 + $0x169] sm:$0xff]
      %v8740 = vld [vmem:[%s398 + $0x171] sm:$0xff]
      %v8741 = vpack.c.bf16 %v8710, %v8709
      %v8742 = vpack.c.bf16 %v8712, %v8711
      %v8743 = vpack.c.bf16 %v8714, %v8713
      %v8744 = vpack.c.bf16 %v8716, %v8715
      %v8745 = vpack.c.bf16 %v8718, %v8717
      %v8746 = vpack.c.bf16 %v8720, %v8719
      %v8747 = vpack.c.bf16 %v8722, %v8721
      %v8748 = vpack.c.bf16 %v8724, %v8723
      %v8749 = vpack.c.bf16 %v8726, %v8725
      %v8750 = vpack.c.bf16 %v8728, %v8727
      %v8751 = vpack.c.bf16 %v8730, %v8729
      %v8752 = vpack.c.bf16 %v8732, %v8731
      %v8753 = vpack.c.bf16 %v8734, %v8733
      %v8754 = vpack.c.bf16 %v8736, %v8735
      %v8755 = vpack.c.bf16 %v8738, %v8737
      %v8756 = vpack.c.bf16 %v8740, %v8739
      %v8757 = vld [vmem:[%s3] sm:$0xf]
      %v8758 = vld [vmem:[%s3 + $0x4] sm:$0xf]
      %v8759 = vld [vmem:[%s3 + $0x8] sm:$0xf]
      %v8760 = vld [vmem:[%s3 + $0xc] sm:$0xf]
      %v8761 = vld [vmem:[%s3 + $0x10] sm:$0xf]
      %v8762 = vld [vmem:[%s3 + $0x14] sm:$0xf]
      %v8763 = vld [vmem:[%s3 + $0x18] sm:$0xf]
      %v8764 = vld [vmem:[%s3 + $0x1c] sm:$0xf]
      %v8765 = vld [vmem:[%s3 + $0x20] sm:$0xf]
      %v8766 = vld [vmem:[%s3 + $0x24] sm:$0xf]
      %v8767 = vld [vmem:[%s3 + $0x28] sm:$0xf]
      %v8768 = vld [vmem:[%s3 + $0x2c] sm:$0xf]
      %v8769 = vld [vmem:[%s3 + $0x30] sm:$0xf]
      %v8770 = vld [vmem:[%s3 + $0x34] sm:$0xf]
      %v8771 = vld [vmem:[%s3 + $0x38] sm:$0xf]
      %v8772 = vld [vmem:[%s3 + $0x3c] sm:$0xf]
      %v8789 = vunpack.c.l.b16 %v8757
      %v8790 = vunpack.c.l.b16 %v8758
      %v8791 = vunpack.c.l.b16 %v8759
      %v8792 = vunpack.c.l.b16 %v8760
      %v8793 = vunpack.c.l.b16 %v8761
      %v8794 = vunpack.c.l.b16 %v8762
      %v8795 = vunpack.c.l.b16 %v8763
      %v8796 = vunpack.c.l.b16 %v8764
      %v8797 = vunpack.c.l.b16 %v8765
      %v8798 = vunpack.c.l.b16 %v8766
      %v8799 = vunpack.c.l.b16 %v8767
      %v8800 = vunpack.c.l.b16 %v8768
      %v8801 = vunpack.c.l.b16 %v8769
      %v8802 = vunpack.c.l.b16 %v8770
      %v8803 = vunpack.c.l.b16 %v8771
      %v8804 = vunpack.c.l.b16 %v8772
      %v8805 = vpack.c.b16 %v8790, %v8789
      %v8806 = vpack.c.b16 %v8792, %v8791
      %v8807 = vpack.c.b16 %v8794, %v8793
      %v8808 = vpack.c.b16 %v8796, %v8795
      %v8809 = vpack.c.b16 %v8798, %v8797
      %v8810 = vpack.c.b16 %v8800, %v8799
      %v8811 = vpack.c.b16 %v8802, %v8801
      %v8812 = vpack.c.b16 %v8804, %v8803
      %8821 = vmatprep.subr.bf16.mxu0 0
      %8822 = vmatpush1.bf16.msra.mxu0 %v8812
      %8823 = vmatprep.subr.bf16.mxu0 0
      %8824 = vmatpush1.bf16.msra.mxu0 %v8811
      %8825 = vmatprep.subr.bf16.mxu0 0
      %8826 = vmatpush1.bf16.msra.mxu0 %v8810
      %8827 = vmatprep.subr.bf16.mxu0 0
      %8828 = vmatpush1.bf16.msra.mxu0 %v8809
      %8829 = vmatprep.subr.bf16.mxu0 0
      %8830 = vmatpush1.bf16.msra.mxu0 %v8808
      %8831 = vmatprep.subr.bf16.mxu0 0
      %8832 = vmatpush1.bf16.msra.mxu0 %v8807
      %8833 = vmatprep.subr.bf16.mxu0 0
      %8834 = vmatpush1.bf16.msra.mxu0 %v8806
      %8835 = vmatprep.subr.bf16.mxu0 0
      %8836 = vmatpush1.bf16.msra.mxu0 %v8805
      %8837 = vmatprep.subr.bf16.mxu0 0
      %8838 = vmatpush2.bf16.msra.mxu0 0
      %8839 = vmatprep.subr.bf16.mxu0 0
      %8840 = vmatpush2.bf16.msra.mxu0 0
      %8841 = vmatprep.subr.bf16.mxu0 0
      %8842 = vmatpush2.bf16.msra.mxu0 0
      %8843 = vmatprep.subr.bf16.mxu0 0
      %8844 = vmatpush2.bf16.msra.mxu0 0
      %8845 = vmatprep.subr.bf16.mxu0 0
      %8846 = vmatpush2.bf16.msra.mxu0 0
      %8847 = vmatprep.subr.bf16.mxu0 0
      %8848 = vmatpush2.bf16.msra.mxu0 0
      %8849 = vmatprep.subr.bf16.mxu0 0
      %8850 = vmatpush2.bf16.msra.mxu0 0
      %8851 = vmatprep.subr.bf16.mxu0 0
      %8852 = vmatpush2.bf16.msra.mxu0 0
      %8853 = vmatprep.mubr.bf16.mxu0 0
      %8854 = vmatmul.mubr.bf16.gmra.mxu0 %v8741
      %v8855 = vpop.f32.mrf.mxu0
      %v8856 = vadd.f32 0.0, %v8855
      %v8857 = vpop.f32.mrf.mxu0
      %v8858 = vpop.f32.mrf.mxu0
      %v8859 = vadd.f32 0.0, %v8858
      %v8860 = vpop.f32.mrf.mxu0
      %8861 = vmatprep.mubr.bf16.mxu0 0
      %8862 = vmatmul.mubr.bf16.gmra.mxu0 %v8742
      %v8863 = vpop.f32.mrf.mxu0
      %v8864 = vadd.f32 0.0, %v8863
      %v8865 = vpop.f32.mrf.mxu0
      %v8866 = vpop.f32.mrf.mxu0
      %v8867 = vadd.f32 0.0, %v8866
      %v8868 = vpop.f32.mrf.mxu0
      %8869 = vmatprep.mubr.bf16.mxu0 0
      %8870 = vmatmul.mubr.bf16.gmra.mxu0 %v8743
      %v8871 = vpop.f32.mrf.mxu0
      %v8872 = vadd.f32 0.0, %v8871
      %v8873 = vpop.f32.mrf.mxu0
      %v8874 = vpop.f32.mrf.mxu0
      %v8875 = vadd.f32 0.0, %v8874
      %v8876 = vpop.f32.mrf.mxu0
      %8877 = vmatprep.mubr.bf16.mxu0 0
      %8878 = vmatmul.mubr.bf16.gmra.mxu0 %v8744
      %v8879 = vpop.f32.mrf.mxu0
      %v8880 = vadd.f32 0.0, %v8879
      %v8881 = vpop.f32.mrf.mxu0
      %v8882 = vpop.f32.mrf.mxu0
      %v8883 = vadd.f32 0.0, %v8882
      %v8884 = vpop.f32.mrf.mxu0
      %8885 = vmatprep.mubr.bf16.mxu0 0
      %8886 = vmatmul.mubr.bf16.gmra.mxu0 %v8745
      %v8887 = vpop.f32.mrf.mxu0
      %v8888 = vadd.f32 0.0, %v8887
      %v8889 = vpop.f32.mrf.mxu0
      %v8890 = vpop.f32.mrf.mxu0
      %v8891 = vadd.f32 0.0, %v8890
      %v8892 = vpop.f32.mrf.mxu0
      %8893 = vmatprep.mubr.bf16.mxu0 0
      %8894 = vmatmul.mubr.bf16.gmra.mxu0 %v8746
      %v8895 = vpop.f32.mrf.mxu0
      %v8896 = vadd.f32 0.0, %v8895
      %v8897 = vpop.f32.mrf.mxu0
      %v8898 = vpop.f32.mrf.mxu0
      %v8899 = vadd.f32 0.0, %v8898
      %v8900 = vpop.f32.mrf.mxu0
      %8901 = vmatprep.mubr.bf16.mxu0 0
      %8902 = vmatmul.mubr.bf16.gmra.mxu0 %v8747
      %v8903 = vpop.f32.mrf.mxu0
      %v8904 = vadd.f32 0.0, %v8903
      %v8905 = vpop.f32.mrf.mxu0
      %v8906 = vpop.f32.mrf.mxu0
      %v8907 = vadd.f32 0.0, %v8906
      %v8908 = vpop.f32.mrf.mxu0
      %8909 = vmatprep.mubr.bf16.mxu0 0
      %8910 = vmatmul.mubr.bf16.gmra.mxu0 %v8748
      %v8911 = vpop.f32.mrf.mxu0
      %v8912 = vadd.f32 0.0, %v8911
      %v8913 = vpop.f32.mrf.mxu0
      %v8914 = vpop.f32.mrf.mxu0
      %v8915 = vadd.f32 0.0, %v8914
      %v8916 = vpop.f32.mrf.mxu0
      %8917 = vmatprep.mubr.bf16.mxu0 0
      %8918 = vmatmul.mubr.bf16.gmra.mxu0 %v8749
      %v8919 = vpop.f32.mrf.mxu0
      %v8920 = vadd.f32 0.0, %v8919
      %v8921 = vpop.f32.mrf.mxu0
      %v8922 = vpop.f32.mrf.mxu0
      %v8923 = vadd.f32 0.0, %v8922
      %v8924 = vpop.f32.mrf.mxu0
      %8925 = vmatprep.mubr.bf16.mxu0 0
      %8926 = vmatmul.mubr.bf16.gmra.mxu0 %v8750
      %v8927 = vpop.f32.mrf.mxu0
      %v8928 = vadd.f32 0.0, %v8927
      %v8929 = vpop.f32.mrf.mxu0
      %v8930 = vpop.f32.mrf.mxu0
      %v8931 = vadd.f32 0.0, %v8930
      %v8932 = vpop.f32.mrf.mxu0
      %8933 = vmatprep.mubr.bf16.mxu0 0
      %8934 = vmatmul.mubr.bf16.gmra.mxu0 %v8751
      %v8935 = vpop.f32.mrf.mxu0
      %v8936 = vadd.f32 0.0, %v8935
      %v8937 = vpop.f32.mrf.mxu0
      %v8938 = vpop.f32.mrf.mxu0
      %v8939 = vadd.f32 0.0, %v8938
      %v8940 = vpop.f32.mrf.mxu0
      %8941 = vmatprep.mubr.bf16.mxu0 0
      %8942 = vmatmul.mubr.bf16.gmra.mxu0 %v8752
      %v8943 = vpop.f32.mrf.mxu0
      %v8944 = vadd.f32 0.0, %v8943
      %v8945 = vpop.f32.mrf.mxu0
      %v8946 = vpop.f32.mrf.mxu0
      %v8947 = vadd.f32 0.0, %v8946
      %v8948 = vpop.f32.mrf.mxu0
      %8949 = vmatprep.mubr.bf16.mxu0 0
      %8950 = vmatmul.mubr.bf16.gmra.mxu0 %v8753
      %v8951 = vpop.f32.mrf.mxu0
      %v8952 = vadd.f32 0.0, %v8951
      %v8953 = vpop.f32.mrf.mxu0
      %v8954 = vpop.f32.mrf.mxu0
      %v8955 = vadd.f32 0.0, %v8954
      %v8956 = vpop.f32.mrf.mxu0
      %8957 = vmatprep.mubr.bf16.mxu0 0
      %8958 = vmatmul.mubr.bf16.gmra.mxu0 %v8754
      %v8959 = vpop.f32.mrf.mxu0
      %v8960 = vadd.f32 0.0, %v8959
      %v8961 = vpop.f32.mrf.mxu0
      %v8962 = vpop.f32.mrf.mxu0
      %v8963 = vadd.f32 0.0, %v8962
      %v8964 = vpop.f32.mrf.mxu0
      %8965 = vmatprep.mubr.bf16.mxu0 0
      %8966 = vmatmul.mubr.bf16.gmra.mxu0 %v8755
      %v8967 = vpop.f32.mrf.mxu0
      %v8968 = vadd.f32 0.0, %v8967
      %v8969 = vpop.f32.mrf.mxu0
      %v8970 = vpop.f32.mrf.mxu0
      %v8971 = vadd.f32 0.0, %v8970
      %v8972 = vpop.f32.mrf.mxu0
      %8973 = vmatprep.mubr.bf16.mxu0 0
      %8974 = vmatmul.mubr.bf16.gmra.mxu0 %v8756
      %v8975 = vpop.f32.mrf.mxu0
      %v8976 = vadd.f32 0.0, %v8975
      %v8977 = vpop.f32.mrf.mxu0
      %v8978 = vpop.f32.mrf.mxu0
      %v8979 = vadd.f32 0.0, %v8978
      %v8980 = vpop.f32.mrf.mxu0
      %8981 = vdwg.mxu0
      %v8982 = vld [vmem:[%s6] sm:$0x3]
      %v8983 = vlaneseq
      %v8984 = vshrl.u32 %v8983, 7
      %v8985 = vsub.s32 0, %v8984
      %v8986 = vrot.slane %v8982, %v8985
      %v8987 = vmul.f32 %v8856, %v8986
      %v8988 = vmul.f32 %v8859, %v8986
      %v8989 = vmul.f32 %v8864, %v8986
      %v8990 = vmul.f32 %v8867, %v8986
      %v8991 = vmul.f32 %v8872, %v8986
      %v8992 = vmul.f32 %v8875, %v8986
      %v8993 = vmul.f32 %v8880, %v8986
      %v8994 = vmul.f32 %v8883, %v8986
      %v8995 = vmul.f32 %v8888, %v8986
      %v8996 = vmul.f32 %v8891, %v8986
      %v8997 = vmul.f32 %v8896, %v8986
      %v8998 = vmul.f32 %v8899, %v8986
      %v8999 = vmul.f32 %v8904, %v8986
      %v9000 = vmul.f32 %v8907, %v8986
      %v9001 = vmul.f32 %v8912, %v8986
      %v9002 = vmul.f32 %v8915, %v8986
      %v9003 = vmul.f32 %v8920, %v8986
      %v9004 = vmul.f32 %v8923, %v8986
      %v9005 = vmul.f32 %v8928, %v8986
      %v9006 = vmul.f32 %v8931, %v8986
      %v9007 = vmul.f32 %v8936, %v8986
      %v9008 = vmul.f32 %v8939, %v8986
      %v9009 = vmul.f32 %v8944, %v8986
      %v9010 = vmul.f32 %v8947, %v8986
      %v9011 = vmul.f32 %v8952, %v8986
      %v9012 = vmul.f32 %v8955, %v8986
      %v9013 = vmul.f32 %v8960, %v8986
      %v9014 = vmul.f32 %v8963, %v8986
      %v9015 = vmul.f32 %v8968, %v8986
      %v9016 = vmul.f32 %v8971, %v8986
      %v9017 = vmul.f32 %v8976, %v8986
      %v9018 = vmul.f32 %v8979, %v8986
      %v9019 = vlaneseq
      %v9020 = vshrl.u32 %v9019, 7
      %v9021 = vsub.s32 1, %v9020
      %v9022 = vrot.slane %v8982, %v9021
      %v9023 = vadd.f32 %v8987, %v9022
      %v9024 = vadd.f32 %v8988, %v9022
      %v9025 = vadd.f32 %v8989, %v9022
      %v9026 = vadd.f32 %v8990, %v9022
      %v9027 = vadd.f32 %v8991, %v9022
      %v9028 = vadd.f32 %v8992, %v9022
      %v9029 = vadd.f32 %v8993, %v9022
      %v9030 = vadd.f32 %v8994, %v9022
      %v9031 = vadd.f32 %v8995, %v9022
      %v9032 = vadd.f32 %v8996, %v9022
      %v9033 = vadd.f32 %v8997, %v9022
      %v9034 = vadd.f32 %v8998, %v9022
      %v9035 = vadd.f32 %v8999, %v9022
      %v9036 = vadd.f32 %v9000, %v9022
      %v9037 = vadd.f32 %v9001, %v9022
      %v9038 = vadd.f32 %v9002, %v9022
      %v9039 = vadd.f32 %v9003, %v9022
      %v9040 = vadd.f32 %v9004, %v9022
      %v9041 = vadd.f32 %v9005, %v9022
      %v9042 = vadd.f32 %v9006, %v9022
      %v9043 = vadd.f32 %v9007, %v9022
      %v9044 = vadd.f32 %v9008, %v9022
      %v9045 = vadd.f32 %v9009, %v9022
      %v9046 = vadd.f32 %v9010, %v9022
      %v9047 = vadd.f32 %v9011, %v9022
      %v9048 = vadd.f32 %v9012, %v9022
      %v9049 = vadd.f32 %v9013, %v9022
      %v9050 = vadd.f32 %v9014, %v9022
      %v9051 = vadd.f32 %v9015, %v9022
      %v9052 = vadd.f32 %v9016, %v9022
      %v9053 = vadd.f32 %v9017, %v9022
      %v9054 = vadd.f32 %v9018, %v9022
      %v9055 = vadd.f32 %v8677, %v9023
      %v9056 = vadd.f32 %v8678, %v9024
      %v9057 = vadd.f32 %v8679, %v9025
      %v9058 = vadd.f32 %v8680, %v9026
      %v9059 = vadd.f32 %v8681, %v9027
      %v9060 = vadd.f32 %v8682, %v9028
      %v9061 = vadd.f32 %v8683, %v9029
      %v9062 = vadd.f32 %v8684, %v9030
      %v9063 = vadd.f32 %v8685, %v9031
      %v9064 = vadd.f32 %v8686, %v9032
      %v9065 = vadd.f32 %v8687, %v9033
      %v9066 = vadd.f32 %v8688, %v9034
      %v9067 = vadd.f32 %v8689, %v9035
      %v9068 = vadd.f32 %v8690, %v9036
      %v9069 = vadd.f32 %v8691, %v9037
      %v9070 = vadd.f32 %v8692, %v9038
      %v9071 = vadd.f32 %v8693, %v9039
      %v9072 = vadd.f32 %v8694, %v9040
      %v9073 = vadd.f32 %v8695, %v9041
      %v9074 = vadd.f32 %v8696, %v9042
      %v9075 = vadd.f32 %v8697, %v9043
      %v9076 = vadd.f32 %v8698, %v9044
      %v9077 = vadd.f32 %v8699, %v9045
      %v9078 = vadd.f32 %v8700, %v9046
      %v9079 = vadd.f32 %v8701, %v9047
      %v9080 = vadd.f32 %v8702, %v9048
      %v9081 = vadd.f32 %v8703, %v9049
      %v9082 = vadd.f32 %v8704, %v9050
      %v9083 = vadd.f32 %v8705, %v9051
      %v9084 = vadd.f32 %v8706, %v9052
      %v9085 = vadd.f32 %v8707, %v9053
      %v9086 = vadd.f32 %v8708, %v9054
      %v9087 = vmax.f32 %v9055, 0.0
      %v9088 = vmax.f32 %v9056, 0.0
      %v9089 = vmax.f32 %v9057, 0.0
      %v9090 = vmax.f32 %v9058, 0.0
      %v9091 = vmax.f32 %v9059, 0.0
      %v9092 = vmax.f32 %v9060, 0.0
      %v9093 = vmax.f32 %v9061, 0.0
      %v9094 = vmax.f32 %v9062, 0.0
      %v9095 = vmax.f32 %v9063, 0.0
      %v9096 = vmax.f32 %v9064, 0.0
      %v9097 = vmax.f32 %v9065, 0.0
      %v9098 = vmax.f32 %v9066, 0.0
      %v9099 = vmax.f32 %v9067, 0.0
      %v9100 = vmax.f32 %v9068, 0.0
      %v9101 = vmax.f32 %v9069, 0.0
      %v9102 = vmax.f32 %v9070, 0.0
      %v9103 = vmax.f32 %v9071, 0.0
      %v9104 = vmax.f32 %v9072, 0.0
      %v9105 = vmax.f32 %v9073, 0.0
      %v9106 = vmax.f32 %v9074, 0.0
      %v9107 = vmax.f32 %v9075, 0.0
      %v9108 = vmax.f32 %v9076, 0.0
      %v9109 = vmax.f32 %v9077, 0.0
      %v9110 = vmax.f32 %v9078, 0.0
      %v9111 = vmax.f32 %v9079, 0.0
      %v9112 = vmax.f32 %v9080, 0.0
      %v9113 = vmax.f32 %v9081, 0.0
      %v9114 = vmax.f32 %v9082, 0.0
      %v9115 = vmax.f32 %v9083, 0.0
      %v9116 = vmax.f32 %v9084, 0.0
      %v9117 = vmax.f32 %v9085, 0.0
      %v9118 = vmax.f32 %v9086, 0.0
      %v9119 = vpack.c.bf16 %v9088, %v9087
      %v9120 = vpack.c.bf16 %v9090, %v9089
      %v9121 = vpack.c.bf16 %v9092, %v9091
      %v9122 = vpack.c.bf16 %v9094, %v9093
      %v9123 = vpack.c.bf16 %v9096, %v9095
      %v9124 = vpack.c.bf16 %v9098, %v9097
      %v9125 = vpack.c.bf16 %v9100, %v9099
      %v9126 = vpack.c.bf16 %v9102, %v9101
      %v9127 = vpack.c.bf16 %v9104, %v9103
      %v9128 = vpack.c.bf16 %v9106, %v9105
      %v9129 = vpack.c.bf16 %v9108, %v9107
      %v9130 = vpack.c.bf16 %v9110, %v9109
      %v9131 = vpack.c.bf16 %v9112, %v9111
      %v9132 = vpack.c.bf16 %v9114, %v9113
      %v9133 = vpack.c.bf16 %v9116, %v9115
      %v9134 = vpack.c.bf16 %v9118, %v9117
      %v9151 = vunpack.c.l.b16 %v9119
      %v9152 = vunpack.c.h.b16 %v9119
      %v9153 = vunpack.c.l.b16 %v9120
      %v9154 = vunpack.c.h.b16 %v9120
      %v9155 = vunpack.c.l.b16 %v9121
      %v9156 = vunpack.c.h.b16 %v9121
      %v9157 = vunpack.c.l.b16 %v9122
      %v9158 = vunpack.c.h.b16 %v9122
      %v9159 = vunpack.c.l.b16 %v9123
      %v9160 = vunpack.c.h.b16 %v9123
      %v9161 = vunpack.c.l.b16 %v9124
      %v9162 = vunpack.c.h.b16 %v9124
      %v9163 = vunpack.c.l.b16 %v9125
      %v9164 = vunpack.c.h.b16 %v9125
      %v9165 = vunpack.c.l.b16 %v9126
      %v9166 = vunpack.c.h.b16 %v9126
      %v9167 = vunpack.c.l.b16 %v9127
      %v9168 = vunpack.c.h.b16 %v9127
      %v9169 = vunpack.c.l.b16 %v9128
      %v9170 = vunpack.c.h.b16 %v9128
      %v9171 = vunpack.c.l.b16 %v9129
      %v9172 = vunpack.c.h.b16 %v9129
      %v9173 = vunpack.c.l.b16 %v9130
      %v9174 = vunpack.c.h.b16 %v9130
      %v9175 = vunpack.c.l.b16 %v9131
      %v9176 = vunpack.c.h.b16 %v9131
      %v9177 = vunpack.c.l.b16 %v9132
      %v9178 = vunpack.c.h.b16 %v9132
      %v9179 = vunpack.c.l.b16 %v9133
      %v9180 = vunpack.c.h.b16 %v9133
      %v9181 = vunpack.c.l.b16 %v9134
      %v9182 = vunpack.c.h.b16 %v9134
      %v9183 = vpack.c.b16 %v9151, %v9151
      %v9184 = vpack.c.b16 %v9152, %v9152
      %v9185 = vpack.c.b16 %v9153, %v9153
      %v9186 = vpack.c.b16 %v9154, %v9154
      %v9187 = vpack.c.b16 %v9155, %v9155
      %v9188 = vpack.c.b16 %v9156, %v9156
      %v9189 = vpack.c.b16 %v9157, %v9157
      %v9190 = vpack.c.b16 %v9158, %v9158
      %v9191 = vpack.c.b16 %v9159, %v9159
      %v9192 = vpack.c.b16 %v9160, %v9160
      %v9193 = vpack.c.b16 %v9161, %v9161
      %v9194 = vpack.c.b16 %v9162, %v9162
      %v9195 = vpack.c.b16 %v9163, %v9163
      %v9196 = vpack.c.b16 %v9164, %v9164
      %v9197 = vpack.c.b16 %v9165, %v9165
      %v9198 = vpack.c.b16 %v9166, %v9166
      %v9199 = vpack.c.b16 %v9167, %v9167
      %v9200 = vpack.c.b16 %v9168, %v9168
      %v9201 = vpack.c.b16 %v9169, %v9169
      %v9202 = vpack.c.b16 %v9170, %v9170
      %v9203 = vpack.c.b16 %v9171, %v9171
      %v9204 = vpack.c.b16 %v9172, %v9172
      %v9205 = vpack.c.b16 %v9173, %v9173
      %v9206 = vpack.c.b16 %v9174, %v9174
      %v9207 = vpack.c.b16 %v9175, %v9175
      %v9208 = vpack.c.b16 %v9176, %v9176
      %v9209 = vpack.c.b16 %v9177, %v9177
      %v9210 = vpack.c.b16 %v9178, %v9178
      %v9211 = vpack.c.b16 %v9179, %v9179
      %v9212 = vpack.c.b16 %v9180, %v9180
      %v9213 = vpack.c.b16 %v9181, %v9181
      %v9214 = vpack.c.b16 %v9182, %v9182
      %9247 = vst [vmem:[%s278] sm:$0xf] %v9183
      %9248 = vst [vmem:[%s278 + $0x4] sm:$0xf] %v9184
      %9249 = vst [vmem:[%s278 + $0x8] sm:$0xf] %v9185
      %9250 = vst [vmem:[%s278 + $0xc] sm:$0xf] %v9186
      %9251 = vst [vmem:[%s278 + $0x10] sm:$0xf] %v9187
      %9252 = vst [vmem:[%s278 + $0x14] sm:$0xf] %v9188
      %9253 = vst [vmem:[%s278 + $0x18] sm:$0xf] %v9189
      %9254 = vst [vmem:[%s278 + $0x1c] sm:$0xf] %v9190
      %9255 = vst [vmem:[%s278 + $0x20] sm:$0xf] %v9191
      %9256 = vst [vmem:[%s278 + $0x24] sm:$0xf] %v9192
      %9257 = vst [vmem:[%s278 + $0x28] sm:$0xf] %v9193
      %9258 = vst [vmem:[%s278 + $0x2c] sm:$0xf] %v9194
      %9259 = vst [vmem:[%s278 + $0x30] sm:$0xf] %v9195
      %9260 = vst [vmem:[%s278 + $0x34] sm:$0xf] %v9196
      %9261 = vst [vmem:[%s278 + $0x38] sm:$0xf] %v9197
      %9262 = vst [vmem:[%s278 + $0x3c] sm:$0xf] %v9198
      %9263 = vst [vmem:[%s278 + $0x40] sm:$0xf] %v9199
      %9264 = vst [vmem:[%s278 + $0x44] sm:$0xf] %v9200
      %9265 = vst [vmem:[%s278 + $0x48] sm:$0xf] %v9201
      %9266 = vst [vmem:[%s278 + $0x4c] sm:$0xf] %v9202
      %9267 = vst [vmem:[%s278 + $0x50] sm:$0xf] %v9203
      %9268 = vst [vmem:[%s278 + $0x54] sm:$0xf] %v9204
      %9269 = vst [vmem:[%s278 + $0x58] sm:$0xf] %v9205
      %9270 = vst [vmem:[%s278 + $0x5c] sm:$0xf] %v9206
      %9271 = vst [vmem:[%s278 + $0x60] sm:$0xf] %v9207
      %9272 = vst [vmem:[%s278 + $0x64] sm:$0xf] %v9208
      %9273 = vst [vmem:[%s278 + $0x68] sm:$0xf] %v9209
      %9274 = vst [vmem:[%s278 + $0x6c] sm:$0xf] %v9210
      %9275 = vst [vmem:[%s278 + $0x70] sm:$0xf] %v9211
      %9276 = vst [vmem:[%s278 + $0x74] sm:$0xf] %v9212
      %9277 = vst [vmem:[%s278 + $0x78] sm:$0xf] %v9213
      %9278 = vst [vmem:[%s278 + $0x7c] sm:$0xf] %v9214
      %p9279 = scmp.lt.s32.totalorder %s18, 1
      %s9280 = scalar_select %p9279, %s18, 1
      %s9281 = smul.addr %s9280, 32
      %s9282 = smul.addr %s9281, 4
      %s9283 = scalar_lea.vmem %s7, %s9282
      // Predicated region
      $region49: #{basic_block_forward.1} parent=47 // pred_check
        %p9284 = pneg %p188
      $region50: #{basic_block_forward.1} parent=47 // pred_check_branch
        %9286 = sbr.rel (%p9284) target = $region52
      $region51: #{basic_block_forward.1} parent=47 // pred_region
        _
      $region52: #{basic_block_forward.1} parent=47 // pred_fallthru
        _
    $region48: #{basic_block_forward.1} parent=5 // pred_fallthru
      _
    %p9287 = scmp.le.s32.totalorder 2, %s13
    // Predicated region
    $region53: #{basic_block_forward.1} parent=5 // pred_check
      %p9288 = pneg %p9287
    $region54: #{basic_block_forward.1} parent=5 // pred_check_branch
      %9290 = sbr.rel (%p9288) target = $region56
    $region55: #{basic_block_forward.1} parent=5 // pred_region
      %s9291 = ssub.s32 %s13, 2
      // Predicated region
      $region57: #{basic_block_forward.1} parent=55 // pred_check
        %p9292 = pneg %p194
      $region58: #{basic_block_forward.1} parent=55 // pred_check_branch
        %9294 = sbr.rel (%p9292) target = $region60
      $region59: #{basic_block_forward.1} parent=55 // pred_region
        %p9295 = scmp.lt.s32.totalorder %s19, 1
        %s9296 = scalar_select %p9295, %s19, 1
        %s9297 = smul.addr %s9296, 32
        %s9298 = smul.addr %s9297, 4
        %s9299 = scalar_lea.vmem %s7, %s9298
      $region60: #{basic_block_forward.1} parent=55 // pred_fallthru
        _
    $region56: #{basic_block_forward.1} parent=5 // pred_fallthru
      _
  $region6: #{basic_block_forward.1} parent=0 // loop_footer
    %s17 = sadd.s32 1, %s13
  $region7: #{basic_block_forward.1} parent=0 // loop_footer_branch
    %12 = sbr.rel target = $region3
  $region8: #{basic_block_forward.1} parent=0 // loop_exit
    _

</llo_original>
